<compile_context>
chip_gen: v6e
topology: v6e:2x2x1
jax: 0.10.0
libtpu: 0.0.40
codegen_flags: <defaults>
</compile_context>

<pallas_src>
import functools
import math

import jax
import jax.numpy as jnp
from jax.experimental import pallas as pl
from jax.experimental.pallas import tpu as pltpu


# ----------------------------------------------------------------------------
# BERT-base config
# ----------------------------------------------------------------------------
VOCAB = 30522
HIDDEN = 768
LAYERS = 12
HEADS = 12
HEAD_DIM = 64
INTER = 3072
MAX_POS = 512
PROJ_DIM = 128
LN_EPS = 1e-12
TK = 256          # K-reduction tile (bf16)


def _round_up(x, m):
    return (x + m - 1) // m * m


def _pick_tn(np_):
    for t in (512, 256, 128):
        if np_ % t == 0:
            return t
    return 128


# ----------------------------------------------------------------------------
# Pallas kernels
# ----------------------------------------------------------------------------
def _gemm_bias_act_kernel(a_ref, b_ref, bias_ref, o_ref, acc_ref, *, act):
    """Tiled GEMM (bf16 in, fp32 accumulate) with fused bias + activation epilogue."""
    k = pl.program_id(2)

    @pl.when(k == 0)
    def _():
        acc_ref[...] = jnp.zeros_like(acc_ref)

    acc_ref[...] += jnp.dot(a_ref[...], b_ref[...],
                            preferred_element_type=jnp.float32)

    @pl.when(k == pl.num_programs(2) - 1)
    def _():
        y = acc_ref[...] + bias_ref[...]          # fp32 epilogue (v5e-safe)
        if act == "gelu":                         # tanh-approx GELU
            y = 0.5 * y * (1.0 + jnp.tanh(0.7978845608028654 *
                                          (y + 0.044715 * y * y * y)))
        elif act == "tanh":
            y = jnp.tanh(y)
        elif act == "relu":
            y = jnp.maximum(y, 0.0)
        o_ref[...] = y.astype(o_ref.dtype)


def _gemm_bias_res_ln_kernel(a_ref, b_ref, bias_ref, res_ref, g_ref, beta_ref,
                             o_ref, acc_ref, *, eps):
    """Tiled GEMM with fused bias + residual add + LayerNorm epilogue.

    The output tile spans the full hidden dim (N), so the LayerNorm row
    reduction happens entirely inside the epilogue — no extra HBM passes.
    """
    k = pl.program_id(1)

    @pl.when(k == 0)
    def _():
        acc_ref[...] = jnp.zeros_like(acc_ref)

    acc_ref[...] += jnp.dot(a_ref[...], b_ref[...],
                            preferred_element_type=jnp.float32)

    @pl.when(k == pl.num_programs(1) - 1)
    def _():
        y = acc_ref[...] + bias_ref[...] + res_ref[...].astype(jnp.float32)
        mu = jnp.mean(y, axis=-1, keepdims=True)
        yc = y - mu
        var = jnp.mean(yc * yc, axis=-1, keepdims=True)
        y = yc * jax.lax.rsqrt(var + eps) * g_ref[...] + beta_ref[...]
        o_ref[...] = y.astype(o_ref.dtype)


def _layernorm_kernel(x_ref, g_ref, b_ref, o_ref, *, eps):
    x = x_ref[...].astype(jnp.float32)
    mu = jnp.mean(x, axis=-1, keepdims=True)
    xc = x - mu
    var = jnp.mean(xc * xc, axis=-1, keepdims=True)
    y = xc * jax.lax.rsqrt(var + eps) * g_ref[...] + b_ref[...]
    o_ref[...] = y.astype(o_ref.dtype)


def _attention_kernel(q_ref, k_ref, v_ref, bias_ref, o_ref, *, scale):
    """softmax(q k^T * scale + mask_bias) v for one (batch, head)."""
    q = q_ref[...]                                   # (S, dh) bf16
    k = k_ref[...]                                   # (S, dh) bf16
    v = v_ref[...]                                   # (S, dh) bf16
    s = jax.lax.dot_general(q, k, (((1,), (1,)), ((), ())),
                            preferred_element_type=jnp.float32)   # (S, S) fp32
    s = s * scale + bias_ref[...][None, :]           # mask bias over keys
    m = jnp.max(s, axis=-1, keepdims=True)
    p = jnp.exp(s - m)
    l = jnp.sum(p, axis=-1, keepdims=True)
    ctx = jnp.dot(p.astype(jnp.bfloat16), v, preferred_element_type=jnp.float32)
    ctx = ctx * pl.reciprocal(l, approx=True)
    o_ref[...] = ctx.astype(o_ref.dtype)


# ----------------------------------------------------------------------------
# Pallas wrappers
# ----------------------------------------------------------------------------
def gemm_bias_act(a, w_p, b_p, *, n, act=None, out_dtype=jnp.bfloat16):
    """a:(M,K) @ w_p:(Kp,Np) + bias, fused activation.  Weights pre-padded bf16."""
    M, K = a.shape
    Kp, Np = w_p.shape
    tm = min(_round_up(M, 8), 256)
    Mp = _round_up(M, tm)
    tk = TK
    tn = _pick_tn(Np)

    a_p = a.astype(jnp.bfloat16)
    if (Mp, Kp) != (M, K):
        a_p = jnp.pad(a_p, ((0, Mp - M), (0, Kp - K)))

    kernel = functools.partial(_gemm_bias_act_kernel, act=act)
    cost = pl.CostEstimate(
        flops=2 * M * n * K,
        transcendentals=(M * n if act in ("gelu", "tanh") else 0),
        bytes_accessed=Mp * Kp * 2 + Kp * Np * 2 + Np * 4
        + Mp * Np * jnp.dtype(out_dtype).itemsize)

    out = pl.pallas_call(
        kernel,
        out_shape=jax.ShapeDtypeStruct((Mp, Np), out_dtype),
        grid_spec=pltpu.PrefetchScalarGridSpec(
            num_scalar_prefetch=0,
            grid=(Mp // tm, Np // tn, Kp // tk),
            in_specs=[
                pl.BlockSpec((tm, tk), lambda i, j, k: (i, k)),
                pl.BlockSpec((tk, tn), lambda i, j, k: (k, j)),
                pl.BlockSpec((1, tn), lambda i, j, k: (0, j)),
            ],
            out_specs=pl.BlockSpec((tm, tn), lambda i, j, k: (i, j)),
            scratch_shapes=[pltpu.VMEM((tm, tn), jnp.float32)],
        ),
        compiler_params=pltpu.CompilerParams(
            dimension_semantics=("parallel", "parallel", "arbitrary")),
        cost_estimate=cost,
    )(a_p, w_p, b_p)
    return out[:M, :n]


def gemm_bias_residual_layernorm(a, w_p, b_p, residual, gamma, beta, *,
                                 eps=LN_EPS, out_dtype=jnp.bfloat16):
    """(a @ w + bias + residual) -> LayerNorm, all fused in one Pallas kernel."""
    M, K = a.shape
    Kp, N = w_p.shape
    assert N % 128 == 0 and gamma.shape == (1, N) and beta.shape == (1, N)
    tm = min(_round_up(M, 8), 256)
    Mp = _round_up(M, tm)
    tk = TK

    a_p = a.astype(jnp.bfloat16)
    if (Mp, Kp) != (M, K):
        a_p = jnp.pad(a_p, ((0, Mp - M), (0, Kp - K)))
    res_p = residual.astype(jnp.bfloat16)
    if Mp != M:
        res_p = jnp.pad(res_p, ((0, Mp - M), (0, 0)))

    kernel = functools.partial(_gemm_bias_res_ln_kernel, eps=eps)
    cost = pl.CostEstimate(
        flops=2 * M * N * K, transcendentals=M,
        bytes_accessed=Mp * Kp * 2 + Kp * N * 2 + 2 * Mp * N * 2 + 3 * N * 4)

    out = pl.pallas_call(
        kernel,
        out_shape=jax.ShapeDtypeStruct((Mp, N), out_dtype),
        grid_spec=pltpu.PrefetchScalarGridSpec(
            num_scalar_prefetch=0,
            grid=(Mp // tm, Kp // tk),
            in_specs=[
                pl.BlockSpec((tm, tk), lambda i, k: (i, k)),
                pl.BlockSpec((tk, N), lambda i, k: (k, 0)),
                pl.BlockSpec((1, N), lambda i, k: (0, 0)),
                pl.BlockSpec((tm, N), lambda i, k: (i, 0)),
                pl.BlockSpec((1, N), lambda i, k: (0, 0)),
                pl.BlockSpec((1, N), lambda i, k: (0, 0)),
            ],
            out_specs=pl.BlockSpec((tm, N), lambda i, k: (i, 0)),
            scratch_shapes=[pltpu.VMEM((tm, N), jnp.float32)],
        ),
        compiler_params=pltpu.CompilerParams(
            dimension_semantics=("parallel", "arbitrary")),
        cost_estimate=cost,
    )(a_p, w_p, b_p, res_p, gamma, beta)
    return out[:M]


def layernorm(x, gamma, beta, *, eps=LN_EPS, out_dtype=jnp.bfloat16):
    """Row-tiled standalone LayerNorm (used once, for the embeddings)."""
    M, N = x.shape
    tm = min(_round_up(M, 8), 256)
    Mp = _round_up(M, tm)
    x_p = x.astype(jnp.float32)
    if Mp != M:
        x_p = jnp.pad(x_p, ((0, Mp - M), (0, 0)))
    kernel = functools.partial(_layernorm_kernel, eps=eps)
    out = pl.pallas_call(
        kernel,
        out_shape=jax.ShapeDtypeStruct((Mp, N), out_dtype),
        grid=(Mp // tm,),
        in_specs=[
            pl.BlockSpec((tm, N), lambda i: (i, 0)),
            pl.BlockSpec((1, N), lambda i: (0, 0)),
            pl.BlockSpec((1, N), lambda i: (0, 0)),
        ],
        out_specs=pl.BlockSpec((tm, N), lambda i: (i, 0)),
        compiler_params=pltpu.CompilerParams(dimension_semantics=("parallel",)),
    )(x_p, gamma, beta)
    return out[:M]


def attention(q, k, v, mask_bias, *, scale):
    """q,k,v: (B, H, S, dh) bf16; mask_bias: (B, 1, S) fp32 -> (B, H, S, dh) bf16."""
    B, nH, S, dh = q.shape
    kernel = functools.partial(_attention_kernel, scale=scale)
    return pl.pallas_call(
        kernel,
        out_shape=jax.ShapeDtypeStruct((B, nH, S, dh), jnp.bfloat16),
        grid=(B, nH),
        in_specs=[
            pl.BlockSpec((None, None, S, dh), lambda b, h: (b, h, 0, 0)),
            pl.BlockSpec((None, None, S, dh), lambda b, h: (b, h, 0, 0)),
            pl.BlockSpec((None, None, S, dh), lambda b, h: (b, h, 0, 0)),
            pl.BlockSpec((None, None, S), lambda b, h: (b, 0, 0)),
        ],
        out_specs=pl.BlockSpec((None, None, S, dh), lambda b, h: (b, h, 0, 0)),
        compiler_params=pltpu.CompilerParams(
            dimension_semantics=("parallel", "parallel")),
    )(q.astype(jnp.bfloat16), k.astype(jnp.bfloat16),
      v.astype(jnp.bfloat16), mask_bias)


# ----------------------------------------------------------------------------
# Deterministic parameter init (weights pre-padded + pre-cast to bf16 once)
# ----------------------------------------------------------------------------
def _rand_linear(key, k_dim, n_dim):
    kw, kb = jax.random.split(key)
    w = 0.02 * jax.random.normal(kw, (k_dim, n_dim), jnp.float32)
    b = 0.02 * jax.random.normal(kb, (n_dim,), jnp.float32)
    kp = _round_up(k_dim, TK)
    np_ = _round_up(n_dim, 128)
    w_p = jnp.pad(w, ((0, kp - k_dim), (0, np_ - n_dim))).astype(jnp.bfloat16)
    b_p = jnp.pad(b, (0, np_ - n_dim)).reshape(1, np_)
    return w_p, b_p


def init_params(key):
    k_emb, k_pos, k_typ, k_layers, k_pool, k_proj = jax.random.split(key, 6)
    params = {
        "word_emb": (0.02 * jax.random.normal(k_emb, (VOCAB, HIDDEN),
                                              jnp.float32)).astype(jnp.bfloat16),
        "pos_emb": (0.02 * jax.random.normal(k_pos, (MAX_POS, HIDDEN),
                                             jnp.float32)).astype(jnp.bfloat16),
        "type_emb": (0.02 * jax.random.normal(k_typ, (2, HIDDEN),
                                              jnp.float32)).astype(jnp.bfloat16),
        "emb_ln_g": jnp.ones((1, HIDDEN), jnp.float32),
        "emb_ln_b": jnp.zeros((1, HIDDEN), jnp.float32),
    }
    layer_list = []
    for i in range(LAYERS):
        k1, k2, k3, k4 = jax.random.split(jax.random.fold_in(k_layers, i), 4)
        qkv_w, qkv_b = _rand_linear(k1, HIDDEN, 3 * HIDDEN)   # fused Q,K,V projection
        ao_w, ao_b = _rand_linear(k2, HIDDEN, HIDDEN)
        f1_w, f1_b = _rand_linear(k3, HIDDEN, INTER)
        f2_w, f2_b = _rand_linear(k4, INTER, HIDDEN)
        layer_list.append(dict(
            qkv_w=qkv_w, qkv_b=qkv_b, ao_w=ao_w, ao_b=ao_b,
            f1_w=f1_w, f1_b=f1_b, f2_w=f2_w, f2_b=f2_b,
            ln1_g=jnp.ones((1, HIDDEN), jnp.float32),
            ln1_b=jnp.zeros((1, HIDDEN), jnp.float32),
            ln2_g=jnp.ones((1, HIDDEN), jnp.float32),
            ln2_b=jnp.zeros((1, HIDDEN), jnp.float32),
        ))
    params["layers"] = jax.tree_util.tree_map(
        lambda *xs: jnp.stack(xs, axis=0), *layer_list)
    params["pool_w"], params["pool_b"] = _rand_linear(k_pool, HIDDEN, HIDDEN)
    params["proj_w"], params["proj_b"] = _rand_linear(k_proj, HIDDEN, PROJ_DIM)
    return params


# ----------------------------------------------------------------------------
# TextEncoder forward (eval semantics; BERT backbone is frozen in the module)
# ----------------------------------------------------------------------------
def text_encoder_forward(params, input_ids, attention_mask):
    B, S = input_ids.shape
    M = B * S

    # --- embeddings (gather + add are tiny glue; LayerNorm is a Pallas kernel)
    we = jnp.take(params["word_emb"], input_ids.reshape(-1),
                  axis=0).astype(jnp.float32)                      # (M, H)
    pe = params["pos_emb"][:S].astype(jnp.float32)                 # (S, H)
    te = params["type_emb"][0].astype(jnp.float32)                 # (H,)  token_type=0
    emb = we + jnp.tile(pe, (B, 1)) + te[None, :]
    x = layernorm(emb, params["emb_ln_g"], params["emb_ln_b"])     # (M, H) bf16
    # (dropouts are identity in eval mode)

    mask_bias = ((1.0 - attention_mask.astype(jnp.float32)) * -1e9).reshape(B, 1, S)
    scale = 1.0 / math.sqrt(HEAD_DIM)

    def layer_fn(h, lp):
        # fused QKV projection: (M, H) @ (H, 3H)
        qkv = gemm_bias_act(h, lp["qkv_w"], lp["qkv_b"], n=3 * HIDDEN)
        qkv = qkv.reshape(B, S, 3, HEADS, HEAD_DIM)
        q = jnp.transpose(qkv[:, :, 0], (0, 2, 1, 3))              # (B, nH, S, dh)
        k = jnp.transpose(qkv[:, :, 1], (0, 2, 1, 3))
        v = jnp.transpose(qkv[:, :, 2], (0, 2, 1, 3))
        ctx = attention(q, k, v, mask_bias, scale=scale)           # (B, nH, S, dh)
        ctx = jnp.transpose(ctx, (0, 2, 1, 3)).reshape(M, HIDDEN)
        # attention output dense + bias + residual + LayerNorm (fused)
        a_out = gemm_bias_residual_layernorm(ctx, lp["ao_w"], lp["ao_b"],
                                             h, lp["ln1_g"], lp["ln1_b"])
        # FFN: up-projection + GELU (fused), down-projection + residual + LN (fused)
        ffn = gemm_bias_act(a_out, lp["f1_w"], lp["f1_b"], n=INTER, act="gelu")
        out = gemm_bias_residual_layernorm(ffn, lp["f2_w"], lp["f2_b"],
                                           a_out, lp["ln2_g"], lp["ln2_b"])
        return out, None

    x, _ = jax.lax.scan(layer_fn, x, params["layers"])

    # BERT pooler: dense + tanh on the [CLS] token
    cls = x.reshape(B, S, HIDDEN)[:, 0, :]                         # (B, H) bf16
    pooled = gemm_bias_act(cls, params["pool_w"], params["pool_b"],
                           n=HIDDEN, act="tanh")
    # projection head: Linear(768, 128), fp32 output
    return gemm_bias_act(pooled, params["proj_w"], params["proj_b"],
                         n=PROJ_DIM, act=None, out_dtype=jnp.float32)


# ----------------------------------------------------------------------------
if __name__ == "__main__":
    key = jax.random.PRNGKey(0)
    kp, kid = jax.random.split(key)
    params = init_params(kp)

    B, S = 2, 16
    input_ids = jax.random.randint(kid, (B, S), 0, VOCAB, dtype=jnp.int32)
    lengths = jnp.array([S, S - 4], dtype=jnp.int32)
    attention_mask = (jnp.arange(S, dtype=jnp.int32)[None, :]
                      < lengths[:, None]).astype(jnp.int32)

    fwd = jax.jit(text_encoder_forward)
    out = fwd(params, input_ids, attention_mask)
    out = jax.block_until_ready(out)

    assert out.shape == (B, PROJ_DIM), out.shape
    assert bool(jnp.all(jnp.isfinite(out)))
    print("KERNEL_OK")
</pallas_src>

<mosaic_0001>
module attributes {stable_mosaic.version = 11 : i64} {
  func.func @_layernorm_kernel(%arg0: i32, %arg1: memref<32x768xf32, #tpu.memory_space<vmem>>, %arg2: memref<1x768xf32, #tpu.memory_space<vmem>>, %arg3: memref<1x768xf32, #tpu.memory_space<vmem>>, %arg4: memref<32x768xbf16, #tpu.memory_space<vmem>>) attributes {dimension_semantics = [#tpu.dimension_semantics<parallel>], iteration_bounds = array<i64: 1>, scalar_prefetch = 0 : i64, scratch_operands = 0 : i64, tpu.core_type = #tpu.core_type<tc>, window_params = [{transform_indices = @transform_0, window_bounds = array<i64: 32, 768>}, {pipeline_mode = #tpu.pipeline_mode<synchronous>, transform_indices = @transform_1, window_bounds = array<i64: 1, 768>}, {pipeline_mode = #tpu.pipeline_mode<synchronous>, transform_indices = @transform_2, window_bounds = array<i64: 1, 768>}, {transform_indices = @transform_3, window_bounds = array<i64: 32, 768>}]} {
    %c0 = arith.constant 0 : index
    %c0_0 = arith.constant 0 : index
    %0 = vector.load %arg1[%c0, %c0_0] : memref<32x768xf32, #tpu.memory_space<vmem>>, vector<32x768xf32>
    %cst = arith.constant dense<0.000000e+00> : vector<32xf32>
    %1 = vector.multi_reduction <add>, %0, %cst [1] : vector<32x768xf32> to vector<32xf32>
    %2 = vector.shape_cast %1 : vector<32xf32> to vector<32x1xf32>
    %cst_1 = arith.constant 7.680000e+02 : f32
    %3 = vector.broadcast %cst_1 : f32 to vector<32x1xf32>
    %4 = arith.divf %2, %3 : vector<32x1xf32>
    %5 = vector.broadcast %4 : vector<32x1xf32> to vector<32x768xf32>
    %6 = arith.subf %0, %5 : vector<32x768xf32>
    %7 = arith.mulf %6, %6 : vector<32x768xf32>
    %cst_2 = arith.constant dense<0.000000e+00> : vector<32xf32>
    %8 = vector.multi_reduction <add>, %7, %cst_2 [1] : vector<32x768xf32> to vector<32xf32>
    %9 = vector.shape_cast %8 : vector<32xf32> to vector<32x1xf32>
    %cst_3 = arith.constant 7.680000e+02 : f32
    %10 = vector.broadcast %cst_3 : f32 to vector<32x1xf32>
    %11 = arith.divf %9, %10 : vector<32x1xf32>
    %cst_4 = arith.constant 9.99999996E-13 : f32
    %12 = vector.broadcast %cst_4 : f32 to vector<32x1xf32>
    %13 = arith.addf %11, %12 : vector<32x1xf32>
    %14 = math.rsqrt %13 : vector<32x1xf32>
    %15 = vector.broadcast %14 : vector<32x1xf32> to vector<32x768xf32>
    %16 = arith.mulf %6, %15 : vector<32x768xf32>
    %c0_5 = arith.constant 0 : index
    %c0_6 = arith.constant 0 : index
    %17 = vector.load %arg2[%c0_5, %c0_6] : memref<1x768xf32, #tpu.memory_space<vmem>>, vector<1x768xf32>
    %18 = vector.broadcast %17 : vector<1x768xf32> to vector<32x768xf32>
    %19 = arith.mulf %16, %18 : vector<32x768xf32>
    %c0_7 = arith.constant 0 : index
    %c0_8 = arith.constant 0 : index
    %20 = vector.load %arg3[%c0_7, %c0_8] : memref<1x768xf32, #tpu.memory_space<vmem>>, vector<1x768xf32>
    %21 = vector.broadcast %20 : vector<1x768xf32> to vector<32x768xf32>
    %22 = arith.addf %19, %21 : vector<32x768xf32>
    %23 = arith.truncf %22 : vector<32x768xf32> to vector<32x768xbf16>
    %c0_9 = arith.constant 0 : index
    %c0_10 = arith.constant 0 : index
    %24 = vector.load %arg4[%c0_9, %c0_10] : memref<32x768xbf16, #tpu.memory_space<vmem>>, vector<32x768xbf16>
    tpu.vector_store %arg4[%c0_9, %c0_10], %23 {strides = array<i32>} : memref<32x768xbf16, #tpu.memory_space<vmem>>, vector<32x768xbf16>,
    return
  }
  func.func @transform_0(%arg0: i32) -> (i32, i32) {
    %c0_i32 = arith.constant 0 : i32
    %c0_i32_0 = arith.constant 0 : i32
    return %arg0, %c0_i32 : i32, i32
  }
  func.func @transform_1(%arg0: i32) -> (i32, i32) {
    %c0_i32 = arith.constant 0 : i32
    %c0_i32_0 = arith.constant 0 : i32
    %c0_i32_1 = arith.constant 0 : i32
    return %c0_i32, %c0_i32_0 : i32, i32
  }
  func.func @transform_2(%arg0: i32) -> (i32, i32) {
    %c0_i32 = arith.constant 0 : i32
    %c0_i32_0 = arith.constant 0 : i32
    %c0_i32_1 = arith.constant 0 : i32
    return %c0_i32, %c0_i32_0 : i32, i32
  }
  func.func @transform_3(%arg0: i32) -> (i32, i32) {
    %c0_i32 = arith.constant 0 : i32
    %c0_i32_0 = arith.constant 0 : i32
    return %arg0, %c0_i32 : i32, i32
  }
}

module attributes {stable_mosaic.version = 11 : i64} {
  func.func @_gemm_bias_act_kernel(%arg0: i32, %arg1: i32, %arg2: i32, %arg3: memref<32x256xbf16, #tpu.memory_space<vmem>>, %arg4: memref<256x256xbf16, #tpu.memory_space<vmem>>, %arg5: memref<1x256xf32, #tpu.memory_space<vmem>>, %arg6: memref<32x256xbf16, #tpu.memory_space<vmem>>, %arg7: memref<32x256xf32, #tpu.memory_space<vmem>>) attributes {dimension_semantics = [#tpu.dimension_semantics<parallel>, #tpu.dimension_semantics<parallel>, #tpu.dimension_semantics<arbitrary>], iteration_bounds = array<i64: 1, 9, 3>, scalar_prefetch = 0 : i64, scratch_operands = 1 : i64, tpu.core_type = #tpu.core_type<tc>, window_params = [{transform_indices = @transform_0, window_bounds = array<i64: 32, 256>}, {transform_indices = @transform_1, window_bounds = array<i64: 256, 256>}, {transform_indices = @transform_2, window_bounds = array<i64: 1, 256>}, {transform_indices = @transform_3, window_bounds = array<i64: 32, 256>}]} {
    %c0_i32 = arith.constant 0 : i32
    %0 = arith.cmpi eq, %arg2, %c0_i32 : i32
    %1 = arith.extui %0 : i1 to i32
    %c0_i32_0 = arith.constant 0 : i32
    %2 = arith.cmpi ne, %1, %c0_i32_0 : i32
    scf.if %2 {
      %cst_9 = arith.constant 0.000000e+00 : f32
      %12 = vector.broadcast %cst_9 : f32 to vector<32x256xf32>
      %c0_10 = arith.constant 0 : index
      %c0_11 = arith.constant 0 : index
      %13 = vector.load %arg7[%c0_10, %c0_11] : memref<32x256xf32, #tpu.memory_space<vmem>>, vector<32x256xf32>
      tpu.vector_store %arg7[%c0_10, %c0_11], %12 {strides = array<i32>} : memref<32x256xf32, #tpu.memory_space<vmem>>, vector<32x256xf32>,
    } else {
    }
    %c0 = arith.constant 0 : index
    %c0_1 = arith.constant 0 : index
    %3 = vector.load %arg7[%c0, %c0_1] : memref<32x256xf32, #tpu.memory_space<vmem>>, vector<32x256xf32>
    %c0_2 = arith.constant 0 : index
    %c0_3 = arith.constant 0 : index
    %4 = vector.load %arg3[%c0_2, %c0_3] : memref<32x256xbf16, #tpu.memory_space<vmem>>, vector<32x256xbf16>
    %c0_4 = arith.constant 0 : index
    %c0_5 = arith.constant 0 : index
    %5 = vector.load %arg4[%c0_4, %c0_5] : memref<256x256xbf16, #tpu.memory_space<vmem>>, vector<256x256xbf16>
    %cst = arith.constant dense<0.000000e+00> : vector<32x256xf32>
    %6 = tpu.matmul %4, %5, %cst {dimension_numbers = #tpu.dot_dimension_numbers<[1], [0], [0], [1], [0, 0, 1, 1], [], []>} : vector<32x256xbf16>, vector<256x256xbf16>, vector<32x256xf32> -> vector<32x256xf32>
    %7 = arith.addf %3, %6 : vector<32x256xf32>
    %c0_6 = arith.constant 0 : index
    %c0_7 = arith.constant 0 : index
    %8 = vector.load %arg7[%c0_6, %c0_7] : memref<32x256xf32, #tpu.memory_space<vmem>>, vector<32x256xf32>
    tpu.vector_store %arg7[%c0_6, %c0_7], %7 {strides = array<i32>} : memref<32x256xf32, #tpu.memory_space<vmem>>, vector<32x256xf32>,
    %c2_i32 = arith.constant 2 : i32
    %9 = arith.cmpi eq, %arg2, %c2_i32 : i32
    %10 = arith.extui %9 : i1 to i32
    %c0_i32_8 = arith.constant 0 : i32
    %11 = arith.cmpi ne, %10, %c0_i32_8 : i32
    scf.if %11 {
      %c0_9 = arith.constant 0 : index
      %c0_10 = arith.constant 0 : index
      %12 = vector.load %arg7[%c0_9, %c0_10] : memref<32x256xf32, #tpu.memory_space<vmem>>, vector<32x256xf32>
      %c0_11 = arith.constant 0 : index
      %c0_12 = arith.constant 0 : index
      %13 = vector.load %arg5[%c0_11, %c0_12] : memref<1x256xf32, #tpu.memory_space<vmem>>, vector<1x256xf32>
      %14 = vector.broadcast %13 : vector<1x256xf32> to vector<32x256xf32>
      %15 = arith.addf %12, %14 : vector<32x256xf32>
      %16 = arith.truncf %15 : vector<32x256xf32> to vector<32x256xbf16>
      %c0_13 = arith.constant 0 : index
      %c0_14 = arith.constant 0 : index
      %17 = vector.load %arg6[%c0_13, %c0_14] : memref<32x256xbf16, #tpu.memory_space<vmem>>, vector<32x256xbf16>
      tpu.vector_store %arg6[%c0_13, %c0_14], %16 {strides = array<i32>} : memref<32x256xbf16, #tpu.memory_space<vmem>>, vector<32x256xbf16>,
    } else {
    }
    return
  }
  func.func @transform_0(%arg0: i32, %arg1: i32, %arg2: i32) -> (i32, i32) {
    %c0_i32 = arith.constant 0 : i32
    return %arg0, %arg2 : i32, i32
  }
  func.func @transform_1(%arg0: i32, %arg1: i32, %arg2: i32) -> (i32, i32) {
    %c0_i32 = arith.constant 0 : i32
    return %arg2, %arg1 : i32, i32
  }
  func.func @transform_2(%arg0: i32, %arg1: i32, %arg2: i32) -> (i32, i32) {
    %c0_i32 = arith.constant 0 : i32
    %c0_i32_0 = arith.constant 0 : i32
    return %c0_i32, %arg1 : i32, i32
  }
  func.func @transform_3(%arg0: i32, %arg1: i32, %arg2: i32) -> (i32, i32) {
    %c0_i32 = arith.constant 0 : i32
    return %arg0, %arg1 : i32, i32
  }
}

module attributes {stable_mosaic.version = 11 : i64} {
  func.func @_attention_kernel(%arg0: i32, %arg1: i32, %arg2: memref<1x1x16x64xbf16, #tpu.memory_space<vmem>>, %arg3: memref<1x1x16x64xbf16, #tpu.memory_space<vmem>>, %arg4: memref<1x1x16x64xbf16, #tpu.memory_space<vmem>>, %arg5: memref<1x1x16xf32, #tpu.memory_space<vmem>>, %arg6: memref<1x1x16x64xbf16, #tpu.memory_space<vmem>>) attributes {dimension_semantics = [#tpu.dimension_semantics<parallel>, #tpu.dimension_semantics<parallel>], iteration_bounds = array<i64: 2, 12>, scalar_prefetch = 0 : i64, scratch_operands = 0 : i64, tpu.core_type = #tpu.core_type<tc>, window_params = [{transform_indices = @transform_0, window_bounds = array<i64: 1, 1, 16, 64>}, {transform_indices = @transform_1, window_bounds = array<i64: 1, 1, 16, 64>}, {transform_indices = @transform_2, window_bounds = array<i64: 1, 1, 16, 64>}, {transform_indices = @transform_3, window_bounds = array<i64: 1, 1, 16>}, {transform_indices = @transform_4, window_bounds = array<i64: 1, 1, 16, 64>}]} {
    %c0 = arith.constant 0 : index
    %c0_0 = arith.constant 0 : index
    %c0_1 = arith.constant 0 : index
    %c0_2 = arith.constant 0 : index
    %0 = vector.load %arg2[%c0, %c0_0, %c0_1, %c0_2] : memref<1x1x16x64xbf16, #tpu.memory_space<vmem>>, vector<1x1x16x64xbf16>
    %1 = vector.shape_cast %0 : vector<1x1x16x64xbf16> to vector<16x64xbf16>
    %c0_3 = arith.constant 0 : index
    %c0_4 = arith.constant 0 : index
    %c0_5 = arith.constant 0 : index
    %c0_6 = arith.constant 0 : index
    %2 = vector.load %arg3[%c0_3, %c0_4, %c0_5, %c0_6] : memref<1x1x16x64xbf16, #tpu.memory_space<vmem>>, vector<1x1x16x64xbf16>
    %3 = vector.shape_cast %2 : vector<1x1x16x64xbf16> to vector<16x64xbf16>
    %c0_7 = arith.constant 0 : index
    %c0_8 = arith.constant 0 : index
    %c0_9 = arith.constant 0 : index
    %c0_10 = arith.constant 0 : index
    %4 = vector.load %arg4[%c0_7, %c0_8, %c0_9, %c0_10] : memref<1x1x16x64xbf16, #tpu.memory_space<vmem>>, vector<1x1x16x64xbf16>
    %5 = vector.shape_cast %4 : vector<1x1x16x64xbf16> to vector<16x64xbf16>
    %cst = arith.constant dense<0.000000e+00> : vector<16x16xf32>
    %6 = tpu.matmul %1, %3, %cst {dimension_numbers = #tpu.dot_dimension_numbers<[1], [1], [0], [0], [0, 0, 1, 0], [], []>} : vector<16x64xbf16>, vector<16x64xbf16>, vector<16x16xf32> -> vector<16x16xf32>
    %cst_11 = arith.constant 1.250000e-01 : f32
    %7 = vector.broadcast %cst_11 : f32 to vector<16x16xf32>
    %8 = arith.mulf %6, %7 : vector<16x16xf32>
    %c0_12 = arith.constant 0 : index
    %c0_13 = arith.constant 0 : index
    %c0_14 = arith.constant 0 : index
    %9 = vector.load %arg5[%c0_12, %c0_13, %c0_14] : memref<1x1x16xf32, #tpu.memory_space<vmem>>, vector<1x1x16xf32>
    %10 = vector.shape_cast %9 : vector<1x1x16xf32> to vector<16xf32>
    %11 = vector.shape_cast %10 : vector<16xf32> to vector<1x16xf32>
    %12 = vector.broadcast %11 : vector<1x16xf32> to vector<16x16xf32>
    %13 = arith.addf %8, %12 : vector<16x16xf32>
    %cst_15 = arith.constant dense<0xFF800000> : vector<16xf32>
    %14 = vector.multi_reduction <maximumf>, %13, %cst_15 [1] : vector<16x16xf32> to vector<16xf32>
    %15 = vector.shape_cast %14 : vector<16xf32> to vector<16x1xf32>
    %16 = vector.broadcast %15 : vector<16x1xf32> to vector<16x16xf32>
    %17 = arith.subf %13, %16 : vector<16x16xf32>
    %18 = math.exp %17 : vector<16x16xf32>
    %cst_16 = arith.constant dense<0.000000e+00> : vector<16xf32>
    %19 = vector.multi_reduction <add>, %18, %cst_16 [1] : vector<16x16xf32> to vector<16xf32>
    %20 = vector.shape_cast %19 : vector<16xf32> to vector<16x1xf32>
    %21 = arith.truncf %18 : vector<16x16xf32> to vector<16x16xbf16>
    %cst_17 = arith.constant dense<0.000000e+00> : vector<16x64xf32>
    %22 = tpu.matmul %21, %5, %cst_17 {dimension_numbers = #tpu.dot_dimension_numbers<[1], [0], [0], [1], [0, 0, 1, 1], [], []>} : vector<16x16xbf16>, vector<16x64xbf16>, vector<16x64xf32> -> vector<16x64xf32>
    %23 = tpu.reciprocal %20 {approx = true} : vector<16x1xf32> -> vector<16x1xf32>
    %24 = vector.broadcast %23 : vector<16x1xf32> to vector<16x64xf32>
    %25 = arith.mulf %22, %24 : vector<16x64xf32>
    %26 = arith.truncf %25 : vector<16x64xf32> to vector<16x64xbf16>
    %c0_18 = arith.constant 0 : index
    %c0_19 = arith.constant 0 : index
    %c0_20 = arith.constant 0 : index
    %c0_21 = arith.constant 0 : index
    %27 = vector.load %arg6[%c0_18, %c0_19, %c0_20, %c0_21] : memref<1x1x16x64xbf16, #tpu.memory_space<vmem>>, vector<1x1x16x64xbf16>
    %28 = vector.shape_cast %27 : vector<1x1x16x64xbf16> to vector<16x64xbf16>
    %29 = vector.shape_cast %26 : vector<16x64xbf16> to vector<1x1x16x64xbf16>
    tpu.vector_store %arg6[%c0_18, %c0_19, %c0_20, %c0_21], %29 {strides = array<i32>} : memref<1x1x16x64xbf16, #tpu.memory_space<vmem>>, vector<1x1x16x64xbf16>,
    return
  }
  func.func @transform_0(%arg0: i32, %arg1: i32) -> (i32, i32, i32, i32) {
    %c0_i32 = arith.constant 0 : i32
    %c0_i32_0 = arith.constant 0 : i32
    %c0_i32_1 = arith.constant 0 : i32
    return %arg0, %arg1, %c0_i32, %c0_i32_0 : i32, i32, i32, i32
  }
  func.func @transform_1(%arg0: i32, %arg1: i32) -> (i32, i32, i32, i32) {
    %c0_i32 = arith.constant 0 : i32
    %c0_i32_0 = arith.constant 0 : i32
    %c0_i32_1 = arith.constant 0 : i32
    return %arg0, %arg1, %c0_i32, %c0_i32_0 : i32, i32, i32, i32
  }
  func.func @transform_2(%arg0: i32, %arg1: i32) -> (i32, i32, i32, i32) {
    %c0_i32 = arith.constant 0 : i32
    %c0_i32_0 = arith.constant 0 : i32
    %c0_i32_1 = arith.constant 0 : i32
    return %arg0, %arg1, %c0_i32, %c0_i32_0 : i32, i32, i32, i32
  }
  func.func @transform_3(%arg0: i32, %arg1: i32) -> (i32, i32, i32) {
    %c0_i32 = arith.constant 0 : i32
    %c0_i32_0 = arith.constant 0 : i32
    %c0_i32_1 = arith.constant 0 : i32
    return %arg0, %c0_i32, %c0_i32_0 : i32, i32, i32
  }
  func.func @transform_4(%arg0: i32, %arg1: i32) -> (i32, i32, i32, i32) {
    %c0_i32 = arith.constant 0 : i32
    %c0_i32_0 = arith.constant 0 : i32
    %c0_i32_1 = arith.constant 0 : i32
    return %arg0, %arg1, %c0_i32, %c0_i32_0 : i32, i32, i32, i32
  }
}

module attributes {stable_mosaic.version = 11 : i64} {
  func.func @_gemm_bias_res_ln_kernel(%arg0: i32, %arg1: i32, %arg2: memref<32x256xbf16, #tpu.memory_space<vmem>>, %arg3: memref<256x768xbf16, #tpu.memory_space<vmem>>, %arg4: memref<1x768xf32, #tpu.memory_space<vmem>>, %arg5: memref<32x768xbf16, #tpu.memory_space<vmem>>, %arg6: memref<1x768xf32, #tpu.memory_space<vmem>>, %arg7: memref<1x768xf32, #tpu.memory_space<vmem>>, %arg8: memref<32x768xbf16, #tpu.memory_space<vmem>>, %arg9: memref<32x768xf32, #tpu.memory_space<vmem>>) attributes {dimension_semantics = [#tpu.dimension_semantics<parallel>, #tpu.dimension_semantics<arbitrary>], iteration_bounds = array<i64: 1, 3>, scalar_prefetch = 0 : i64, scratch_operands = 1 : i64, tpu.core_type = #tpu.core_type<tc>, window_params = [{transform_indices = @transform_0, window_bounds = array<i64: 32, 256>}, {transform_indices = @transform_1, window_bounds = array<i64: 256, 768>}, {pipeline_mode = #tpu.pipeline_mode<synchronous>, transform_indices = @transform_2, window_bounds = array<i64: 1, 768>}, {transform_indices = @transform_3, window_bounds = array<i64: 32, 768>}, {pipeline_mode = #tpu.pipeline_mode<synchronous>, transform_indices = @transform_4, window_bounds = array<i64: 1, 768>}, {pipeline_mode = #tpu.pipeline_mode<synchronous>, transform_indices = @transform_5, window_bounds = array<i64: 1, 768>}, {transform_indices = @transform_6, window_bounds = array<i64: 32, 768>}]} {
    %c0_i32 = arith.constant 0 : i32
    %0 = arith.cmpi eq, %arg1, %c0_i32 : i32
    %1 = arith.extui %0 : i1 to i32
    %c0_i32_0 = arith.constant 0 : i32
    %2 = arith.cmpi ne, %1, %c0_i32_0 : i32
    scf.if %2 {
      %cst_9 = arith.constant 0.000000e+00 : f32
      %12 = vector.broadcast %cst_9 : f32 to vector<32x768xf32>
      %c0_10 = arith.constant 0 : index
      %c0_11 = arith.constant 0 : index
      %13 = vector.load %arg9[%c0_10, %c0_11] : memref<32x768xf32, #tpu.memory_space<vmem>>, vector<32x768xf32>
      tpu.vector_store %arg9[%c0_10, %c0_11], %12 {strides = array<i32>} : memref<32x768xf32, #tpu.memory_space<vmem>>, vector<32x768xf32>,
    } else {
    }
    %c0 = arith.constant 0 : index
    %c0_1 = arith.constant 0 : index
    %3 = vector.load %arg9[%c0, %c0_1] : memref<32x768xf32, #tpu.memory_space<vmem>>, vector<32x768xf32>
    %c0_2 = arith.constant 0 : index
    %c0_3 = arith.constant 0 : index
    %4 = vector.load %arg2[%c0_2, %c0_3] : memref<32x256xbf16, #tpu.memory_space<vmem>>, vector<32x256xbf16>
    %c0_4 = arith.constant 0 : index
    %c0_5 = arith.constant 0 : index
    %5 = vector.load %arg3[%c0_4, %c0_5] : memref<256x768xbf16, #tpu.memory_space<vmem>>, vector<256x768xbf16>
    %cst = arith.constant dense<0.000000e+00> : vector<32x768xf32>
    %6 = tpu.matmul %4, %5, %cst {dimension_numbers = #tpu.dot_dimension_numbers<[1], [0], [0], [1], [0, 0, 1, 1], [], []>} : vector<32x256xbf16>, vector<256x768xbf16>, vector<32x768xf32> -> vector<32x768xf32>
    %7 = arith.addf %3, %6 : vector<32x768xf32>
    %c0_6 = arith.constant 0 : index
    %c0_7 = arith.constant 0 : index
    %8 = vector.load %arg9[%c0_6, %c0_7] : memref<32x768xf32, #tpu.memory_space<vmem>>, vector<32x768xf32>
    tpu.vector_store %arg9[%c0_6, %c0_7], %7 {strides = array<i32>} : memref<32x768xf32, #tpu.memory_space<vmem>>, vector<32x768xf32>,
    %c2_i32 = arith.constant 2 : i32
    %9 = arith.cmpi eq, %arg1, %c2_i32 : i32
    %10 = arith.extui %9 : i1 to i32
    %c0_i32_8 = arith.constant 0 : i32
    %11 = arith.cmpi ne, %10, %c0_i32_8 : i32
    scf.if %11 {
      %c0_9 = arith.constant 0 : index
      %c0_10 = arith.constant 0 : index
      %12 = vector.load %arg9[%c0_9, %c0_10] : memref<32x768xf32, #tpu.memory_space<vmem>>, vector<32x768xf32>
      %c0_11 = arith.constant 0 : index
      %c0_12 = arith.constant 0 : index
      %13 = vector.load %arg4[%c0_11, %c0_12] : memref<1x768xf32, #tpu.memory_space<vmem>>, vector<1x768xf32>
      %14 = vector.broadcast %13 : vector<1x768xf32> to vector<32x768xf32>
      %15 = arith.addf %12, %14 : vector<32x768xf32>
      %c0_13 = arith.constant 0 : index
      %c0_14 = arith.constant 0 : index
      %16 = vector.load %arg5[%c0_13, %c0_14] : memref<32x768xbf16, #tpu.memory_space<vmem>>, vector<32x768xbf16>
      %17 = arith.extf %16 : vector<32x768xbf16> to vector<32x768xf32>
      %18 = arith.addf %15, %17 : vector<32x768xf32>
      %cst_15 = arith.constant dense<0.000000e+00> : vector<32xf32>
      %19 = vector.multi_reduction <add>, %18, %cst_15 [1] : vector<32x768xf32> to vector<32xf32>
      %20 = vector.shape_cast %19 : vector<32xf32> to vector<32x1xf32>
      %cst_16 = arith.constant 7.680000e+02 : f32
      %21 = vector.broadcast %cst_16 : f32 to vector<32x1xf32>
      %22 = arith.divf %20, %21 : vector<32x1xf32>
      %23 = vector.broadcast %22 : vector<32x1xf32> to vector<32x768xf32>
      %24 = arith.subf %18, %23 : vector<32x768xf32>
      %25 = arith.mulf %24, %24 : vector<32x768xf32>
      %cst_17 = arith.constant dense<0.000000e+00> : vector<32xf32>
      %26 = vector.multi_reduction <add>, %25, %cst_17 [1] : vector<32x768xf32> to vector<32xf32>
      %27 = vector.shape_cast %26 : vector<32xf32> to vector<32x1xf32>
      %cst_18 = arith.constant 7.680000e+02 : f32
      %28 = vector.broadcast %cst_18 : f32 to vector<32x1xf32>
      %29 = arith.divf %27, %28 : vector<32x1xf32>
      %cst_19 = arith.constant 9.99999996E-13 : f32
      %30 = vector.broadcast %cst_19 : f32 to vector<32x1xf32>
      %31 = arith.addf %29, %30 : vector<32x1xf32>
      %32 = math.rsqrt %31 : vector<32x1xf32>
      %33 = vector.broadcast %32 : vector<32x1xf32> to vector<32x768xf32>
      %34 = arith.mulf %24, %33 : vector<32x768xf32>
      %c0_20 = arith.constant 0 : index
      %c0_21 = arith.constant 0 : index
      %35 = vector.load %arg6[%c0_20, %c0_21] : memref<1x768xf32, #tpu.memory_space<vmem>>, vector<1x768xf32>
      %36 = vector.broadcast %35 : vector<1x768xf32> to vector<32x768xf32>
      %37 = arith.mulf %34, %36 : vector<32x768xf32>
      %c0_22 = arith.constant 0 : index
      %c0_23 = arith.constant 0 : index
      %38 = vector.load %arg7[%c0_22, %c0_23] : memref<1x768xf32, #tpu.memory_space<vmem>>, vector<1x768xf32>
      %39 = vector.broadcast %38 : vector<1x768xf32> to vector<32x768xf32>
      %40 = arith.addf %37, %39 : vector<32x768xf32>
      %41 = arith.truncf %40 : vector<32x768xf32> to vector<32x768xbf16>
      %c0_24 = arith.constant 0 : index
      %c0_25 = arith.constant 0 : index
      %42 = vector.load %arg8[%c0_24, %c0_25] : memref<32x768xbf16, #tpu.memory_space<vmem>>, vector<32x768xbf16>
      tpu.vector_store %arg8[%c0_24, %c0_25], %41 {strides = array<i32>} : memref<32x768xbf16, #tpu.memory_space<vmem>>, vector<32x768xbf16>,
    } else {
    }
    return
  }
  func.func @transform_0(%arg0: i32, %arg1: i32) -> (i32, i32) {
    %c0_i32 = arith.constant 0 : i32
    return %arg0, %arg1 : i32, i32
  }
  func.func @transform_1(%arg0: i32, %arg1: i32) -> (i32, i32) {
    %c0_i32 = arith.constant 0 : i32
    %c0_i32_0 = arith.constant 0 : i32
    return %arg1, %c0_i32 : i32, i32
  }
  func.func @transform_2(%arg0: i32, %arg1: i32) -> (i32, i32) {
    %c0_i32 = arith.constant 0 : i32
    %c0_i32_0 = arith.constant 0 : i32
    %c0_i32_1 = arith.constant 0 : i32
    return %c0_i32, %c0_i32_0 : i32, i32
  }
  func.func @transform_3(%arg0: i32, %arg1: i32) -> (i32, i32) {
    %c0_i32 = arith.constant 0 : i32
    %c0_i32_0 = arith.constant 0 : i32
    return %arg0, %c0_i32 : i32, i32
  }
  func.func @transform_4(%arg0: i32, %arg1: i32) -> (i32, i32) {
    %c0_i32 = arith.constant 0 : i32
    %c0_i32_0 = arith.constant 0 : i32
    %c0_i32_1 = arith.constant 0 : i32
    return %c0_i32, %c0_i32_0 : i32, i32
  }
  func.func @transform_5(%arg0: i32, %arg1: i32) -> (i32, i32) {
    %c0_i32 = arith.constant 0 : i32
    %c0_i32_0 = arith.constant 0 : i32
    %c0_i32_1 = arith.constant 0 : i32
    return %c0_i32, %c0_i32_0 : i32, i32
  }
  func.func @transform_6(%arg0: i32, %arg1: i32) -> (i32, i32) {
    %c0_i32 = arith.constant 0 : i32
    %c0_i32_0 = arith.constant 0 : i32
    return %arg0, %c0_i32 : i32, i32
  }
}

module attributes {stable_mosaic.version = 11 : i64} {
  func.func @_gemm_bias_act_kernel(%arg0: i32, %arg1: i32, %arg2: i32, %arg3: memref<32x256xbf16, #tpu.memory_space<vmem>>, %arg4: memref<256x512xbf16, #tpu.memory_space<vmem>>, %arg5: memref<1x512xf32, #tpu.memory_space<vmem>>, %arg6: memref<32x512xbf16, #tpu.memory_space<vmem>>, %arg7: memref<32x512xf32, #tpu.memory_space<vmem>>) attributes {dimension_semantics = [#tpu.dimension_semantics<parallel>, #tpu.dimension_semantics<parallel>, #tpu.dimension_semantics<arbitrary>], iteration_bounds = array<i64: 1, 6, 3>, scalar_prefetch = 0 : i64, scratch_operands = 1 : i64, tpu.core_type = #tpu.core_type<tc>, window_params = [{transform_indices = @transform_0, window_bounds = array<i64: 32, 256>}, {transform_indices = @transform_1, window_bounds = array<i64: 256, 512>}, {transform_indices = @transform_2, window_bounds = array<i64: 1, 512>}, {transform_indices = @transform_3, window_bounds = array<i64: 32, 512>}]} {
    %c0_i32 = arith.constant 0 : i32
    %0 = arith.cmpi eq, %arg2, %c0_i32 : i32
    %1 = arith.extui %0 : i1 to i32
    %c0_i32_0 = arith.constant 0 : i32
    %2 = arith.cmpi ne, %1, %c0_i32_0 : i32
    scf.if %2 {
      %cst_9 = arith.constant 0.000000e+00 : f32
      %12 = vector.broadcast %cst_9 : f32 to vector<32x512xf32>
      %c0_10 = arith.constant 0 : index
      %c0_11 = arith.constant 0 : index
      %13 = vector.load %arg7[%c0_10, %c0_11] : memref<32x512xf32, #tpu.memory_space<vmem>>, vector<32x512xf32>
      tpu.vector_store %arg7[%c0_10, %c0_11], %12 {strides = array<i32>} : memref<32x512xf32, #tpu.memory_space<vmem>>, vector<32x512xf32>,
    } else {
    }
    %c0 = arith.constant 0 : index
    %c0_1 = arith.constant 0 : index
    %3 = vector.load %arg7[%c0, %c0_1] : memref<32x512xf32, #tpu.memory_space<vmem>>, vector<32x512xf32>
    %c0_2 = arith.constant 0 : index
    %c0_3 = arith.constant 0 : index
    %4 = vector.load %arg3[%c0_2, %c0_3] : memref<32x256xbf16, #tpu.memory_space<vmem>>, vector<32x256xbf16>
    %c0_4 = arith.constant 0 : index
    %c0_5 = arith.constant 0 : index
    %5 = vector.load %arg4[%c0_4, %c0_5] : memref<256x512xbf16, #tpu.memory_space<vmem>>, vector<256x512xbf16>
    %cst = arith.constant dense<0.000000e+00> : vector<32x512xf32>
    %6 = tpu.matmul %4, %5, %cst {dimension_numbers = #tpu.dot_dimension_numbers<[1], [0], [0], [1], [0, 0, 1, 1], [], []>} : vector<32x256xbf16>, vector<256x512xbf16>, vector<32x512xf32> -> vector<32x512xf32>
    %7 = arith.addf %3, %6 : vector<32x512xf32>
    %c0_6 = arith.constant 0 : index
    %c0_7 = arith.constant 0 : index
    %8 = vector.load %arg7[%c0_6, %c0_7] : memref<32x512xf32, #tpu.memory_space<vmem>>, vector<32x512xf32>
    tpu.vector_store %arg7[%c0_6, %c0_7], %7 {strides = array<i32>} : memref<32x512xf32, #tpu.memory_space<vmem>>, vector<32x512xf32>,
    %c2_i32 = arith.constant 2 : i32
    %9 = arith.cmpi eq, %arg2, %c2_i32 : i32
    %10 = arith.extui %9 : i1 to i32
    %c0_i32_8 = arith.constant 0 : i32
    %11 = arith.cmpi ne, %10, %c0_i32_8 : i32
    scf.if %11 {
      %c0_9 = arith.constant 0 : index
      %c0_10 = arith.constant 0 : index
      %12 = vector.load %arg7[%c0_9, %c0_10] : memref<32x512xf32, #tpu.memory_space<vmem>>, vector<32x512xf32>
      %c0_11 = arith.constant 0 : index
      %c0_12 = arith.constant 0 : index
      %13 = vector.load %arg5[%c0_11, %c0_12] : memref<1x512xf32, #tpu.memory_space<vmem>>, vector<1x512xf32>
      %14 = vector.broadcast %13 : vector<1x512xf32> to vector<32x512xf32>
      %15 = arith.addf %12, %14 : vector<32x512xf32>
      %cst_13 = arith.constant 5.000000e-01 : f32
      %16 = vector.broadcast %cst_13 : f32 to vector<32x512xf32>
      %17 = arith.mulf %16, %15 : vector<32x512xf32>
      %cst_14 = arith.constant 4.471500e-02 : f32
      %18 = vector.broadcast %cst_14 : f32 to vector<32x512xf32>
      %19 = arith.mulf %18, %15 : vector<32x512xf32>
      %20 = arith.mulf %19, %15 : vector<32x512xf32>
      %21 = arith.mulf %20, %15 : vector<32x512xf32>
      %22 = arith.addf %15, %21 : vector<32x512xf32>
      %cst_15 = arith.constant 0.797884583 : f32
      %23 = vector.broadcast %cst_15 : f32 to vector<32x512xf32>
      %24 = arith.mulf %23, %22 : vector<32x512xf32>
      %25 = math.tanh %24 : vector<32x512xf32>
      %cst_16 = arith.constant 1.000000e+00 : f32
      %26 = vector.broadcast %cst_16 : f32 to vector<32x512xf32>
      %27 = arith.addf %26, %25 : vector<32x512xf32>
      %28 = arith.mulf %17, %27 : vector<32x512xf32>
      %29 = arith.truncf %28 : vector<32x512xf32> to vector<32x512xbf16>
      %c0_17 = arith.constant 0 : index
      %c0_18 = arith.constant 0 : index
      %30 = vector.load %arg6[%c0_17, %c0_18] : memref<32x512xbf16, #tpu.memory_space<vmem>>, vector<32x512xbf16>
      tpu.vector_store %arg6[%c0_17, %c0_18], %29 {strides = array<i32>} : memref<32x512xbf16, #tpu.memory_space<vmem>>, vector<32x512xbf16>,
    } else {
    }
    return
  }
  func.func @transform_0(%arg0: i32, %arg1: i32, %arg2: i32) -> (i32, i32) {
    %c0_i32 = arith.constant 0 : i32
    return %arg0, %arg2 : i32, i32
  }
  func.func @transform_1(%arg0: i32, %arg1: i32, %arg2: i32) -> (i32, i32) {
    %c0_i32 = arith.constant 0 : i32
    return %arg2, %arg1 : i32, i32
  }
  func.func @transform_2(%arg0: i32, %arg1: i32, %arg2: i32) -> (i32, i32) {
    %c0_i32 = arith.constant 0 : i32
    %c0_i32_0 = arith.constant 0 : i32
    return %c0_i32, %arg1 : i32, i32
  }
  func.func @transform_3(%arg0: i32, %arg1: i32, %arg2: i32) -> (i32, i32) {
    %c0_i32 = arith.constant 0 : i32
    return %arg0, %arg1 : i32, i32
  }
}

module attributes {stable_mosaic.version = 11 : i64} {
  func.func @_gemm_bias_res_ln_kernel(%arg0: i32, %arg1: i32, %arg2: memref<32x256xbf16, #tpu.memory_space<vmem>>, %arg3: memref<256x768xbf16, #tpu.memory_space<vmem>>, %arg4: memref<1x768xf32, #tpu.memory_space<vmem>>, %arg5: memref<32x768xbf16, #tpu.memory_space<vmem>>, %arg6: memref<1x768xf32, #tpu.memory_space<vmem>>, %arg7: memref<1x768xf32, #tpu.memory_space<vmem>>, %arg8: memref<32x768xbf16, #tpu.memory_space<vmem>>, %arg9: memref<32x768xf32, #tpu.memory_space<vmem>>) attributes {dimension_semantics = [#tpu.dimension_semantics<parallel>, #tpu.dimension_semantics<arbitrary>], iteration_bounds = array<i64: 1, 12>, scalar_prefetch = 0 : i64, scratch_operands = 1 : i64, tpu.core_type = #tpu.core_type<tc>, window_params = [{transform_indices = @transform_0, window_bounds = array<i64: 32, 256>}, {transform_indices = @transform_1, window_bounds = array<i64: 256, 768>}, {pipeline_mode = #tpu.pipeline_mode<synchronous>, transform_indices = @transform_2, window_bounds = array<i64: 1, 768>}, {transform_indices = @transform_3, window_bounds = array<i64: 32, 768>}, {pipeline_mode = #tpu.pipeline_mode<synchronous>, transform_indices = @transform_4, window_bounds = array<i64: 1, 768>}, {pipeline_mode = #tpu.pipeline_mode<synchronous>, transform_indices = @transform_5, window_bounds = array<i64: 1, 768>}, {transform_indices = @transform_6, window_bounds = array<i64: 32, 768>}]} {
    %c0_i32 = arith.constant 0 : i32
    %0 = arith.cmpi eq, %arg1, %c0_i32 : i32
    %1 = arith.extui %0 : i1 to i32
    %c0_i32_0 = arith.constant 0 : i32
    %2 = arith.cmpi ne, %1, %c0_i32_0 : i32
    scf.if %2 {
      %cst_9 = arith.constant 0.000000e+00 : f32
      %12 = vector.broadcast %cst_9 : f32 to vector<32x768xf32>
      %c0_10 = arith.constant 0 : index
      %c0_11 = arith.constant 0 : index
      %13 = vector.load %arg9[%c0_10, %c0_11] : memref<32x768xf32, #tpu.memory_space<vmem>>, vector<32x768xf32>
      tpu.vector_store %arg9[%c0_10, %c0_11], %12 {strides = array<i32>} : memref<32x768xf32, #tpu.memory_space<vmem>>, vector<32x768xf32>,
    } else {
    }
    %c0 = arith.constant 0 : index
    %c0_1 = arith.constant 0 : index
    %3 = vector.load %arg9[%c0, %c0_1] : memref<32x768xf32, #tpu.memory_space<vmem>>, vector<32x768xf32>
    %c0_2 = arith.constant 0 : index
    %c0_3 = arith.constant 0 : index
    %4 = vector.load %arg2[%c0_2, %c0_3] : memref<32x256xbf16, #tpu.memory_space<vmem>>, vector<32x256xbf16>
    %c0_4 = arith.constant 0 : index
    %c0_5 = arith.constant 0 : index
    %5 = vector.load %arg3[%c0_4, %c0_5] : memref<256x768xbf16, #tpu.memory_space<vmem>>, vector<256x768xbf16>
    %cst = arith.constant dense<0.000000e+00> : vector<32x768xf32>
    %6 = tpu.matmul %4, %5, %cst {dimension_numbers = #tpu.dot_dimension_numbers<[1], [0], [0], [1], [0, 0, 1, 1], [], []>} : vector<32x256xbf16>, vector<256x768xbf16>, vector<32x768xf32> -> vector<32x768xf32>
    %7 = arith.addf %3, %6 : vector<32x768xf32>
    %c0_6 = arith.constant 0 : index
    %c0_7 = arith.constant 0 : index
    %8 = vector.load %arg9[%c0_6, %c0_7] : memref<32x768xf32, #tpu.memory_space<vmem>>, vector<32x768xf32>
    tpu.vector_store %arg9[%c0_6, %c0_7], %7 {strides = array<i32>} : memref<32x768xf32, #tpu.memory_space<vmem>>, vector<32x768xf32>,
    %c11_i32 = arith.constant 11 : i32
    %9 = arith.cmpi eq, %arg1, %c11_i32 : i32
    %10 = arith.extui %9 : i1 to i32
    %c0_i32_8 = arith.constant 0 : i32
    %11 = arith.cmpi ne, %10, %c0_i32_8 : i32
    scf.if %11 {
      %c0_9 = arith.constant 0 : index
      %c0_10 = arith.constant 0 : index
      %12 = vector.load %arg9[%c0_9, %c0_10] : memref<32x768xf32, #tpu.memory_space<vmem>>, vector<32x768xf32>
      %c0_11 = arith.constant 0 : index
      %c0_12 = arith.constant 0 : index
      %13 = vector.load %arg4[%c0_11, %c0_12] : memref<1x768xf32, #tpu.memory_space<vmem>>, vector<1x768xf32>
      %14 = vector.broadcast %13 : vector<1x768xf32> to vector<32x768xf32>
      %15 = arith.addf %12, %14 : vector<32x768xf32>
      %c0_13 = arith.constant 0 : index
      %c0_14 = arith.constant 0 : index
      %16 = vector.load %arg5[%c0_13, %c0_14] : memref<32x768xbf16, #tpu.memory_space<vmem>>, vector<32x768xbf16>
      %17 = arith.extf %16 : vector<32x768xbf16> to vector<32x768xf32>
      %18 = arith.addf %15, %17 : vector<32x768xf32>
      %cst_15 = arith.constant dense<0.000000e+00> : vector<32xf32>
      %19 = vector.multi_reduction <add>, %18, %cst_15 [1] : vector<32x768xf32> to vector<32xf32>
      %20 = vector.shape_cast %19 : vector<32xf32> to vector<32x1xf32>
      %cst_16 = arith.constant 7.680000e+02 : f32
      %21 = vector.broadcast %cst_16 : f32 to vector<32x1xf32>
      %22 = arith.divf %20, %21 : vector<32x1xf32>
      %23 = vector.broadcast %22 : vector<32x1xf32> to vector<32x768xf32>
      %24 = arith.subf %18, %23 : vector<32x768xf32>
      %25 = arith.mulf %24, %24 : vector<32x768xf32>
      %cst_17 = arith.constant dense<0.000000e+00> : vector<32xf32>
      %26 = vector.multi_reduction <add>, %25, %cst_17 [1] : vector<32x768xf32> to vector<32xf32>
      %27 = vector.shape_cast %26 : vector<32xf32> to vector<32x1xf32>
      %cst_18 = arith.constant 7.680000e+02 : f32
      %28 = vector.broadcast %cst_18 : f32 to vector<32x1xf32>
      %29 = arith.divf %27, %28 : vector<32x1xf32>
      %cst_19 = arith.constant 9.99999996E-13 : f32
      %30 = vector.broadcast %cst_19 : f32 to vector<32x1xf32>
      %31 = arith.addf %29, %30 : vector<32x1xf32>
      %32 = math.rsqrt %31 : vector<32x1xf32>
      %33 = vector.broadcast %32 : vector<32x1xf32> to vector<32x768xf32>
      %34 = arith.mulf %24, %33 : vector<32x768xf32>
      %c0_20 = arith.constant 0 : index
      %c0_21 = arith.constant 0 : index
      %35 = vector.load %arg6[%c0_20, %c0_21] : memref<1x768xf32, #tpu.memory_space<vmem>>, vector<1x768xf32>
      %36 = vector.broadcast %35 : vector<1x768xf32> to vector<32x768xf32>
      %37 = arith.mulf %34, %36 : vector<32x768xf32>
      %c0_22 = arith.constant 0 : index
      %c0_23 = arith.constant 0 : index
      %38 = vector.load %arg7[%c0_22, %c0_23] : memref<1x768xf32, #tpu.memory_space<vmem>>, vector<1x768xf32>
      %39 = vector.broadcast %38 : vector<1x768xf32> to vector<32x768xf32>
      %40 = arith.addf %37, %39 : vector<32x768xf32>
      %41 = arith.truncf %40 : vector<32x768xf32> to vector<32x768xbf16>
      %c0_24 = arith.constant 0 : index
      %c0_25 = arith.constant 0 : index
      %42 = vector.load %arg8[%c0_24, %c0_25] : memref<32x768xbf16, #tpu.memory_space<vmem>>, vector<32x768xbf16>
      tpu.vector_store %arg8[%c0_24, %c0_25], %41 {strides = array<i32>} : memref<32x768xbf16, #tpu.memory_space<vmem>>, vector<32x768xbf16>,
    } else {
    }
    return
  }
  func.func @transform_0(%arg0: i32, %arg1: i32) -> (i32, i32) {
    %c0_i32 = arith.constant 0 : i32
    return %arg0, %arg1 : i32, i32
  }
  func.func @transform_1(%arg0: i32, %arg1: i32) -> (i32, i32) {
    %c0_i32 = arith.constant 0 : i32
    %c0_i32_0 = arith.constant 0 : i32
    return %arg1, %c0_i32 : i32, i32
  }
  func.func @transform_2(%arg0: i32, %arg1: i32) -> (i32, i32) {
    %c0_i32 = arith.constant 0 : i32
    %c0_i32_0 = arith.constant 0 : i32
    %c0_i32_1 = arith.constant 0 : i32
    return %c0_i32, %c0_i32_0 : i32, i32
  }
  func.func @transform_3(%arg0: i32, %arg1: i32) -> (i32, i32) {
    %c0_i32 = arith.constant 0 : i32
    %c0_i32_0 = arith.constant 0 : i32
    return %arg0, %c0_i32 : i32, i32
  }
  func.func @transform_4(%arg0: i32, %arg1: i32) -> (i32, i32) {
    %c0_i32 = arith.constant 0 : i32
    %c0_i32_0 = arith.constant 0 : i32
    %c0_i32_1 = arith.constant 0 : i32
    return %c0_i32, %c0_i32_0 : i32, i32
  }
  func.func @transform_5(%arg0: i32, %arg1: i32) -> (i32, i32) {
    %c0_i32 = arith.constant 0 : i32
    %c0_i32_0 = arith.constant 0 : i32
    %c0_i32_1 = arith.constant 0 : i32
    return %c0_i32, %c0_i32_0 : i32, i32
  }
  func.func @transform_6(%arg0: i32, %arg1: i32) -> (i32, i32) {
    %c0_i32 = arith.constant 0 : i32
    %c0_i32_0 = arith.constant 0 : i32
    return %arg0, %c0_i32 : i32, i32
  }
}

module attributes {stable_mosaic.version = 11 : i64} {
  func.func @_gemm_bias_act_kernel(%arg0: i32, %arg1: i32, %arg2: i32, %arg3: memref<8x256xbf16, #tpu.memory_space<vmem>>, %arg4: memref<256x256xbf16, #tpu.memory_space<vmem>>, %arg5: memref<1x256xf32, #tpu.memory_space<vmem>>, %arg6: memref<8x256xbf16, #tpu.memory_space<vmem>>, %arg7: memref<8x256xf32, #tpu.memory_space<vmem>>) attributes {dimension_semantics = [#tpu.dimension_semantics<parallel>, #tpu.dimension_semantics<parallel>, #tpu.dimension_semantics<arbitrary>], iteration_bounds = array<i64: 1, 3, 3>, scalar_prefetch = 0 : i64, scratch_operands = 1 : i64, tpu.core_type = #tpu.core_type<tc>, window_params = [{transform_indices = @transform_0, window_bounds = array<i64: 8, 256>}, {transform_indices = @transform_1, window_bounds = array<i64: 256, 256>}, {transform_indices = @transform_2, window_bounds = array<i64: 1, 256>}, {transform_indices = @transform_3, window_bounds = array<i64: 8, 256>}]} {
    %c0_i32 = arith.constant 0 : i32
    %0 = arith.cmpi eq, %arg2, %c0_i32 : i32
    %1 = arith.extui %0 : i1 to i32
    %c0_i32_0 = arith.constant 0 : i32
    %2 = arith.cmpi ne, %1, %c0_i32_0 : i32
    scf.if %2 {
      %cst_9 = arith.constant 0.000000e+00 : f32
      %12 = vector.broadcast %cst_9 : f32 to vector<8x256xf32>
      %c0_10 = arith.constant 0 : index
      %c0_11 = arith.constant 0 : index
      %13 = vector.load %arg7[%c0_10, %c0_11] : memref<8x256xf32, #tpu.memory_space<vmem>>, vector<8x256xf32>
      tpu.vector_store %arg7[%c0_10, %c0_11], %12 {strides = array<i32>} : memref<8x256xf32, #tpu.memory_space<vmem>>, vector<8x256xf32>,
    } else {
    }
    %c0 = arith.constant 0 : index
    %c0_1 = arith.constant 0 : index
    %3 = vector.load %arg7[%c0, %c0_1] : memref<8x256xf32, #tpu.memory_space<vmem>>, vector<8x256xf32>
    %c0_2 = arith.constant 0 : index
    %c0_3 = arith.constant 0 : index
    %4 = vector.load %arg3[%c0_2, %c0_3] : memref<8x256xbf16, #tpu.memory_space<vmem>>, vector<8x256xbf16>
    %c0_4 = arith.constant 0 : index
    %c0_5 = arith.constant 0 : index
    %5 = vector.load %arg4[%c0_4, %c0_5] : memref<256x256xbf16, #tpu.memory_space<vmem>>, vector<256x256xbf16>
    %cst = arith.constant dense<0.000000e+00> : vector<8x256xf32>
    %6 = tpu.matmul %4, %5, %cst {dimension_numbers = #tpu.dot_dimension_numbers<[1], [0], [0], [1], [0, 0, 1, 1], [], []>} : vector<8x256xbf16>, vector<256x256xbf16>, vector<8x256xf32> -> vector<8x256xf32>
    %7 = arith.addf %3, %6 : vector<8x256xf32>
    %c0_6 = arith.constant 0 : index
    %c0_7 = arith.constant 0 : index
    %8 = vector.load %arg7[%c0_6, %c0_7] : memref<8x256xf32, #tpu.memory_space<vmem>>, vector<8x256xf32>
    tpu.vector_store %arg7[%c0_6, %c0_7], %7 {strides = array<i32>} : memref<8x256xf32, #tpu.memory_space<vmem>>, vector<8x256xf32>,
    %c2_i32 = arith.constant 2 : i32
    %9 = arith.cmpi eq, %arg2, %c2_i32 : i32
    %10 = arith.extui %9 : i1 to i32
    %c0_i32_8 = arith.constant 0 : i32
    %11 = arith.cmpi ne, %10, %c0_i32_8 : i32
    scf.if %11 {
      %c0_9 = arith.constant 0 : index
      %c0_10 = arith.constant 0 : index
      %12 = vector.load %arg7[%c0_9, %c0_10] : memref<8x256xf32, #tpu.memory_space<vmem>>, vector<8x256xf32>
      %c0_11 = arith.constant 0 : index
      %c0_12 = arith.constant 0 : index
      %13 = vector.load %arg5[%c0_11, %c0_12] : memref<1x256xf32, #tpu.memory_space<vmem>>, vector<1x256xf32>
      %14 = vector.broadcast %13 : vector<1x256xf32> to vector<8x256xf32>
      %15 = arith.addf %12, %14 : vector<8x256xf32>
      %16 = math.tanh %15 : vector<8x256xf32>
      %17 = arith.truncf %16 : vector<8x256xf32> to vector<8x256xbf16>
      %c0_13 = arith.constant 0 : index
      %c0_14 = arith.constant 0 : index
      %18 = vector.load %arg6[%c0_13, %c0_14] : memref<8x256xbf16, #tpu.memory_space<vmem>>, vector<8x256xbf16>
      tpu.vector_store %arg6[%c0_13, %c0_14], %17 {strides = array<i32>} : memref<8x256xbf16, #tpu.memory_space<vmem>>, vector<8x256xbf16>,
    } else {
    }
    return
  }
  func.func @transform_0(%arg0: i32, %arg1: i32, %arg2: i32) -> (i32, i32) {
    %c0_i32 = arith.constant 0 : i32
    return %arg0, %arg2 : i32, i32
  }
  func.func @transform_1(%arg0: i32, %arg1: i32, %arg2: i32) -> (i32, i32) {
    %c0_i32 = arith.constant 0 : i32
    return %arg2, %arg1 : i32, i32
  }
  func.func @transform_2(%arg0: i32, %arg1: i32, %arg2: i32) -> (i32, i32) {
    %c0_i32 = arith.constant 0 : i32
    %c0_i32_0 = arith.constant 0 : i32
    return %c0_i32, %arg1 : i32, i32
  }
  func.func @transform_3(%arg0: i32, %arg1: i32, %arg2: i32) -> (i32, i32) {
    %c0_i32 = arith.constant 0 : i32
    return %arg0, %arg1 : i32, i32
  }
}

module attributes {stable_mosaic.version = 11 : i64} {
  func.func @_gemm_bias_act_kernel(%arg0: i32, %arg1: i32, %arg2: i32, %arg3: memref<8x256xbf16, #tpu.memory_space<vmem>>, %arg4: memref<256x128xbf16, #tpu.memory_space<vmem>>, %arg5: memref<1x128xf32, #tpu.memory_space<vmem>>, %arg6: memref<8x128xf32, #tpu.memory_space<vmem>>, %arg7: memref<8x128xf32, #tpu.memory_space<vmem>>) attributes {dimension_semantics = [#tpu.dimension_semantics<parallel>, #tpu.dimension_semantics<parallel>, #tpu.dimension_semantics<arbitrary>], iteration_bounds = array<i64: 1, 1, 3>, scalar_prefetch = 0 : i64, scratch_operands = 1 : i64, tpu.core_type = #tpu.core_type<tc>, window_params = [{transform_indices = @transform_0, window_bounds = array<i64: 8, 256>}, {transform_indices = @transform_1, window_bounds = array<i64: 256, 128>}, {transform_indices = @transform_2, window_bounds = array<i64: 1, 128>}, {transform_indices = @transform_3, window_bounds = array<i64: 8, 128>}]} {
    %c0_i32 = arith.constant 0 : i32
    %0 = arith.cmpi eq, %arg2, %c0_i32 : i32
    %1 = arith.extui %0 : i1 to i32
    %c0_i32_0 = arith.constant 0 : i32
    %2 = arith.cmpi ne, %1, %c0_i32_0 : i32
    scf.if %2 {
      %cst_9 = arith.constant 0.000000e+00 : f32
      %12 = vector.broadcast %cst_9 : f32 to vector<8x128xf32>
      %c0_10 = arith.constant 0 : index
      %c0_11 = arith.constant 0 : index
      %13 = vector.load %arg7[%c0_10, %c0_11] : memref<8x128xf32, #tpu.memory_space<vmem>>, vector<8x128xf32>
      tpu.vector_store %arg7[%c0_10, %c0_11], %12 {strides = array<i32>} : memref<8x128xf32, #tpu.memory_space<vmem>>, vector<8x128xf32>,
    } else {
    }
    %c0 = arith.constant 0 : index
    %c0_1 = arith.constant 0 : index
    %3 = vector.load %arg7[%c0, %c0_1] : memref<8x128xf32, #tpu.memory_space<vmem>>, vector<8x128xf32>
    %c0_2 = arith.constant 0 : index
    %c0_3 = arith.constant 0 : index
    %4 = vector.load %arg3[%c0_2, %c0_3] : memref<8x256xbf16, #tpu.memory_space<vmem>>, vector<8x256xbf16>
    %c0_4 = arith.constant 0 : index
    %c0_5 = arith.constant 0 : index
    %5 = vector.load %arg4[%c0_4, %c0_5] : memref<256x128xbf16, #tpu.memory_space<vmem>>, vector<256x128xbf16>
    %cst = arith.constant dense<0.000000e+00> : vector<8x128xf32>
    %6 = tpu.matmul %4, %5, %cst {dimension_numbers = #tpu.dot_dimension_numbers<[1], [0], [0], [1], [0, 0, 1, 1], [], []>} : vector<8x256xbf16>, vector<256x128xbf16>, vector<8x128xf32> -> vector<8x128xf32>
    %7 = arith.addf %3, %6 : vector<8x128xf32>
    %c0_6 = arith.constant 0 : index
    %c0_7 = arith.constant 0 : index
    %8 = vector.load %arg7[%c0_6, %c0_7] : memref<8x128xf32, #tpu.memory_space<vmem>>, vector<8x128xf32>
    tpu.vector_store %arg7[%c0_6, %c0_7], %7 {strides = array<i32>} : memref<8x128xf32, #tpu.memory_space<vmem>>, vector<8x128xf32>,
    %c2_i32 = arith.constant 2 : i32
    %9 = arith.cmpi eq, %arg2, %c2_i32 : i32
    %10 = arith.extui %9 : i1 to i32
    %c0_i32_8 = arith.constant 0 : i32
    %11 = arith.cmpi ne, %10, %c0_i32_8 : i32
    scf.if %11 {
      %c0_9 = arith.constant 0 : index
      %c0_10 = arith.constant 0 : index
      %12 = vector.load %arg7[%c0_9, %c0_10] : memref<8x128xf32, #tpu.memory_space<vmem>>, vector<8x128xf32>
      %c0_11 = arith.constant 0 : index
      %c0_12 = arith.constant 0 : index
      %13 = vector.load %arg5[%c0_11, %c0_12] : memref<1x128xf32, #tpu.memory_space<vmem>>, vector<1x128xf32>
      %14 = vector.broadcast %13 : vector<1x128xf32> to vector<8x128xf32>
      %15 = arith.addf %12, %14 : vector<8x128xf32>
      %c0_13 = arith.constant 0 : index
      %c0_14 = arith.constant 0 : index
      %16 = vector.load %arg6[%c0_13, %c0_14] : memref<8x128xf32, #tpu.memory_space<vmem>>, vector<8x128xf32>
      tpu.vector_store %arg6[%c0_13, %c0_14], %15 {strides = array<i32>} : memref<8x128xf32, #tpu.memory_space<vmem>>, vector<8x128xf32>,
    } else {
    }
    return
  }
  func.func @transform_0(%arg0: i32, %arg1: i32, %arg2: i32) -> (i32, i32) {
    %c0_i32 = arith.constant 0 : i32
    return %arg0, %arg2 : i32, i32
  }
  func.func @transform_1(%arg0: i32, %arg1: i32, %arg2: i32) -> (i32, i32) {
    %c0_i32 = arith.constant 0 : i32
    return %arg2, %arg1 : i32, i32
  }
  func.func @transform_2(%arg0: i32, %arg1: i32, %arg2: i32) -> (i32, i32) {
    %c0_i32 = arith.constant 0 : i32
    %c0_i32_0 = arith.constant 0 : i32
    return %c0_i32, %arg1 : i32, i32
  }
  func.func @transform_3(%arg0: i32, %arg1: i32, %arg2: i32) -> (i32, i32) {
    %c0_i32 = arith.constant 0 : i32
    return %arg0, %arg1 : i32, i32
  }
}

</mosaic_0001>

<llo_original>
// kernel: text_encoder_forward.3
$region0: #{text_encoder_forward.3}
  #allocation0 [shape = 'u32[]', space=smem, size = 0x4, offset = 0x4, fixed_abs, tag = 'smem constant byte address 0x4 - core index']
  #allocation1 [shape = 'u32[144,128]{1,0:T(1,128)}', space=vmem, size = 0x12000, scoped, tag = 'internal scratch']
  %s0 = inlined_call_operand.vmem [shape: f32[32,768], index: 0, kind: input, shape index: {}]
  %s1 = inlined_call_operand.hbm [shape: f32[1,768], index: 1, kind: input, shape index: {}]
  %s2 = inlined_call_operand.hbm [shape: f32[1,768], index: 2, kind: input, shape index: {}]
  %s3 = inlined_call_operand.vmem [shape: bf16[32,768], index: 3, kind: output, shape index: {}]
  %s4 = sld [smem:[#allocation0]]
  $region30: #{text_encoder_forward.3} parent=0
    _
  %s6 = ssub.s32 1, %s4
  %s7 = scalar_select 0, %s6, %s4
  $region1: #{text_encoder_forward.3} parent=0
    #allocation2 [shape = 'u8[3072]{0}', space=vmem, size = 0xc00, scoped, tag = 'input window, operand 1, single buffered']
    #allocation3 [shape = 's32[1]{0}', space=sflag, size = 0x4, scoped, tag = 'scoped memory for text_encoder_forward.3']
    #allocation4 [shape = 'u8[3072]{0}', space=vmem, size = 0xc00, scoped, tag = 'input window, operand 2, single buffered']
    #allocation5 [shape = 's32[1]{0}', space=sflag, size = 0x4, scoped, tag = 'scoped memory for text_encoder_forward.3']
    %8 = vsyncpa [#allocation3], 0
    %9 = vsyncpa [#allocation5], 0
    // Predicated region
    $region2: #{text_encoder_forward.3} parent=1 // pred_check
      _
    $region3: #{text_encoder_forward.3} parent=1 // pred_check_branch
      %11 = sbr.rel (0) target = $region5
    $region4: #{text_encoder_forward.3} parent=1 // pred_region
      _
    $region5: #{text_encoder_forward.3} parent=1 // pred_fallthru
      _
    // Predicated region
    $region6: #{text_encoder_forward.3} parent=1 // pred_check
      _
    $region7: #{text_encoder_forward.3} parent=1 // pred_check_branch
      %13 = sbr.rel (0) target = $region9
    $region8: #{text_encoder_forward.3} parent=1 // pred_region
      %s15 = ssub.s32 96, 96
      %16 = vsyncadd [#allocation3], %s15
      %s18 = sshll.u32 [#allocation2], 4
      %s19 = int_to_ptr.vmem [resolvable:$true] %s18
      %21 = dma.hbm_to_vmem [thread:$0]  %s1, 96, %s19, [#allocation3]
    $region9: #{text_encoder_forward.3} parent=1 // pred_fallthru
      _
    // Predicated region
    $region10: #{text_encoder_forward.3} parent=1 // pred_check
      _
    $region11: #{text_encoder_forward.3} parent=1 // pred_check_branch
      %23 = sbr.rel (0) target = $region13
    $region12: #{text_encoder_forward.3} parent=1 // pred_region
      %s25 = ssub.s32 96, 96
      %26 = vsyncadd [#allocation5], %s25
      %s28 = sshll.u32 [#allocation4], 4
      %s29 = int_to_ptr.vmem [resolvable:$true] %s28
      %31 = dma.hbm_to_vmem [thread:$0]  %s2, 96, %s29, [#allocation5]
    $region13: #{text_encoder_forward.3} parent=1 // pred_fallthru
      _
    // Predicated region
    $region14: #{text_encoder_forward.3} parent=1 // pred_check
      _
    $region15: #{text_encoder_forward.3} parent=1 // pred_check_branch
      %33 = sbr.rel (0) target = $region17
    $region16: #{text_encoder_forward.3} parent=1 // pred_region
      %34 = dma.done [#allocation3], 96
    $region17: #{text_encoder_forward.3} parent=1 // pred_fallthru
      _
    // Predicated region
    $region18: #{text_encoder_forward.3} parent=1 // pred_check
      _
    $region19: #{text_encoder_forward.3} parent=1 // pred_check_branch
      %36 = sbr.rel (0) target = $region21
    $region20: #{text_encoder_forward.3} parent=1 // pred_region
      %37 = dma.done [#allocation5], 96
    $region21: #{text_encoder_forward.3} parent=1 // pred_fallthru
      _
    %v38 = vld [vmem:[%s0] sm:$0xff]
    %v39 = vld [vmem:[%s0 + $0x8] sm:$0xff]
    %v40 = vld [vmem:[%s0 + $0x10] sm:$0xff]
    %v41 = vld [vmem:[%s0 + $0x18] sm:$0xff]
    %v42 = vld [vmem:[%s0 + $0x20] sm:$0xff]
    %v43 = vld [vmem:[%s0 + $0x28] sm:$0xff]
    %v44 = vld [vmem:[%s0 + $0x30] sm:$0xff]
    %v45 = vld [vmem:[%s0 + $0x38] sm:$0xff]
    %v46 = vld [vmem:[%s0 + $0x40] sm:$0xff]
    %v47 = vld [vmem:[%s0 + $0x48] sm:$0xff]
    %v48 = vld [vmem:[%s0 + $0x50] sm:$0xff]
    %v49 = vld [vmem:[%s0 + $0x58] sm:$0xff]
    %v50 = vld [vmem:[%s0 + $0x60] sm:$0xff]
    %v51 = vld [vmem:[%s0 + $0x68] sm:$0xff]
    %v52 = vld [vmem:[%s0 + $0x70] sm:$0xff]
    %v53 = vld [vmem:[%s0 + $0x78] sm:$0xff]
    %v54 = vld [vmem:[%s0 + $0x80] sm:$0xff]
    %v55 = vld [vmem:[%s0 + $0x88] sm:$0xff]
    %v56 = vld [vmem:[%s0 + $0x90] sm:$0xff]
    %v57 = vld [vmem:[%s0 + $0x98] sm:$0xff]
    %v58 = vld [vmem:[%s0 + $0xa0] sm:$0xff]
    %v59 = vld [vmem:[%s0 + $0xa8] sm:$0xff]
    %v60 = vld [vmem:[%s0 + $0xb0] sm:$0xff]
    %v61 = vld [vmem:[%s0 + $0xb8] sm:$0xff]
    %v62 = vadd.f32 %v38, %v39
    %v63 = vadd.f32 %v62, %v40
    %v64 = vadd.f32 %v63, %v41
    %v65 = vadd.f32 %v64, %v42
    %v66 = vadd.f32 %v65, %v43
    %67 = vadd.xlane.f32.xlu0 %v66
    %v68 = vpop.xlane.xlu0 %67
    %v69 = vadd.f32 %v44, %v45
    %v70 = vadd.f32 %v69, %v46
    %v71 = vadd.f32 %v70, %v47
    %v72 = vadd.f32 %v71, %v48
    %v73 = vadd.f32 %v72, %v49
    %74 = vadd.xlane.f32.xlu0 %v73
    %v75 = vpop.xlane.xlu0 %74
    %v76 = vadd.f32 %v50, %v51
    %v77 = vadd.f32 %v76, %v52
    %v78 = vadd.f32 %v77, %v53
    %v79 = vadd.f32 %v78, %v54
    %v80 = vadd.f32 %v79, %v55
    %81 = vadd.xlane.f32.xlu0 %v80
    %v82 = vpop.xlane.xlu0 %81
    %v83 = vadd.f32 %v56, %v57
    %v84 = vadd.f32 %v83, %v58
    %v85 = vadd.f32 %v84, %v59
    %v86 = vadd.f32 %v85, %v60
    %v87 = vadd.f32 %v86, %v61
    %88 = vadd.xlane.f32.xlu0 %v87
    %v89 = vpop.xlane.xlu0 %88
    %v90 = vrcp.pop 768.0
    %v91 = vmul.f32 %v68, %v90
    %v92 = vmul.f32 %v75, %v90
    %v93 = vmul.f32 %v82, %v90
    %v94 = vmul.f32 %v89, %v90
    %v95 = vsub.f32 %v38, %v91
    %v96 = vsub.f32 %v39, %v91
    %v97 = vsub.f32 %v40, %v91
    %v98 = vsub.f32 %v41, %v91
    %v99 = vsub.f32 %v42, %v91
    %v100 = vsub.f32 %v43, %v91
    %v101 = vsub.f32 %v44, %v92
    %v102 = vsub.f32 %v45, %v92
    %v103 = vsub.f32 %v46, %v92
    %v104 = vsub.f32 %v47, %v92
    %v105 = vsub.f32 %v48, %v92
    %v106 = vsub.f32 %v49, %v92
    %v107 = vsub.f32 %v50, %v93
    %v108 = vsub.f32 %v51, %v93
    %v109 = vsub.f32 %v52, %v93
    %v110 = vsub.f32 %v53, %v93
    %v111 = vsub.f32 %v54, %v93
    %v112 = vsub.f32 %v55, %v93
    %v113 = vsub.f32 %v56, %v94
    %v114 = vsub.f32 %v57, %v94
    %v115 = vsub.f32 %v58, %v94
    %v116 = vsub.f32 %v59, %v94
    %v117 = vsub.f32 %v60, %v94
    %v118 = vsub.f32 %v61, %v94
    %v119 = vmul.f32 %v95, %v95
    %v120 = vmul.f32 %v96, %v96
    %v121 = vmul.f32 %v97, %v97
    %v122 = vmul.f32 %v98, %v98
    %v123 = vmul.f32 %v99, %v99
    %v124 = vmul.f32 %v100, %v100
    %v125 = vmul.f32 %v101, %v101
    %v126 = vmul.f32 %v102, %v102
    %v127 = vmul.f32 %v103, %v103
    %v128 = vmul.f32 %v104, %v104
    %v129 = vmul.f32 %v105, %v105
    %v130 = vmul.f32 %v106, %v106
    %v131 = vmul.f32 %v107, %v107
    %v132 = vmul.f32 %v108, %v108
    %v133 = vmul.f32 %v109, %v109
    %v134 = vmul.f32 %v110, %v110
    %v135 = vmul.f32 %v111, %v111
    %v136 = vmul.f32 %v112, %v112
    %v137 = vmul.f32 %v113, %v113
    %v138 = vmul.f32 %v114, %v114
    %v139 = vmul.f32 %v115, %v115
    %v140 = vmul.f32 %v116, %v116
    %v141 = vmul.f32 %v117, %v117
    %v142 = vmul.f32 %v118, %v118
    %v143 = vadd.f32 %v119, %v120
    %v144 = vadd.f32 %v143, %v121
    %v145 = vadd.f32 %v144, %v122
    %v146 = vadd.f32 %v145, %v123
    %v147 = vadd.f32 %v146, %v124
    %148 = vadd.xlane.f32.xlu0 %v147
    %v149 = vpop.xlane.xlu0 %148
    %v150 = vadd.f32 %v125, %v126
    %v151 = vadd.f32 %v150, %v127
    %v152 = vadd.f32 %v151, %v128
    %v153 = vadd.f32 %v152, %v129
    %v154 = vadd.f32 %v153, %v130
    %155 = vadd.xlane.f32.xlu0 %v154
    %v156 = vpop.xlane.xlu0 %155
    %v157 = vadd.f32 %v131, %v132
    %v158 = vadd.f32 %v157, %v133
    %v159 = vadd.f32 %v158, %v134
    %v160 = vadd.f32 %v159, %v135
    %v161 = vadd.f32 %v160, %v136
    %162 = vadd.xlane.f32.xlu0 %v161
    %v163 = vpop.xlane.xlu0 %162
    %v164 = vadd.f32 %v137, %v138
    %v165 = vadd.f32 %v164, %v139
    %v166 = vadd.f32 %v165, %v140
    %v167 = vadd.f32 %v166, %v141
    %v168 = vadd.f32 %v167, %v142
    %169 = vadd.xlane.f32.xlu0 %v168
    %v170 = vpop.xlane.xlu0 %169
    %v171 = vmul.f32 %v149, %v90
    %v172 = vmul.f32 %v156, %v90
    %v173 = vmul.f32 %v163, %v90
    %v174 = vmul.f32 %v170, %v90
    %v175 = vadd.f32 %v171, 1e-12
    %v176 = vadd.f32 %v172, 1e-12
    %v177 = vadd.f32 %v173, 1e-12
    %v178 = vadd.f32 %v174, 1e-12
    %v179 = vrsqrt.pop %v175
    %v180 = vrsqrt.pop %v176
    %v181 = vrsqrt.pop %v177
    %v182 = vrsqrt.pop %v178
    %v183 = vmul.f32 %v95, %v179
    %v184 = vmul.f32 %v96, %v179
    %v185 = vmul.f32 %v97, %v179
    %v186 = vmul.f32 %v98, %v179
    %v187 = vmul.f32 %v99, %v179
    %v188 = vmul.f32 %v100, %v179
    %v189 = vmul.f32 %v101, %v180
    %v190 = vmul.f32 %v102, %v180
    %v191 = vmul.f32 %v103, %v180
    %v192 = vmul.f32 %v104, %v180
    %v193 = vmul.f32 %v105, %v180
    %v194 = vmul.f32 %v106, %v180
    %v195 = vmul.f32 %v107, %v181
    %v196 = vmul.f32 %v108, %v181
    %v197 = vmul.f32 %v109, %v181
    %v198 = vmul.f32 %v110, %v181
    %v199 = vmul.f32 %v111, %v181
    %v200 = vmul.f32 %v112, %v181
    %v201 = vmul.f32 %v113, %v182
    %v202 = vmul.f32 %v114, %v182
    %v203 = vmul.f32 %v115, %v182
    %v204 = vmul.f32 %v116, %v182
    %v205 = vmul.f32 %v117, %v182
    %v206 = vmul.f32 %v118, %v182
    %v207 = vld [vmem:[#allocation2] sm:$0x3f]
    %v209 = vlaneseq
    %v210 = vshrl.u32 %v209, 7
    %v211 = vsub.s32 0, %v210
    %v212 = vrot.slane %v207, %v211
    %v213 = vlaneseq
    %v214 = vshrl.u32 %v213, 7
    %v215 = vsub.s32 1, %v214
    %v216 = vrot.slane %v207, %v215
    %v217 = vlaneseq
    %v218 = vshrl.u32 %v217, 7
    %v219 = vsub.s32 2, %v218
    %v220 = vrot.slane %v207, %v219
    %v221 = vlaneseq
    %v222 = vshrl.u32 %v221, 7
    %v223 = vsub.s32 3, %v222
    %v224 = vrot.slane %v207, %v223
    %v225 = vlaneseq
    %v226 = vshrl.u32 %v225, 7
    %v227 = vsub.s32 4, %v226
    %v228 = vrot.slane %v207, %v227
    %v229 = vlaneseq
    %v230 = vshrl.u32 %v229, 7
    %v231 = vsub.s32 5, %v230
    %v232 = vrot.slane %v207, %v231
    %v239 = vmul.f32 %v183, %v212
    %v240 = vmul.f32 %v184, %v216
    %v241 = vmul.f32 %v185, %v220
    %v242 = vmul.f32 %v186, %v224
    %v243 = vmul.f32 %v187, %v228
    %v244 = vmul.f32 %v188, %v232
    %v245 = vmul.f32 %v189, %v212
    %v246 = vmul.f32 %v190, %v216
    %v247 = vmul.f32 %v191, %v220
    %v248 = vmul.f32 %v192, %v224
    %v249 = vmul.f32 %v193, %v228
    %v250 = vmul.f32 %v194, %v232
    %v251 = vmul.f32 %v195, %v212
    %v252 = vmul.f32 %v196, %v216
    %v253 = vmul.f32 %v197, %v220
    %v254 = vmul.f32 %v198, %v224
    %v255 = vmul.f32 %v199, %v228
    %v256 = vmul.f32 %v200, %v232
    %v257 = vmul.f32 %v201, %v212
    %v258 = vmul.f32 %v202, %v216
    %v259 = vmul.f32 %v203, %v220
    %v260 = vmul.f32 %v204, %v224
    %v261 = vmul.f32 %v205, %v228
    %v262 = vmul.f32 %v206, %v232
    %v263 = vld [vmem:[#allocation4] sm:$0x3f]
    %v265 = vlaneseq
    %v266 = vshrl.u32 %v265, 7
    %v267 = vsub.s32 0, %v266
    %v268 = vrot.slane %v263, %v267
    %v269 = vlaneseq
    %v270 = vshrl.u32 %v269, 7
    %v271 = vsub.s32 1, %v270
    %v272 = vrot.slane %v263, %v271
    %v273 = vlaneseq
    %v274 = vshrl.u32 %v273, 7
    %v275 = vsub.s32 2, %v274
    %v276 = vrot.slane %v263, %v275
    %v277 = vlaneseq
    %v278 = vshrl.u32 %v277, 7
    %v279 = vsub.s32 3, %v278
    %v280 = vrot.slane %v263, %v279
    %v281 = vlaneseq
    %v282 = vshrl.u32 %v281, 7
    %v283 = vsub.s32 4, %v282
    %v284 = vrot.slane %v263, %v283
    %v285 = vlaneseq
    %v286 = vshrl.u32 %v285, 7
    %v287 = vsub.s32 5, %v286
    %v288 = vrot.slane %v263, %v287
    %v295 = vadd.f32 %v239, %v268
    %v296 = vadd.f32 %v240, %v272
    %v297 = vadd.f32 %v241, %v276
    %v298 = vadd.f32 %v242, %v280
    %v299 = vadd.f32 %v243, %v284
    %v300 = vadd.f32 %v244, %v288
    %v301 = vadd.f32 %v245, %v268
    %v302 = vadd.f32 %v246, %v272
    %v303 = vadd.f32 %v247, %v276
    %v304 = vadd.f32 %v248, %v280
    %v305 = vadd.f32 %v249, %v284
    %v306 = vadd.f32 %v250, %v288
    %v307 = vadd.f32 %v251, %v268
    %v308 = vadd.f32 %v252, %v272
    %v309 = vadd.f32 %v253, %v276
    %v310 = vadd.f32 %v254, %v280
    %v311 = vadd.f32 %v255, %v284
    %v312 = vadd.f32 %v256, %v288
    %v313 = vadd.f32 %v257, %v268
    %v314 = vadd.f32 %v258, %v272
    %v315 = vadd.f32 %v259, %v276
    %v316 = vadd.f32 %v260, %v280
    %v317 = vadd.f32 %v261, %v284
    %v318 = vadd.f32 %v262, %v288
    %v319 = vpack.c.bf16 %v301, %v295
    %v320 = vpack.c.bf16 %v302, %v296
    %v321 = vpack.c.bf16 %v303, %v297
    %v322 = vpack.c.bf16 %v304, %v298
    %v323 = vpack.c.bf16 %v305, %v299
    %v324 = vpack.c.bf16 %v306, %v300
    %v325 = vpack.c.bf16 %v313, %v307
    %v326 = vpack.c.bf16 %v314, %v308
    %v327 = vpack.c.bf16 %v315, %v309
    %v328 = vpack.c.bf16 %v316, %v310
    %v329 = vpack.c.bf16 %v317, %v311
    %v330 = vpack.c.bf16 %v318, %v312
    %v343 = vunpack.c.l.b16 %v319
    %v344 = vunpack.c.l.b16 %v320
    %v345 = vunpack.c.l.b16 %v321
    %v346 = vunpack.c.l.b16 %v322
    %v347 = vunpack.c.l.b16 %v323
    %v348 = vunpack.c.l.b16 %v324
    %v349 = vunpack.c.h.b16 %v319
    %v350 = vunpack.c.h.b16 %v320
    %v351 = vunpack.c.h.b16 %v321
    %v352 = vunpack.c.h.b16 %v322
    %v353 = vunpack.c.h.b16 %v323
    %v354 = vunpack.c.h.b16 %v324
    %v355 = vunpack.c.l.b16 %v325
    %v356 = vunpack.c.l.b16 %v326
    %v357 = vunpack.c.l.b16 %v327
    %v358 = vunpack.c.l.b16 %v328
    %v359 = vunpack.c.l.b16 %v329
    %v360 = vunpack.c.l.b16 %v330
    %v361 = vunpack.c.h.b16 %v325
    %v362 = vunpack.c.h.b16 %v326
    %v363 = vunpack.c.h.b16 %v327
    %v364 = vunpack.c.h.b16 %v328
    %v365 = vunpack.c.h.b16 %v329
    %v366 = vunpack.c.h.b16 %v330
    %v367 = vpack.c.b16 %v344, %v343
    %v368 = vpack.c.b16 %v346, %v345
    %v369 = vpack.c.b16 %v348, %v347
    %v370 = vpack.c.b16 %v350, %v349
    %v371 = vpack.c.b16 %v352, %v351
    %v372 = vpack.c.b16 %v354, %v353
    %v373 = vpack.c.b16 %v356, %v355
    %v374 = vpack.c.b16 %v358, %v357
    %v375 = vpack.c.b16 %v360, %v359
    %v376 = vpack.c.b16 %v362, %v361
    %v377 = vpack.c.b16 %v364, %v363
    %v378 = vpack.c.b16 %v366, %v365
    %391 = vst [vmem:[%s3] sm:$0xff] %v367
    %392 = vst [vmem:[%s3 + $0x8] sm:$0xff] %v368
    %393 = vst [vmem:[%s3 + $0x10] sm:$0xff] %v369
    %394 = vst [vmem:[%s3 + $0x18] sm:$0xff] %v370
    %395 = vst [vmem:[%s3 + $0x20] sm:$0xff] %v371
    %396 = vst [vmem:[%s3 + $0x28] sm:$0xff] %v372
    %397 = vst [vmem:[%s3 + $0x30] sm:$0xff] %v373
    %398 = vst [vmem:[%s3 + $0x38] sm:$0xff] %v374
    %399 = vst [vmem:[%s3 + $0x40] sm:$0xff] %v375
    %400 = vst [vmem:[%s3 + $0x48] sm:$0xff] %v376
    %401 = vst [vmem:[%s3 + $0x50] sm:$0xff] %v377
    %402 = vst [vmem:[%s3 + $0x58] sm:$0xff] %v378
    // Predicated region
    $region22: #{text_encoder_forward.3} parent=1 // pred_check
      _
    $region23: #{text_encoder_forward.3} parent=1 // pred_check_branch
      %404 = sbr.rel (0) target = $region25
    $region24: #{text_encoder_forward.3} parent=1 // pred_region
      _
    $region25: #{text_encoder_forward.3} parent=1 // pred_fallthru
      _
    // Predicated region
    $region26: #{text_encoder_forward.3} parent=1 // pred_check
      _
    $region27: #{text_encoder_forward.3} parent=1 // pred_check_branch
      %406 = sbr.rel (0) target = $region29
    $region28: #{text_encoder_forward.3} parent=1 // pred_region
      _
    $region29: #{text_encoder_forward.3} parent=1 // pred_fallthru
      _
    %407 = vsyncpa [#allocation3], 1
    %408 = vsyncpa [#allocation5], 1

// kernel: closed_call.16
$region0: #{closed_call.16}
  #allocation0 [shape = 'u32[]', space=smem, size = 0x4, offset = 0x4, fixed_abs, tag = 'smem constant byte address 0x4 - core index']
  #allocation1 [shape = 'u32[144,128]{1,0:T(1,128)}', space=vmem, size = 0x12000, scoped, tag = 'internal scratch']
  #allocation2 [shape = 'f32[32,256]{1,0:T(8,128)}', space=vmem, size = 0x8000, scoped, tag = 'scratch operand']
  %s0 = inlined_call_operand.vmem [shape: bf16[32,768], index: 0, kind: input, shape index: {}]
  %s1 = inlined_call_operand.vmem [shape: bf16[768,2304], index: 1, kind: input, shape index: {}]
  %s2 = inlined_call_operand.vmem [shape: f32[1,2304], index: 2, kind: input, shape index: {}]
  %s3 = inlined_call_operand.vmem [shape: bf16[32,2304], index: 3, kind: output, shape index: {}]
  %s4 = sld [smem:[#allocation0]]
  $region163: #{closed_call.16} parent=0
    _
  %s6 = ssub.s32 1, %s4
  %s7 = scalar_select 0, %s6, %s4
  $region1: #{closed_call.16} parent=0
    #allocation3 [shape = 'u8[32768]{0}', space=vmem, size = 0x8000, scoped, tag = 'input window, operand 0']
    #allocation4 [shape = 'u8[262144]{0}', space=vmem, size = 0x40000, scoped, tag = 'input window, operand 1']
    #allocation5 [shape = 'u8[32768]{0}', space=vmem, size = 0x8000, scoped, tag = 'output window, operand 0']
    loop: start=0, step=1, limit=29
    $region2: #{closed_call.16} parent=1 // loop_pre_header
      _
    $region3: #{closed_call.16} parent=1 // loop_header
      %s9 = sphi 0, %s13
      %p10 = scmp.ge.s32.totalorder %s9, 29
      %s16 = sphi 0, %s35
      %s17 = sphi 0, %s31
      %s18 = sphi 0, %s27
      %s19 = sphi 0, %s16
      %s20 = sphi 0, %s17
      %s21 = sphi 0, %s18
      %s22 = sphi 0, %s19
      %s23 = sphi 0, %s20
      %s24 = sphi 0, %s21
      %s40 = sphi 0, %s42
      %s43 = sphi 0, %s40
      %s44 = sphi 0, %s43
      %s60 = sphi 0, %s44
      %s68 = sphi 0, %s70
      %s71 = sphi 0, %s68
      %s72 = sphi 0, %s71
      %s88 = sphi 0, %s72
      %s94 = sphi 0, %s96
      %s97 = sphi 0, %s94
      %s98 = sphi 0, %s97
      %s114 = sphi 0, %s98
      %s122 = sphi 0, %s124
      %s125 = sphi 0, %s122
      %s126 = sphi 0, %s125
      %s142 = sphi 0, %s126
    $region4: #{closed_call.16} parent=1 // loop_header_branch
      %12 = sbr.rel (%p10) target = $region8
    $region5: #{closed_call.16} parent=1 // loop_body
      %s14 = ssub.s32 %s9, 1
      %s15 = ssub.s32 %s9, 2
      %s25 = sadd.s32 1, %s18
      %p26 = scmp.ge.s32.totalorder %s25, 3
      %s27 = scalar_select %p26, 0, %s25
      %s28 = sadd.s32 1, %s17
      %s29 = scalar_select %p26, %s28, %s17
      %p30 = scmp.ge.s32.totalorder %s29, 9
      %s31 = scalar_select %p30, 0, %s29
      %s32 = sadd.s32 1, %s16
      %s33 = scalar_select %p30, %s32, %s16
      %p34 = scmp.ge.s32.totalorder %s33, 1
      %s35 = scalar_select %p34, 0, %s33
      %s36 = ssub.s32 %s16, %s35
      %s37 = ssub.s32 %s18, %s27
      %s38 = sor.u32 %s36, %s37
      %p39 = scmp.eq.s32.totalorder %s38, 0
      %s41 = sadd.s32 %s40, 1
      %s42 = scalar_select %p39, %s40, %s41
      %p45 = pneg %p39
      %p46 = scmp.eq.s32.totalorder %s9, 26
      %p47 = por %p45, %p46
      %p48 = scmp.ne.s32.totalorder %s40, %s43
      %p49 = scmp.eq.s32.totalorder %s9, 0
      %p50 = por %p48, %p49
      %p51 = scmp.ne.s32.totalorder %s40, %s43
      %p52 = scmp.eq.s32.totalorder %s14, 26
      %p53 = por %p51, %p52
      %p54 = scmp.ne.s32.totalorder %s43, %s44
      %p55 = scmp.eq.s32.totalorder %s14, 0
      %p56 = por %p54, %p55
      %p57 = scmp.ne.s32.totalorder %s43, %s44
      %p58 = scmp.eq.s32.totalorder %s15, 26
      %p59 = por %p57, %p58
      %p61 = scmp.ne.s32.totalorder %s44, %s60
      %p62 = scmp.eq.s32.totalorder %s15, 0
      %p63 = por %p61, %p62
      %s64 = ssub.s32 %s18, %s27
      %s65 = ssub.s32 %s17, %s31
      %s66 = sor.u32 %s64, %s65
      %p67 = scmp.eq.s32.totalorder %s66, 0
      %s69 = sadd.s32 %s68, 1
      %s70 = scalar_select %p67, %s68, %s69
      %p73 = pneg %p67
      %p74 = scmp.eq.s32.totalorder %s9, 26
      %p75 = por %p73, %p74
      %p76 = scmp.ne.s32.totalorder %s68, %s71
      %p77 = scmp.eq.s32.totalorder %s9, 0
      %p78 = por %p76, %p77
      %p79 = scmp.ne.s32.totalorder %s68, %s71
      %p80 = scmp.eq.s32.totalorder %s14, 26
      %p81 = por %p79, %p80
      %p82 = scmp.ne.s32.totalorder %s71, %s72
      %p83 = scmp.eq.s32.totalorder %s14, 0
      %p84 = por %p82, %p83
      %p85 = scmp.ne.s32.totalorder %s71, %s72
      %p86 = scmp.eq.s32.totalorder %s15, 26
      %p87 = por %p85, %p86
      %p89 = scmp.ne.s32.totalorder %s72, %s88
      %p90 = scmp.eq.s32.totalorder %s15, 0
      %p91 = por %p89, %p90
      %s92 = ssub.s32 %s17, %s31
      %p93 = scmp.eq.s32.totalorder %s92, 0
      %s95 = sadd.s32 %s94, 1
      %s96 = scalar_select %p93, %s94, %s95
      %p99 = pneg %p93
      %p100 = scmp.eq.s32.totalorder %s9, 26
      %p101 = por %p99, %p100
      %p102 = scmp.ne.s32.totalorder %s94, %s97
      %p103 = scmp.eq.s32.totalorder %s9, 0
      %p104 = por %p102, %p103
      %p105 = scmp.ne.s32.totalorder %s94, %s97
      %p106 = scmp.eq.s32.totalorder %s14, 26
      %p107 = por %p105, %p106
      %p108 = scmp.ne.s32.totalorder %s97, %s98
      %p109 = scmp.eq.s32.totalorder %s14, 0
      %p110 = por %p108, %p109
      %p111 = scmp.ne.s32.totalorder %s97, %s98
      %p112 = scmp.eq.s32.totalorder %s15, 26
      %p113 = por %p111, %p112
      %p115 = scmp.ne.s32.totalorder %s98, %s114
      %p116 = scmp.eq.s32.totalorder %s15, 0
      %p117 = por %p115, %p116
      %s118 = ssub.s32 %s16, %s35
      %s119 = ssub.s32 %s17, %s31
      %s120 = sor.u32 %s118, %s119
      %p121 = scmp.eq.s32.totalorder %s120, 0
      %s123 = sadd.s32 %s122, 1
      %s124 = scalar_select %p121, %s122, %s123
      %p127 = pneg %p121
      %p128 = scmp.eq.s32.totalorder %s9, 26
      %p129 = por %p127, %p128
      %p130 = scmp.ne.s32.totalorder %s122, %s125
      %p131 = scmp.eq.s32.totalorder %s9, 0
      %p132 = por %p130, %p131
      %p133 = scmp.ne.s32.totalorder %s122, %s125
      %p134 = scmp.eq.s32.totalorder %s14, 26
      %p135 = por %p133, %p134
      %p136 = scmp.ne.s32.totalorder %s125, %s126
      %p137 = scmp.eq.s32.totalorder %s14, 0
      %p138 = por %p136, %p137
      %p139 = scmp.ne.s32.totalorder %s125, %s126
      %p140 = scmp.eq.s32.totalorder %s15, 26
      %p141 = por %p139, %p140
      %p143 = scmp.ne.s32.totalorder %s126, %s142
      %p144 = scmp.eq.s32.totalorder %s15, 0
      %p145 = por %p143, %p144
      %p146 = scmp.le.s32.totalorder 1, %s9
      %p147 = scmp.lt.s32.totalorder %s9, 28
      %p148 = pnand %p146, %p147
      %p149 = pneg %p148
      // Predicated region
      $region9: #{closed_call.16} parent=5 // pred_check
        _
      $region10: #{closed_call.16} parent=5 // pred_check_branch
        %151 = sbr.rel (%p148) target = $region12
      $region11: #{closed_call.16} parent=5 // pred_region
        %s152 = ssub.s32 %s9, 1
      $region12: #{closed_call.16} parent=5 // pred_fallthru
        _
      %p153 = scmp.lt.s32.totalorder %s9, 27
      // Predicated region
      $region13: #{closed_call.16} parent=5 // pred_check
        %p154 = pneg %p153
      $region14: #{closed_call.16} parent=5 // pred_check_branch
        %156 = sbr.rel (%p154) target = $region16
      $region15: #{closed_call.16} parent=5 // pred_region
        // Predicated region
        $region17: #{closed_call.16} parent=15 // pred_check
          %p157 = pneg %p50
        $region18: #{closed_call.16} parent=15 // pred_check_branch
          %159 = sbr.rel (%p157) target = $region20
        $region19: #{closed_call.16} parent=15 // pred_region
          %s160 = sand.u32 %s40, 1
          %s161 = sand.u32 %s40, 1
          %s162 = smul.addr %s161, 32
          %s163 = scalar_lea.vmem [#allocation3], %s162
          %s164 = smul.u32 4, %s16
          %s165 = smul.u32 2, %s18
          %s166 = smul.addr %s164, 6
          %s167 = sadd.s32 %s165, %s166
          %s168 = smul.addr %s167, 4
          %s169 = scalar_lea.vmem %s0, %s168
          // Predicated region
          $region21: #{closed_call.16} parent=19 // pred_check
            _
          $region22: #{closed_call.16} parent=19 // pred_check_branch
            %171 = sbr.rel (0) target = $region24
          $region23: #{closed_call.16} parent=19 // pred_region
            // Predicated region
            $region25: #{closed_call.16} parent=23 // pred_check
              _
            $region26: #{closed_call.16} parent=23 // pred_check_branch
              %173 = sbr.rel (0) target = $region28
            $region27: #{closed_call.16} parent=23 // pred_region
              // Predicated region
              $region40: #{closed_call.16} parent=27 // pred_check
                _
              $region41: #{closed_call.16} parent=27 // pred_check_branch
                %195 = sbr.rel (0) target = $region43
              $region42: #{closed_call.16} parent=27 // pred_region
                loop: start=0, step=1, limit=1
                $region44: #{closed_call.16} parent=42 // loop_pre_header
                  _
                $region45: #{closed_call.16} parent=42 // loop_header
                  %s197 = sphi 0, %s201
                  %p198 = scmp.ge.s32.totalorder %s197, 1
                  %s202 = sphi %s169, %s169
                  %s203 = sphi %s163, %s163
                $region46: #{closed_call.16} parent=42 // loop_header_branch
                  %200 = sbr.rel (%p198) target = $region50
                $region47: #{closed_call.16} parent=42 // loop_body
                  %v204 = vld [vmem:[%s202] sm:$0xff]
                  %205 = vst [vmem:[%s203] sm:$0xff] %v204
                  %v206 = vld [vmem:[%s202 + $0x18] sm:$0xff]
                  %207 = vst [vmem:[%s203 + $0x8] sm:$0xff] %v206
                  %v208 = vld [vmem:[%s202 + $0x30] sm:$0xff]
                  %209 = vst [vmem:[%s203 + $0x10] sm:$0xff] %v208
                  %v210 = vld [vmem:[%s202 + $0x48] sm:$0xff]
                  %211 = vst [vmem:[%s203 + $0x18] sm:$0xff] %v210
                $region48: #{closed_call.16} parent=42 // loop_footer
                  %s201 = sadd.s32 1, %s197
                $region49: #{closed_call.16} parent=42 // loop_footer_branch
                  %196 = sbr.rel target = $region45
                $region50: #{closed_call.16} parent=42 // loop_exit
                  _
              $region43: #{closed_call.16} parent=27 // pred_fallthru
                _
              // Predicated region
              $region51: #{closed_call.16} parent=27 // pred_check
                _
              $region52: #{closed_call.16} parent=27 // pred_check_branch
                %213 = sbr.rel target = $region54
              $region53: #{closed_call.16} parent=27 // pred_region
                _
              $region54: #{closed_call.16} parent=27 // pred_fallthru
                _
            $region28: #{closed_call.16} parent=23 // pred_fallthru
              _
            // Predicated region
            $region29: #{closed_call.16} parent=23 // pred_check
              _
            $region30: #{closed_call.16} parent=23 // pred_check_branch
              %175 = sbr.rel target = $region32
            $region31: #{closed_call.16} parent=23 // pred_region
              %s177 = ssub.s32 256, 1
              loop: start=0, step=1, limit=1
              $region33: #{closed_call.16} parent=31 // loop_pre_header
                _
              $region34: #{closed_call.16} parent=31 // loop_header
                %s179 = sphi 0, %s183
                %p180 = scmp.ge.s32.totalorder %s179, 1
                %s184 = sphi %s169, %s169
                %s185 = sphi %s163, %s163
              $region35: #{closed_call.16} parent=31 // loop_header_branch
                %182 = sbr.rel (%p180) target = $region39
              $region36: #{closed_call.16} parent=31 // loop_body
                %v186 = vld [vmem:[%s184] sm:%s177]
                %187 = vst [vmem:[%s185] sm:%s177] %v186
                %v188 = vld [vmem:[%s184 + $0x18] sm:%s177]
                %189 = vst [vmem:[%s185 + $0x8] sm:%s177] %v188
                %v190 = vld [vmem:[%s184 + $0x30] sm:%s177]
                %191 = vst [vmem:[%s185 + $0x10] sm:%s177] %v190
                %v192 = vld [vmem:[%s184 + $0x48] sm:%s177]
                %193 = vst [vmem:[%s185 + $0x18] sm:%s177] %v192
              $region37: #{closed_call.16} parent=31 // loop_footer
                %s183 = sadd.s32 1, %s179
              $region38: #{closed_call.16} parent=31 // loop_footer_branch
                %178 = sbr.rel target = $region34
              $region39: #{closed_call.16} parent=31 // loop_exit
                _
            $region32: #{closed_call.16} parent=23 // pred_fallthru
              _
          $region24: #{closed_call.16} parent=19 // pred_fallthru
            _
          %214 = vnop
        $region20: #{closed_call.16} parent=15 // pred_fallthru
          _
        // Predicated region
        $region55: #{closed_call.16} parent=15 // pred_check
          %p215 = pneg %p78
        $region56: #{closed_call.16} parent=15 // pred_check_branch
          %217 = sbr.rel (%p215) target = $region58
        $region57: #{closed_call.16} parent=15 // pred_region
          %s218 = sand.u32 %s68, 1
          %s219 = sand.u32 %s68, 1
          %s220 = smul.addr %s219, 256
          %s221 = scalar_lea.vmem [#allocation4], %s220
          %s222 = smul.u32 32, %s18
          %s223 = smul.u32 2, %s17
          %s224 = smul.addr %s222, 18
          %s225 = sadd.s32 %s223, %s224
          %s226 = smul.addr %s225, 4
          %s227 = scalar_lea.vmem %s1, %s226
          // Predicated region
          $region59: #{closed_call.16} parent=57 // pred_check
            _
          $region60: #{closed_call.16} parent=57 // pred_check_branch
            %229 = sbr.rel (0) target = $region62
          $region61: #{closed_call.16} parent=57 // pred_region
            // Predicated region
            $region63: #{closed_call.16} parent=61 // pred_check
              _
            $region64: #{closed_call.16} parent=61 // pred_check_branch
              %231 = sbr.rel (0) target = $region66
            $region65: #{closed_call.16} parent=61 // pred_region
              // Predicated region
              $region78: #{closed_call.16} parent=65 // pred_check
                _
              $region79: #{closed_call.16} parent=65 // pred_check_branch
                %309 = sbr.rel (0) target = $region81
              $region80: #{closed_call.16} parent=65 // pred_region
                loop: start=0, step=1, limit=1
                $region82: #{closed_call.16} parent=80 // loop_pre_header
                  _
                $region83: #{closed_call.16} parent=80 // loop_header
                  %s311 = sphi 0, %s315
                  %p312 = scmp.ge.s32.totalorder %s311, 1
                  %s316 = sphi %s227, %s227
                  %s317 = sphi %s221, %s221
                $region84: #{closed_call.16} parent=80 // loop_header_branch
                  %314 = sbr.rel (%p312) target = $region88
                $region85: #{closed_call.16} parent=80 // loop_body
                  %v318 = vld [vmem:[%s316] sm:$0xff]
                  %319 = vst [vmem:[%s317] sm:$0xff] %v318
                  %v320 = vld [vmem:[%s316 + $0x48] sm:$0xff]
                  %321 = vst [vmem:[%s317 + $0x8] sm:$0xff] %v320
                  %v322 = vld [vmem:[%s316 + $0x90] sm:$0xff]
                  %323 = vst [vmem:[%s317 + $0x10] sm:$0xff] %v322
                  %v324 = vld [vmem:[%s316 + $0xd8] sm:$0xff]
                  %325 = vst [vmem:[%s317 + $0x18] sm:$0xff] %v324
                  %v326 = vld [vmem:[%s316 + $0x120] sm:$0xff]
                  %327 = vst [vmem:[%s317 + $0x20] sm:$0xff] %v326
                  %v328 = vld [vmem:[%s316 + $0x168] sm:$0xff]
                  %329 = vst [vmem:[%s317 + $0x28] sm:$0xff] %v328
                  %v330 = vld [vmem:[%s316 + $0x1b0] sm:$0xff]
                  %331 = vst [vmem:[%s317 + $0x30] sm:$0xff] %v330
                  %v332 = vld [vmem:[%s316 + $0x1f8] sm:$0xff]
                  %333 = vst [vmem:[%s317 + $0x38] sm:$0xff] %v332
                  %v334 = vld [vmem:[%s316 + $0x240] sm:$0xff]
                  %335 = vst [vmem:[%s317 + $0x40] sm:$0xff] %v334
                  %v336 = vld [vmem:[%s316 + $0x288] sm:$0xff]
                  %337 = vst [vmem:[%s317 + $0x48] sm:$0xff] %v336
                  %v338 = vld [vmem:[%s316 + $0x2d0] sm:$0xff]
                  %339 = vst [vmem:[%s317 + $0x50] sm:$0xff] %v338
                  %v340 = vld [vmem:[%s316 + $0x318] sm:$0xff]
                  %341 = vst [vmem:[%s317 + $0x58] sm:$0xff] %v340
                  %v342 = vld [vmem:[%s316 + $0x360] sm:$0xff]
                  %343 = vst [vmem:[%s317 + $0x60] sm:$0xff] %v342
                  %v344 = vld [vmem:[%s316 + $0x3a8] sm:$0xff]
                  %345 = vst [vmem:[%s317 + $0x68] sm:$0xff] %v344
                  %v346 = vld [vmem:[%s316 + $0x3f0] sm:$0xff]
                  %347 = vst [vmem:[%s317 + $0x70] sm:$0xff] %v346
                  %v348 = vld [vmem:[%s316 + $0x438] sm:$0xff]
                  %349 = vst [vmem:[%s317 + $0x78] sm:$0xff] %v348
                  %v350 = vld [vmem:[%s316 + $0x480] sm:$0xff]
                  %351 = vst [vmem:[%s317 + $0x80] sm:$0xff] %v350
                  %v352 = vld [vmem:[%s316 + $0x4c8] sm:$0xff]
                  %353 = vst [vmem:[%s317 + $0x88] sm:$0xff] %v352
                  %v354 = vld [vmem:[%s316 + $0x510] sm:$0xff]
                  %355 = vst [vmem:[%s317 + $0x90] sm:$0xff] %v354
                  %v356 = vld [vmem:[%s316 + $0x558] sm:$0xff]
                  %357 = vst [vmem:[%s317 + $0x98] sm:$0xff] %v356
                  %v358 = vld [vmem:[%s316 + $0x5a0] sm:$0xff]
                  %359 = vst [vmem:[%s317 + $0xa0] sm:$0xff] %v358
                  %v360 = vld [vmem:[%s316 + $0x5e8] sm:$0xff]
                  %361 = vst [vmem:[%s317 + $0xa8] sm:$0xff] %v360
                  %v362 = vld [vmem:[%s316 + $0x630] sm:$0xff]
                  %363 = vst [vmem:[%s317 + $0xb0] sm:$0xff] %v362
                  %v364 = vld [vmem:[%s316 + $0x678] sm:$0xff]
                  %365 = vst [vmem:[%s317 + $0xb8] sm:$0xff] %v364
                  %v366 = vld [vmem:[%s316 + $0x6c0] sm:$0xff]
                  %367 = vst [vmem:[%s317 + $0xc0] sm:$0xff] %v366
                  %v368 = vld [vmem:[%s316 + $0x708] sm:$0xff]
                  %369 = vst [vmem:[%s317 + $0xc8] sm:$0xff] %v368
                  %v370 = vld [vmem:[%s316 + $0x750] sm:$0xff]
                  %371 = vst [vmem:[%s317 + $0xd0] sm:$0xff] %v370
                  %v372 = vld [vmem:[%s316 + $0x798] sm:$0xff]
                  %373 = vst [vmem:[%s317 + $0xd8] sm:$0xff] %v372
                  %v374 = vld [vmem:[%s316 + $0x7e0] sm:$0xff]
                  %375 = vst [vmem:[%s317 + $0xe0] sm:$0xff] %v374
                  %v376 = vld [vmem:[%s316 + $0x828] sm:$0xff]
                  %377 = vst [vmem:[%s317 + $0xe8] sm:$0xff] %v376
                  %v378 = vld [vmem:[%s316 + $0x870] sm:$0xff]
                  %379 = vst [vmem:[%s317 + $0xf0] sm:$0xff] %v378
                  %v380 = vld [vmem:[%s316 + $0x8b8] sm:$0xff]
                  %381 = vst [vmem:[%s317 + $0xf8] sm:$0xff] %v380
                $region86: #{closed_call.16} parent=80 // loop_footer
                  %s315 = sadd.s32 1, %s311
                $region87: #{closed_call.16} parent=80 // loop_footer_branch
                  %310 = sbr.rel target = $region83
                $region88: #{closed_call.16} parent=80 // loop_exit
                  _
              $region81: #{closed_call.16} parent=65 // pred_fallthru
                _
              // Predicated region
              $region89: #{closed_call.16} parent=65 // pred_check
                _
              $region90: #{closed_call.16} parent=65 // pred_check_branch
                %383 = sbr.rel target = $region92
              $region91: #{closed_call.16} parent=65 // pred_region
                _
              $region92: #{closed_call.16} parent=65 // pred_fallthru
                _
            $region66: #{closed_call.16} parent=61 // pred_fallthru
              _
            // Predicated region
            $region67: #{closed_call.16} parent=61 // pred_check
              _
            $region68: #{closed_call.16} parent=61 // pred_check_branch
              %233 = sbr.rel target = $region70
            $region69: #{closed_call.16} parent=61 // pred_region
              %s235 = ssub.s32 256, 1
              loop: start=0, step=1, limit=1
              $region71: #{closed_call.16} parent=69 // loop_pre_header
                _
              $region72: #{closed_call.16} parent=69 // loop_header
                %s237 = sphi 0, %s241
                %p238 = scmp.ge.s32.totalorder %s237, 1
                %s242 = sphi %s227, %s227
                %s243 = sphi %s221, %s221
              $region73: #{closed_call.16} parent=69 // loop_header_branch
                %240 = sbr.rel (%p238) target = $region77
              $region74: #{closed_call.16} parent=69 // loop_body
                %v244 = vld [vmem:[%s242] sm:%s235]
                %245 = vst [vmem:[%s243] sm:%s235] %v244
                %v246 = vld [vmem:[%s242 + $0x48] sm:%s235]
                %247 = vst [vmem:[%s243 + $0x8] sm:%s235] %v246
                %v248 = vld [vmem:[%s242 + $0x90] sm:%s235]
                %249 = vst [vmem:[%s243 + $0x10] sm:%s235] %v248
                %v250 = vld [vmem:[%s242 + $0xd8] sm:%s235]
                %251 = vst [vmem:[%s243 + $0x18] sm:%s235] %v250
                %v252 = vld [vmem:[%s242 + $0x120] sm:%s235]
                %253 = vst [vmem:[%s243 + $0x20] sm:%s235] %v252
                %v254 = vld [vmem:[%s242 + $0x168] sm:%s235]
                %255 = vst [vmem:[%s243 + $0x28] sm:%s235] %v254
                %v256 = vld [vmem:[%s242 + $0x1b0] sm:%s235]
                %257 = vst [vmem:[%s243 + $0x30] sm:%s235] %v256
                %v258 = vld [vmem:[%s242 + $0x1f8] sm:%s235]
                %259 = vst [vmem:[%s243 + $0x38] sm:%s235] %v258
                %v260 = vld [vmem:[%s242 + $0x240] sm:%s235]
                %261 = vst [vmem:[%s243 + $0x40] sm:%s235] %v260
                %v262 = vld [vmem:[%s242 + $0x288] sm:%s235]
                %263 = vst [vmem:[%s243 + $0x48] sm:%s235] %v262
                %v264 = vld [vmem:[%s242 + $0x2d0] sm:%s235]
                %265 = vst [vmem:[%s243 + $0x50] sm:%s235] %v264
                %v266 = vld [vmem:[%s242 + $0x318] sm:%s235]
                %267 = vst [vmem:[%s243 + $0x58] sm:%s235] %v266
                %v268 = vld [vmem:[%s242 + $0x360] sm:%s235]
                %269 = vst [vmem:[%s243 + $0x60] sm:%s235] %v268
                %v270 = vld [vmem:[%s242 + $0x3a8] sm:%s235]
                %271 = vst [vmem:[%s243 + $0x68] sm:%s235] %v270
                %v272 = vld [vmem:[%s242 + $0x3f0] sm:%s235]
                %273 = vst [vmem:[%s243 + $0x70] sm:%s235] %v272
                %v274 = vld [vmem:[%s242 + $0x438] sm:%s235]
                %275 = vst [vmem:[%s243 + $0x78] sm:%s235] %v274
                %v276 = vld [vmem:[%s242 + $0x480] sm:%s235]
                %277 = vst [vmem:[%s243 + $0x80] sm:%s235] %v276
                %v278 = vld [vmem:[%s242 + $0x4c8] sm:%s235]
                %279 = vst [vmem:[%s243 + $0x88] sm:%s235] %v278
                %v280 = vld [vmem:[%s242 + $0x510] sm:%s235]
                %281 = vst [vmem:[%s243 + $0x90] sm:%s235] %v280
                %v282 = vld [vmem:[%s242 + $0x558] sm:%s235]
                %283 = vst [vmem:[%s243 + $0x98] sm:%s235] %v282
                %v284 = vld [vmem:[%s242 + $0x5a0] sm:%s235]
                %285 = vst [vmem:[%s243 + $0xa0] sm:%s235] %v284
                %v286 = vld [vmem:[%s242 + $0x5e8] sm:%s235]
                %287 = vst [vmem:[%s243 + $0xa8] sm:%s235] %v286
                %v288 = vld [vmem:[%s242 + $0x630] sm:%s235]
                %289 = vst [vmem:[%s243 + $0xb0] sm:%s235] %v288
                %v290 = vld [vmem:[%s242 + $0x678] sm:%s235]
                %291 = vst [vmem:[%s243 + $0xb8] sm:%s235] %v290
                %v292 = vld [vmem:[%s242 + $0x6c0] sm:%s235]
                %293 = vst [vmem:[%s243 + $0xc0] sm:%s235] %v292
                %v294 = vld [vmem:[%s242 + $0x708] sm:%s235]
                %295 = vst [vmem:[%s243 + $0xc8] sm:%s235] %v294
                %v296 = vld [vmem:[%s242 + $0x750] sm:%s235]
                %297 = vst [vmem:[%s243 + $0xd0] sm:%s235] %v296
                %v298 = vld [vmem:[%s242 + $0x798] sm:%s235]
                %299 = vst [vmem:[%s243 + $0xd8] sm:%s235] %v298
                %v300 = vld [vmem:[%s242 + $0x7e0] sm:%s235]
                %301 = vst [vmem:[%s243 + $0xe0] sm:%s235] %v300
                %v302 = vld [vmem:[%s242 + $0x828] sm:%s235]
                %303 = vst [vmem:[%s243 + $0xe8] sm:%s235] %v302
                %v304 = vld [vmem:[%s242 + $0x870] sm:%s235]
                %305 = vst [vmem:[%s243 + $0xf0] sm:%s235] %v304
                %v306 = vld [vmem:[%s242 + $0x8b8] sm:%s235]
                %307 = vst [vmem:[%s243 + $0xf8] sm:%s235] %v306
              $region75: #{closed_call.16} parent=69 // loop_footer
                %s241 = sadd.s32 1, %s237
              $region76: #{closed_call.16} parent=69 // loop_footer_branch
                %236 = sbr.rel target = $region72
              $region77: #{closed_call.16} parent=69 // loop_exit
                _
            $region70: #{closed_call.16} parent=61 // pred_fallthru
              _
          $region62: #{closed_call.16} parent=57 // pred_fallthru
            _
          %384 = vnop
        $region58: #{closed_call.16} parent=15 // pred_fallthru
          _
        // Predicated region
        $region93: #{closed_call.16} parent=15 // pred_check
          %p385 = pneg %p104
        $region94: #{closed_call.16} parent=15 // pred_check_branch
          %387 = sbr.rel (%p385) target = $region96
        $region95: #{closed_call.16} parent=15 // pred_region
          %s388 = smul.u32 2, %s17
          %p389 = scmp.lt.s32.totalorder %s388, 17
          %s390 = scalar_select %p389, %s388, 17
          %s391 = scalar_lea.vmem %s2, %s390
          %s392 = smul.u32 2, %s17
        $region96: #{closed_call.16} parent=15 // pred_fallthru
          _
      $region16: #{closed_call.16} parent=5 // pred_fallthru
        _
      %p393 = scmp.le.s32.totalorder 1, %s9
      %p394 = scmp.lt.s32.totalorder %s9, 28
      %p395 = pnand %p393, %p394
      %p396 = pneg %p395
      // Predicated region
      $region97: #{closed_call.16} parent=5 // pred_check
        _
      $region98: #{closed_call.16} parent=5 // pred_check_branch
        %398 = sbr.rel (%p395) target = $region100
      $region99: #{closed_call.16} parent=5 // pred_region
        %s399 = ssub.s32 %s9, 1
        %s400 = sand.u32 %s43, 1
        %s401 = sand.u32 %s43, 1
        %s402 = smul.addr %s401, 32
        %s403 = scalar_lea.vmem [#allocation3], %s402
        // Predicated region
        $region101: #{closed_call.16} parent=99 // pred_check
          %p404 = pneg %p56
        $region102: #{closed_call.16} parent=99 // pred_check_branch
          %406 = sbr.rel (%p404) target = $region104
        $region103: #{closed_call.16} parent=99 // pred_region
          _
        $region104: #{closed_call.16} parent=99 // pred_fallthru
          _
        %s407 = sand.u32 %s71, 1
        %s408 = sand.u32 %s71, 1
        %s409 = smul.addr %s408, 256
        %s410 = scalar_lea.vmem [#allocation4], %s409
        // Predicated region
        $region105: #{closed_call.16} parent=99 // pred_check
          %p411 = pneg %p84
        $region106: #{closed_call.16} parent=99 // pred_check_branch
          %413 = sbr.rel (%p411) target = $region108
        $region107: #{closed_call.16} parent=99 // pred_region
          _
        $region108: #{closed_call.16} parent=99 // pred_fallthru
          _
        %s414 = sand.u32 %s43, 1
        %s415 = sand.u32 %s43, 1
        %s416 = smul.addr %s415, 32
        %s417 = scalar_lea.vmem [#allocation3], %s416
        %p418 = pneg %p56
        %p419 = pneg %p53
        %s420 = sand.u32 %s71, 1
        %s421 = sand.u32 %s71, 1
        %s422 = smul.addr %s421, 256
        %s423 = scalar_lea.vmem [#allocation4], %s422
        %p424 = pneg %p84
        %p425 = pneg %p81
        %s426 = smul.u32 2, %s20
        %p427 = scmp.lt.s32.totalorder %s426, 17
        %s428 = scalar_select %p427, %s426, 17
        %s429 = scalar_lea.vmem %s2, %s428
        %p430 = pneg %p110
        %p431 = pneg %p107
        %p432 = pneg %p138
        %p433 = pneg %p135
        %s434 = sand.u32 %s125, 1
        %s435 = sand.u32 %s125, 1
        %s436 = smul.addr %s435, 32
        %s437 = scalar_lea.vmem [#allocation5], %s436
        %s438 = smul.u32 4, %s19
        %s439 = smul.u32 2, %s21
        %s440 = smul.u32 32, %s21
        %s441 = smul.u32 2, %s20
        %s442 = smul.u32 2, %s20
        %p443 = scmp.lt.s32.totalorder %s442, 17
        %s444 = scalar_select %p443, %s442, 17
        %s445 = scalar_lea.vmem %s2, %s444
        %s446 = smul.u32 2, %s20
        %s447 = smul.u32 4, %s19
        %s448 = smul.u32 2, %s20
        %p449 = scmp.eq.s32.totalorder %s21, 0
        // Predicated region
        $region109: #{closed_call.16} parent=99 // pred_check
          %p450 = pneg %p449
        $region110: #{closed_call.16} parent=99 // pred_check_branch
          %452 = sbr.rel (%p450) target = $region112
        $region111: #{closed_call.16} parent=99 // pred_region
          %453 = vst [vmem:[#allocation2] sm:$0xff] 0.0
          %454 = vst [vmem:[#allocation2 + $0x8] sm:$0xff] 0.0
          %455 = vst [vmem:[#allocation2 + $0x10] sm:$0xff] 0.0
          %456 = vst [vmem:[#allocation2 + $0x18] sm:$0xff] 0.0
          %457 = vst [vmem:[#allocation2 + $0x20] sm:$0xff] 0.0
          %458 = vst [vmem:[#allocation2 + $0x28] sm:$0xff] 0.0
          %459 = vst [vmem:[#allocation2 + $0x30] sm:$0xff] 0.0
          %460 = vst [vmem:[#allocation2 + $0x38] sm:$0xff] 0.0
        $region112: #{closed_call.16} parent=99 // pred_fallthru
          _
        %v461 = vld [vmem:[#allocation2] sm:$0xff]
        %v462 = vld [vmem:[#allocation2 + $0x8] sm:$0xff]
        %v463 = vld [vmem:[#allocation2 + $0x10] sm:$0xff]
        %v464 = vld [vmem:[#allocation2 + $0x18] sm:$0xff]
        %v465 = vld [vmem:[#allocation2 + $0x20] sm:$0xff]
        %v466 = vld [vmem:[#allocation2 + $0x28] sm:$0xff]
        %v467 = vld [vmem:[#allocation2 + $0x30] sm:$0xff]
        %v468 = vld [vmem:[#allocation2 + $0x38] sm:$0xff]
        %v469 = vld [vmem:[%s403] sm:$0xff]
        %v470 = vld [vmem:[%s403 + $0x8] sm:$0xff]
        %v471 = vld [vmem:[%s403 + $0x10] sm:$0xff]
        %v472 = vld [vmem:[%s403 + $0x18] sm:$0xff]
        %v473 = vld [vmem:[%s410] sm:$0xff]
        %v474 = vld [vmem:[%s410 + $0x8] sm:$0xff]
        %v475 = vld [vmem:[%s410 + $0x10] sm:$0xff]
        %v476 = vld [vmem:[%s410 + $0x18] sm:$0xff]
        %v477 = vld [vmem:[%s410 + $0x20] sm:$0xff]
        %v478 = vld [vmem:[%s410 + $0x28] sm:$0xff]
        %v479 = vld [vmem:[%s410 + $0x30] sm:$0xff]
        %v480 = vld [vmem:[%s410 + $0x38] sm:$0xff]
        %v481 = vld [vmem:[%s410 + $0x40] sm:$0xff]
        %v482 = vld [vmem:[%s410 + $0x48] sm:$0xff]
        %v483 = vld [vmem:[%s410 + $0x50] sm:$0xff]
        %v484 = vld [vmem:[%s410 + $0x58] sm:$0xff]
        %v485 = vld [vmem:[%s410 + $0x60] sm:$0xff]
        %v486 = vld [vmem:[%s410 + $0x68] sm:$0xff]
        %v487 = vld [vmem:[%s410 + $0x70] sm:$0xff]
        %v488 = vld [vmem:[%s410 + $0x78] sm:$0xff]
        %v489 = vld [vmem:[%s410 + $0x80] sm:$0xff]
        %v490 = vld [vmem:[%s410 + $0x88] sm:$0xff]
        %v491 = vld [vmem:[%s410 + $0x90] sm:$0xff]
        %v492 = vld [vmem:[%s410 + $0x98] sm:$0xff]
        %v493 = vld [vmem:[%s410 + $0xa0] sm:$0xff]
        %v494 = vld [vmem:[%s410 + $0xa8] sm:$0xff]
        %v495 = vld [vmem:[%s410 + $0xb0] sm:$0xff]
        %v496 = vld [vmem:[%s410 + $0xb8] sm:$0xff]
        %v497 = vld [vmem:[%s410 + $0xc0] sm:$0xff]
        %v498 = vld [vmem:[%s410 + $0xc8] sm:$0xff]
        %v499 = vld [vmem:[%s410 + $0xd0] sm:$0xff]
        %v500 = vld [vmem:[%s410 + $0xd8] sm:$0xff]
        %v501 = vld [vmem:[%s410 + $0xe0] sm:$0xff]
        %v502 = vld [vmem:[%s410 + $0xe8] sm:$0xff]
        %v503 = vld [vmem:[%s410 + $0xf0] sm:$0xff]
        %v504 = vld [vmem:[%s410 + $0xf8] sm:$0xff]
        %v509 = vunpack.c.l.b16 %v469
        %v510 = vunpack.c.h.b16 %v469
        %v511 = vunpack.c.l.b16 %v470
        %v512 = vunpack.c.h.b16 %v470
        %v513 = vunpack.c.l.b16 %v471
        %v514 = vunpack.c.h.b16 %v471
        %v515 = vunpack.c.l.b16 %v472
        %v516 = vunpack.c.h.b16 %v472
        %v517 = vpack.c.b16 %v511, %v509
        %v518 = vpack.c.b16 %v512, %v510
        %v519 = vpack.c.b16 %v515, %v513
        %v520 = vpack.c.b16 %v516, %v514
        %v557 = vunpack.c.l.b16 %v473
        %v558 = vunpack.c.h.b16 %v473
        %v559 = vunpack.c.l.b16 %v474
        %v560 = vunpack.c.h.b16 %v474
        %v561 = vunpack.c.l.b16 %v475
        %v562 = vunpack.c.h.b16 %v475
        %v563 = vunpack.c.l.b16 %v476
        %v564 = vunpack.c.h.b16 %v476
        %v565 = vunpack.c.l.b16 %v477
        %v566 = vunpack.c.h.b16 %v477
        %v567 = vunpack.c.l.b16 %v478
        %v568 = vunpack.c.h.b16 %v478
        %v569 = vunpack.c.l.b16 %v479
        %v570 = vunpack.c.h.b16 %v479
        %v571 = vunpack.c.l.b16 %v480
        %v572 = vunpack.c.h.b16 %v480
        %v573 = vunpack.c.l.b16 %v481
        %v574 = vunpack.c.h.b16 %v481
        %v575 = vunpack.c.l.b16 %v482
        %v576 = vunpack.c.h.b16 %v482
        %v577 = vunpack.c.l.b16 %v483
        %v578 = vunpack.c.h.b16 %v483
        %v579 = vunpack.c.l.b16 %v484
        %v580 = vunpack.c.h.b16 %v484
        %v581 = vunpack.c.l.b16 %v485
        %v582 = vunpack.c.h.b16 %v485
        %v583 = vunpack.c.l.b16 %v486
        %v584 = vunpack.c.h.b16 %v486
        %v585 = vunpack.c.l.b16 %v487
        %v586 = vunpack.c.h.b16 %v487
        %v587 = vunpack.c.l.b16 %v488
        %v588 = vunpack.c.h.b16 %v488
        %v589 = vunpack.c.l.b16 %v489
        %v590 = vunpack.c.h.b16 %v489
        %v591 = vunpack.c.l.b16 %v490
        %v592 = vunpack.c.h.b16 %v490
        %v593 = vunpack.c.l.b16 %v491
        %v594 = vunpack.c.h.b16 %v491
        %v595 = vunpack.c.l.b16 %v492
        %v596 = vunpack.c.h.b16 %v492
        %v597 = vunpack.c.l.b16 %v493
        %v598 = vunpack.c.h.b16 %v493
        %v599 = vunpack.c.l.b16 %v494
        %v600 = vunpack.c.h.b16 %v494
        %v601 = vunpack.c.l.b16 %v495
        %v602 = vunpack.c.h.b16 %v495
        %v603 = vunpack.c.l.b16 %v496
        %v604 = vunpack.c.h.b16 %v496
        %v605 = vunpack.c.l.b16 %v497
        %v606 = vunpack.c.h.b16 %v497
        %v607 = vunpack.c.l.b16 %v498
        %v608 = vunpack.c.h.b16 %v498
        %v609 = vunpack.c.l.b16 %v499
        %v610 = vunpack.c.h.b16 %v499
        %v611 = vunpack.c.l.b16 %v500
        %v612 = vunpack.c.h.b16 %v500
        %v613 = vunpack.c.l.b16 %v501
        %v614 = vunpack.c.h.b16 %v501
        %v615 = vunpack.c.l.b16 %v502
        %v616 = vunpack.c.h.b16 %v502
        %v617 = vunpack.c.l.b16 %v503
        %v618 = vunpack.c.h.b16 %v503
        %v619 = vunpack.c.l.b16 %v504
        %v620 = vunpack.c.h.b16 %v504
        %v621 = vpack.c.b16 %v559, %v557
        %v622 = vpack.c.b16 %v560, %v558
        %v623 = vpack.c.b16 %v563, %v561
        %v624 = vpack.c.b16 %v564, %v562
        %v625 = vpack.c.b16 %v567, %v565
        %v626 = vpack.c.b16 %v568, %v566
        %v627 = vpack.c.b16 %v571, %v569
        %v628 = vpack.c.b16 %v572, %v570
        %v629 = vpack.c.b16 %v575, %v573
        %v630 = vpack.c.b16 %v576, %v574
        %v631 = vpack.c.b16 %v579, %v577
        %v632 = vpack.c.b16 %v580, %v578
        %v633 = vpack.c.b16 %v583, %v581
        %v634 = vpack.c.b16 %v584, %v582
        %v635 = vpack.c.b16 %v587, %v585
        %v636 = vpack.c.b16 %v588, %v586
        %v637 = vpack.c.b16 %v591, %v589
        %v638 = vpack.c.b16 %v592, %v590
        %v639 = vpack.c.b16 %v595, %v593
        %v640 = vpack.c.b16 %v596, %v594
        %v641 = vpack.c.b16 %v599, %v597
        %v642 = vpack.c.b16 %v600, %v598
        %v643 = vpack.c.b16 %v603, %v601
        %v644 = vpack.c.b16 %v604, %v602
        %v645 = vpack.c.b16 %v607, %v605
        %v646 = vpack.c.b16 %v608, %v606
        %v647 = vpack.c.b16 %v611, %v609
        %v648 = vpack.c.b16 %v612, %v610
        %v649 = vpack.c.b16 %v615, %v613
        %v650 = vpack.c.b16 %v616, %v614
        %v651 = vpack.c.b16 %v619, %v617
        %v652 = vpack.c.b16 %v620, %v618
        %685 = vmatprep.subr.bf16.mxu0 %v636
        %686 = vmatpush1.bf16.msra.mxu0 %v635
        %687 = vmatprep.subr.bf16.mxu0 %v634
        %688 = vmatpush1.bf16.msra.mxu0 %v633
        %689 = vmatprep.subr.bf16.mxu0 %v632
        %690 = vmatpush1.bf16.msra.mxu0 %v631
        %691 = vmatprep.subr.bf16.mxu0 %v630
        %692 = vmatpush1.bf16.msra.mxu0 %v629
        %693 = vmatprep.subr.bf16.mxu0 %v628
        %694 = vmatpush1.bf16.msra.mxu0 %v627
        %695 = vmatprep.subr.bf16.mxu0 %v626
        %696 = vmatpush1.bf16.msra.mxu0 %v625
        %697 = vmatprep.subr.bf16.mxu0 %v624
        %698 = vmatpush1.bf16.msra.mxu0 %v623
        %699 = vmatprep.subr.bf16.mxu0 %v622
        %700 = vmatpush1.bf16.msra.mxu0 %v621
        %701 = vmatprep.subr.bf16.mxu0 %v652
        %702 = vmatpush2.bf16.msra.mxu0 %v651
        %703 = vmatprep.subr.bf16.mxu0 %v650
        %704 = vmatpush2.bf16.msra.mxu0 %v649
        %705 = vmatprep.subr.bf16.mxu0 %v648
        %706 = vmatpush2.bf16.msra.mxu0 %v647
        %707 = vmatprep.subr.bf16.mxu0 %v646
        %708 = vmatpush2.bf16.msra.mxu0 %v645
        %709 = vmatprep.subr.bf16.mxu0 %v644
        %710 = vmatpush2.bf16.msra.mxu0 %v643
        %711 = vmatprep.subr.bf16.mxu0 %v642
        %712 = vmatpush2.bf16.msra.mxu0 %v641
        %713 = vmatprep.subr.bf16.mxu0 %v640
        %714 = vmatpush2.bf16.msra.mxu0 %v639
        %715 = vmatprep.subr.bf16.mxu0 %v638
        %716 = vmatpush2.bf16.msra.mxu0 %v637
        %717 = vmatprep.mubr.bf16.mxu0 %v518
        %718 = vmatmul.mubr.bf16.gmra.mxu0 %v517
        %v719 = vpop.f32.mrf.mxu0
        %v720 = vadd.f32 0.0, %v719
        %v721 = vpop.f32.mrf.mxu0
        %v722 = vadd.f32 0.0, %v721
        %v723 = vpop.f32.mrf.mxu0
        %v724 = vadd.f32 0.0, %v723
        %v725 = vpop.f32.mrf.mxu0
        %v726 = vadd.f32 0.0, %v725
        %727 = vmatprep.mubr.bf16.mxu0 %v520
        %728 = vmatmul.mubr.bf16.gmra.mxu0 %v519
        %v729 = vpop.f32.mrf.mxu0
        %v730 = vadd.f32 0.0, %v729
        %v731 = vpop.f32.mrf.mxu0
        %v732 = vadd.f32 0.0, %v731
        %v733 = vpop.f32.mrf.mxu0
        %v734 = vadd.f32 0.0, %v733
        %v735 = vpop.f32.mrf.mxu0
        %v736 = vadd.f32 0.0, %v735
        %737 = vdwg.mxu0
        %v738 = vadd.f32 %v461, %v720
        %v739 = vadd.f32 %v462, %v722
        %v740 = vadd.f32 %v463, %v724
        %v741 = vadd.f32 %v464, %v726
        %v742 = vadd.f32 %v465, %v730
        %v743 = vadd.f32 %v466, %v732
        %v744 = vadd.f32 %v467, %v734
        %v745 = vadd.f32 %v468, %v736
        %746 = vst [vmem:[#allocation2] sm:$0xff] %v738
        %747 = vst [vmem:[#allocation2 + $0x8] sm:$0xff] %v739
        %748 = vst [vmem:[#allocation2 + $0x10] sm:$0xff] %v740
        %749 = vst [vmem:[#allocation2 + $0x18] sm:$0xff] %v741
        %750 = vst [vmem:[#allocation2 + $0x20] sm:$0xff] %v742
        %751 = vst [vmem:[#allocation2 + $0x28] sm:$0xff] %v743
        %752 = vst [vmem:[#allocation2 + $0x30] sm:$0xff] %v744
        %753 = vst [vmem:[#allocation2 + $0x38] sm:$0xff] %v745
        %p754 = scmp.eq.s32.totalorder %s21, 2
        // Predicated region
        $region113: #{closed_call.16} parent=99 // pred_check
          %p755 = pneg %p754
        $region114: #{closed_call.16} parent=99 // pred_check_branch
          %757 = sbr.rel (%p755) target = $region116
        $region115: #{closed_call.16} parent=99 // pred_region
          %v758 = vld [vmem:[#allocation2] sm:$0xff]
          %v759 = vld [vmem:[#allocation2 + $0x8] sm:$0xff]
          %v760 = vld [vmem:[#allocation2 + $0x10] sm:$0xff]
          %v761 = vld [vmem:[#allocation2 + $0x18] sm:$0xff]
          %v762 = vld [vmem:[#allocation2 + $0x20] sm:$0xff]
          %v763 = vld [vmem:[#allocation2 + $0x28] sm:$0xff]
          %v764 = vld [vmem:[#allocation2 + $0x30] sm:$0xff]
          %v765 = vld [vmem:[#allocation2 + $0x38] sm:$0xff]
          %v766 = vld [vmem:[%s445] sm:$0x3]
          %v768 = vlaneseq
          %v769 = vshrl.u32 %v768, 7
          %v770 = vsub.s32 0, %v769
          %v771 = vrot.slane %v766, %v770
          %v772 = vlaneseq
          %v773 = vshrl.u32 %v772, 7
          %v774 = vsub.s32 1, %v773
          %v775 = vrot.slane %v766, %v774
          %v778 = vadd.f32 %v758, %v771
          %v779 = vadd.f32 %v759, %v775
          %v780 = vadd.f32 %v760, %v771
          %v781 = vadd.f32 %v761, %v775
          %v782 = vadd.f32 %v762, %v771
          %v783 = vadd.f32 %v763, %v775
          %v784 = vadd.f32 %v764, %v771
          %v785 = vadd.f32 %v765, %v775
          %v786 = vpack.c.bf16 %v780, %v778
          %v787 = vpack.c.bf16 %v781, %v779
          %v788 = vpack.c.bf16 %v784, %v782
          %v789 = vpack.c.bf16 %v785, %v783
          %v794 = vunpack.c.l.b16 %v786
          %v795 = vunpack.c.l.b16 %v787
          %v796 = vunpack.c.h.b16 %v786
          %v797 = vunpack.c.h.b16 %v787
          %v798 = vunpack.c.l.b16 %v788
          %v799 = vunpack.c.l.b16 %v789
          %v800 = vunpack.c.h.b16 %v788
          %v801 = vunpack.c.h.b16 %v789
          %v802 = vpack.c.b16 %v795, %v794
          %v803 = vpack.c.b16 %v797, %v796
          %v804 = vpack.c.b16 %v799, %v798
          %v805 = vpack.c.b16 %v801, %v800
          %810 = vst [vmem:[%s437] sm:$0xff] %v802
          %811 = vst [vmem:[%s437 + $0x8] sm:$0xff] %v803
          %812 = vst [vmem:[%s437 + $0x10] sm:$0xff] %v804
          %813 = vst [vmem:[%s437 + $0x18] sm:$0xff] %v805
        $region116: #{closed_call.16} parent=99 // pred_fallthru
          _
        %s814 = sand.u32 %s125, 1
        %s815 = sand.u32 %s125, 1
        %s816 = smul.addr %s815, 32
        %s817 = scalar_lea.vmem [#allocation5], %s816
        // Predicated region
        $region117: #{closed_call.16} parent=99 // pred_check
          %p818 = pneg %p135
        $region118: #{closed_call.16} parent=99 // pred_check_branch
          %820 = sbr.rel (%p818) target = $region120
        $region119: #{closed_call.16} parent=99 // pred_region
          %s821 = smul.u32 4, %s19
          %s822 = smul.u32 2, %s20
          %s823 = smul.addr %s821, 18
          %s824 = sadd.s32 %s822, %s823
          %s825 = smul.addr %s824, 4
          %s826 = scalar_lea.vmem %s3, %s825
          // Predicated region
          $region121: #{closed_call.16} parent=119 // pred_check
            _
          $region122: #{closed_call.16} parent=119 // pred_check_branch
            %828 = sbr.rel (0) target = $region124
          $region123: #{closed_call.16} parent=119 // pred_region
            // Predicated region
            $region125: #{closed_call.16} parent=123 // pred_check
              _
            $region126: #{closed_call.16} parent=123 // pred_check_branch
              %830 = sbr.rel (0) target = $region128
            $region127: #{closed_call.16} parent=123 // pred_region
              // Predicated region
              $region140: #{closed_call.16} parent=127 // pred_check
                _
              $region141: #{closed_call.16} parent=127 // pred_check_branch
                %852 = sbr.rel (0) target = $region143
              $region142: #{closed_call.16} parent=127 // pred_region
                loop: start=0, step=1, limit=1
                $region144: #{closed_call.16} parent=142 // loop_pre_header
                  _
                $region145: #{closed_call.16} parent=142 // loop_header
                  %s854 = sphi 0, %s858
                  %p855 = scmp.ge.s32.totalorder %s854, 1
                  %s859 = sphi %s817, %s817
                  %s860 = sphi %s826, %s826
                $region146: #{closed_call.16} parent=142 // loop_header_branch
                  %857 = sbr.rel (%p855) target = $region150
                $region147: #{closed_call.16} parent=142 // loop_body
                  %v861 = vld [vmem:[%s859] sm:$0xff]
                  %862 = vst [vmem:[%s860] sm:$0xff] %v861
                  %v863 = vld [vmem:[%s859 + $0x8] sm:$0xff]
                  %864 = vst [vmem:[%s860 + $0x48] sm:$0xff] %v863
                  %v865 = vld [vmem:[%s859 + $0x10] sm:$0xff]
                  %866 = vst [vmem:[%s860 + $0x90] sm:$0xff] %v865
                  %v867 = vld [vmem:[%s859 + $0x18] sm:$0xff]
                  %868 = vst [vmem:[%s860 + $0xd8] sm:$0xff] %v867
                $region148: #{closed_call.16} parent=142 // loop_footer
                  %s858 = sadd.s32 1, %s854
                $region149: #{closed_call.16} parent=142 // loop_footer_branch
                  %853 = sbr.rel target = $region145
                $region150: #{closed_call.16} parent=142 // loop_exit
                  _
              $region143: #{closed_call.16} parent=127 // pred_fallthru
                _
              // Predicated region
              $region151: #{closed_call.16} parent=127 // pred_check
                _
              $region152: #{closed_call.16} parent=127 // pred_check_branch
                %870 = sbr.rel target = $region154
              $region153: #{closed_call.16} parent=127 // pred_region
                _
              $region154: #{closed_call.16} parent=127 // pred_fallthru
                _
            $region128: #{closed_call.16} parent=123 // pred_fallthru
              _
            // Predicated region
            $region129: #{closed_call.16} parent=123 // pred_check
              _
            $region130: #{closed_call.16} parent=123 // pred_check_branch
              %832 = sbr.rel target = $region132
            $region131: #{closed_call.16} parent=123 // pred_region
              %s834 = ssub.s32 256, 1
              loop: start=0, step=1, limit=1
              $region133: #{closed_call.16} parent=131 // loop_pre_header
                _
              $region134: #{closed_call.16} parent=131 // loop_header
                %s836 = sphi 0, %s840
                %p837 = scmp.ge.s32.totalorder %s836, 1
                %s841 = sphi %s817, %s817
                %s842 = sphi %s826, %s826
              $region135: #{closed_call.16} parent=131 // loop_header_branch
                %839 = sbr.rel (%p837) target = $region139
              $region136: #{closed_call.16} parent=131 // loop_body
                %v843 = vld [vmem:[%s841] sm:%s834]
                %844 = vst [vmem:[%s842] sm:%s834] %v843
                %v845 = vld [vmem:[%s841 + $0x8] sm:%s834]
                %846 = vst [vmem:[%s842 + $0x48] sm:%s834] %v845
                %v847 = vld [vmem:[%s841 + $0x10] sm:%s834]
                %848 = vst [vmem:[%s842 + $0x90] sm:%s834] %v847
                %v849 = vld [vmem:[%s841 + $0x18] sm:%s834]
                %850 = vst [vmem:[%s842 + $0xd8] sm:%s834] %v849
              $region137: #{closed_call.16} parent=131 // loop_footer
                %s840 = sadd.s32 1, %s836
              $region138: #{closed_call.16} parent=131 // loop_footer_branch
                %835 = sbr.rel target = $region134
              $region139: #{closed_call.16} parent=131 // loop_exit
                _
            $region132: #{closed_call.16} parent=123 // pred_fallthru
              _
          $region124: #{closed_call.16} parent=119 // pred_fallthru
            _
          %871 = vnop
        $region120: #{closed_call.16} parent=99 // pred_fallthru
          _
      $region100: #{closed_call.16} parent=5 // pred_fallthru
        _
      %p872 = scmp.le.s32.totalorder 2, %s9
      // Predicated region
      $region155: #{closed_call.16} parent=5 // pred_check
        %p873 = pneg %p872
      $region156: #{closed_call.16} parent=5 // pred_check_branch
        %875 = sbr.rel (%p873) target = $region158
      $region157: #{closed_call.16} parent=5 // pred_region
        %s876 = ssub.s32 %s9, 2
        // Predicated region
        $region159: #{closed_call.16} parent=157 // pred_check
          %p877 = pneg %p141
        $region160: #{closed_call.16} parent=157 // pred_check_branch
          %879 = sbr.rel (%p877) target = $region162
        $region161: #{closed_call.16} parent=157 // pred_region
          %s880 = sand.u32 %s126, 1
          %s881 = sand.u32 %s126, 1
          %s882 = smul.addr %s881, 32
          %s883 = scalar_lea.vmem [#allocation5], %s882
        $region162: #{closed_call.16} parent=157 // pred_fallthru
          _
      $region158: #{closed_call.16} parent=5 // pred_fallthru
        _
    $region6: #{closed_call.16} parent=1 // loop_footer
      %s13 = sadd.s32 1, %s9
    $region7: #{closed_call.16} parent=1 // loop_footer_branch
      %8 = sbr.rel target = $region3
    $region8: #{closed_call.16} parent=1 // loop_exit
      _

// kernel: closed_call.17
$region0: #{closed_call.17}
  #allocation0 [shape = 'u32[]', space=smem, size = 0x4, offset = 0x4, fixed_abs, tag = 'smem constant byte address 0x4 - core index']
  #allocation1 [shape = 'u32[144,128]{1,0:T(1,128)}', space=vmem, size = 0x12000, scoped, tag = 'internal scratch']
  %s0 = inlined_call_operand.vmem [shape: bf16[2,12,16,64], index: 0, kind: input, shape index: {}]
  %s1 = inlined_call_operand.vmem [shape: bf16[2,12,16,64], index: 1, kind: input, shape index: {}]
  %s2 = inlined_call_operand.vmem [shape: bf16[2,12,16,64], index: 2, kind: input, shape index: {}]
  %s3 = inlined_call_operand.vmem [shape: f32[2,1,16], index: 3, kind: input, shape index: {}]
  %s4 = inlined_call_operand.vmem [shape: bf16[2,12,16,64], index: 4, kind: output, shape index: {}]
  %s5 = sld [smem:[#allocation0]]
  $region49: #{closed_call.17} parent=0
    _
  %s7 = ssub.s32 1, %s5
  %s8 = scalar_select 0, %s7, %s5
  loop: start=0, step=1, limit=26
  $region2: #{closed_call.17} parent=0 // loop_pre_header
    _
  $region3: #{closed_call.17} parent=0 // loop_header
    %s10 = sphi 0, %s14
    %p11 = scmp.ge.s32.totalorder %s10, 26
    %s17 = sphi 0, %s29
    %s18 = sphi 0, %s25
    %s19 = sphi 0, %s17
    %s20 = sphi 0, %s18
    %s21 = sphi 0, %s19
    %s22 = sphi 0, %s20
    %s34 = sphi 0, %s36
    %s37 = sphi 0, %s34
    %s38 = sphi 0, %s37
    %s54 = sphi 0, %s38
    %s62 = sphi 0, %s64
    %s65 = sphi 0, %s62
    %s66 = sphi 0, %s65
    %s82 = sphi 0, %s66
    %s90 = sphi 0, %s92
    %s93 = sphi 0, %s90
    %s94 = sphi 0, %s93
    %s110 = sphi 0, %s94
    %s116 = sphi 0, %s118
    %s119 = sphi 0, %s116
    %s120 = sphi 0, %s119
    %s136 = sphi 0, %s120
    %s144 = sphi 0, %s146
    %s147 = sphi 0, %s144
    %s148 = sphi 0, %s147
    %s164 = sphi 0, %s148
  $region4: #{closed_call.17} parent=0 // loop_header_branch
    %13 = sbr.rel (%p11) target = $region8
  $region5: #{closed_call.17} parent=0 // loop_body
    %s15 = ssub.s32 %s10, 1
    %s16 = ssub.s32 %s10, 2
    %s23 = sadd.s32 1, %s18
    %p24 = scmp.ge.s32.totalorder %s23, 12
    %s25 = scalar_select %p24, 0, %s23
    %s26 = sadd.s32 1, %s17
    %s27 = scalar_select %p24, %s26, %s17
    %p28 = scmp.ge.s32.totalorder %s27, 2
    %s29 = scalar_select %p28, 0, %s27
    %s30 = ssub.s32 %s17, %s29
    %s31 = ssub.s32 %s18, %s25
    %s32 = sor.u32 %s30, %s31
    %p33 = scmp.eq.s32.totalorder %s32, 0
    %s35 = sadd.s32 %s34, 1
    %s36 = scalar_select %p33, %s34, %s35
    %p39 = pneg %p33
    %p40 = scmp.eq.s32.totalorder %s10, 23
    %p41 = por %p39, %p40
    %p42 = scmp.ne.s32.totalorder %s34, %s37
    %p43 = scmp.eq.s32.totalorder %s10, 0
    %p44 = por %p42, %p43
    %p45 = scmp.ne.s32.totalorder %s34, %s37
    %p46 = scmp.eq.s32.totalorder %s15, 23
    %p47 = por %p45, %p46
    %p48 = scmp.ne.s32.totalorder %s37, %s38
    %p49 = scmp.eq.s32.totalorder %s15, 0
    %p50 = por %p48, %p49
    %p51 = scmp.ne.s32.totalorder %s37, %s38
    %p52 = scmp.eq.s32.totalorder %s16, 23
    %p53 = por %p51, %p52
    %p55 = scmp.ne.s32.totalorder %s38, %s54
    %p56 = scmp.eq.s32.totalorder %s16, 0
    %p57 = por %p55, %p56
    %s58 = ssub.s32 %s17, %s29
    %s59 = ssub.s32 %s18, %s25
    %s60 = sor.u32 %s58, %s59
    %p61 = scmp.eq.s32.totalorder %s60, 0
    %s63 = sadd.s32 %s62, 1
    %s64 = scalar_select %p61, %s62, %s63
    %p67 = pneg %p61
    %p68 = scmp.eq.s32.totalorder %s10, 23
    %p69 = por %p67, %p68
    %p70 = scmp.ne.s32.totalorder %s62, %s65
    %p71 = scmp.eq.s32.totalorder %s10, 0
    %p72 = por %p70, %p71
    %p73 = scmp.ne.s32.totalorder %s62, %s65
    %p74 = scmp.eq.s32.totalorder %s15, 23
    %p75 = por %p73, %p74
    %p76 = scmp.ne.s32.totalorder %s65, %s66
    %p77 = scmp.eq.s32.totalorder %s15, 0
    %p78 = por %p76, %p77
    %p79 = scmp.ne.s32.totalorder %s65, %s66
    %p80 = scmp.eq.s32.totalorder %s16, 23
    %p81 = por %p79, %p80
    %p83 = scmp.ne.s32.totalorder %s66, %s82
    %p84 = scmp.eq.s32.totalorder %s16, 0
    %p85 = por %p83, %p84
    %s86 = ssub.s32 %s17, %s29
    %s87 = ssub.s32 %s18, %s25
    %s88 = sor.u32 %s86, %s87
    %p89 = scmp.eq.s32.totalorder %s88, 0
    %s91 = sadd.s32 %s90, 1
    %s92 = scalar_select %p89, %s90, %s91
    %p95 = pneg %p89
    %p96 = scmp.eq.s32.totalorder %s10, 23
    %p97 = por %p95, %p96
    %p98 = scmp.ne.s32.totalorder %s90, %s93
    %p99 = scmp.eq.s32.totalorder %s10, 0
    %p100 = por %p98, %p99
    %p101 = scmp.ne.s32.totalorder %s90, %s93
    %p102 = scmp.eq.s32.totalorder %s15, 23
    %p103 = por %p101, %p102
    %p104 = scmp.ne.s32.totalorder %s93, %s94
    %p105 = scmp.eq.s32.totalorder %s15, 0
    %p106 = por %p104, %p105
    %p107 = scmp.ne.s32.totalorder %s93, %s94
    %p108 = scmp.eq.s32.totalorder %s16, 23
    %p109 = por %p107, %p108
    %p111 = scmp.ne.s32.totalorder %s94, %s110
    %p112 = scmp.eq.s32.totalorder %s16, 0
    %p113 = por %p111, %p112
    %s114 = ssub.s32 %s17, %s29
    %p115 = scmp.eq.s32.totalorder %s114, 0
    %s117 = sadd.s32 %s116, 1
    %s118 = scalar_select %p115, %s116, %s117
    %p121 = pneg %p115
    %p122 = scmp.eq.s32.totalorder %s10, 23
    %p123 = por %p121, %p122
    %p124 = scmp.ne.s32.totalorder %s116, %s119
    %p125 = scmp.eq.s32.totalorder %s10, 0
    %p126 = por %p124, %p125
    %p127 = scmp.ne.s32.totalorder %s116, %s119
    %p128 = scmp.eq.s32.totalorder %s15, 23
    %p129 = por %p127, %p128
    %p130 = scmp.ne.s32.totalorder %s119, %s120
    %p131 = scmp.eq.s32.totalorder %s15, 0
    %p132 = por %p130, %p131
    %p133 = scmp.ne.s32.totalorder %s119, %s120
    %p134 = scmp.eq.s32.totalorder %s16, 23
    %p135 = por %p133, %p134
    %p137 = scmp.ne.s32.totalorder %s120, %s136
    %p138 = scmp.eq.s32.totalorder %s16, 0
    %p139 = por %p137, %p138
    %s140 = ssub.s32 %s17, %s29
    %s141 = ssub.s32 %s18, %s25
    %s142 = sor.u32 %s140, %s141
    %p143 = scmp.eq.s32.totalorder %s142, 0
    %s145 = sadd.s32 %s144, 1
    %s146 = scalar_select %p143, %s144, %s145
    %p149 = pneg %p143
    %p150 = scmp.eq.s32.totalorder %s10, 23
    %p151 = por %p149, %p150
    %p152 = scmp.ne.s32.totalorder %s144, %s147
    %p153 = scmp.eq.s32.totalorder %s10, 0
    %p154 = por %p152, %p153
    %p155 = scmp.ne.s32.totalorder %s144, %s147
    %p156 = scmp.eq.s32.totalorder %s15, 23
    %p157 = por %p155, %p156
    %p158 = scmp.ne.s32.totalorder %s147, %s148
    %p159 = scmp.eq.s32.totalorder %s15, 0
    %p160 = por %p158, %p159
    %p161 = scmp.ne.s32.totalorder %s147, %s148
    %p162 = scmp.eq.s32.totalorder %s16, 23
    %p163 = por %p161, %p162
    %p165 = scmp.ne.s32.totalorder %s148, %s164
    %p166 = scmp.eq.s32.totalorder %s16, 0
    %p167 = por %p165, %p166
    %p168 = scmp.le.s32.totalorder 1, %s10
    %p169 = scmp.lt.s32.totalorder %s10, 25
    %p170 = pnand %p168, %p169
    %p171 = pneg %p170
    // Predicated region
    $region9: #{closed_call.17} parent=5 // pred_check
      _
    $region10: #{closed_call.17} parent=5 // pred_check_branch
      %173 = sbr.rel (%p170) target = $region12
    $region11: #{closed_call.17} parent=5 // pred_region
      %s174 = ssub.s32 %s10, 1
    $region12: #{closed_call.17} parent=5 // pred_fallthru
      _
    %p175 = scmp.lt.s32.totalorder %s10, 24
    // Predicated region
    $region13: #{closed_call.17} parent=5 // pred_check
      %p176 = pneg %p175
    $region14: #{closed_call.17} parent=5 // pred_check_branch
      %178 = sbr.rel (%p176) target = $region16
    $region15: #{closed_call.17} parent=5 // pred_region
      // Predicated region
      $region17: #{closed_call.17} parent=15 // pred_check
        %p179 = pneg %p44
      $region18: #{closed_call.17} parent=15 // pred_check_branch
        %181 = sbr.rel (%p179) target = $region20
      $region19: #{closed_call.17} parent=15 // pred_region
        %p182 = scmp.lt.s32.totalorder %s17, 1
        %s183 = scalar_select %p182, %s17, 1
        %p184 = scmp.lt.s32.totalorder %s18, 11
        %s185 = scalar_select %p184, %s18, 11
        %s186 = smul.addr %s185, 2
        %s187 = smul.addr %s183, 24
        %s188 = sadd.s32 %s186, %s187
        %s189 = smul.addr %s188, 4
        %s190 = scalar_lea.vmem %s0, %s189
      $region20: #{closed_call.17} parent=15 // pred_fallthru
        _
      // Predicated region
      $region21: #{closed_call.17} parent=15 // pred_check
        %p191 = pneg %p72
      $region22: #{closed_call.17} parent=15 // pred_check_branch
        %193 = sbr.rel (%p191) target = $region24
      $region23: #{closed_call.17} parent=15 // pred_region
        %p194 = scmp.lt.s32.totalorder %s17, 1
        %s195 = scalar_select %p194, %s17, 1
        %p196 = scmp.lt.s32.totalorder %s18, 11
        %s197 = scalar_select %p196, %s18, 11
        %s198 = smul.addr %s197, 2
        %s199 = smul.addr %s195, 24
        %s200 = sadd.s32 %s198, %s199
        %s201 = smul.addr %s200, 4
        %s202 = scalar_lea.vmem %s1, %s201
      $region24: #{closed_call.17} parent=15 // pred_fallthru
        _
      // Predicated region
      $region25: #{closed_call.17} parent=15 // pred_check
        %p203 = pneg %p100
      $region26: #{closed_call.17} parent=15 // pred_check_branch
        %205 = sbr.rel (%p203) target = $region28
      $region27: #{closed_call.17} parent=15 // pred_region
        %p206 = scmp.lt.s32.totalorder %s17, 1
        %s207 = scalar_select %p206, %s17, 1
        %p208 = scmp.lt.s32.totalorder %s18, 11
        %s209 = scalar_select %p208, %s18, 11
        %s210 = smul.addr %s209, 2
        %s211 = smul.addr %s207, 24
        %s212 = sadd.s32 %s210, %s211
        %s213 = smul.addr %s212, 4
        %s214 = scalar_lea.vmem %s2, %s213
      $region28: #{closed_call.17} parent=15 // pred_fallthru
        _
      // Predicated region
      $region29: #{closed_call.17} parent=15 // pred_check
        %p215 = pneg %p126
      $region30: #{closed_call.17} parent=15 // pred_check_branch
        %217 = sbr.rel (%p215) target = $region32
      $region31: #{closed_call.17} parent=15 // pred_region
        %p218 = scmp.lt.s32.totalorder %s17, 1
        %s219 = scalar_select %p218, %s17, 1
        %s220 = scalar_lea.vmem %s3, %s219
      $region32: #{closed_call.17} parent=15 // pred_fallthru
        _
    $region16: #{closed_call.17} parent=5 // pred_fallthru
      _
    %p221 = scmp.le.s32.totalorder 1, %s10
    %p222 = scmp.lt.s32.totalorder %s10, 25
    %p223 = pnand %p221, %p222
    %p224 = pneg %p223
    // Predicated region
    $region33: #{closed_call.17} parent=5 // pred_check
      _
    $region34: #{closed_call.17} parent=5 // pred_check_branch
      %226 = sbr.rel (%p223) target = $region36
    $region35: #{closed_call.17} parent=5 // pred_region
      %s227 = ssub.s32 %s10, 1
      %p228 = scmp.lt.s32.totalorder %s19, 1
      %s229 = scalar_select %p228, %s19, 1
      %p230 = scmp.lt.s32.totalorder %s20, 11
      %s231 = scalar_select %p230, %s20, 11
      %s232 = smul.addr %s231, 2
      %s233 = smul.addr %s229, 24
      %s234 = sadd.s32 %s232, %s233
      %s235 = smul.addr %s234, 4
      %s236 = scalar_lea.vmem %s0, %s235
      %p237 = pneg %p50
      %p238 = pneg %p47
      %p239 = scmp.lt.s32.totalorder %s19, 1
      %s240 = scalar_select %p239, %s19, 1
      %p241 = scmp.lt.s32.totalorder %s20, 11
      %s242 = scalar_select %p241, %s20, 11
      %s243 = smul.addr %s242, 2
      %s244 = smul.addr %s240, 24
      %s245 = sadd.s32 %s243, %s244
      %s246 = smul.addr %s245, 4
      %s247 = scalar_lea.vmem %s1, %s246
      %p248 = pneg %p78
      %p249 = pneg %p75
      %p250 = scmp.lt.s32.totalorder %s19, 1
      %s251 = scalar_select %p250, %s19, 1
      %p252 = scmp.lt.s32.totalorder %s20, 11
      %s253 = scalar_select %p252, %s20, 11
      %s254 = smul.addr %s253, 2
      %s255 = smul.addr %s251, 24
      %s256 = sadd.s32 %s254, %s255
      %s257 = smul.addr %s256, 4
      %s258 = scalar_lea.vmem %s2, %s257
      %p259 = pneg %p106
      %p260 = pneg %p103
      %p261 = scmp.lt.s32.totalorder %s19, 1
      %s262 = scalar_select %p261, %s19, 1
      %s263 = scalar_lea.vmem %s3, %s262
      %p264 = pneg %p132
      %p265 = pneg %p129
      %p266 = pneg %p160
      %p267 = pneg %p157
      %p268 = scmp.lt.s32.totalorder %s19, 1
      %s269 = scalar_select %p268, %s19, 1
      %p270 = scmp.lt.s32.totalorder %s20, 11
      %s271 = scalar_select %p270, %s20, 11
      %s272 = smul.addr %s271, 2
      %s273 = smul.addr %s269, 24
      %s274 = sadd.s32 %s272, %s273
      %s275 = smul.addr %s274, 4
      %s276 = scalar_lea.vmem %s4, %s275
      %p277 = scmp.lt.s32.totalorder %s19, 1
      %s278 = scalar_select %p277, %s19, 1
      %p279 = scmp.lt.s32.totalorder %s20, 11
      %s280 = scalar_select %p279, %s20, 11
      %s281 = smul.addr %s280, 2
      %s282 = smul.addr %s278, 24
      %s283 = sadd.s32 %s281, %s282
      %s284 = smul.addr %s283, 4
      %s285 = scalar_lea.vmem %s0, %s284
      %p286 = scmp.lt.s32.totalorder %s19, 1
      %s287 = scalar_select %p286, %s19, 1
      %p288 = scmp.lt.s32.totalorder %s20, 11
      %s289 = scalar_select %p288, %s20, 11
      %s290 = smul.addr %s289, 2
      %s291 = smul.addr %s287, 24
      %s292 = sadd.s32 %s290, %s291
      %s293 = smul.addr %s292, 4
      %s294 = scalar_lea.vmem %s1, %s293
      %p295 = scmp.lt.s32.totalorder %s19, 1
      %s296 = scalar_select %p295, %s19, 1
      %p297 = scmp.lt.s32.totalorder %s20, 11
      %s298 = scalar_select %p297, %s20, 11
      %s299 = smul.addr %s298, 2
      %s300 = smul.addr %s296, 24
      %s301 = sadd.s32 %s299, %s300
      %s302 = smul.addr %s301, 4
      %s303 = scalar_lea.vmem %s2, %s302
      %p304 = scmp.lt.s32.totalorder %s19, 1
      %s305 = scalar_select %p304, %s19, 1
      %s306 = scalar_lea.vmem %s3, %s305
      %p307 = scmp.lt.s32.totalorder %s19, 1
      %s308 = scalar_select %p307, %s19, 1
      %p309 = scmp.lt.s32.totalorder %s20, 11
      %s310 = scalar_select %p309, %s20, 11
      %s311 = smul.addr %s310, 2
      %s312 = smul.addr %s308, 24
      %s313 = sadd.s32 %s311, %s312
      %s314 = smul.addr %s313, 4
      %s315 = scalar_lea.vmem %s4, %s314
      %v317 = vld [vmem:[%s285] sm:$0xf]
      %v318 = vld [vmem:[%s285 + $0x4] sm:$0xf]
      %v319 = vld [vmem:[%s294] sm:$0xf]
      %v320 = vld [vmem:[%s294 + $0x4] sm:$0xf]
      %v321 = vld [vmem:[%s303] sm:$0xf]
      %v322 = vld [vmem:[%s303 + $0x4] sm:$0xf]
      %v325 = vunpack.c.l.b16 %v317
      %v326 = vunpack.c.l.b16 %v318
      %v327 = vpack.c.b16 %v326, %v325
      %v330 = vunpack.c.l.b16 %v319
      %v331 = vunpack.c.l.b16 %v320
      %v332 = vpack.c.b16 %v331, %v330
      %vm333 = vcmask 523264
      %v335 = vsel %vm333, %v327, 0
      %v338 = vsel %vm333, %v332, 0
      %340 = vmatprep.subr.bf16.mxu0 0
      %341 = vmatpush1.bf16.xpose.msra.mxu0 0
      %342 = vmatprep.subr.bf16.mxu0 0
      %343 = vmatpush1.bf16.xpose.msra.mxu0 0
      %344 = vmatprep.subr.bf16.mxu0 0
      %345 = vmatpush1.bf16.xpose.msra.mxu0 0
      %346 = vmatprep.subr.bf16.mxu0 0
      %347 = vmatpush1.bf16.xpose.msra.mxu0 0
      %348 = vmatprep.subr.bf16.mxu0 0
      %349 = vmatpush1.bf16.xpose.msra.mxu0 0
      %350 = vmatprep.subr.bf16.mxu0 0
      %351 = vmatpush1.bf16.xpose.msra.mxu0 0
      %352 = vmatprep.subr.bf16.mxu0 0
      %353 = vmatpush1.bf16.xpose.msra.mxu0 0
      %354 = vmatprep.subr.bf16.mxu0 0
      %355 = vmatpush1.bf16.xpose.msra.mxu0 %v338
      %356 = vmatprep.subr.bf16.mxu0 0
      %357 = vmatpush2.bf16.xpose.msra.mxu0 0
      %358 = vmatprep.subr.bf16.mxu0 0
      %359 = vmatpush2.bf16.xpose.msra.mxu0 0
      %360 = vmatprep.subr.bf16.mxu0 0
      %361 = vmatpush2.bf16.xpose.msra.mxu0 0
      %362 = vmatprep.subr.bf16.mxu0 0
      %363 = vmatpush2.bf16.xpose.msra.mxu0 0
      %364 = vmatprep.subr.bf16.mxu0 0
      %365 = vmatpush2.bf16.xpose.msra.mxu0 0
      %366 = vmatprep.subr.bf16.mxu0 0
      %367 = vmatpush2.bf16.xpose.msra.mxu0 0
      %368 = vmatprep.subr.bf16.mxu0 0
      %369 = vmatpush2.bf16.xpose.msra.mxu0 0
      %370 = vmatprep.subr.bf16.mxu0 0
      %371 = vmatpush2.bf16.xpose.msra.mxu0 0
      %372 = vmatprep.mubr.bf16.mxu0 0
      %373 = vmatmul.mubr.bf16.gmra.mxu0 %v335
      %v374 = vpop.f32.mrf.mxu0
      %v375 = vadd.f32 0.0, %v374
      %v376 = vpop.f32.mrf.mxu0
      %v377 = vpop.f32.mrf.mxu0
      %v378 = vadd.f32 0.0, %v377
      %v379 = vpop.f32.mrf.mxu0
      %380 = vdwg.mxu0
      %v381 = vmul.f32 %v375, 0.125
      %v382 = vmul.f32 %v378, 0.125
      %v383 = vld [vmem:[%s306] sm:$0x1]
      %v385 = vlaneseq
      %v386 = vshrl.u32 %v385, 7
      %v387 = vsub.s32 0, %v386
      %v388 = vrot.slane %v383, %v387
      %v390 = vadd.f32 %v381, %v388
      %v391 = vadd.f32 %v382, %v388
      %vm392 = vcmask 130048
      %v393 = vsel %vm392, %v390, -inf
      %394 = vmax.xlane.f32.xlu0 %v393
      %v395 = vpop.xlane.xlu0 %394
      %v396 = vsel %vm392, %v391, -inf
      %397 = vmax.xlane.f32.xlu0 %v396
      %v398 = vpop.xlane.xlu0 %397
      %v399 = vsub.f32 %v390, %v395
      %v400 = vsub.f32 %v391, %v398
      %v401 = vmul.f32 %v399, 1.442695
      %v402 = vpow.pop %v401
      %v403 = vmul.f32 %v400, 1.442695
      %v404 = vpow.pop %v403
      %v405 = vsel %vm392, %v402, 0.0
      %406 = vadd.xlane.f32.xlu0 %v405
      %v407 = vpop.xlane.xlu0 %406
      %v408 = vsel %vm392, %v404, 0.0
      %409 = vadd.xlane.f32.xlu0 %v408
      %v410 = vpop.xlane.xlu0 %409
      %v411 = vpack.c.bf16 %v404, %v402
      %v414 = vunpack.c.l.b16 %v321
      %v415 = vunpack.c.l.b16 %v322
      %v416 = vpack.c.b16 %v415, %v414
      %v419 = vsel %vm392, %v411, 0
      %421 = vmatprep.subr.bf16.mxu0 0
      %422 = vmatpush1.bf16.msra.mxu0 0
      %423 = vmatprep.subr.bf16.mxu0 0
      %424 = vmatpush1.bf16.msra.mxu0 0
      %425 = vmatprep.subr.bf16.mxu0 0
      %426 = vmatpush1.bf16.msra.mxu0 0
      %427 = vmatprep.subr.bf16.mxu0 0
      %428 = vmatpush1.bf16.msra.mxu0 0
      %429 = vmatprep.subr.bf16.mxu0 0
      %430 = vmatpush1.bf16.msra.mxu0 0
      %431 = vmatprep.subr.bf16.mxu0 0
      %432 = vmatpush1.bf16.msra.mxu0 0
      %433 = vmatprep.subr.bf16.mxu0 0
      %434 = vmatpush1.bf16.msra.mxu0 0
      %435 = vmatprep.subr.bf16.mxu0 0
      %436 = vmatpush1.bf16.msra.mxu0 %v416
      %437 = vmatprep.subr.bf16.mxu0 0
      %438 = vmatpush2.bf16.msra.mxu0 0
      %439 = vmatprep.subr.bf16.mxu0 0
      %440 = vmatpush2.bf16.msra.mxu0 0
      %441 = vmatprep.subr.bf16.mxu0 0
      %442 = vmatpush2.bf16.msra.mxu0 0
      %443 = vmatprep.subr.bf16.mxu0 0
      %444 = vmatpush2.bf16.msra.mxu0 0
      %445 = vmatprep.subr.bf16.mxu0 0
      %446 = vmatpush2.bf16.msra.mxu0 0
      %447 = vmatprep.subr.bf16.mxu0 0
      %448 = vmatpush2.bf16.msra.mxu0 0
      %449 = vmatprep.subr.bf16.mxu0 0
      %450 = vmatpush2.bf16.msra.mxu0 0
      %451 = vmatprep.subr.bf16.mxu0 0
      %452 = vmatpush2.bf16.msra.mxu0 0
      %453 = vmatprep.mubr.bf16.mxu0 0
      %454 = vmatmul.mubr.bf16.gmra.mxu0 %v419
      %v455 = vpop.f32.mrf.mxu0
      %v456 = vadd.f32 0.0, %v455
      %v457 = vpop.f32.mrf.mxu0
      %v458 = vpop.f32.mrf.mxu0
      %v459 = vadd.f32 0.0, %v458
      %v460 = vpop.f32.mrf.mxu0
      %461 = vdwg.mxu0
      %v462 = vrcp.pop %v407
      %v463 = vrcp.pop %v410
      %v464 = vmul.f32 %v456, %v462
      %v465 = vmul.f32 %v459, %v463
      %v466 = vpack.c.bf16 %v465, %v464
      %v468 = vunpack.c.l.b16 %v466
      %v469 = vunpack.c.h.b16 %v466
      %v470 = vpack.c.b16 %v468, %v468
      %v471 = vpack.c.b16 %v469, %v469
      %vm474 = vcmask 519168
      %475 = vst.msk [vmem:[%s315] sm:$0xf] %vm474, %v470
      %476 = vst.msk [vmem:[%s315 + $0x4] sm:$0xf] %vm474, %v471
      %p477 = scmp.lt.s32.totalorder %s19, 1
      %s478 = scalar_select %p477, %s19, 1
      %p479 = scmp.lt.s32.totalorder %s20, 11
      %s480 = scalar_select %p479, %s20, 11
      %s481 = smul.addr %s480, 2
      %s482 = smul.addr %s478, 24
      %s483 = sadd.s32 %s481, %s482
      %s484 = smul.addr %s483, 4
      %s485 = scalar_lea.vmem %s4, %s484
      // Predicated region
      $region37: #{closed_call.17} parent=35 // pred_check
        %p486 = pneg %p157
      $region38: #{closed_call.17} parent=35 // pred_check_branch
        %488 = sbr.rel (%p486) target = $region40
      $region39: #{closed_call.17} parent=35 // pred_region
        _
      $region40: #{closed_call.17} parent=35 // pred_fallthru
        _
    $region36: #{closed_call.17} parent=5 // pred_fallthru
      _
    %p489 = scmp.le.s32.totalorder 2, %s10
    // Predicated region
    $region41: #{closed_call.17} parent=5 // pred_check
      %p490 = pneg %p489
    $region42: #{closed_call.17} parent=5 // pred_check_branch
      %492 = sbr.rel (%p490) target = $region44
    $region43: #{closed_call.17} parent=5 // pred_region
      %s493 = ssub.s32 %s10, 2
      // Predicated region
      $region45: #{closed_call.17} parent=43 // pred_check
        %p494 = pneg %p163
      $region46: #{closed_call.17} parent=43 // pred_check_branch
        %496 = sbr.rel (%p494) target = $region48
      $region47: #{closed_call.17} parent=43 // pred_region
        %p497 = scmp.lt.s32.totalorder %s21, 1
        %s498 = scalar_select %p497, %s21, 1
        %p499 = scmp.lt.s32.totalorder %s22, 11
        %s500 = scalar_select %p499, %s22, 11
        %s501 = smul.addr %s500, 2
        %s502 = smul.addr %s498, 24
        %s503 = sadd.s32 %s501, %s502
        %s504 = smul.addr %s503, 4
        %s505 = scalar_lea.vmem %s4, %s504
      $region48: #{closed_call.17} parent=43 // pred_fallthru
        _
    $region44: #{closed_call.17} parent=5 // pred_fallthru
      _
  $region6: #{closed_call.17} parent=0 // loop_footer
    %s14 = sadd.s32 1, %s10
  $region7: #{closed_call.17} parent=0 // loop_footer_branch
    %9 = sbr.rel target = $region3
  $region8: #{closed_call.17} parent=0 // loop_exit
    _

// kernel: closed_call.18
$region0: #{closed_call.18}
  #allocation0 [shape = 'u32[]', space=smem, size = 0x4, offset = 0x4, fixed_abs, tag = 'smem constant byte address 0x4 - core index']
  #allocation1 [shape = 'u32[144,128]{1,0:T(1,128)}', space=vmem, size = 0x12000, scoped, tag = 'internal scratch']
  #allocation2 [shape = 'f32[32,768]{1,0:T(8,128)}', space=vmem, size = 0x18000, scoped, tag = 'scratch operand']
  %s0 = inlined_call_operand.vmem [shape: bf16[32,768], index: 0, kind: input, shape index: {}]
  %s1 = inlined_call_operand.vmem [shape: bf16[768,768], index: 1, kind: input, shape index: {}]
  %s2 = inlined_call_operand.vmem [shape: f32[1,768], index: 2, kind: input, shape index: {}]
  %s3 = inlined_call_operand.vmem [shape: bf16[32,768], index: 3, kind: input, shape index: {}]
  %s4 = inlined_call_operand.vmem [shape: f32[1,768], index: 4, kind: input, shape index: {}]
  %s5 = inlined_call_operand.vmem [shape: f32[1,768], index: 5, kind: input, shape index: {}]
  %s6 = inlined_call_operand.vmem [shape: bf16[32,768], index: 6, kind: output, shape index: {}]
  %s7 = sld [smem:[#allocation0]]
  $region103: #{closed_call.18} parent=0
    _
  %s9 = ssub.s32 1, %s7
  %s10 = scalar_select 0, %s9, %s7
  $region1: #{closed_call.18} parent=0
    #allocation3 [shape = 'u8[32768]{0}', space=vmem, size = 0x8000, scoped, tag = 'input window, operand 0']
    loop: start=0, step=1, limit=5
    $region2: #{closed_call.18} parent=1 // loop_pre_header
      _
    $region3: #{closed_call.18} parent=1 // loop_header
      %s12 = sphi 0, %s16
      %p13 = scmp.ge.s32.totalorder %s12, 5
      %s19 = sphi 0, %s31
      %s20 = sphi 0, %s27
      %s21 = sphi 0, %s19
      %s22 = sphi 0, %s20
      %s23 = sphi 0, %s21
      %s24 = sphi 0, %s22
      %s36 = sphi 0, %s38
      %s39 = sphi 0, %s36
      %s40 = sphi 0, %s39
      %s56 = sphi 0, %s40
      %s62 = sphi 0, %s64
      %s65 = sphi 0, %s62
      %s66 = sphi 0, %s65
      %s82 = sphi 0, %s66
      %s86 = sphi 0, %s86
      %s88 = sphi 0, %s86
      %s89 = sphi 0, %s88
      %s103 = sphi 0, %s89
      %s109 = sphi 0, %s111
      %s112 = sphi 0, %s109
      %s113 = sphi 0, %s112
      %s129 = sphi 0, %s113
      %s133 = sphi 0, %s133
      %s135 = sphi 0, %s133
      %s136 = sphi 0, %s135
      %s150 = sphi 0, %s136
      %s154 = sphi 0, %s154
      %s156 = sphi 0, %s154
      %s157 = sphi 0, %s156
      %s171 = sphi 0, %s157
      %s177 = sphi 0, %s179
      %s180 = sphi 0, %s177
      %s181 = sphi 0, %s180
      %s197 = sphi 0, %s181
    $region4: #{closed_call.18} parent=1 // loop_header_branch
      %15 = sbr.rel (%p13) target = $region8
    $region5: #{closed_call.18} parent=1 // loop_body
      %s17 = ssub.s32 %s12, 1
      %s18 = ssub.s32 %s12, 2
      %s25 = sadd.s32 1, %s20
      %p26 = scmp.ge.s32.totalorder %s25, 3
      %s27 = scalar_select %p26, 0, %s25
      %s28 = sadd.s32 1, %s19
      %s29 = scalar_select %p26, %s28, %s19
      %p30 = scmp.ge.s32.totalorder %s29, 1
      %s31 = scalar_select %p30, 0, %s29
      %s32 = ssub.s32 %s19, %s31
      %s33 = ssub.s32 %s20, %s27
      %s34 = sor.u32 %s32, %s33
      %p35 = scmp.eq.s32.totalorder %s34, 0
      %s37 = sadd.s32 %s36, 1
      %s38 = scalar_select %p35, %s36, %s37
      %p41 = pneg %p35
      %p42 = scmp.eq.s32.totalorder %s12, 2
      %p43 = por %p41, %p42
      %p44 = scmp.ne.s32.totalorder %s36, %s39
      %p45 = scmp.eq.s32.totalorder %s12, 0
      %p46 = por %p44, %p45
      %p47 = scmp.ne.s32.totalorder %s36, %s39
      %p48 = scmp.eq.s32.totalorder %s17, 2
      %p49 = por %p47, %p48
      %p50 = scmp.ne.s32.totalorder %s39, %s40
      %p51 = scmp.eq.s32.totalorder %s17, 0
      %p52 = por %p50, %p51
      %p53 = scmp.ne.s32.totalorder %s39, %s40
      %p54 = scmp.eq.s32.totalorder %s18, 2
      %p55 = por %p53, %p54
      %p57 = scmp.ne.s32.totalorder %s40, %s56
      %p58 = scmp.eq.s32.totalorder %s18, 0
      %p59 = por %p57, %p58
      %s60 = ssub.s32 %s20, %s27
      %p61 = scmp.eq.s32.totalorder %s60, 0
      %s63 = sadd.s32 %s62, 1
      %s64 = scalar_select %p61, %s62, %s63
      %p67 = pneg %p61
      %p68 = scmp.eq.s32.totalorder %s12, 2
      %p69 = por %p67, %p68
      %p70 = scmp.ne.s32.totalorder %s62, %s65
      %p71 = scmp.eq.s32.totalorder %s12, 0
      %p72 = por %p70, %p71
      %p73 = scmp.ne.s32.totalorder %s62, %s65
      %p74 = scmp.eq.s32.totalorder %s17, 2
      %p75 = por %p73, %p74
      %p76 = scmp.ne.s32.totalorder %s65, %s66
      %p77 = scmp.eq.s32.totalorder %s17, 0
      %p78 = por %p76, %p77
      %p79 = scmp.ne.s32.totalorder %s65, %s66
      %p80 = scmp.eq.s32.totalorder %s18, 2
      %p81 = por %p79, %p80
      %p83 = scmp.ne.s32.totalorder %s66, %s82
      %p84 = scmp.eq.s32.totalorder %s18, 0
      %p85 = por %p83, %p84
      %s87 = sadd.s32 %s86, 1
      %p90 = scmp.eq.s32.totalorder %s12, 2
      %p91 = scmp.ne.s32.totalorder %s86, %s88
      %p92 = scmp.eq.s32.totalorder %s12, 0
      %p93 = por %p91, %p92
      %p94 = scmp.ne.s32.totalorder %s86, %s88
      %p95 = scmp.eq.s32.totalorder %s17, 2
      %p96 = por %p94, %p95
      %p97 = scmp.ne.s32.totalorder %s88, %s89
      %p98 = scmp.eq.s32.totalorder %s17, 0
      %p99 = por %p97, %p98
      %p100 = scmp.ne.s32.totalorder %s88, %s89
      %p101 = scmp.eq.s32.totalorder %s18, 2
      %p102 = por %p100, %p101
      %p104 = scmp.ne.s32.totalorder %s89, %s103
      %p105 = scmp.eq.s32.totalorder %s18, 0
      %p106 = por %p104, %p105
      %s107 = ssub.s32 %s19, %s31
      %p108 = scmp.eq.s32.totalorder %s107, 0
      %s110 = sadd.s32 %s109, 1
      %s111 = scalar_select %p108, %s109, %s110
      %p114 = pneg %p108
      %p115 = scmp.eq.s32.totalorder %s12, 2
      %p116 = por %p114, %p115
      %p117 = scmp.ne.s32.totalorder %s109, %s112
      %p118 = scmp.eq.s32.totalorder %s12, 0
      %p119 = por %p117, %p118
      %p120 = scmp.ne.s32.totalorder %s109, %s112
      %p121 = scmp.eq.s32.totalorder %s17, 2
      %p122 = por %p120, %p121
      %p123 = scmp.ne.s32.totalorder %s112, %s113
      %p124 = scmp.eq.s32.totalorder %s17, 0
      %p125 = por %p123, %p124
      %p126 = scmp.ne.s32.totalorder %s112, %s113
      %p127 = scmp.eq.s32.totalorder %s18, 2
      %p128 = por %p126, %p127
      %p130 = scmp.ne.s32.totalorder %s113, %s129
      %p131 = scmp.eq.s32.totalorder %s18, 0
      %p132 = por %p130, %p131
      %s134 = sadd.s32 %s133, 1
      %p137 = scmp.eq.s32.totalorder %s12, 2
      %p138 = scmp.ne.s32.totalorder %s133, %s135
      %p139 = scmp.eq.s32.totalorder %s12, 0
      %p140 = por %p138, %p139
      %p141 = scmp.ne.s32.totalorder %s133, %s135
      %p142 = scmp.eq.s32.totalorder %s17, 2
      %p143 = por %p141, %p142
      %p144 = scmp.ne.s32.totalorder %s135, %s136
      %p145 = scmp.eq.s32.totalorder %s17, 0
      %p146 = por %p144, %p145
      %p147 = scmp.ne.s32.totalorder %s135, %s136
      %p148 = scmp.eq.s32.totalorder %s18, 2
      %p149 = por %p147, %p148
      %p151 = scmp.ne.s32.totalorder %s136, %s150
      %p152 = scmp.eq.s32.totalorder %s18, 0
      %p153 = por %p151, %p152
      %s155 = sadd.s32 %s154, 1
      %p158 = scmp.eq.s32.totalorder %s12, 2
      %p159 = scmp.ne.s32.totalorder %s154, %s156
      %p160 = scmp.eq.s32.totalorder %s12, 0
      %p161 = por %p159, %p160
      %p162 = scmp.ne.s32.totalorder %s154, %s156
      %p163 = scmp.eq.s32.totalorder %s17, 2
      %p164 = por %p162, %p163
      %p165 = scmp.ne.s32.totalorder %s156, %s157
      %p166 = scmp.eq.s32.totalorder %s17, 0
      %p167 = por %p165, %p166
      %p168 = scmp.ne.s32.totalorder %s156, %s157
      %p169 = scmp.eq.s32.totalorder %s18, 2
      %p170 = por %p168, %p169
      %p172 = scmp.ne.s32.totalorder %s157, %s171
      %p173 = scmp.eq.s32.totalorder %s18, 0
      %p174 = por %p172, %p173
      %s175 = ssub.s32 %s19, %s31
      %p176 = scmp.eq.s32.totalorder %s175, 0
      %s178 = sadd.s32 %s177, 1
      %s179 = scalar_select %p176, %s177, %s178
      %p182 = pneg %p176
      %p183 = scmp.eq.s32.totalorder %s12, 2
      %p184 = por %p182, %p183
      %p185 = scmp.ne.s32.totalorder %s177, %s180
      %p186 = scmp.eq.s32.totalorder %s12, 0
      %p187 = por %p185, %p186
      %p188 = scmp.ne.s32.totalorder %s177, %s180
      %p189 = scmp.eq.s32.totalorder %s17, 2
      %p190 = por %p188, %p189
      %p191 = scmp.ne.s32.totalorder %s180, %s181
      %p192 = scmp.eq.s32.totalorder %s17, 0
      %p193 = por %p191, %p192
      %p194 = scmp.ne.s32.totalorder %s180, %s181
      %p195 = scmp.eq.s32.totalorder %s18, 2
      %p196 = por %p194, %p195
      %p198 = scmp.ne.s32.totalorder %s181, %s197
      %p199 = scmp.eq.s32.totalorder %s18, 0
      %p200 = por %p198, %p199
      %p201 = scmp.le.s32.totalorder 1, %s12
      %p202 = scmp.lt.s32.totalorder %s12, 4
      %p203 = pnand %p201, %p202
      %p204 = pneg %p203
      // Predicated region
      $region9: #{closed_call.18} parent=5 // pred_check
        _
      $region10: #{closed_call.18} parent=5 // pred_check_branch
        %206 = sbr.rel (%p203) target = $region12
      $region11: #{closed_call.18} parent=5 // pred_region
        %s207 = ssub.s32 %s12, 1
        // Predicated region
        $region13: #{closed_call.18} parent=11 // pred_check
          %p208 = pneg %p99
        $region14: #{closed_call.18} parent=11 // pred_check_branch
          %210 = sbr.rel (%p208) target = $region16
        $region15: #{closed_call.18} parent=11 // pred_region
          _
        $region16: #{closed_call.18} parent=11 // pred_fallthru
          _
        // Predicated region
        $region17: #{closed_call.18} parent=11 // pred_check
          %p211 = pneg %p125
        $region18: #{closed_call.18} parent=11 // pred_check_branch
          %213 = sbr.rel (%p211) target = $region20
        $region19: #{closed_call.18} parent=11 // pred_region
          %s214 = smul.u32 4, %s21
          %p215 = scmp.lt.s32.totalorder %s214, 3
          %s216 = scalar_select %p215, %s214, 3
          %s217 = smul.addr %s216, 6
          %s218 = smul.addr %s217, 4
          %s219 = scalar_lea.vmem %s3, %s218
          %s220 = smul.u32 4, %s21
        $region20: #{closed_call.18} parent=11 // pred_fallthru
          _
        // Predicated region
        $region21: #{closed_call.18} parent=11 // pred_check
          %p221 = pneg %p146
        $region22: #{closed_call.18} parent=11 // pred_check_branch
          %223 = sbr.rel (%p221) target = $region24
        $region23: #{closed_call.18} parent=11 // pred_region
          _
        $region24: #{closed_call.18} parent=11 // pred_fallthru
          _
        // Predicated region
        $region25: #{closed_call.18} parent=11 // pred_check
          %p224 = pneg %p167
        $region26: #{closed_call.18} parent=11 // pred_check_branch
          %226 = sbr.rel (%p224) target = $region28
        $region27: #{closed_call.18} parent=11 // pred_region
          _
        $region28: #{closed_call.18} parent=11 // pred_fallthru
          _
      $region12: #{closed_call.18} parent=5 // pred_fallthru
        _
      %p227 = scmp.lt.s32.totalorder %s12, 3
      // Predicated region
      $region29: #{closed_call.18} parent=5 // pred_check
        %p228 = pneg %p227
      $region30: #{closed_call.18} parent=5 // pred_check_branch
        %230 = sbr.rel (%p228) target = $region32
      $region31: #{closed_call.18} parent=5 // pred_region
        // Predicated region
        $region33: #{closed_call.18} parent=31 // pred_check
          %p231 = pneg %p46
        $region34: #{closed_call.18} parent=31 // pred_check_branch
          %233 = sbr.rel (%p231) target = $region36
        $region35: #{closed_call.18} parent=31 // pred_region
          %s234 = sand.u32 %s36, 1
          %s235 = sand.u32 %s36, 1
          %s236 = smul.addr %s235, 32
          %s237 = scalar_lea.vmem [#allocation3], %s236
          %s238 = smul.u32 4, %s19
          %s239 = smul.u32 2, %s20
          %s240 = smul.addr %s238, 6
          %s241 = sadd.s32 %s239, %s240
          %s242 = smul.addr %s241, 4
          %s243 = scalar_lea.vmem %s0, %s242
          // Predicated region
          $region37: #{closed_call.18} parent=35 // pred_check
            _
          $region38: #{closed_call.18} parent=35 // pred_check_branch
            %245 = sbr.rel (0) target = $region40
          $region39: #{closed_call.18} parent=35 // pred_region
            // Predicated region
            $region41: #{closed_call.18} parent=39 // pred_check
              _
            $region42: #{closed_call.18} parent=39 // pred_check_branch
              %247 = sbr.rel (0) target = $region44
            $region43: #{closed_call.18} parent=39 // pred_region
              // Predicated region
              $region56: #{closed_call.18} parent=43 // pred_check
                _
              $region57: #{closed_call.18} parent=43 // pred_check_branch
                %269 = sbr.rel (0) target = $region59
              $region58: #{closed_call.18} parent=43 // pred_region
                loop: start=0, step=1, limit=1
                $region60: #{closed_call.18} parent=58 // loop_pre_header
                  _
                $region61: #{closed_call.18} parent=58 // loop_header
                  %s271 = sphi 0, %s275
                  %p272 = scmp.ge.s32.totalorder %s271, 1
                  %s276 = sphi %s243, %s243
                  %s277 = sphi %s237, %s237
                $region62: #{closed_call.18} parent=58 // loop_header_branch
                  %274 = sbr.rel (%p272) target = $region66
                $region63: #{closed_call.18} parent=58 // loop_body
                  %v278 = vld [vmem:[%s276] sm:$0xff]
                  %279 = vst [vmem:[%s277] sm:$0xff] %v278
                  %v280 = vld [vmem:[%s276 + $0x18] sm:$0xff]
                  %281 = vst [vmem:[%s277 + $0x8] sm:$0xff] %v280
                  %v282 = vld [vmem:[%s276 + $0x30] sm:$0xff]
                  %283 = vst [vmem:[%s277 + $0x10] sm:$0xff] %v282
                  %v284 = vld [vmem:[%s276 + $0x48] sm:$0xff]
                  %285 = vst [vmem:[%s277 + $0x18] sm:$0xff] %v284
                $region64: #{closed_call.18} parent=58 // loop_footer
                  %s275 = sadd.s32 1, %s271
                $region65: #{closed_call.18} parent=58 // loop_footer_branch
                  %270 = sbr.rel target = $region61
                $region66: #{closed_call.18} parent=58 // loop_exit
                  _
              $region59: #{closed_call.18} parent=43 // pred_fallthru
                _
              // Predicated region
              $region67: #{closed_call.18} parent=43 // pred_check
                _
              $region68: #{closed_call.18} parent=43 // pred_check_branch
                %287 = sbr.rel target = $region70
              $region69: #{closed_call.18} parent=43 // pred_region
                _
              $region70: #{closed_call.18} parent=43 // pred_fallthru
                _
            $region44: #{closed_call.18} parent=39 // pred_fallthru
              _
            // Predicated region
            $region45: #{closed_call.18} parent=39 // pred_check
              _
            $region46: #{closed_call.18} parent=39 // pred_check_branch
              %249 = sbr.rel target = $region48
            $region47: #{closed_call.18} parent=39 // pred_region
              %s251 = ssub.s32 256, 1
              loop: start=0, step=1, limit=1
              $region49: #{closed_call.18} parent=47 // loop_pre_header
                _
              $region50: #{closed_call.18} parent=47 // loop_header
                %s253 = sphi 0, %s257
                %p254 = scmp.ge.s32.totalorder %s253, 1
                %s258 = sphi %s243, %s243
                %s259 = sphi %s237, %s237
              $region51: #{closed_call.18} parent=47 // loop_header_branch
                %256 = sbr.rel (%p254) target = $region55
              $region52: #{closed_call.18} parent=47 // loop_body
                %v260 = vld [vmem:[%s258] sm:%s251]
                %261 = vst [vmem:[%s259] sm:%s251] %v260
                %v262 = vld [vmem:[%s258 + $0x18] sm:%s251]
                %263 = vst [vmem:[%s259 + $0x8] sm:%s251] %v262
                %v264 = vld [vmem:[%s258 + $0x30] sm:%s251]
                %265 = vst [vmem:[%s259 + $0x10] sm:%s251] %v264
                %v266 = vld [vmem:[%s258 + $0x48] sm:%s251]
                %267 = vst [vmem:[%s259 + $0x18] sm:%s251] %v266
              $region53: #{closed_call.18} parent=47 // loop_footer
                %s257 = sadd.s32 1, %s253
              $region54: #{closed_call.18} parent=47 // loop_footer_branch
                %252 = sbr.rel target = $region50
              $region55: #{closed_call.18} parent=47 // loop_exit
                _
            $region48: #{closed_call.18} parent=39 // pred_fallthru
              _
          $region40: #{closed_call.18} parent=35 // pred_fallthru
            _
          %288 = vnop
        $region36: #{closed_call.18} parent=31 // pred_fallthru
          _
        // Predicated region
        $region71: #{closed_call.18} parent=31 // pred_check
          %p289 = pneg %p72
        $region72: #{closed_call.18} parent=31 // pred_check_branch
          %291 = sbr.rel (%p289) target = $region74
        $region73: #{closed_call.18} parent=31 // pred_region
          %s292 = smul.u32 32, %s20
          %p293 = scmp.lt.s32.totalorder %s292, 95
          %s294 = scalar_select %p293, %s292, 95
          %s295 = smul.addr %s294, 6
          %s296 = smul.addr %s295, 4
          %s297 = scalar_lea.vmem %s1, %s296
          %s298 = smul.u32 32, %s20
        $region74: #{closed_call.18} parent=31 // pred_fallthru
          _
      $region32: #{closed_call.18} parent=5 // pred_fallthru
        _
      %p299 = scmp.le.s32.totalorder 1, %s12
      %p300 = scmp.lt.s32.totalorder %s12, 4
      %p301 = pnand %p299, %p300
      %p302 = pneg %p301
      // Predicated region
      $region75: #{closed_call.18} parent=5 // pred_check
        _
      $region76: #{closed_call.18} parent=5 // pred_check_branch
        %304 = sbr.rel (%p301) target = $region78
      $region77: #{closed_call.18} parent=5 // pred_region
        %s305 = ssub.s32 %s12, 1
        %s306 = sand.u32 %s39, 1
        %s307 = sand.u32 %s39, 1
        %s308 = smul.addr %s307, 32
        %s309 = scalar_lea.vmem [#allocation3], %s308
        // Predicated region
        $region79: #{closed_call.18} parent=77 // pred_check
          %p310 = pneg %p52
        $region80: #{closed_call.18} parent=77 // pred_check_branch
          %312 = sbr.rel (%p310) target = $region82
        $region81: #{closed_call.18} parent=77 // pred_region
          _
        $region82: #{closed_call.18} parent=77 // pred_fallthru
          _
        %s313 = sand.u32 %s39, 1
        %s314 = sand.u32 %s39, 1
        %s315 = smul.addr %s314, 32
        %s316 = scalar_lea.vmem [#allocation3], %s315
        %p317 = pneg %p52
        %p318 = pneg %p49
        %s319 = smul.u32 32, %s22
        %p320 = scmp.lt.s32.totalorder %s319, 95
        %s321 = scalar_select %p320, %s319, 95
        %s322 = smul.addr %s321, 6
        %s323 = smul.addr %s322, 4
        %s324 = scalar_lea.vmem %s1, %s323
        %p325 = pneg %p78
        %p326 = pneg %p75
        %p327 = pneg %p99
        %p328 = pneg %p96
        %s329 = smul.u32 4, %s21
        %p330 = scmp.lt.s32.totalorder %s329, 3
        %s331 = scalar_select %p330, %s329, 3
        %s332 = smul.addr %s331, 6
        %s333 = smul.addr %s332, 4
        %s334 = scalar_lea.vmem %s3, %s333
        %p335 = pneg %p125
        %p336 = pneg %p122
        %p337 = pneg %p146
        %p338 = pneg %p143
        %p339 = pneg %p167
        %p340 = pneg %p164
        %p341 = pneg %p193
        %p342 = pneg %p190
        %s343 = smul.u32 4, %s21
        %p344 = scmp.lt.s32.totalorder %s343, 3
        %s345 = scalar_select %p344, %s343, 3
        %s346 = smul.addr %s345, 6
        %s347 = smul.addr %s346, 4
        %s348 = scalar_lea.vmem %s6, %s347
        %s349 = smul.u32 4, %s21
        %s350 = smul.u32 2, %s22
        %s351 = smul.u32 32, %s22
        %p352 = scmp.lt.s32.totalorder %s351, 95
        %s353 = scalar_select %p352, %s351, 95
        %s354 = smul.addr %s353, 6
        %s355 = smul.addr %s354, 4
        %s356 = scalar_lea.vmem %s1, %s355
        %s357 = smul.u32 32, %s22
        %s358 = smul.u32 4, %s21
        %p359 = scmp.lt.s32.totalorder %s358, 3
        %s360 = scalar_select %p359, %s358, 3
        %s361 = smul.addr %s360, 6
        %s362 = smul.addr %s361, 4
        %s363 = scalar_lea.vmem %s3, %s362
        %s364 = smul.u32 4, %s21
        %s365 = smul.u32 4, %s21
        %p366 = scmp.lt.s32.totalorder %s365, 3
        %s367 = scalar_select %p366, %s365, 3
        %s368 = smul.addr %s367, 6
        %s369 = smul.addr %s368, 4
        %s370 = scalar_lea.vmem %s6, %s369
        %s371 = smul.u32 4, %s21
        %p372 = scmp.eq.s32.totalorder %s22, 0
        // Predicated region
        $region83: #{closed_call.18} parent=77 // pred_check
          %p373 = pneg %p372
        $region84: #{closed_call.18} parent=77 // pred_check_branch
          %375 = sbr.rel (%p373) target = $region86
        $region85: #{closed_call.18} parent=77 // pred_region
          %376 = vst [vmem:[#allocation2] sm:$0xff] 0.0
          %377 = vst [vmem:[#allocation2 + $0x8] sm:$0xff] 0.0
          %378 = vst [vmem:[#allocation2 + $0x10] sm:$0xff] 0.0
          %379 = vst [vmem:[#allocation2 + $0x18] sm:$0xff] 0.0
          %380 = vst [vmem:[#allocation2 + $0x20] sm:$0xff] 0.0
          %381 = vst [vmem:[#allocation2 + $0x28] sm:$0xff] 0.0
          %382 = vst [vmem:[#allocation2 + $0x30] sm:$0xff] 0.0
          %383 = vst [vmem:[#allocation2 + $0x38] sm:$0xff] 0.0
          %384 = vst [vmem:[#allocation2 + $0x40] sm:$0xff] 0.0
          %385 = vst [vmem:[#allocation2 + $0x48] sm:$0xff] 0.0
          %386 = vst [vmem:[#allocation2 + $0x50] sm:$0xff] 0.0
          %387 = vst [vmem:[#allocation2 + $0x58] sm:$0xff] 0.0
          %388 = vst [vmem:[#allocation2 + $0x60] sm:$0xff] 0.0
          %389 = vst [vmem:[#allocation2 + $0x68] sm:$0xff] 0.0
          %390 = vst [vmem:[#allocation2 + $0x70] sm:$0xff] 0.0
          %391 = vst [vmem:[#allocation2 + $0x78] sm:$0xff] 0.0
          %392 = vst [vmem:[#allocation2 + $0x80] sm:$0xff] 0.0
          %393 = vst [vmem:[#allocation2 + $0x88] sm:$0xff] 0.0
          %394 = vst [vmem:[#allocation2 + $0x90] sm:$0xff] 0.0
          %395 = vst [vmem:[#allocation2 + $0x98] sm:$0xff] 0.0
          %396 = vst [vmem:[#allocation2 + $0xa0] sm:$0xff] 0.0
          %397 = vst [vmem:[#allocation2 + $0xa8] sm:$0xff] 0.0
          %398 = vst [vmem:[#allocation2 + $0xb0] sm:$0xff] 0.0
          %399 = vst [vmem:[#allocation2 + $0xb8] sm:$0xff] 0.0
        $region86: #{closed_call.18} parent=77 // pred_fallthru
          _
        %v400 = vld [vmem:[#allocation2] sm:$0xff]
        %v401 = vld [vmem:[#allocation2 + $0x8] sm:$0xff]
        %v402 = vld [vmem:[#allocation2 + $0x10] sm:$0xff]
        %v403 = vld [vmem:[#allocation2 + $0x18] sm:$0xff]
        %v404 = vld [vmem:[#allocation2 + $0x20] sm:$0xff]
        %v405 = vld [vmem:[#allocation2 + $0x28] sm:$0xff]
        %v406 = vld [vmem:[#allocation2 + $0x30] sm:$0xff]
        %v407 = vld [vmem:[#allocation2 + $0x38] sm:$0xff]
        %v408 = vld [vmem:[#allocation2 + $0x40] sm:$0xff]
        %v409 = vld [vmem:[#allocation2 + $0x48] sm:$0xff]
        %v410 = vld [vmem:[#allocation2 + $0x50] sm:$0xff]
        %v411 = vld [vmem:[#allocation2 + $0x58] sm:$0xff]
        %v412 = vld [vmem:[#allocation2 + $0x60] sm:$0xff]
        %v413 = vld [vmem:[#allocation2 + $0x68] sm:$0xff]
        %v414 = vld [vmem:[#allocation2 + $0x70] sm:$0xff]
        %v415 = vld [vmem:[#allocation2 + $0x78] sm:$0xff]
        %v416 = vld [vmem:[#allocation2 + $0x80] sm:$0xff]
        %v417 = vld [vmem:[#allocation2 + $0x88] sm:$0xff]
        %v418 = vld [vmem:[#allocation2 + $0x90] sm:$0xff]
        %v419 = vld [vmem:[#allocation2 + $0x98] sm:$0xff]
        %v420 = vld [vmem:[#allocation2 + $0xa0] sm:$0xff]
        %v421 = vld [vmem:[#allocation2 + $0xa8] sm:$0xff]
        %v422 = vld [vmem:[#allocation2 + $0xb0] sm:$0xff]
        %v423 = vld [vmem:[#allocation2 + $0xb8] sm:$0xff]
        %v424 = vld [vmem:[%s309] sm:$0xff]
        %v425 = vld [vmem:[%s309 + $0x8] sm:$0xff]
        %v426 = vld [vmem:[%s309 + $0x10] sm:$0xff]
        %v427 = vld [vmem:[%s309 + $0x18] sm:$0xff]
        %v428 = vld [vmem:[%s356] sm:$0xff]
        %v429 = vld [vmem:[%s356 + $0x8] sm:$0xff]
        %v430 = vld [vmem:[%s356 + $0x10] sm:$0xff]
        %v431 = vld [vmem:[%s356 + $0x18] sm:$0xff]
        %v432 = vld [vmem:[%s356 + $0x20] sm:$0xff]
        %v433 = vld [vmem:[%s356 + $0x28] sm:$0xff]
        %v434 = vld [vmem:[%s356 + $0x30] sm:$0xff]
        %v435 = vld [vmem:[%s356 + $0x38] sm:$0xff]
        %v436 = vld [vmem:[%s356 + $0x40] sm:$0xff]
        %v437 = vld [vmem:[%s356 + $0x48] sm:$0xff]
        %v438 = vld [vmem:[%s356 + $0x50] sm:$0xff]
        %v439 = vld [vmem:[%s356 + $0x58] sm:$0xff]
        %v440 = vld [vmem:[%s356 + $0x60] sm:$0xff]
        %v441 = vld [vmem:[%s356 + $0x68] sm:$0xff]
        %v442 = vld [vmem:[%s356 + $0x70] sm:$0xff]
        %v443 = vld [vmem:[%s356 + $0x78] sm:$0xff]
        %v444 = vld [vmem:[%s356 + $0x80] sm:$0xff]
        %v445 = vld [vmem:[%s356 + $0x88] sm:$0xff]
        %v446 = vld [vmem:[%s356 + $0x90] sm:$0xff]
        %v447 = vld [vmem:[%s356 + $0x98] sm:$0xff]
        %v448 = vld [vmem:[%s356 + $0xa0] sm:$0xff]
        %v449 = vld [vmem:[%s356 + $0xa8] sm:$0xff]
        %v450 = vld [vmem:[%s356 + $0xb0] sm:$0xff]
        %v451 = vld [vmem:[%s356 + $0xb8] sm:$0xff]
        %v452 = vld [vmem:[%s356 + $0xc0] sm:$0xff]
        %v453 = vld [vmem:[%s356 + $0xc8] sm:$0xff]
        %v454 = vld [vmem:[%s356 + $0xd0] sm:$0xff]
        %v455 = vld [vmem:[%s356 + $0xd8] sm:$0xff]
        %v456 = vld [vmem:[%s356 + $0xe0] sm:$0xff]
        %v457 = vld [vmem:[%s356 + $0xe8] sm:$0xff]
        %v458 = vld [vmem:[%s356 + $0xf0] sm:$0xff]
        %v459 = vld [vmem:[%s356 + $0xf8] sm:$0xff]
        %v460 = vld [vmem:[%s356 + $0x100] sm:$0xff]
        %v461 = vld [vmem:[%s356 + $0x108] sm:$0xff]
        %v462 = vld [vmem:[%s356 + $0x110] sm:$0xff]
        %v463 = vld [vmem:[%s356 + $0x118] sm:$0xff]
        %v464 = vld [vmem:[%s356 + $0x120] sm:$0xff]
        %v465 = vld [vmem:[%s356 + $0x128] sm:$0xff]
        %v466 = vld [vmem:[%s356 + $0x130] sm:$0xff]
        %v467 = vld [vmem:[%s356 + $0x138] sm:$0xff]
        %v468 = vld [vmem:[%s356 + $0x140] sm:$0xff]
        %v469 = vld [vmem:[%s356 + $0x148] sm:$0xff]
        %v470 = vld [vmem:[%s356 + $0x150] sm:$0xff]
        %v471 = vld [vmem:[%s356 + $0x158] sm:$0xff]
        %v472 = vld [vmem:[%s356 + $0x160] sm:$0xff]
        %v473 = vld [vmem:[%s356 + $0x168] sm:$0xff]
        %v474 = vld [vmem:[%s356 + $0x170] sm:$0xff]
        %v475 = vld [vmem:[%s356 + $0x178] sm:$0xff]
        %v476 = vld [vmem:[%s356 + $0x180] sm:$0xff]
        %v477 = vld [vmem:[%s356 + $0x188] sm:$0xff]
        %v478 = vld [vmem:[%s356 + $0x190] sm:$0xff]
        %v479 = vld [vmem:[%s356 + $0x198] sm:$0xff]
        %v480 = vld [vmem:[%s356 + $0x1a0] sm:$0xff]
        %v481 = vld [vmem:[%s356 + $0x1a8] sm:$0xff]
        %v482 = vld [vmem:[%s356 + $0x1b0] sm:$0xff]
        %v483 = vld [vmem:[%s356 + $0x1b8] sm:$0xff]
        %v484 = vld [vmem:[%s356 + $0x1c0] sm:$0xff]
        %v485 = vld [vmem:[%s356 + $0x1c8] sm:$0xff]
        %v486 = vld [vmem:[%s356 + $0x1d0] sm:$0xff]
        %v487 = vld [vmem:[%s356 + $0x1d8] sm:$0xff]
        %v488 = vld [vmem:[%s356 + $0x1e0] sm:$0xff]
        %v489 = vld [vmem:[%s356 + $0x1e8] sm:$0xff]
        %v490 = vld [vmem:[%s356 + $0x1f0] sm:$0xff]
        %v491 = vld [vmem:[%s356 + $0x1f8] sm:$0xff]
        %v492 = vld [vmem:[%s356 + $0x200] sm:$0xff]
        %v493 = vld [vmem:[%s356 + $0x208] sm:$0xff]
        %v494 = vld [vmem:[%s356 + $0x210] sm:$0xff]
        %v495 = vld [vmem:[%s356 + $0x218] sm:$0xff]
        %v496 = vld [vmem:[%s356 + $0x220] sm:$0xff]
        %v497 = vld [vmem:[%s356 + $0x228] sm:$0xff]
        %v498 = vld [vmem:[%s356 + $0x230] sm:$0xff]
        %v499 = vld [vmem:[%s356 + $0x238] sm:$0xff]
        %v500 = vld [vmem:[%s356 + $0x240] sm:$0xff]
        %v501 = vld [vmem:[%s356 + $0x248] sm:$0xff]
        %v502 = vld [vmem:[%s356 + $0x250] sm:$0xff]
        %v503 = vld [vmem:[%s356 + $0x258] sm:$0xff]
        %v504 = vld [vmem:[%s356 + $0x260] sm:$0xff]
        %v505 = vld [vmem:[%s356 + $0x268] sm:$0xff]
        %v506 = vld [vmem:[%s356 + $0x270] sm:$0xff]
        %v507 = vld [vmem:[%s356 + $0x278] sm:$0xff]
        %v508 = vld [vmem:[%s356 + $0x280] sm:$0xff]
        %v509 = vld [vmem:[%s356 + $0x288] sm:$0xff]
        %v510 = vld [vmem:[%s356 + $0x290] sm:$0xff]
        %v511 = vld [vmem:[%s356 + $0x298] sm:$0xff]
        %v512 = vld [vmem:[%s356 + $0x2a0] sm:$0xff]
        %v513 = vld [vmem:[%s356 + $0x2a8] sm:$0xff]
        %v514 = vld [vmem:[%s356 + $0x2b0] sm:$0xff]
        %v515 = vld [vmem:[%s356 + $0x2b8] sm:$0xff]
        %v516 = vld [vmem:[%s356 + $0x2c0] sm:$0xff]
        %v517 = vld [vmem:[%s356 + $0x2c8] sm:$0xff]
        %v518 = vld [vmem:[%s356 + $0x2d0] sm:$0xff]
        %v519 = vld [vmem:[%s356 + $0x2d8] sm:$0xff]
        %v520 = vld [vmem:[%s356 + $0x2e0] sm:$0xff]
        %v521 = vld [vmem:[%s356 + $0x2e8] sm:$0xff]
        %v522 = vld [vmem:[%s356 + $0x2f0] sm:$0xff]
        %v523 = vld [vmem:[%s356 + $0x2f8] sm:$0xff]
        %v528 = vunpack.c.l.b16 %v424
        %v529 = vunpack.c.h.b16 %v424
        %v530 = vunpack.c.l.b16 %v425
        %v531 = vunpack.c.h.b16 %v425
        %v532 = vunpack.c.l.b16 %v426
        %v533 = vunpack.c.h.b16 %v426
        %v534 = vunpack.c.l.b16 %v427
        %v535 = vunpack.c.h.b16 %v427
        %v536 = vpack.c.b16 %v530, %v528
        %v537 = vpack.c.b16 %v531, %v529
        %v538 = vpack.c.b16 %v534, %v532
        %v539 = vpack.c.b16 %v535, %v533
        %v640 = vunpack.c.l.b16 %v428
        %v641 = vunpack.c.h.b16 %v428
        %v642 = vunpack.c.l.b16 %v429
        %v643 = vunpack.c.h.b16 %v429
        %v644 = vunpack.c.l.b16 %v430
        %v645 = vunpack.c.h.b16 %v430
        %v646 = vunpack.c.l.b16 %v431
        %v647 = vunpack.c.h.b16 %v431
        %v648 = vunpack.c.l.b16 %v432
        %v649 = vunpack.c.h.b16 %v432
        %v650 = vunpack.c.l.b16 %v433
        %v651 = vunpack.c.h.b16 %v433
        %v652 = vunpack.c.l.b16 %v434
        %v653 = vunpack.c.h.b16 %v434
        %v654 = vunpack.c.l.b16 %v435
        %v655 = vunpack.c.h.b16 %v435
        %v656 = vunpack.c.l.b16 %v436
        %v657 = vunpack.c.h.b16 %v436
        %v658 = vunpack.c.l.b16 %v437
        %v659 = vunpack.c.h.b16 %v437
        %v660 = vunpack.c.l.b16 %v438
        %v661 = vunpack.c.h.b16 %v438
        %v662 = vunpack.c.l.b16 %v439
        %v663 = vunpack.c.h.b16 %v439
        %v664 = vunpack.c.l.b16 %v440
        %v665 = vunpack.c.h.b16 %v440
        %v666 = vunpack.c.l.b16 %v441
        %v667 = vunpack.c.h.b16 %v441
        %v668 = vunpack.c.l.b16 %v442
        %v669 = vunpack.c.h.b16 %v442
        %v670 = vunpack.c.l.b16 %v443
        %v671 = vunpack.c.h.b16 %v443
        %v672 = vunpack.c.l.b16 %v444
        %v673 = vunpack.c.h.b16 %v444
        %v674 = vunpack.c.l.b16 %v445
        %v675 = vunpack.c.h.b16 %v445
        %v676 = vunpack.c.l.b16 %v446
        %v677 = vunpack.c.h.b16 %v446
        %v678 = vunpack.c.l.b16 %v447
        %v679 = vunpack.c.h.b16 %v447
        %v680 = vunpack.c.l.b16 %v448
        %v681 = vunpack.c.h.b16 %v448
        %v682 = vunpack.c.l.b16 %v449
        %v683 = vunpack.c.h.b16 %v449
        %v684 = vunpack.c.l.b16 %v450
        %v685 = vunpack.c.h.b16 %v450
        %v686 = vunpack.c.l.b16 %v451
        %v687 = vunpack.c.h.b16 %v451
        %v688 = vunpack.c.l.b16 %v452
        %v689 = vunpack.c.h.b16 %v452
        %v690 = vunpack.c.l.b16 %v453
        %v691 = vunpack.c.h.b16 %v453
        %v692 = vunpack.c.l.b16 %v454
        %v693 = vunpack.c.h.b16 %v454
        %v694 = vunpack.c.l.b16 %v455
        %v695 = vunpack.c.h.b16 %v455
        %v696 = vunpack.c.l.b16 %v456
        %v697 = vunpack.c.h.b16 %v456
        %v698 = vunpack.c.l.b16 %v457
        %v699 = vunpack.c.h.b16 %v457
        %v700 = vunpack.c.l.b16 %v458
        %v701 = vunpack.c.h.b16 %v458
        %v702 = vunpack.c.l.b16 %v459
        %v703 = vunpack.c.h.b16 %v459
        %v704 = vunpack.c.l.b16 %v460
        %v705 = vunpack.c.h.b16 %v460
        %v706 = vunpack.c.l.b16 %v461
        %v707 = vunpack.c.h.b16 %v461
        %v708 = vunpack.c.l.b16 %v462
        %v709 = vunpack.c.h.b16 %v462
        %v710 = vunpack.c.l.b16 %v463
        %v711 = vunpack.c.h.b16 %v463
        %v712 = vunpack.c.l.b16 %v464
        %v713 = vunpack.c.h.b16 %v464
        %v714 = vunpack.c.l.b16 %v465
        %v715 = vunpack.c.h.b16 %v465
        %v716 = vunpack.c.l.b16 %v466
        %v717 = vunpack.c.h.b16 %v466
        %v718 = vunpack.c.l.b16 %v467
        %v719 = vunpack.c.h.b16 %v467
        %v720 = vunpack.c.l.b16 %v468
        %v721 = vunpack.c.h.b16 %v468
        %v722 = vunpack.c.l.b16 %v469
        %v723 = vunpack.c.h.b16 %v469
        %v724 = vunpack.c.l.b16 %v470
        %v725 = vunpack.c.h.b16 %v470
        %v726 = vunpack.c.l.b16 %v471
        %v727 = vunpack.c.h.b16 %v471
        %v728 = vunpack.c.l.b16 %v472
        %v729 = vunpack.c.h.b16 %v472
        %v730 = vunpack.c.l.b16 %v473
        %v731 = vunpack.c.h.b16 %v473
        %v732 = vunpack.c.l.b16 %v474
        %v733 = vunpack.c.h.b16 %v474
        %v734 = vunpack.c.l.b16 %v475
        %v735 = vunpack.c.h.b16 %v475
        %v736 = vunpack.c.l.b16 %v476
        %v737 = vunpack.c.h.b16 %v476
        %v738 = vunpack.c.l.b16 %v477
        %v739 = vunpack.c.h.b16 %v477
        %v740 = vunpack.c.l.b16 %v478
        %v741 = vunpack.c.h.b16 %v478
        %v742 = vunpack.c.l.b16 %v479
        %v743 = vunpack.c.h.b16 %v479
        %v744 = vunpack.c.l.b16 %v480
        %v745 = vunpack.c.h.b16 %v480
        %v746 = vunpack.c.l.b16 %v481
        %v747 = vunpack.c.h.b16 %v481
        %v748 = vunpack.c.l.b16 %v482
        %v749 = vunpack.c.h.b16 %v482
        %v750 = vunpack.c.l.b16 %v483
        %v751 = vunpack.c.h.b16 %v483
        %v752 = vunpack.c.l.b16 %v484
        %v753 = vunpack.c.h.b16 %v484
        %v754 = vunpack.c.l.b16 %v485
        %v755 = vunpack.c.h.b16 %v485
        %v756 = vunpack.c.l.b16 %v486
        %v757 = vunpack.c.h.b16 %v486
        %v758 = vunpack.c.l.b16 %v487
        %v759 = vunpack.c.h.b16 %v487
        %v760 = vunpack.c.l.b16 %v488
        %v761 = vunpack.c.h.b16 %v488
        %v762 = vunpack.c.l.b16 %v489
        %v763 = vunpack.c.h.b16 %v489
        %v764 = vunpack.c.l.b16 %v490
        %v765 = vunpack.c.h.b16 %v490
        %v766 = vunpack.c.l.b16 %v491
        %v767 = vunpack.c.h.b16 %v491
        %v768 = vunpack.c.l.b16 %v492
        %v769 = vunpack.c.h.b16 %v492
        %v770 = vunpack.c.l.b16 %v493
        %v771 = vunpack.c.h.b16 %v493
        %v772 = vunpack.c.l.b16 %v494
        %v773 = vunpack.c.h.b16 %v494
        %v774 = vunpack.c.l.b16 %v495
        %v775 = vunpack.c.h.b16 %v495
        %v776 = vunpack.c.l.b16 %v496
        %v777 = vunpack.c.h.b16 %v496
        %v778 = vunpack.c.l.b16 %v497
        %v779 = vunpack.c.h.b16 %v497
        %v780 = vunpack.c.l.b16 %v498
        %v781 = vunpack.c.h.b16 %v498
        %v782 = vunpack.c.l.b16 %v499
        %v783 = vunpack.c.h.b16 %v499
        %v784 = vunpack.c.l.b16 %v500
        %v785 = vunpack.c.h.b16 %v500
        %v786 = vunpack.c.l.b16 %v501
        %v787 = vunpack.c.h.b16 %v501
        %v788 = vunpack.c.l.b16 %v502
        %v789 = vunpack.c.h.b16 %v502
        %v790 = vunpack.c.l.b16 %v503
        %v791 = vunpack.c.h.b16 %v503
        %v792 = vunpack.c.l.b16 %v504
        %v793 = vunpack.c.h.b16 %v504
        %v794 = vunpack.c.l.b16 %v505
        %v795 = vunpack.c.h.b16 %v505
        %v796 = vunpack.c.l.b16 %v506
        %v797 = vunpack.c.h.b16 %v506
        %v798 = vunpack.c.l.b16 %v507
        %v799 = vunpack.c.h.b16 %v507
        %v800 = vunpack.c.l.b16 %v508
        %v801 = vunpack.c.h.b16 %v508
        %v802 = vunpack.c.l.b16 %v509
        %v803 = vunpack.c.h.b16 %v509
        %v804 = vunpack.c.l.b16 %v510
        %v805 = vunpack.c.h.b16 %v510
        %v806 = vunpack.c.l.b16 %v511
        %v807 = vunpack.c.h.b16 %v511
        %v808 = vunpack.c.l.b16 %v512
        %v809 = vunpack.c.h.b16 %v512
        %v810 = vunpack.c.l.b16 %v513
        %v811 = vunpack.c.h.b16 %v513
        %v812 = vunpack.c.l.b16 %v514
        %v813 = vunpack.c.h.b16 %v514
        %v814 = vunpack.c.l.b16 %v515
        %v815 = vunpack.c.h.b16 %v515
        %v816 = vunpack.c.l.b16 %v516
        %v817 = vunpack.c.h.b16 %v516
        %v818 = vunpack.c.l.b16 %v517
        %v819 = vunpack.c.h.b16 %v517
        %v820 = vunpack.c.l.b16 %v518
        %v821 = vunpack.c.h.b16 %v518
        %v822 = vunpack.c.l.b16 %v519
        %v823 = vunpack.c.h.b16 %v519
        %v824 = vunpack.c.l.b16 %v520
        %v825 = vunpack.c.h.b16 %v520
        %v826 = vunpack.c.l.b16 %v521
        %v827 = vunpack.c.h.b16 %v521
        %v828 = vunpack.c.l.b16 %v522
        %v829 = vunpack.c.h.b16 %v522
        %v830 = vunpack.c.l.b16 %v523
        %v831 = vunpack.c.h.b16 %v523
        %v832 = vpack.c.b16 %v646, %v640
        %v833 = vpack.c.b16 %v647, %v641
        %v834 = vpack.c.b16 %v648, %v642
        %v835 = vpack.c.b16 %v649, %v643
        %v836 = vpack.c.b16 %v650, %v644
        %v837 = vpack.c.b16 %v651, %v645
        %v838 = vpack.c.b16 %v658, %v652
        %v839 = vpack.c.b16 %v659, %v653
        %v840 = vpack.c.b16 %v660, %v654
        %v841 = vpack.c.b16 %v661, %v655
        %v842 = vpack.c.b16 %v662, %v656
        %v843 = vpack.c.b16 %v663, %v657
        %v844 = vpack.c.b16 %v670, %v664
        %v845 = vpack.c.b16 %v671, %v665
        %v846 = vpack.c.b16 %v672, %v666
        %v847 = vpack.c.b16 %v673, %v667
        %v848 = vpack.c.b16 %v674, %v668
        %v849 = vpack.c.b16 %v675, %v669
        %v850 = vpack.c.b16 %v682, %v676
        %v851 = vpack.c.b16 %v683, %v677
        %v852 = vpack.c.b16 %v684, %v678
        %v853 = vpack.c.b16 %v685, %v679
        %v854 = vpack.c.b16 %v686, %v680
        %v855 = vpack.c.b16 %v687, %v681
        %v856 = vpack.c.b16 %v694, %v688
        %v857 = vpack.c.b16 %v695, %v689
        %v858 = vpack.c.b16 %v696, %v690
        %v859 = vpack.c.b16 %v697, %v691
        %v860 = vpack.c.b16 %v698, %v692
        %v861 = vpack.c.b16 %v699, %v693
        %v862 = vpack.c.b16 %v706, %v700
        %v863 = vpack.c.b16 %v707, %v701
        %v864 = vpack.c.b16 %v708, %v702
        %v865 = vpack.c.b16 %v709, %v703
        %v866 = vpack.c.b16 %v710, %v704
        %v867 = vpack.c.b16 %v711, %v705
        %v868 = vpack.c.b16 %v718, %v712
        %v869 = vpack.c.b16 %v719, %v713
        %v870 = vpack.c.b16 %v720, %v714
        %v871 = vpack.c.b16 %v721, %v715
        %v872 = vpack.c.b16 %v722, %v716
        %v873 = vpack.c.b16 %v723, %v717
        %v874 = vpack.c.b16 %v730, %v724
        %v875 = vpack.c.b16 %v731, %v725
        %v876 = vpack.c.b16 %v732, %v726
        %v877 = vpack.c.b16 %v733, %v727
        %v878 = vpack.c.b16 %v734, %v728
        %v879 = vpack.c.b16 %v735, %v729
        %v880 = vpack.c.b16 %v742, %v736
        %v881 = vpack.c.b16 %v743, %v737
        %v882 = vpack.c.b16 %v744, %v738
        %v883 = vpack.c.b16 %v745, %v739
        %v884 = vpack.c.b16 %v746, %v740
        %v885 = vpack.c.b16 %v747, %v741
        %v886 = vpack.c.b16 %v754, %v748
        %v887 = vpack.c.b16 %v755, %v749
        %v888 = vpack.c.b16 %v756, %v750
        %v889 = vpack.c.b16 %v757, %v751
        %v890 = vpack.c.b16 %v758, %v752
        %v891 = vpack.c.b16 %v759, %v753
        %v892 = vpack.c.b16 %v766, %v760
        %v893 = vpack.c.b16 %v767, %v761
        %v894 = vpack.c.b16 %v768, %v762
        %v895 = vpack.c.b16 %v769, %v763
        %v896 = vpack.c.b16 %v770, %v764
        %v897 = vpack.c.b16 %v771, %v765
        %v898 = vpack.c.b16 %v778, %v772
        %v899 = vpack.c.b16 %v779, %v773
        %v900 = vpack.c.b16 %v780, %v774
        %v901 = vpack.c.b16 %v781, %v775
        %v902 = vpack.c.b16 %v782, %v776
        %v903 = vpack.c.b16 %v783, %v777
        %v904 = vpack.c.b16 %v790, %v784
        %v905 = vpack.c.b16 %v791, %v785
        %v906 = vpack.c.b16 %v792, %v786
        %v907 = vpack.c.b16 %v793, %v787
        %v908 = vpack.c.b16 %v794, %v788
        %v909 = vpack.c.b16 %v795, %v789
        %v910 = vpack.c.b16 %v802, %v796
        %v911 = vpack.c.b16 %v803, %v797
        %v912 = vpack.c.b16 %v804, %v798
        %v913 = vpack.c.b16 %v805, %v799
        %v914 = vpack.c.b16 %v806, %v800
        %v915 = vpack.c.b16 %v807, %v801
        %v916 = vpack.c.b16 %v814, %v808
        %v917 = vpack.c.b16 %v815, %v809
        %v918 = vpack.c.b16 %v816, %v810
        %v919 = vpack.c.b16 %v817, %v811
        %v920 = vpack.c.b16 %v818, %v812
        %v921 = vpack.c.b16 %v819, %v813
        %v922 = vpack.c.b16 %v826, %v820
        %v923 = vpack.c.b16 %v827, %v821
        %v924 = vpack.c.b16 %v828, %v822
        %v925 = vpack.c.b16 %v829, %v823
        %v926 = vpack.c.b16 %v830, %v824
        %v927 = vpack.c.b16 %v831, %v825
        %1024 = vmatprep.subr.bf16.mxu0 %v875
        %1025 = vmatpush1.bf16.msra.mxu0 %v874
        %1026 = vmatprep.subr.bf16.mxu0 %v869
        %1027 = vmatpush1.bf16.msra.mxu0 %v868
        %1028 = vmatprep.subr.bf16.mxu0 %v863
        %1029 = vmatpush1.bf16.msra.mxu0 %v862
        %1030 = vmatprep.subr.bf16.mxu0 %v857
        %1031 = vmatpush1.bf16.msra.mxu0 %v856
        %1032 = vmatprep.subr.bf16.mxu0 %v851
        %1033 = vmatpush1.bf16.msra.mxu0 %v850
        %1034 = vmatprep.subr.bf16.mxu0 %v845
        %1035 = vmatpush1.bf16.msra.mxu0 %v844
        %1036 = vmatprep.subr.bf16.mxu0 %v839
        %1037 = vmatpush1.bf16.msra.mxu0 %v838
        %1038 = vmatprep.subr.bf16.mxu0 %v833
        %1039 = vmatpush1.bf16.msra.mxu0 %v832
        %1040 = vmatprep.subr.bf16.mxu0 %v923
        %1041 = vmatpush2.bf16.msra.mxu0 %v922
        %1042 = vmatprep.subr.bf16.mxu0 %v917
        %1043 = vmatpush2.bf16.msra.mxu0 %v916
        %1044 = vmatprep.subr.bf16.mxu0 %v911
        %1045 = vmatpush2.bf16.msra.mxu0 %v910
        %1046 = vmatprep.subr.bf16.mxu0 %v905
        %1047 = vmatpush2.bf16.msra.mxu0 %v904
        %1048 = vmatprep.subr.bf16.mxu0 %v899
        %1049 = vmatpush2.bf16.msra.mxu0 %v898
        %1050 = vmatprep.subr.bf16.mxu0 %v893
        %1051 = vmatpush2.bf16.msra.mxu0 %v892
        %1052 = vmatprep.subr.bf16.mxu0 %v887
        %1053 = vmatpush2.bf16.msra.mxu0 %v886
        %1054 = vmatprep.subr.bf16.mxu0 %v881
        %1055 = vmatpush2.bf16.msra.mxu0 %v880
        %1056 = vmatprep.mubr.bf16.mxu0 %v537
        %1057 = vmatmul.mubr.bf16.gmra.mxu0 %v536
        %v1058 = vpop.f32.mrf.mxu0
        %v1059 = vadd.f32 0.0, %v1058
        %v1060 = vpop.f32.mrf.mxu0
        %v1061 = vadd.f32 0.0, %v1060
        %v1062 = vpop.f32.mrf.mxu0
        %v1063 = vadd.f32 0.0, %v1062
        %v1064 = vpop.f32.mrf.mxu0
        %v1065 = vadd.f32 0.0, %v1064
        %1066 = vmatprep.mubr.bf16.mxu0 %v539
        %1067 = vmatmul.mubr.bf16.gmra.mxu0 %v538
        %v1068 = vpop.f32.mrf.mxu0
        %v1069 = vadd.f32 0.0, %v1068
        %v1070 = vpop.f32.mrf.mxu0
        %v1071 = vadd.f32 0.0, %v1070
        %v1072 = vpop.f32.mrf.mxu0
        %v1073 = vadd.f32 0.0, %v1072
        %v1074 = vpop.f32.mrf.mxu0
        %v1075 = vadd.f32 0.0, %v1074
        %1076 = vdwg.mxu0
        %1077 = vmatprep.subr.bf16.mxu0 %v877
        %1078 = vmatpush1.bf16.msra.mxu0 %v876
        %1079 = vmatprep.subr.bf16.mxu0 %v871
        %1080 = vmatpush1.bf16.msra.mxu0 %v870
        %1081 = vmatprep.subr.bf16.mxu0 %v865
        %1082 = vmatpush1.bf16.msra.mxu0 %v864
        %1083 = vmatprep.subr.bf16.mxu0 %v859
        %1084 = vmatpush1.bf16.msra.mxu0 %v858
        %1085 = vmatprep.subr.bf16.mxu0 %v853
        %1086 = vmatpush1.bf16.msra.mxu0 %v852
        %1087 = vmatprep.subr.bf16.mxu0 %v847
        %1088 = vmatpush1.bf16.msra.mxu0 %v846
        %1089 = vmatprep.subr.bf16.mxu0 %v841
        %1090 = vmatpush1.bf16.msra.mxu0 %v840
        %1091 = vmatprep.subr.bf16.mxu0 %v835
        %1092 = vmatpush1.bf16.msra.mxu0 %v834
        %1093 = vmatprep.subr.bf16.mxu0 %v925
        %1094 = vmatpush2.bf16.msra.mxu0 %v924
        %1095 = vmatprep.subr.bf16.mxu0 %v919
        %1096 = vmatpush2.bf16.msra.mxu0 %v918
        %1097 = vmatprep.subr.bf16.mxu0 %v913
        %1098 = vmatpush2.bf16.msra.mxu0 %v912
        %1099 = vmatprep.subr.bf16.mxu0 %v907
        %1100 = vmatpush2.bf16.msra.mxu0 %v906
        %1101 = vmatprep.subr.bf16.mxu0 %v901
        %1102 = vmatpush2.bf16.msra.mxu0 %v900
        %1103 = vmatprep.subr.bf16.mxu0 %v895
        %1104 = vmatpush2.bf16.msra.mxu0 %v894
        %1105 = vmatprep.subr.bf16.mxu0 %v889
        %1106 = vmatpush2.bf16.msra.mxu0 %v888
        %1107 = vmatprep.subr.bf16.mxu0 %v883
        %1108 = vmatpush2.bf16.msra.mxu0 %v882
        %1109 = vmatprep.mubr.bf16.mxu0 %v537
        %1110 = vmatmul.mubr.bf16.gmra.mxu0 %v536
        %v1111 = vpop.f32.mrf.mxu0
        %v1112 = vadd.f32 0.0, %v1111
        %v1113 = vpop.f32.mrf.mxu0
        %v1114 = vadd.f32 0.0, %v1113
        %v1115 = vpop.f32.mrf.mxu0
        %v1116 = vadd.f32 0.0, %v1115
        %v1117 = vpop.f32.mrf.mxu0
        %v1118 = vadd.f32 0.0, %v1117
        %1119 = vmatprep.mubr.bf16.mxu0 %v539
        %1120 = vmatmul.mubr.bf16.gmra.mxu0 %v538
        %v1121 = vpop.f32.mrf.mxu0
        %v1122 = vadd.f32 0.0, %v1121
        %v1123 = vpop.f32.mrf.mxu0
        %v1124 = vadd.f32 0.0, %v1123
        %v1125 = vpop.f32.mrf.mxu0
        %v1126 = vadd.f32 0.0, %v1125
        %v1127 = vpop.f32.mrf.mxu0
        %v1128 = vadd.f32 0.0, %v1127
        %1129 = vdwg.mxu0
        %1130 = vmatprep.subr.bf16.mxu0 %v879
        %1131 = vmatpush1.bf16.msra.mxu0 %v878
        %1132 = vmatprep.subr.bf16.mxu0 %v873
        %1133 = vmatpush1.bf16.msra.mxu0 %v872
        %1134 = vmatprep.subr.bf16.mxu0 %v867
        %1135 = vmatpush1.bf16.msra.mxu0 %v866
        %1136 = vmatprep.subr.bf16.mxu0 %v861
        %1137 = vmatpush1.bf16.msra.mxu0 %v860
        %1138 = vmatprep.subr.bf16.mxu0 %v855
        %1139 = vmatpush1.bf16.msra.mxu0 %v854
        %1140 = vmatprep.subr.bf16.mxu0 %v849
        %1141 = vmatpush1.bf16.msra.mxu0 %v848
        %1142 = vmatprep.subr.bf16.mxu0 %v843
        %1143 = vmatpush1.bf16.msra.mxu0 %v842
        %1144 = vmatprep.subr.bf16.mxu0 %v837
        %1145 = vmatpush1.bf16.msra.mxu0 %v836
        %1146 = vmatprep.subr.bf16.mxu0 %v927
        %1147 = vmatpush2.bf16.msra.mxu0 %v926
        %1148 = vmatprep.subr.bf16.mxu0 %v921
        %1149 = vmatpush2.bf16.msra.mxu0 %v920
        %1150 = vmatprep.subr.bf16.mxu0 %v915
        %1151 = vmatpush2.bf16.msra.mxu0 %v914
        %1152 = vmatprep.subr.bf16.mxu0 %v909
        %1153 = vmatpush2.bf16.msra.mxu0 %v908
        %1154 = vmatprep.subr.bf16.mxu0 %v903
        %1155 = vmatpush2.bf16.msra.mxu0 %v902
        %1156 = vmatprep.subr.bf16.mxu0 %v897
        %1157 = vmatpush2.bf16.msra.mxu0 %v896
        %1158 = vmatprep.subr.bf16.mxu0 %v891
        %1159 = vmatpush2.bf16.msra.mxu0 %v890
        %1160 = vmatprep.subr.bf16.mxu0 %v885
        %1161 = vmatpush2.bf16.msra.mxu0 %v884
        %1162 = vmatprep.mubr.bf16.mxu0 %v537
        %1163 = vmatmul.mubr.bf16.gmra.mxu0 %v536
        %v1164 = vpop.f32.mrf.mxu0
        %v1165 = vadd.f32 0.0, %v1164
        %v1166 = vpop.f32.mrf.mxu0
        %v1167 = vadd.f32 0.0, %v1166
        %v1168 = vpop.f32.mrf.mxu0
        %v1169 = vadd.f32 0.0, %v1168
        %v1170 = vpop.f32.mrf.mxu0
        %v1171 = vadd.f32 0.0, %v1170
        %1172 = vmatprep.mubr.bf16.mxu0 %v539
        %1173 = vmatmul.mubr.bf16.gmra.mxu0 %v538
        %v1174 = vpop.f32.mrf.mxu0
        %v1175 = vadd.f32 0.0, %v1174
        %v1176 = vpop.f32.mrf.mxu0
        %v1177 = vadd.f32 0.0, %v1176
        %v1178 = vpop.f32.mrf.mxu0
        %v1179 = vadd.f32 0.0, %v1178
        %v1180 = vpop.f32.mrf.mxu0
        %v1181 = vadd.f32 0.0, %v1180
        %1182 = vdwg.mxu0
        %v1183 = vadd.f32 %v400, %v1059
        %v1184 = vadd.f32 %v401, %v1061
        %v1185 = vadd.f32 %v402, %v1112
        %v1186 = vadd.f32 %v403, %v1114
        %v1187 = vadd.f32 %v404, %v1165
        %v1188 = vadd.f32 %v405, %v1167
        %v1189 = vadd.f32 %v406, %v1063
        %v1190 = vadd.f32 %v407, %v1065
        %v1191 = vadd.f32 %v408, %v1116
        %v1192 = vadd.f32 %v409, %v1118
        %v1193 = vadd.f32 %v410, %v1169
        %v1194 = vadd.f32 %v411, %v1171
        %v1195 = vadd.f32 %v412, %v1069
        %v1196 = vadd.f32 %v413, %v1071
        %v1197 = vadd.f32 %v414, %v1122
        %v1198 = vadd.f32 %v415, %v1124
        %v1199 = vadd.f32 %v416, %v1175
        %v1200 = vadd.f32 %v417, %v1177
        %v1201 = vadd.f32 %v418, %v1073
        %v1202 = vadd.f32 %v419, %v1075
        %v1203 = vadd.f32 %v420, %v1126
        %v1204 = vadd.f32 %v421, %v1128
        %v1205 = vadd.f32 %v422, %v1179
        %v1206 = vadd.f32 %v423, %v1181
        %1207 = vst [vmem:[#allocation2] sm:$0xff] %v1183
        %1208 = vst [vmem:[#allocation2 + $0x8] sm:$0xff] %v1184
        %1209 = vst [vmem:[#allocation2 + $0x10] sm:$0xff] %v1185
        %1210 = vst [vmem:[#allocation2 + $0x18] sm:$0xff] %v1186
        %1211 = vst [vmem:[#allocation2 + $0x20] sm:$0xff] %v1187
        %1212 = vst [vmem:[#allocation2 + $0x28] sm:$0xff] %v1188
        %1213 = vst [vmem:[#allocation2 + $0x30] sm:$0xff] %v1189
        %1214 = vst [vmem:[#allocation2 + $0x38] sm:$0xff] %v1190
        %1215 = vst [vmem:[#allocation2 + $0x40] sm:$0xff] %v1191
        %1216 = vst [vmem:[#allocation2 + $0x48] sm:$0xff] %v1192
        %1217 = vst [vmem:[#allocation2 + $0x50] sm:$0xff] %v1193
        %1218 = vst [vmem:[#allocation2 + $0x58] sm:$0xff] %v1194
        %1219 = vst [vmem:[#allocation2 + $0x60] sm:$0xff] %v1195
        %1220 = vst [vmem:[#allocation2 + $0x68] sm:$0xff] %v1196
        %1221 = vst [vmem:[#allocation2 + $0x70] sm:$0xff] %v1197
        %1222 = vst [vmem:[#allocation2 + $0x78] sm:$0xff] %v1198
        %1223 = vst [vmem:[#allocation2 + $0x80] sm:$0xff] %v1199
        %1224 = vst [vmem:[#allocation2 + $0x88] sm:$0xff] %v1200
        %1225 = vst [vmem:[#allocation2 + $0x90] sm:$0xff] %v1201
        %1226 = vst [vmem:[#allocation2 + $0x98] sm:$0xff] %v1202
        %1227 = vst [vmem:[#allocation2 + $0xa0] sm:$0xff] %v1203
        %1228 = vst [vmem:[#allocation2 + $0xa8] sm:$0xff] %v1204
        %1229 = vst [vmem:[#allocation2 + $0xb0] sm:$0xff] %v1205
        %1230 = vst [vmem:[#allocation2 + $0xb8] sm:$0xff] %v1206
        %p1231 = scmp.eq.s32.totalorder %s22, 2
        // Predicated region
        $region87: #{closed_call.18} parent=77 // pred_check
          %p1232 = pneg %p1231
        $region88: #{closed_call.18} parent=77 // pred_check_branch
          %1234 = sbr.rel (%p1232) target = $region90
        $region89: #{closed_call.18} parent=77 // pred_region
          %v1235 = vld [vmem:[#allocation2] sm:$0xff]
          %v1236 = vld [vmem:[#allocation2 + $0x8] sm:$0xff]
          %v1237 = vld [vmem:[#allocation2 + $0x10] sm:$0xff]
          %v1238 = vld [vmem:[#allocation2 + $0x18] sm:$0xff]
          %v1239 = vld [vmem:[#allocation2 + $0x20] sm:$0xff]
          %v1240 = vld [vmem:[#allocation2 + $0x28] sm:$0xff]
          %v1241 = vld [vmem:[#allocation2 + $0x30] sm:$0xff]
          %v1242 = vld [vmem:[#allocation2 + $0x38] sm:$0xff]
          %v1243 = vld [vmem:[#allocation2 + $0x40] sm:$0xff]
          %v1244 = vld [vmem:[#allocation2 + $0x48] sm:$0xff]
          %v1245 = vld [vmem:[#allocation2 + $0x50] sm:$0xff]
          %v1246 = vld [vmem:[#allocation2 + $0x58] sm:$0xff]
          %v1247 = vld [vmem:[#allocation2 + $0x60] sm:$0xff]
          %v1248 = vld [vmem:[#allocation2 + $0x68] sm:$0xff]
          %v1249 = vld [vmem:[#allocation2 + $0x70] sm:$0xff]
          %v1250 = vld [vmem:[#allocation2 + $0x78] sm:$0xff]
          %v1251 = vld [vmem:[#allocation2 + $0x80] sm:$0xff]
          %v1252 = vld [vmem:[#allocation2 + $0x88] sm:$0xff]
          %v1253 = vld [vmem:[#allocation2 + $0x90] sm:$0xff]
          %v1254 = vld [vmem:[#allocation2 + $0x98] sm:$0xff]
          %v1255 = vld [vmem:[#allocation2 + $0xa0] sm:$0xff]
          %v1256 = vld [vmem:[#allocation2 + $0xa8] sm:$0xff]
          %v1257 = vld [vmem:[#allocation2 + $0xb0] sm:$0xff]
          %v1258 = vld [vmem:[#allocation2 + $0xb8] sm:$0xff]
          %v1259 = vld [vmem:[%s2] sm:$0x3f]
          %v1261 = vlaneseq
          %v1262 = vshrl.u32 %v1261, 7
          %v1263 = vsub.s32 0, %v1262
          %v1264 = vrot.slane %v1259, %v1263
          %v1265 = vlaneseq
          %v1266 = vshrl.u32 %v1265, 7
          %v1267 = vsub.s32 1, %v1266
          %v1268 = vrot.slane %v1259, %v1267
          %v1269 = vlaneseq
          %v1270 = vshrl.u32 %v1269, 7
          %v1271 = vsub.s32 2, %v1270
          %v1272 = vrot.slane %v1259, %v1271
          %v1273 = vlaneseq
          %v1274 = vshrl.u32 %v1273, 7
          %v1275 = vsub.s32 3, %v1274
          %v1276 = vrot.slane %v1259, %v1275
          %v1277 = vlaneseq
          %v1278 = vshrl.u32 %v1277, 7
          %v1279 = vsub.s32 4, %v1278
          %v1280 = vrot.slane %v1259, %v1279
          %v1281 = vlaneseq
          %v1282 = vshrl.u32 %v1281, 7
          %v1283 = vsub.s32 5, %v1282
          %v1284 = vrot.slane %v1259, %v1283
          %v1291 = vadd.f32 %v1235, %v1264
          %v1292 = vadd.f32 %v1236, %v1268
          %v1293 = vadd.f32 %v1237, %v1272
          %v1294 = vadd.f32 %v1238, %v1276
          %v1295 = vadd.f32 %v1239, %v1280
          %v1296 = vadd.f32 %v1240, %v1284
          %v1297 = vadd.f32 %v1241, %v1264
          %v1298 = vadd.f32 %v1242, %v1268
          %v1299 = vadd.f32 %v1243, %v1272
          %v1300 = vadd.f32 %v1244, %v1276
          %v1301 = vadd.f32 %v1245, %v1280
          %v1302 = vadd.f32 %v1246, %v1284
          %v1303 = vadd.f32 %v1247, %v1264
          %v1304 = vadd.f32 %v1248, %v1268
          %v1305 = vadd.f32 %v1249, %v1272
          %v1306 = vadd.f32 %v1250, %v1276
          %v1307 = vadd.f32 %v1251, %v1280
          %v1308 = vadd.f32 %v1252, %v1284
          %v1309 = vadd.f32 %v1253, %v1264
          %v1310 = vadd.f32 %v1254, %v1268
          %v1311 = vadd.f32 %v1255, %v1272
          %v1312 = vadd.f32 %v1256, %v1276
          %v1313 = vadd.f32 %v1257, %v1280
          %v1314 = vadd.f32 %v1258, %v1284
          %v1315 = vld [vmem:[%s363] sm:$0xff]
          %v1316 = vld [vmem:[%s363 + $0x8] sm:$0xff]
          %v1317 = vld [vmem:[%s363 + $0x10] sm:$0xff]
          %v1318 = vld [vmem:[%s363 + $0x18] sm:$0xff]
          %v1319 = vld [vmem:[%s363 + $0x20] sm:$0xff]
          %v1320 = vld [vmem:[%s363 + $0x28] sm:$0xff]
          %v1321 = vld [vmem:[%s363 + $0x30] sm:$0xff]
          %v1322 = vld [vmem:[%s363 + $0x38] sm:$0xff]
          %v1323 = vld [vmem:[%s363 + $0x40] sm:$0xff]
          %v1324 = vld [vmem:[%s363 + $0x48] sm:$0xff]
          %v1325 = vld [vmem:[%s363 + $0x50] sm:$0xff]
          %v1326 = vld [vmem:[%s363 + $0x58] sm:$0xff]
          %v1327 = vunpack.c.l.bf16 %v1315
          %v1328 = vunpack.c.h.bf16 %v1315
          %v1329 = vunpack.c.l.bf16 %v1316
          %v1330 = vunpack.c.h.bf16 %v1316
          %v1331 = vunpack.c.l.bf16 %v1317
          %v1332 = vunpack.c.h.bf16 %v1317
          %v1333 = vunpack.c.l.bf16 %v1318
          %v1334 = vunpack.c.h.bf16 %v1318
          %v1335 = vunpack.c.l.bf16 %v1319
          %v1336 = vunpack.c.h.bf16 %v1319
          %v1337 = vunpack.c.l.bf16 %v1320
          %v1338 = vunpack.c.h.bf16 %v1320
          %v1339 = vunpack.c.l.bf16 %v1321
          %v1340 = vunpack.c.h.bf16 %v1321
          %v1341 = vunpack.c.l.bf16 %v1322
          %v1342 = vunpack.c.h.bf16 %v1322
          %v1343 = vunpack.c.l.bf16 %v1323
          %v1344 = vunpack.c.h.bf16 %v1323
          %v1345 = vunpack.c.l.bf16 %v1324
          %v1346 = vunpack.c.h.bf16 %v1324
          %v1347 = vunpack.c.l.bf16 %v1325
          %v1348 = vunpack.c.h.bf16 %v1325
          %v1349 = vunpack.c.l.bf16 %v1326
          %v1350 = vunpack.c.h.bf16 %v1326
          %v1351 = vadd.f32 %v1291, %v1327
          %v1352 = vadd.f32 %v1292, %v1328
          %v1353 = vadd.f32 %v1293, %v1329
          %v1354 = vadd.f32 %v1294, %v1330
          %v1355 = vadd.f32 %v1295, %v1331
          %v1356 = vadd.f32 %v1296, %v1332
          %v1357 = vadd.f32 %v1297, %v1333
          %v1358 = vadd.f32 %v1298, %v1334
          %v1359 = vadd.f32 %v1299, %v1335
          %v1360 = vadd.f32 %v1300, %v1336
          %v1361 = vadd.f32 %v1301, %v1337
          %v1362 = vadd.f32 %v1302, %v1338
          %v1363 = vadd.f32 %v1303, %v1339
          %v1364 = vadd.f32 %v1304, %v1340
          %v1365 = vadd.f32 %v1305, %v1341
          %v1366 = vadd.f32 %v1306, %v1342
          %v1367 = vadd.f32 %v1307, %v1343
          %v1368 = vadd.f32 %v1308, %v1344
          %v1369 = vadd.f32 %v1309, %v1345
          %v1370 = vadd.f32 %v1310, %v1346
          %v1371 = vadd.f32 %v1311, %v1347
          %v1372 = vadd.f32 %v1312, %v1348
          %v1373 = vadd.f32 %v1313, %v1349
          %v1374 = vadd.f32 %v1314, %v1350
          %v1375 = vadd.f32 %v1351, %v1352
          %v1376 = vadd.f32 %v1375, %v1353
          %v1377 = vadd.f32 %v1376, %v1354
          %v1378 = vadd.f32 %v1377, %v1355
          %v1379 = vadd.f32 %v1378, %v1356
          %1380 = vadd.xlane.f32.xlu0 %v1379
          %v1381 = vpop.xlane.xlu0 %1380
          %v1382 = vadd.f32 %v1357, %v1358
          %v1383 = vadd.f32 %v1382, %v1359
          %v1384 = vadd.f32 %v1383, %v1360
          %v1385 = vadd.f32 %v1384, %v1361
          %v1386 = vadd.f32 %v1385, %v1362
          %1387 = vadd.xlane.f32.xlu0 %v1386
          %v1388 = vpop.xlane.xlu0 %1387
          %v1389 = vadd.f32 %v1363, %v1364
          %v1390 = vadd.f32 %v1389, %v1365
          %v1391 = vadd.f32 %v1390, %v1366
          %v1392 = vadd.f32 %v1391, %v1367
          %v1393 = vadd.f32 %v1392, %v1368
          %1394 = vadd.xlane.f32.xlu0 %v1393
          %v1395 = vpop.xlane.xlu0 %1394
          %v1396 = vadd.f32 %v1369, %v1370
          %v1397 = vadd.f32 %v1396, %v1371
          %v1398 = vadd.f32 %v1397, %v1372
          %v1399 = vadd.f32 %v1398, %v1373
          %v1400 = vadd.f32 %v1399, %v1374
          %1401 = vadd.xlane.f32.xlu0 %v1400
          %v1402 = vpop.xlane.xlu0 %1401
          %v1403 = vrcp.pop 768.0
          %v1404 = vmul.f32 %v1381, %v1403
          %v1405 = vmul.f32 %v1388, %v1403
          %v1406 = vmul.f32 %v1395, %v1403
          %v1407 = vmul.f32 %v1402, %v1403
          %v1408 = vsub.f32 %v1351, %v1404
          %v1409 = vsub.f32 %v1352, %v1404
          %v1410 = vsub.f32 %v1353, %v1404
          %v1411 = vsub.f32 %v1354, %v1404
          %v1412 = vsub.f32 %v1355, %v1404
          %v1413 = vsub.f32 %v1356, %v1404
          %v1414 = vsub.f32 %v1357, %v1405
          %v1415 = vsub.f32 %v1358, %v1405
          %v1416 = vsub.f32 %v1359, %v1405
          %v1417 = vsub.f32 %v1360, %v1405
          %v1418 = vsub.f32 %v1361, %v1405
          %v1419 = vsub.f32 %v1362, %v1405
          %v1420 = vsub.f32 %v1363, %v1406
          %v1421 = vsub.f32 %v1364, %v1406
          %v1422 = vsub.f32 %v1365, %v1406
          %v1423 = vsub.f32 %v1366, %v1406
          %v1424 = vsub.f32 %v1367, %v1406
          %v1425 = vsub.f32 %v1368, %v1406
          %v1426 = vsub.f32 %v1369, %v1407
          %v1427 = vsub.f32 %v1370, %v1407
          %v1428 = vsub.f32 %v1371, %v1407
          %v1429 = vsub.f32 %v1372, %v1407
          %v1430 = vsub.f32 %v1373, %v1407
          %v1431 = vsub.f32 %v1374, %v1407
          %v1432 = vmul.f32 %v1408, %v1408
          %v1433 = vmul.f32 %v1409, %v1409
          %v1434 = vmul.f32 %v1410, %v1410
          %v1435 = vmul.f32 %v1411, %v1411
          %v1436 = vmul.f32 %v1412, %v1412
          %v1437 = vmul.f32 %v1413, %v1413
          %v1438 = vmul.f32 %v1414, %v1414
          %v1439 = vmul.f32 %v1415, %v1415
          %v1440 = vmul.f32 %v1416, %v1416
          %v1441 = vmul.f32 %v1417, %v1417
          %v1442 = vmul.f32 %v1418, %v1418
          %v1443 = vmul.f32 %v1419, %v1419
          %v1444 = vmul.f32 %v1420, %v1420
          %v1445 = vmul.f32 %v1421, %v1421
          %v1446 = vmul.f32 %v1422, %v1422
          %v1447 = vmul.f32 %v1423, %v1423
          %v1448 = vmul.f32 %v1424, %v1424
          %v1449 = vmul.f32 %v1425, %v1425
          %v1450 = vmul.f32 %v1426, %v1426
          %v1451 = vmul.f32 %v1427, %v1427
          %v1452 = vmul.f32 %v1428, %v1428
          %v1453 = vmul.f32 %v1429, %v1429
          %v1454 = vmul.f32 %v1430, %v1430
          %v1455 = vmul.f32 %v1431, %v1431
          %v1456 = vadd.f32 %v1432, %v1433
          %v1457 = vadd.f32 %v1456, %v1434
          %v1458 = vadd.f32 %v1457, %v1435
          %v1459 = vadd.f32 %v1458, %v1436
          %v1460 = vadd.f32 %v1459, %v1437
          %1461 = vadd.xlane.f32.xlu0 %v1460
          %v1462 = vpop.xlane.xlu0 %1461
          %v1463 = vadd.f32 %v1438, %v1439
          %v1464 = vadd.f32 %v1463, %v1440
          %v1465 = vadd.f32 %v1464, %v1441
          %v1466 = vadd.f32 %v1465, %v1442
          %v1467 = vadd.f32 %v1466, %v1443
          %1468 = vadd.xlane.f32.xlu0 %v1467
          %v1469 = vpop.xlane.xlu0 %1468
          %v1470 = vadd.f32 %v1444, %v1445
          %v1471 = vadd.f32 %v1470, %v1446
          %v1472 = vadd.f32 %v1471, %v1447
          %v1473 = vadd.f32 %v1472, %v1448
          %v1474 = vadd.f32 %v1473, %v1449
          %1475 = vadd.xlane.f32.xlu0 %v1474
          %v1476 = vpop.xlane.xlu0 %1475
          %v1477 = vadd.f32 %v1450, %v1451
          %v1478 = vadd.f32 %v1477, %v1452
          %v1479 = vadd.f32 %v1478, %v1453
          %v1480 = vadd.f32 %v1479, %v1454
          %v1481 = vadd.f32 %v1480, %v1455
          %1482 = vadd.xlane.f32.xlu0 %v1481
          %v1483 = vpop.xlane.xlu0 %1482
          %v1484 = vmul.f32 %v1462, %v1403
          %v1485 = vmul.f32 %v1469, %v1403
          %v1486 = vmul.f32 %v1476, %v1403
          %v1487 = vmul.f32 %v1483, %v1403
          %v1488 = vadd.f32 %v1484, 1e-12
          %v1489 = vadd.f32 %v1485, 1e-12
          %v1490 = vadd.f32 %v1486, 1e-12
          %v1491 = vadd.f32 %v1487, 1e-12
          %v1492 = vrsqrt.pop %v1488
          %v1493 = vrsqrt.pop %v1489
          %v1494 = vrsqrt.pop %v1490
          %v1495 = vrsqrt.pop %v1491
          %v1496 = vmul.f32 %v1408, %v1492
          %v1497 = vmul.f32 %v1409, %v1492
          %v1498 = vmul.f32 %v1410, %v1492
          %v1499 = vmul.f32 %v1411, %v1492
          %v1500 = vmul.f32 %v1412, %v1492
          %v1501 = vmul.f32 %v1413, %v1492
          %v1502 = vmul.f32 %v1414, %v1493
          %v1503 = vmul.f32 %v1415, %v1493
          %v1504 = vmul.f32 %v1416, %v1493
          %v1505 = vmul.f32 %v1417, %v1493
          %v1506 = vmul.f32 %v1418, %v1493
          %v1507 = vmul.f32 %v1419, %v1493
          %v1508 = vmul.f32 %v1420, %v1494
          %v1509 = vmul.f32 %v1421, %v1494
          %v1510 = vmul.f32 %v1422, %v1494
          %v1511 = vmul.f32 %v1423, %v1494
          %v1512 = vmul.f32 %v1424, %v1494
          %v1513 = vmul.f32 %v1425, %v1494
          %v1514 = vmul.f32 %v1426, %v1495
          %v1515 = vmul.f32 %v1427, %v1495
          %v1516 = vmul.f32 %v1428, %v1495
          %v1517 = vmul.f32 %v1429, %v1495
          %v1518 = vmul.f32 %v1430, %v1495
          %v1519 = vmul.f32 %v1431, %v1495
          %v1520 = vld [vmem:[%s4] sm:$0x3f]
          %v1522 = vlaneseq
          %v1523 = vshrl.u32 %v1522, 7
          %v1524 = vsub.s32 0, %v1523
          %v1525 = vrot.slane %v1520, %v1524
          %v1526 = vlaneseq
          %v1527 = vshrl.u32 %v1526, 7
          %v1528 = vsub.s32 1, %v1527
          %v1529 = vrot.slane %v1520, %v1528
          %v1530 = vlaneseq
          %v1531 = vshrl.u32 %v1530, 7
          %v1532 = vsub.s32 2, %v1531
          %v1533 = vrot.slane %v1520, %v1532
          %v1534 = vlaneseq
          %v1535 = vshrl.u32 %v1534, 7
          %v1536 = vsub.s32 3, %v1535
          %v1537 = vrot.slane %v1520, %v1536
          %v1538 = vlaneseq
          %v1539 = vshrl.u32 %v1538, 7
          %v1540 = vsub.s32 4, %v1539
          %v1541 = vrot.slane %v1520, %v1540
          %v1542 = vlaneseq
          %v1543 = vshrl.u32 %v1542, 7
          %v1544 = vsub.s32 5, %v1543
          %v1545 = vrot.slane %v1520, %v1544
          %v1552 = vmul.f32 %v1496, %v1525
          %v1553 = vmul.f32 %v1497, %v1529
          %v1554 = vmul.f32 %v1498, %v1533
          %v1555 = vmul.f32 %v1499, %v1537
          %v1556 = vmul.f32 %v1500, %v1541
          %v1557 = vmul.f32 %v1501, %v1545
          %v1558 = vmul.f32 %v1502, %v1525
          %v1559 = vmul.f32 %v1503, %v1529
          %v1560 = vmul.f32 %v1504, %v1533
          %v1561 = vmul.f32 %v1505, %v1537
          %v1562 = vmul.f32 %v1506, %v1541
          %v1563 = vmul.f32 %v1507, %v1545
          %v1564 = vmul.f32 %v1508, %v1525
          %v1565 = vmul.f32 %v1509, %v1529
          %v1566 = vmul.f32 %v1510, %v1533
          %v1567 = vmul.f32 %v1511, %v1537
          %v1568 = vmul.f32 %v1512, %v1541
          %v1569 = vmul.f32 %v1513, %v1545
          %v1570 = vmul.f32 %v1514, %v1525
          %v1571 = vmul.f32 %v1515, %v1529
          %v1572 = vmul.f32 %v1516, %v1533
          %v1573 = vmul.f32 %v1517, %v1537
          %v1574 = vmul.f32 %v1518, %v1541
          %v1575 = vmul.f32 %v1519, %v1545
          %v1576 = vld [vmem:[%s5] sm:$0x3f]
          %v1578 = vlaneseq
          %v1579 = vshrl.u32 %v1578, 7
          %v1580 = vsub.s32 0, %v1579
          %v1581 = vrot.slane %v1576, %v1580
          %v1582 = vlaneseq
          %v1583 = vshrl.u32 %v1582, 7
          %v1584 = vsub.s32 1, %v1583
          %v1585 = vrot.slane %v1576, %v1584
          %v1586 = vlaneseq
          %v1587 = vshrl.u32 %v1586, 7
          %v1588 = vsub.s32 2, %v1587
          %v1589 = vrot.slane %v1576, %v1588
          %v1590 = vlaneseq
          %v1591 = vshrl.u32 %v1590, 7
          %v1592 = vsub.s32 3, %v1591
          %v1593 = vrot.slane %v1576, %v1592
          %v1594 = vlaneseq
          %v1595 = vshrl.u32 %v1594, 7
          %v1596 = vsub.s32 4, %v1595
          %v1597 = vrot.slane %v1576, %v1596
          %v1598 = vlaneseq
          %v1599 = vshrl.u32 %v1598, 7
          %v1600 = vsub.s32 5, %v1599
          %v1601 = vrot.slane %v1576, %v1600
          %v1608 = vadd.f32 %v1552, %v1581
          %v1609 = vadd.f32 %v1553, %v1585
          %v1610 = vadd.f32 %v1554, %v1589
          %v1611 = vadd.f32 %v1555, %v1593
          %v1612 = vadd.f32 %v1556, %v1597
          %v1613 = vadd.f32 %v1557, %v1601
          %v1614 = vadd.f32 %v1558, %v1581
          %v1615 = vadd.f32 %v1559, %v1585
          %v1616 = vadd.f32 %v1560, %v1589
          %v1617 = vadd.f32 %v1561, %v1593
          %v1618 = vadd.f32 %v1562, %v1597
          %v1619 = vadd.f32 %v1563, %v1601
          %v1620 = vadd.f32 %v1564, %v1581
          %v1621 = vadd.f32 %v1565, %v1585
          %v1622 = vadd.f32 %v1566, %v1589
          %v1623 = vadd.f32 %v1567, %v1593
          %v1624 = vadd.f32 %v1568, %v1597
          %v1625 = vadd.f32 %v1569, %v1601
          %v1626 = vadd.f32 %v1570, %v1581
          %v1627 = vadd.f32 %v1571, %v1585
          %v1628 = vadd.f32 %v1572, %v1589
          %v1629 = vadd.f32 %v1573, %v1593
          %v1630 = vadd.f32 %v1574, %v1597
          %v1631 = vadd.f32 %v1575, %v1601
          %v1632 = vpack.c.bf16 %v1614, %v1608
          %v1633 = vpack.c.bf16 %v1615, %v1609
          %v1634 = vpack.c.bf16 %v1616, %v1610
          %v1635 = vpack.c.bf16 %v1617, %v1611
          %v1636 = vpack.c.bf16 %v1618, %v1612
          %v1637 = vpack.c.bf16 %v1619, %v1613
          %v1638 = vpack.c.bf16 %v1626, %v1620
          %v1639 = vpack.c.bf16 %v1627, %v1621
          %v1640 = vpack.c.bf16 %v1628, %v1622
          %v1641 = vpack.c.bf16 %v1629, %v1623
          %v1642 = vpack.c.bf16 %v1630, %v1624
          %v1643 = vpack.c.bf16 %v1631, %v1625
          %v1656 = vunpack.c.l.b16 %v1632
          %v1657 = vunpack.c.l.b16 %v1633
          %v1658 = vunpack.c.l.b16 %v1634
          %v1659 = vunpack.c.l.b16 %v1635
          %v1660 = vunpack.c.l.b16 %v1636
          %v1661 = vunpack.c.l.b16 %v1637
          %v1662 = vunpack.c.h.b16 %v1632
          %v1663 = vunpack.c.h.b16 %v1633
          %v1664 = vunpack.c.h.b16 %v1634
          %v1665 = vunpack.c.h.b16 %v1635
          %v1666 = vunpack.c.h.b16 %v1636
          %v1667 = vunpack.c.h.b16 %v1637
          %v1668 = vunpack.c.l.b16 %v1638
          %v1669 = vunpack.c.l.b16 %v1639
          %v1670 = vunpack.c.l.b16 %v1640
          %v1671 = vunpack.c.l.b16 %v1641
          %v1672 = vunpack.c.l.b16 %v1642
          %v1673 = vunpack.c.l.b16 %v1643
          %v1674 = vunpack.c.h.b16 %v1638
          %v1675 = vunpack.c.h.b16 %v1639
          %v1676 = vunpack.c.h.b16 %v1640
          %v1677 = vunpack.c.h.b16 %v1641
          %v1678 = vunpack.c.h.b16 %v1642
          %v1679 = vunpack.c.h.b16 %v1643
          %v1680 = vpack.c.b16 %v1657, %v1656
          %v1681 = vpack.c.b16 %v1659, %v1658
          %v1682 = vpack.c.b16 %v1661, %v1660
          %v1683 = vpack.c.b16 %v1663, %v1662
          %v1684 = vpack.c.b16 %v1665, %v1664
          %v1685 = vpack.c.b16 %v1667, %v1666
          %v1686 = vpack.c.b16 %v1669, %v1668
          %v1687 = vpack.c.b16 %v1671, %v1670
          %v1688 = vpack.c.b16 %v1673, %v1672
          %v1689 = vpack.c.b16 %v1675, %v1674
          %v1690 = vpack.c.b16 %v1677, %v1676
          %v1691 = vpack.c.b16 %v1679, %v1678
          %1704 = vst [vmem:[%s370] sm:$0xff] %v1680
          %1705 = vst [vmem:[%s370 + $0x8] sm:$0xff] %v1681
          %1706 = vst [vmem:[%s370 + $0x10] sm:$0xff] %v1682
          %1707 = vst [vmem:[%s370 + $0x18] sm:$0xff] %v1683
          %1708 = vst [vmem:[%s370 + $0x20] sm:$0xff] %v1684
          %1709 = vst [vmem:[%s370 + $0x28] sm:$0xff] %v1685
          %1710 = vst [vmem:[%s370 + $0x30] sm:$0xff] %v1686
          %1711 = vst [vmem:[%s370 + $0x38] sm:$0xff] %v1687
          %1712 = vst [vmem:[%s370 + $0x40] sm:$0xff] %v1688
          %1713 = vst [vmem:[%s370 + $0x48] sm:$0xff] %v1689
          %1714 = vst [vmem:[%s370 + $0x50] sm:$0xff] %v1690
          %1715 = vst [vmem:[%s370 + $0x58] sm:$0xff] %v1691
        $region90: #{closed_call.18} parent=77 // pred_fallthru
          _
        %s1716 = smul.u32 4, %s21
        %p1717 = scmp.lt.s32.totalorder %s1716, 3
        %s1718 = scalar_select %p1717, %s1716, 3
        %s1719 = smul.addr %s1718, 6
        %s1720 = smul.addr %s1719, 4
        %s1721 = scalar_lea.vmem %s6, %s1720
        // Predicated region
        $region91: #{closed_call.18} parent=77 // pred_check
          %p1722 = pneg %p190
        $region92: #{closed_call.18} parent=77 // pred_check_branch
          %1724 = sbr.rel (%p1722) target = $region94
        $region93: #{closed_call.18} parent=77 // pred_region
          %s1725 = smul.u32 4, %s21
        $region94: #{closed_call.18} parent=77 // pred_fallthru
          _
        // Predicated region
        $region95: #{closed_call.18} parent=77 // pred_check
          %p1726 = pneg %p190
        $region96: #{closed_call.18} parent=77 // pred_check_branch
          %1728 = sbr.rel (%p1726) target = $region98
        $region97: #{closed_call.18} parent=77 // pred_region
          %s1729 = smul.u32 4, %s21
          %p1730 = scmp.lt.s32.totalorder %s1729, 3
          %s1731 = scalar_select %p1730, %s1729, 3
          %s1732 = smul.addr %s1731, 6
          %s1733 = smul.addr %s1732, 4
          %s1734 = scalar_lea.vmem %s6, %s1733
        $region98: #{closed_call.18} parent=77 // pred_fallthru
          _
      $region78: #{closed_call.18} parent=5 // pred_fallthru
        _
      %p1735 = scmp.le.s32.totalorder 2, %s12
      // Predicated region
      $region99: #{closed_call.18} parent=5 // pred_check
        %p1736 = pneg %p1735
      $region100: #{closed_call.18} parent=5 // pred_check_branch
        %1738 = sbr.rel (%p1736) target = $region102
      $region101: #{closed_call.18} parent=5 // pred_region
        %s1739 = ssub.s32 %s12, 2
      $region102: #{closed_call.18} parent=5 // pred_fallthru
        _
    $region6: #{closed_call.18} parent=1 // loop_footer
      %s16 = sadd.s32 1, %s12
    $region7: #{closed_call.18} parent=1 // loop_footer_branch
      %11 = sbr.rel target = $region3
    $region8: #{closed_call.18} parent=1 // loop_exit
      _

// kernel: closed_call.19
$region0: #{closed_call.19}
  #allocation0 [shape = 'u32[]', space=smem, size = 0x4, offset = 0x4, fixed_abs, tag = 'smem constant byte address 0x4 - core index']
  #allocation1 [shape = 'u32[144,128]{1,0:T(1,128)}', space=vmem, size = 0x12000, scoped, tag = 'internal scratch']
  #allocation2 [shape = 'f32[32,512]{1,0:T(8,128)}', space=vmem, size = 0x10000, scoped, tag = 'scratch operand']
  %s0 = inlined_call_operand.vmem [shape: bf16[32,768], index: 0, kind: input, shape index: {}]
  %s1 = inlined_call_operand.vmem [shape: bf16[768,3072], index: 1, kind: input, shape index: {}]
  %s2 = inlined_call_operand.vmem [shape: f32[1,3072], index: 2, kind: input, shape index: {}]
  %s3 = inlined_call_operand.vmem [shape: bf16[32,3072], index: 3, kind: output, shape index: {}]
  %s4 = sld [smem:[#allocation0]]
  $region133: #{closed_call.19} parent=0
    _
  %s6 = ssub.s32 1, %s4
  %s7 = scalar_select 0, %s6, %s4
  $region1: #{closed_call.19} parent=0
    #allocation3 [shape = 'u8[32768]{0}', space=vmem, size = 0x8000, scoped, tag = 'input window, operand 0']
    #allocation4 [shape = 'u8[524288]{0}', space=vmem, size = 0x80000, scoped, tag = 'input window, operand 1']
    #allocation5 [shape = 'u8[65536]{0}', space=vmem, size = 0x10000, scoped, tag = 'output window, operand 0']
    loop: start=0, step=1, limit=20
    $region2: #{closed_call.19} parent=1 // loop_pre_header
      _
    $region3: #{closed_call.19} parent=1 // loop_header
      %s9 = sphi 0, %s13
      %p10 = scmp.ge.s32.totalorder %s9, 20
      %s16 = sphi 0, %s35
      %s17 = sphi 0, %s31
      %s18 = sphi 0, %s27
      %s19 = sphi 0, %s16
      %s20 = sphi 0, %s17
      %s21 = sphi 0, %s18
      %s22 = sphi 0, %s19
      %s23 = sphi 0, %s20
      %s24 = sphi 0, %s21
      %s40 = sphi 0, %s42
      %s43 = sphi 0, %s40
      %s44 = sphi 0, %s43
      %s60 = sphi 0, %s44
      %s68 = sphi 0, %s70
      %s71 = sphi 0, %s68
      %s72 = sphi 0, %s71
      %s88 = sphi 0, %s72
      %s94 = sphi 0, %s96
      %s97 = sphi 0, %s94
      %s98 = sphi 0, %s97
      %s114 = sphi 0, %s98
      %s122 = sphi 0, %s124
      %s125 = sphi 0, %s122
      %s126 = sphi 0, %s125
      %s142 = sphi 0, %s126
    $region4: #{closed_call.19} parent=1 // loop_header_branch
      %12 = sbr.rel (%p10) target = $region8
    $region5: #{closed_call.19} parent=1 // loop_body
      %s14 = ssub.s32 %s9, 1
      %s15 = ssub.s32 %s9, 2
      %s25 = sadd.s32 1, %s18
      %p26 = scmp.ge.s32.totalorder %s25, 3
      %s27 = scalar_select %p26, 0, %s25
      %s28 = sadd.s32 1, %s17
      %s29 = scalar_select %p26, %s28, %s17
      %p30 = scmp.ge.s32.totalorder %s29, 6
      %s31 = scalar_select %p30, 0, %s29
      %s32 = sadd.s32 1, %s16
      %s33 = scalar_select %p30, %s32, %s16
      %p34 = scmp.ge.s32.totalorder %s33, 1
      %s35 = scalar_select %p34, 0, %s33
      %s36 = ssub.s32 %s16, %s35
      %s37 = ssub.s32 %s18, %s27
      %s38 = sor.u32 %s36, %s37
      %p39 = scmp.eq.s32.totalorder %s38, 0
      %s41 = sadd.s32 %s40, 1
      %s42 = scalar_select %p39, %s40, %s41
      %p45 = pneg %p39
      %p46 = scmp.eq.s32.totalorder %s9, 17
      %p47 = por %p45, %p46
      %p48 = scmp.ne.s32.totalorder %s40, %s43
      %p49 = scmp.eq.s32.totalorder %s9, 0
      %p50 = por %p48, %p49
      %p51 = scmp.ne.s32.totalorder %s40, %s43
      %p52 = scmp.eq.s32.totalorder %s14, 17
      %p53 = por %p51, %p52
      %p54 = scmp.ne.s32.totalorder %s43, %s44
      %p55 = scmp.eq.s32.totalorder %s14, 0
      %p56 = por %p54, %p55
      %p57 = scmp.ne.s32.totalorder %s43, %s44
      %p58 = scmp.eq.s32.totalorder %s15, 17
      %p59 = por %p57, %p58
      %p61 = scmp.ne.s32.totalorder %s44, %s60
      %p62 = scmp.eq.s32.totalorder %s15, 0
      %p63 = por %p61, %p62
      %s64 = ssub.s32 %s18, %s27
      %s65 = ssub.s32 %s17, %s31
      %s66 = sor.u32 %s64, %s65
      %p67 = scmp.eq.s32.totalorder %s66, 0
      %s69 = sadd.s32 %s68, 1
      %s70 = scalar_select %p67, %s68, %s69
      %p73 = pneg %p67
      %p74 = scmp.eq.s32.totalorder %s9, 17
      %p75 = por %p73, %p74
      %p76 = scmp.ne.s32.totalorder %s68, %s71
      %p77 = scmp.eq.s32.totalorder %s9, 0
      %p78 = por %p76, %p77
      %p79 = scmp.ne.s32.totalorder %s68, %s71
      %p80 = scmp.eq.s32.totalorder %s14, 17
      %p81 = por %p79, %p80
      %p82 = scmp.ne.s32.totalorder %s71, %s72
      %p83 = scmp.eq.s32.totalorder %s14, 0
      %p84 = por %p82, %p83
      %p85 = scmp.ne.s32.totalorder %s71, %s72
      %p86 = scmp.eq.s32.totalorder %s15, 17
      %p87 = por %p85, %p86
      %p89 = scmp.ne.s32.totalorder %s72, %s88
      %p90 = scmp.eq.s32.totalorder %s15, 0
      %p91 = por %p89, %p90
      %s92 = ssub.s32 %s17, %s31
      %p93 = scmp.eq.s32.totalorder %s92, 0
      %s95 = sadd.s32 %s94, 1
      %s96 = scalar_select %p93, %s94, %s95
      %p99 = pneg %p93
      %p100 = scmp.eq.s32.totalorder %s9, 17
      %p101 = por %p99, %p100
      %p102 = scmp.ne.s32.totalorder %s94, %s97
      %p103 = scmp.eq.s32.totalorder %s9, 0
      %p104 = por %p102, %p103
      %p105 = scmp.ne.s32.totalorder %s94, %s97
      %p106 = scmp.eq.s32.totalorder %s14, 17
      %p107 = por %p105, %p106
      %p108 = scmp.ne.s32.totalorder %s97, %s98
      %p109 = scmp.eq.s32.totalorder %s14, 0
      %p110 = por %p108, %p109
      %p111 = scmp.ne.s32.totalorder %s97, %s98
      %p112 = scmp.eq.s32.totalorder %s15, 17
      %p113 = por %p111, %p112
      %p115 = scmp.ne.s32.totalorder %s98, %s114
      %p116 = scmp.eq.s32.totalorder %s15, 0
      %p117 = por %p115, %p116
      %s118 = ssub.s32 %s16, %s35
      %s119 = ssub.s32 %s17, %s31
      %s120 = sor.u32 %s118, %s119
      %p121 = scmp.eq.s32.totalorder %s120, 0
      %s123 = sadd.s32 %s122, 1
      %s124 = scalar_select %p121, %s122, %s123
      %p127 = pneg %p121
      %p128 = scmp.eq.s32.totalorder %s9, 17
      %p129 = por %p127, %p128
      %p130 = scmp.ne.s32.totalorder %s122, %s125
      %p131 = scmp.eq.s32.totalorder %s9, 0
      %p132 = por %p130, %p131
      %p133 = scmp.ne.s32.totalorder %s122, %s125
      %p134 = scmp.eq.s32.totalorder %s14, 17
      %p135 = por %p133, %p134
      %p136 = scmp.ne.s32.totalorder %s125, %s126
      %p137 = scmp.eq.s32.totalorder %s14, 0
      %p138 = por %p136, %p137
      %p139 = scmp.ne.s32.totalorder %s125, %s126
      %p140 = scmp.eq.s32.totalorder %s15, 17
      %p141 = por %p139, %p140
      %p143 = scmp.ne.s32.totalorder %s126, %s142
      %p144 = scmp.eq.s32.totalorder %s15, 0
      %p145 = por %p143, %p144
      %p146 = scmp.le.s32.totalorder 1, %s9
      %p147 = scmp.lt.s32.totalorder %s9, 19
      %p148 = pnand %p146, %p147
      %p149 = pneg %p148
      // Predicated region
      $region9: #{closed_call.19} parent=5 // pred_check
        _
      $region10: #{closed_call.19} parent=5 // pred_check_branch
        %151 = sbr.rel (%p148) target = $region12
      $region11: #{closed_call.19} parent=5 // pred_region
        %s152 = ssub.s32 %s9, 1
      $region12: #{closed_call.19} parent=5 // pred_fallthru
        _
      %p153 = scmp.lt.s32.totalorder %s9, 18
      // Predicated region
      $region13: #{closed_call.19} parent=5 // pred_check
        %p154 = pneg %p153
      $region14: #{closed_call.19} parent=5 // pred_check_branch
        %156 = sbr.rel (%p154) target = $region16
      $region15: #{closed_call.19} parent=5 // pred_region
        // Predicated region
        $region17: #{closed_call.19} parent=15 // pred_check
          %p157 = pneg %p50
        $region18: #{closed_call.19} parent=15 // pred_check_branch
          %159 = sbr.rel (%p157) target = $region20
        $region19: #{closed_call.19} parent=15 // pred_region
          %s160 = sand.u32 %s40, 1
          %s161 = sand.u32 %s40, 1
          %s162 = smul.addr %s161, 32
          %s163 = scalar_lea.vmem [#allocation3], %s162
          %s164 = smul.u32 4, %s16
          %s165 = smul.u32 2, %s18
          %s166 = smul.addr %s164, 6
          %s167 = sadd.s32 %s165, %s166
          %s168 = smul.addr %s167, 4
          %s169 = scalar_lea.vmem %s0, %s168
          // Predicated region
          $region21: #{closed_call.19} parent=19 // pred_check
            _
          $region22: #{closed_call.19} parent=19 // pred_check_branch
            %171 = sbr.rel (0) target = $region24
          $region23: #{closed_call.19} parent=19 // pred_region
            // Predicated region
            $region25: #{closed_call.19} parent=23 // pred_check
              _
            $region26: #{closed_call.19} parent=23 // pred_check_branch
              %173 = sbr.rel (0) target = $region28
            $region27: #{closed_call.19} parent=23 // pred_region
              // Predicated region
              $region40: #{closed_call.19} parent=27 // pred_check
                _
              $region41: #{closed_call.19} parent=27 // pred_check_branch
                %195 = sbr.rel (0) target = $region43
              $region42: #{closed_call.19} parent=27 // pred_region
                loop: start=0, step=1, limit=1
                $region44: #{closed_call.19} parent=42 // loop_pre_header
                  _
                $region45: #{closed_call.19} parent=42 // loop_header
                  %s197 = sphi 0, %s201
                  %p198 = scmp.ge.s32.totalorder %s197, 1
                  %s202 = sphi %s169, %s169
                  %s203 = sphi %s163, %s163
                $region46: #{closed_call.19} parent=42 // loop_header_branch
                  %200 = sbr.rel (%p198) target = $region50
                $region47: #{closed_call.19} parent=42 // loop_body
                  %v204 = vld [vmem:[%s202] sm:$0xff]
                  %205 = vst [vmem:[%s203] sm:$0xff] %v204
                  %v206 = vld [vmem:[%s202 + $0x18] sm:$0xff]
                  %207 = vst [vmem:[%s203 + $0x8] sm:$0xff] %v206
                  %v208 = vld [vmem:[%s202 + $0x30] sm:$0xff]
                  %209 = vst [vmem:[%s203 + $0x10] sm:$0xff] %v208
                  %v210 = vld [vmem:[%s202 + $0x48] sm:$0xff]
                  %211 = vst [vmem:[%s203 + $0x18] sm:$0xff] %v210
                $region48: #{closed_call.19} parent=42 // loop_footer
                  %s201 = sadd.s32 1, %s197
                $region49: #{closed_call.19} parent=42 // loop_footer_branch
                  %196 = sbr.rel target = $region45
                $region50: #{closed_call.19} parent=42 // loop_exit
                  _
              $region43: #{closed_call.19} parent=27 // pred_fallthru
                _
              // Predicated region
              $region51: #{closed_call.19} parent=27 // pred_check
                _
              $region52: #{closed_call.19} parent=27 // pred_check_branch
                %213 = sbr.rel target = $region54
              $region53: #{closed_call.19} parent=27 // pred_region
                _
              $region54: #{closed_call.19} parent=27 // pred_fallthru
                _
            $region28: #{closed_call.19} parent=23 // pred_fallthru
              _
            // Predicated region
            $region29: #{closed_call.19} parent=23 // pred_check
              _
            $region30: #{closed_call.19} parent=23 // pred_check_branch
              %175 = sbr.rel target = $region32
            $region31: #{closed_call.19} parent=23 // pred_region
              %s177 = ssub.s32 256, 1
              loop: start=0, step=1, limit=1
              $region33: #{closed_call.19} parent=31 // loop_pre_header
                _
              $region34: #{closed_call.19} parent=31 // loop_header
                %s179 = sphi 0, %s183
                %p180 = scmp.ge.s32.totalorder %s179, 1
                %s184 = sphi %s169, %s169
                %s185 = sphi %s163, %s163
              $region35: #{closed_call.19} parent=31 // loop_header_branch
                %182 = sbr.rel (%p180) target = $region39
              $region36: #{closed_call.19} parent=31 // loop_body
                %v186 = vld [vmem:[%s184] sm:%s177]
                %187 = vst [vmem:[%s185] sm:%s177] %v186
                %v188 = vld [vmem:[%s184 + $0x18] sm:%s177]
                %189 = vst [vmem:[%s185 + $0x8] sm:%s177] %v188
                %v190 = vld [vmem:[%s184 + $0x30] sm:%s177]
                %191 = vst [vmem:[%s185 + $0x10] sm:%s177] %v190
                %v192 = vld [vmem:[%s184 + $0x48] sm:%s177]
                %193 = vst [vmem:[%s185 + $0x18] sm:%s177] %v192
              $region37: #{closed_call.19} parent=31 // loop_footer
                %s183 = sadd.s32 1, %s179
              $region38: #{closed_call.19} parent=31 // loop_footer_branch
                %178 = sbr.rel target = $region34
              $region39: #{closed_call.19} parent=31 // loop_exit
                _
            $region32: #{closed_call.19} parent=23 // pred_fallthru
              _
          $region24: #{closed_call.19} parent=19 // pred_fallthru
            _
          %214 = vnop
        $region20: #{closed_call.19} parent=15 // pred_fallthru
          _
        // Predicated region
        $region55: #{closed_call.19} parent=15 // pred_check
          %p215 = pneg %p78
        $region56: #{closed_call.19} parent=15 // pred_check_branch
          %217 = sbr.rel (%p215) target = $region58
        $region57: #{closed_call.19} parent=15 // pred_region
          %s218 = sand.u32 %s68, 1
          %s219 = sand.u32 %s68, 1
          %s220 = smul.addr %s219, 512
          %s221 = scalar_lea.vmem [#allocation4], %s220
          %s222 = smul.u32 32, %s18
          %s223 = smul.u32 4, %s17
          %s224 = smul.addr %s222, 24
          %s225 = sadd.s32 %s223, %s224
          %s226 = smul.addr %s225, 4
          %s227 = scalar_lea.vmem %s1, %s226
          // Predicated region
          $region59: #{closed_call.19} parent=57 // pred_check
            _
          $region60: #{closed_call.19} parent=57 // pred_check_branch
            %229 = sbr.rel (0) target = $region62
          $region61: #{closed_call.19} parent=57 // pred_region
            // Predicated region
            $region63: #{closed_call.19} parent=61 // pred_check
              _
            $region64: #{closed_call.19} parent=61 // pred_check_branch
              %231 = sbr.rel (0) target = $region66
            $region65: #{closed_call.19} parent=61 // pred_region
              loop: start=0, step=1, limit=1
              $region67: #{closed_call.19} parent=65 // loop_pre_header
                _
              $region68: #{closed_call.19} parent=65 // loop_header
                %s233 = sphi 0, %s237
                %p234 = scmp.ge.s32.totalorder %s233, 1
                %s238 = sphi %s227, %s227
                %s239 = sphi %s221, %s221
              $region69: #{closed_call.19} parent=65 // loop_header_branch
                %236 = sbr.rel (%p234) target = $region73
              $region70: #{closed_call.19} parent=65 // loop_body
                %v240 = vld [vmem:[%s238] sm:$0xff]
                %241 = vst [vmem:[%s239] sm:$0xff] %v240
                %v242 = vld [vmem:[%s238 + $0x8] sm:$0xff]
                %243 = vst [vmem:[%s239 + $0x8] sm:$0xff] %v242
                %v244 = vld [vmem:[%s238 + $0x60] sm:$0xff]
                %245 = vst [vmem:[%s239 + $0x10] sm:$0xff] %v244
                %v246 = vld [vmem:[%s238 + $0x68] sm:$0xff]
                %247 = vst [vmem:[%s239 + $0x18] sm:$0xff] %v246
                %v248 = vld [vmem:[%s238 + $0xc0] sm:$0xff]
                %249 = vst [vmem:[%s239 + $0x20] sm:$0xff] %v248
                %v250 = vld [vmem:[%s238 + $0xc8] sm:$0xff]
                %251 = vst [vmem:[%s239 + $0x28] sm:$0xff] %v250
                %v252 = vld [vmem:[%s238 + $0x120] sm:$0xff]
                %253 = vst [vmem:[%s239 + $0x30] sm:$0xff] %v252
                %v254 = vld [vmem:[%s238 + $0x128] sm:$0xff]
                %255 = vst [vmem:[%s239 + $0x38] sm:$0xff] %v254
                %v256 = vld [vmem:[%s238 + $0x180] sm:$0xff]
                %257 = vst [vmem:[%s239 + $0x40] sm:$0xff] %v256
                %v258 = vld [vmem:[%s238 + $0x188] sm:$0xff]
                %259 = vst [vmem:[%s239 + $0x48] sm:$0xff] %v258
                %v260 = vld [vmem:[%s238 + $0x1e0] sm:$0xff]
                %261 = vst [vmem:[%s239 + $0x50] sm:$0xff] %v260
                %v262 = vld [vmem:[%s238 + $0x1e8] sm:$0xff]
                %263 = vst [vmem:[%s239 + $0x58] sm:$0xff] %v262
                %v264 = vld [vmem:[%s238 + $0x240] sm:$0xff]
                %265 = vst [vmem:[%s239 + $0x60] sm:$0xff] %v264
                %v266 = vld [vmem:[%s238 + $0x248] sm:$0xff]
                %267 = vst [vmem:[%s239 + $0x68] sm:$0xff] %v266
                %v268 = vld [vmem:[%s238 + $0x2a0] sm:$0xff]
                %269 = vst [vmem:[%s239 + $0x70] sm:$0xff] %v268
                %v270 = vld [vmem:[%s238 + $0x2a8] sm:$0xff]
                %271 = vst [vmem:[%s239 + $0x78] sm:$0xff] %v270
                %v272 = vld [vmem:[%s238 + $0x300] sm:$0xff]
                %273 = vst [vmem:[%s239 + $0x80] sm:$0xff] %v272
                %v274 = vld [vmem:[%s238 + $0x308] sm:$0xff]
                %275 = vst [vmem:[%s239 + $0x88] sm:$0xff] %v274
                %v276 = vld [vmem:[%s238 + $0x360] sm:$0xff]
                %277 = vst [vmem:[%s239 + $0x90] sm:$0xff] %v276
                %v278 = vld [vmem:[%s238 + $0x368] sm:$0xff]
                %279 = vst [vmem:[%s239 + $0x98] sm:$0xff] %v278
                %v280 = vld [vmem:[%s238 + $0x3c0] sm:$0xff]
                %281 = vst [vmem:[%s239 + $0xa0] sm:$0xff] %v280
                %v282 = vld [vmem:[%s238 + $0x3c8] sm:$0xff]
                %283 = vst [vmem:[%s239 + $0xa8] sm:$0xff] %v282
                %v284 = vld [vmem:[%s238 + $0x420] sm:$0xff]
                %285 = vst [vmem:[%s239 + $0xb0] sm:$0xff] %v284
                %v286 = vld [vmem:[%s238 + $0x428] sm:$0xff]
                %287 = vst [vmem:[%s239 + $0xb8] sm:$0xff] %v286
                %v288 = vld [vmem:[%s238 + $0x480] sm:$0xff]
                %289 = vst [vmem:[%s239 + $0xc0] sm:$0xff] %v288
                %v290 = vld [vmem:[%s238 + $0x488] sm:$0xff]
                %291 = vst [vmem:[%s239 + $0xc8] sm:$0xff] %v290
                %v292 = vld [vmem:[%s238 + $0x4e0] sm:$0xff]
                %293 = vst [vmem:[%s239 + $0xd0] sm:$0xff] %v292
                %v294 = vld [vmem:[%s238 + $0x4e8] sm:$0xff]
                %295 = vst [vmem:[%s239 + $0xd8] sm:$0xff] %v294
                %v296 = vld [vmem:[%s238 + $0x540] sm:$0xff]
                %297 = vst [vmem:[%s239 + $0xe0] sm:$0xff] %v296
                %v298 = vld [vmem:[%s238 + $0x548] sm:$0xff]
                %299 = vst [vmem:[%s239 + $0xe8] sm:$0xff] %v298
                %v300 = vld [vmem:[%s238 + $0x5a0] sm:$0xff]
                %301 = vst [vmem:[%s239 + $0xf0] sm:$0xff] %v300
                %v302 = vld [vmem:[%s238 + $0x5a8] sm:$0xff]
                %303 = vst [vmem:[%s239 + $0xf8] sm:$0xff] %v302
                %v304 = vld [vmem:[%s238 + $0x600] sm:$0xff]
                %305 = vst [vmem:[%s239 + $0x100] sm:$0xff] %v304
                %v306 = vld [vmem:[%s238 + $0x608] sm:$0xff]
                %307 = vst [vmem:[%s239 + $0x108] sm:$0xff] %v306
                %v308 = vld [vmem:[%s238 + $0x660] sm:$0xff]
                %309 = vst [vmem:[%s239 + $0x110] sm:$0xff] %v308
                %v310 = vld [vmem:[%s238 + $0x668] sm:$0xff]
                %311 = vst [vmem:[%s239 + $0x118] sm:$0xff] %v310
                %v312 = vld [vmem:[%s238 + $0x6c0] sm:$0xff]
                %313 = vst [vmem:[%s239 + $0x120] sm:$0xff] %v312
                %v314 = vld [vmem:[%s238 + $0x6c8] sm:$0xff]
                %315 = vst [vmem:[%s239 + $0x128] sm:$0xff] %v314
                %v316 = vld [vmem:[%s238 + $0x720] sm:$0xff]
                %317 = vst [vmem:[%s239 + $0x130] sm:$0xff] %v316
                %v318 = vld [vmem:[%s238 + $0x728] sm:$0xff]
                %319 = vst [vmem:[%s239 + $0x138] sm:$0xff] %v318
                %v320 = vld [vmem:[%s238 + $0x780] sm:$0xff]
                %321 = vst [vmem:[%s239 + $0x140] sm:$0xff] %v320
                %v322 = vld [vmem:[%s238 + $0x788] sm:$0xff]
                %323 = vst [vmem:[%s239 + $0x148] sm:$0xff] %v322
                %v324 = vld [vmem:[%s238 + $0x7e0] sm:$0xff]
                %325 = vst [vmem:[%s239 + $0x150] sm:$0xff] %v324
                %v326 = vld [vmem:[%s238 + $0x7e8] sm:$0xff]
                %327 = vst [vmem:[%s239 + $0x158] sm:$0xff] %v326
                %v328 = vld [vmem:[%s238 + $0x840] sm:$0xff]
                %329 = vst [vmem:[%s239 + $0x160] sm:$0xff] %v328
                %v330 = vld [vmem:[%s238 + $0x848] sm:$0xff]
                %331 = vst [vmem:[%s239 + $0x168] sm:$0xff] %v330
                %v332 = vld [vmem:[%s238 + $0x8a0] sm:$0xff]
                %333 = vst [vmem:[%s239 + $0x170] sm:$0xff] %v332
                %v334 = vld [vmem:[%s238 + $0x8a8] sm:$0xff]
                %335 = vst [vmem:[%s239 + $0x178] sm:$0xff] %v334
                %v336 = vld [vmem:[%s238 + $0x900] sm:$0xff]
                %337 = vst [vmem:[%s239 + $0x180] sm:$0xff] %v336
                %v338 = vld [vmem:[%s238 + $0x908] sm:$0xff]
                %339 = vst [vmem:[%s239 + $0x188] sm:$0xff] %v338
                %v340 = vld [vmem:[%s238 + $0x960] sm:$0xff]
                %341 = vst [vmem:[%s239 + $0x190] sm:$0xff] %v340
                %v342 = vld [vmem:[%s238 + $0x968] sm:$0xff]
                %343 = vst [vmem:[%s239 + $0x198] sm:$0xff] %v342
                %v344 = vld [vmem:[%s238 + $0x9c0] sm:$0xff]
                %345 = vst [vmem:[%s239 + $0x1a0] sm:$0xff] %v344
                %v346 = vld [vmem:[%s238 + $0x9c8] sm:$0xff]
                %347 = vst [vmem:[%s239 + $0x1a8] sm:$0xff] %v346
                %v348 = vld [vmem:[%s238 + $0xa20] sm:$0xff]
                %349 = vst [vmem:[%s239 + $0x1b0] sm:$0xff] %v348
                %v350 = vld [vmem:[%s238 + $0xa28] sm:$0xff]
                %351 = vst [vmem:[%s239 + $0x1b8] sm:$0xff] %v350
                %v352 = vld [vmem:[%s238 + $0xa80] sm:$0xff]
                %353 = vst [vmem:[%s239 + $0x1c0] sm:$0xff] %v352
                %v354 = vld [vmem:[%s238 + $0xa88] sm:$0xff]
                %355 = vst [vmem:[%s239 + $0x1c8] sm:$0xff] %v354
                %v356 = vld [vmem:[%s238 + $0xae0] sm:$0xff]
                %357 = vst [vmem:[%s239 + $0x1d0] sm:$0xff] %v356
                %v358 = vld [vmem:[%s238 + $0xae8] sm:$0xff]
                %359 = vst [vmem:[%s239 + $0x1d8] sm:$0xff] %v358
                %v360 = vld [vmem:[%s238 + $0xb40] sm:$0xff]
                %361 = vst [vmem:[%s239 + $0x1e0] sm:$0xff] %v360
                %v362 = vld [vmem:[%s238 + $0xb48] sm:$0xff]
                %363 = vst [vmem:[%s239 + $0x1e8] sm:$0xff] %v362
                %v364 = vld [vmem:[%s238 + $0xba0] sm:$0xff]
                %365 = vst [vmem:[%s239 + $0x1f0] sm:$0xff] %v364
                %v366 = vld [vmem:[%s238 + $0xba8] sm:$0xff]
                %367 = vst [vmem:[%s239 + $0x1f8] sm:$0xff] %v366
              $region71: #{closed_call.19} parent=65 // loop_footer
                %s237 = sadd.s32 1, %s233
              $region72: #{closed_call.19} parent=65 // loop_footer_branch
                %232 = sbr.rel target = $region68
              $region73: #{closed_call.19} parent=65 // loop_exit
                _
            $region66: #{closed_call.19} parent=61 // pred_fallthru
              _
            // Predicated region
            $region74: #{closed_call.19} parent=61 // pred_check
              _
            $region75: #{closed_call.19} parent=61 // pred_check_branch
              %369 = sbr.rel target = $region77
            $region76: #{closed_call.19} parent=61 // pred_region
              _
            $region77: #{closed_call.19} parent=61 // pred_fallthru
              _
          $region62: #{closed_call.19} parent=57 // pred_fallthru
            _
          %370 = vnop
        $region58: #{closed_call.19} parent=15 // pred_fallthru
          _
        // Predicated region
        $region78: #{closed_call.19} parent=15 // pred_check
          %p371 = pneg %p104
        $region79: #{closed_call.19} parent=15 // pred_check_branch
          %373 = sbr.rel (%p371) target = $region81
        $region80: #{closed_call.19} parent=15 // pred_region
          %s374 = smul.u32 4, %s17
          %p375 = scmp.lt.s32.totalorder %s374, 23
          %s376 = scalar_select %p375, %s374, 23
          %s377 = scalar_lea.vmem %s2, %s376
          %s378 = smul.u32 4, %s17
        $region81: #{closed_call.19} parent=15 // pred_fallthru
          _
      $region16: #{closed_call.19} parent=5 // pred_fallthru
        _
      %p379 = scmp.le.s32.totalorder 1, %s9
      %p380 = scmp.lt.s32.totalorder %s9, 19
      %p381 = pnand %p379, %p380
      %p382 = pneg %p381
      // Predicated region
      $region82: #{closed_call.19} parent=5 // pred_check
        _
      $region83: #{closed_call.19} parent=5 // pred_check_branch
        %384 = sbr.rel (%p381) target = $region85
      $region84: #{closed_call.19} parent=5 // pred_region
        %s385 = ssub.s32 %s9, 1
        %s386 = sand.u32 %s43, 1
        %s387 = sand.u32 %s43, 1
        %s388 = smul.addr %s387, 32
        %s389 = scalar_lea.vmem [#allocation3], %s388
        // Predicated region
        $region86: #{closed_call.19} parent=84 // pred_check
          %p390 = pneg %p56
        $region87: #{closed_call.19} parent=84 // pred_check_branch
          %392 = sbr.rel (%p390) target = $region89
        $region88: #{closed_call.19} parent=84 // pred_region
          _
        $region89: #{closed_call.19} parent=84 // pred_fallthru
          _
        %s393 = sand.u32 %s71, 1
        %s394 = sand.u32 %s71, 1
        %s395 = smul.addr %s394, 512
        %s396 = scalar_lea.vmem [#allocation4], %s395
        // Predicated region
        $region90: #{closed_call.19} parent=84 // pred_check
          %p397 = pneg %p84
        $region91: #{closed_call.19} parent=84 // pred_check_branch
          %399 = sbr.rel (%p397) target = $region93
        $region92: #{closed_call.19} parent=84 // pred_region
          _
        $region93: #{closed_call.19} parent=84 // pred_fallthru
          _
        %s400 = sand.u32 %s43, 1
        %s401 = sand.u32 %s43, 1
        %s402 = smul.addr %s401, 32
        %s403 = scalar_lea.vmem [#allocation3], %s402
        %p404 = pneg %p56
        %p405 = pneg %p53
        %s406 = sand.u32 %s71, 1
        %s407 = sand.u32 %s71, 1
        %s408 = smul.addr %s407, 512
        %s409 = scalar_lea.vmem [#allocation4], %s408
        %p410 = pneg %p84
        %p411 = pneg %p81
        %s412 = smul.u32 4, %s20
        %p413 = scmp.lt.s32.totalorder %s412, 23
        %s414 = scalar_select %p413, %s412, 23
        %s415 = scalar_lea.vmem %s2, %s414
        %p416 = pneg %p110
        %p417 = pneg %p107
        %p418 = pneg %p138
        %p419 = pneg %p135
        %s420 = sand.u32 %s125, 1
        %s421 = sand.u32 %s125, 1
        %s422 = smul.addr %s421, 64
        %s423 = scalar_lea.vmem [#allocation5], %s422
        %s424 = smul.u32 4, %s19
        %s425 = smul.u32 2, %s21
        %s426 = smul.u32 32, %s21
        %s427 = smul.u32 4, %s20
        %s428 = smul.u32 4, %s20
        %p429 = scmp.lt.s32.totalorder %s428, 23
        %s430 = scalar_select %p429, %s428, 23
        %s431 = scalar_lea.vmem %s2, %s430
        %s432 = smul.u32 4, %s20
        %s433 = smul.u32 4, %s19
        %s434 = smul.u32 4, %s20
        %p435 = scmp.eq.s32.totalorder %s21, 0
        // Predicated region
        $region94: #{closed_call.19} parent=84 // pred_check
          %p436 = pneg %p435
        $region95: #{closed_call.19} parent=84 // pred_check_branch
          %438 = sbr.rel (%p436) target = $region97
        $region96: #{closed_call.19} parent=84 // pred_region
          %439 = vst [vmem:[#allocation2] sm:$0xff] 0.0
          %440 = vst [vmem:[#allocation2 + $0x8] sm:$0xff] 0.0
          %441 = vst [vmem:[#allocation2 + $0x10] sm:$0xff] 0.0
          %442 = vst [vmem:[#allocation2 + $0x18] sm:$0xff] 0.0
          %443 = vst [vmem:[#allocation2 + $0x20] sm:$0xff] 0.0
          %444 = vst [vmem:[#allocation2 + $0x28] sm:$0xff] 0.0
          %445 = vst [vmem:[#allocation2 + $0x30] sm:$0xff] 0.0
          %446 = vst [vmem:[#allocation2 + $0x38] sm:$0xff] 0.0
          %447 = vst [vmem:[#allocation2 + $0x40] sm:$0xff] 0.0
          %448 = vst [vmem:[#allocation2 + $0x48] sm:$0xff] 0.0
          %449 = vst [vmem:[#allocation2 + $0x50] sm:$0xff] 0.0
          %450 = vst [vmem:[#allocation2 + $0x58] sm:$0xff] 0.0
          %451 = vst [vmem:[#allocation2 + $0x60] sm:$0xff] 0.0
          %452 = vst [vmem:[#allocation2 + $0x68] sm:$0xff] 0.0
          %453 = vst [vmem:[#allocation2 + $0x70] sm:$0xff] 0.0
          %454 = vst [vmem:[#allocation2 + $0x78] sm:$0xff] 0.0
        $region97: #{closed_call.19} parent=84 // pred_fallthru
          _
        %v455 = vld [vmem:[#allocation2] sm:$0xff]
        %v456 = vld [vmem:[#allocation2 + $0x8] sm:$0xff]
        %v457 = vld [vmem:[#allocation2 + $0x10] sm:$0xff]
        %v458 = vld [vmem:[#allocation2 + $0x18] sm:$0xff]
        %v459 = vld [vmem:[#allocation2 + $0x20] sm:$0xff]
        %v460 = vld [vmem:[#allocation2 + $0x28] sm:$0xff]
        %v461 = vld [vmem:[#allocation2 + $0x30] sm:$0xff]
        %v462 = vld [vmem:[#allocation2 + $0x38] sm:$0xff]
        %v463 = vld [vmem:[#allocation2 + $0x40] sm:$0xff]
        %v464 = vld [vmem:[#allocation2 + $0x48] sm:$0xff]
        %v465 = vld [vmem:[#allocation2 + $0x50] sm:$0xff]
        %v466 = vld [vmem:[#allocation2 + $0x58] sm:$0xff]
        %v467 = vld [vmem:[#allocation2 + $0x60] sm:$0xff]
        %v468 = vld [vmem:[#allocation2 + $0x68] sm:$0xff]
        %v469 = vld [vmem:[#allocation2 + $0x70] sm:$0xff]
        %v470 = vld [vmem:[#allocation2 + $0x78] sm:$0xff]
        %v471 = vld [vmem:[%s389] sm:$0xff]
        %v472 = vld [vmem:[%s389 + $0x8] sm:$0xff]
        %v473 = vld [vmem:[%s389 + $0x10] sm:$0xff]
        %v474 = vld [vmem:[%s389 + $0x18] sm:$0xff]
        %v475 = vld [vmem:[%s396] sm:$0xff]
        %v476 = vld [vmem:[%s396 + $0x8] sm:$0xff]
        %v477 = vld [vmem:[%s396 + $0x10] sm:$0xff]
        %v478 = vld [vmem:[%s396 + $0x18] sm:$0xff]
        %v479 = vld [vmem:[%s396 + $0x20] sm:$0xff]
        %v480 = vld [vmem:[%s396 + $0x28] sm:$0xff]
        %v481 = vld [vmem:[%s396 + $0x30] sm:$0xff]
        %v482 = vld [vmem:[%s396 + $0x38] sm:$0xff]
        %v483 = vld [vmem:[%s396 + $0x40] sm:$0xff]
        %v484 = vld [vmem:[%s396 + $0x48] sm:$0xff]
        %v485 = vld [vmem:[%s396 + $0x50] sm:$0xff]
        %v486 = vld [vmem:[%s396 + $0x58] sm:$0xff]
        %v487 = vld [vmem:[%s396 + $0x60] sm:$0xff]
        %v488 = vld [vmem:[%s396 + $0x68] sm:$0xff]
        %v489 = vld [vmem:[%s396 + $0x70] sm:$0xff]
        %v490 = vld [vmem:[%s396 + $0x78] sm:$0xff]
        %v491 = vld [vmem:[%s396 + $0x80] sm:$0xff]
        %v492 = vld [vmem:[%s396 + $0x88] sm:$0xff]
        %v493 = vld [vmem:[%s396 + $0x90] sm:$0xff]
        %v494 = vld [vmem:[%s396 + $0x98] sm:$0xff]
        %v495 = vld [vmem:[%s396 + $0xa0] sm:$0xff]
        %v496 = vld [vmem:[%s396 + $0xa8] sm:$0xff]
        %v497 = vld [vmem:[%s396 + $0xb0] sm:$0xff]
        %v498 = vld [vmem:[%s396 + $0xb8] sm:$0xff]
        %v499 = vld [vmem:[%s396 + $0xc0] sm:$0xff]
        %v500 = vld [vmem:[%s396 + $0xc8] sm:$0xff]
        %v501 = vld [vmem:[%s396 + $0xd0] sm:$0xff]
        %v502 = vld [vmem:[%s396 + $0xd8] sm:$0xff]
        %v503 = vld [vmem:[%s396 + $0xe0] sm:$0xff]
        %v504 = vld [vmem:[%s396 + $0xe8] sm:$0xff]
        %v505 = vld [vmem:[%s396 + $0xf0] sm:$0xff]
        %v506 = vld [vmem:[%s396 + $0xf8] sm:$0xff]
        %v507 = vld [vmem:[%s396 + $0x100] sm:$0xff]
        %v508 = vld [vmem:[%s396 + $0x108] sm:$0xff]
        %v509 = vld [vmem:[%s396 + $0x110] sm:$0xff]
        %v510 = vld [vmem:[%s396 + $0x118] sm:$0xff]
        %v511 = vld [vmem:[%s396 + $0x120] sm:$0xff]
        %v512 = vld [vmem:[%s396 + $0x128] sm:$0xff]
        %v513 = vld [vmem:[%s396 + $0x130] sm:$0xff]
        %v514 = vld [vmem:[%s396 + $0x138] sm:$0xff]
        %v515 = vld [vmem:[%s396 + $0x140] sm:$0xff]
        %v516 = vld [vmem:[%s396 + $0x148] sm:$0xff]
        %v517 = vld [vmem:[%s396 + $0x150] sm:$0xff]
        %v518 = vld [vmem:[%s396 + $0x158] sm:$0xff]
        %v519 = vld [vmem:[%s396 + $0x160] sm:$0xff]
        %v520 = vld [vmem:[%s396 + $0x168] sm:$0xff]
        %v521 = vld [vmem:[%s396 + $0x170] sm:$0xff]
        %v522 = vld [vmem:[%s396 + $0x178] sm:$0xff]
        %v523 = vld [vmem:[%s396 + $0x180] sm:$0xff]
        %v524 = vld [vmem:[%s396 + $0x188] sm:$0xff]
        %v525 = vld [vmem:[%s396 + $0x190] sm:$0xff]
        %v526 = vld [vmem:[%s396 + $0x198] sm:$0xff]
        %v527 = vld [vmem:[%s396 + $0x1a0] sm:$0xff]
        %v528 = vld [vmem:[%s396 + $0x1a8] sm:$0xff]
        %v529 = vld [vmem:[%s396 + $0x1b0] sm:$0xff]
        %v530 = vld [vmem:[%s396 + $0x1b8] sm:$0xff]
        %v531 = vld [vmem:[%s396 + $0x1c0] sm:$0xff]
        %v532 = vld [vmem:[%s396 + $0x1c8] sm:$0xff]
        %v533 = vld [vmem:[%s396 + $0x1d0] sm:$0xff]
        %v534 = vld [vmem:[%s396 + $0x1d8] sm:$0xff]
        %v535 = vld [vmem:[%s396 + $0x1e0] sm:$0xff]
        %v536 = vld [vmem:[%s396 + $0x1e8] sm:$0xff]
        %v537 = vld [vmem:[%s396 + $0x1f0] sm:$0xff]
        %v538 = vld [vmem:[%s396 + $0x1f8] sm:$0xff]
        %v543 = vunpack.c.l.b16 %v471
        %v544 = vunpack.c.h.b16 %v471
        %v545 = vunpack.c.l.b16 %v472
        %v546 = vunpack.c.h.b16 %v472
        %v547 = vunpack.c.l.b16 %v473
        %v548 = vunpack.c.h.b16 %v473
        %v549 = vunpack.c.l.b16 %v474
        %v550 = vunpack.c.h.b16 %v474
        %v551 = vpack.c.b16 %v545, %v543
        %v552 = vpack.c.b16 %v546, %v544
        %v553 = vpack.c.b16 %v549, %v547
        %v554 = vpack.c.b16 %v550, %v548
        %v623 = vunpack.c.l.b16 %v475
        %v624 = vunpack.c.h.b16 %v475
        %v625 = vunpack.c.l.b16 %v476
        %v626 = vunpack.c.h.b16 %v476
        %v627 = vunpack.c.l.b16 %v477
        %v628 = vunpack.c.h.b16 %v477
        %v629 = vunpack.c.l.b16 %v478
        %v630 = vunpack.c.h.b16 %v478
        %v631 = vunpack.c.l.b16 %v479
        %v632 = vunpack.c.h.b16 %v479
        %v633 = vunpack.c.l.b16 %v480
        %v634 = vunpack.c.h.b16 %v480
        %v635 = vunpack.c.l.b16 %v481
        %v636 = vunpack.c.h.b16 %v481
        %v637 = vunpack.c.l.b16 %v482
        %v638 = vunpack.c.h.b16 %v482
        %v639 = vunpack.c.l.b16 %v483
        %v640 = vunpack.c.h.b16 %v483
        %v641 = vunpack.c.l.b16 %v484
        %v642 = vunpack.c.h.b16 %v484
        %v643 = vunpack.c.l.b16 %v485
        %v644 = vunpack.c.h.b16 %v485
        %v645 = vunpack.c.l.b16 %v486
        %v646 = vunpack.c.h.b16 %v486
        %v647 = vunpack.c.l.b16 %v487
        %v648 = vunpack.c.h.b16 %v487
        %v649 = vunpack.c.l.b16 %v488
        %v650 = vunpack.c.h.b16 %v488
        %v651 = vunpack.c.l.b16 %v489
        %v652 = vunpack.c.h.b16 %v489
        %v653 = vunpack.c.l.b16 %v490
        %v654 = vunpack.c.h.b16 %v490
        %v655 = vunpack.c.l.b16 %v491
        %v656 = vunpack.c.h.b16 %v491
        %v657 = vunpack.c.l.b16 %v492
        %v658 = vunpack.c.h.b16 %v492
        %v659 = vunpack.c.l.b16 %v493
        %v660 = vunpack.c.h.b16 %v493
        %v661 = vunpack.c.l.b16 %v494
        %v662 = vunpack.c.h.b16 %v494
        %v663 = vunpack.c.l.b16 %v495
        %v664 = vunpack.c.h.b16 %v495
        %v665 = vunpack.c.l.b16 %v496
        %v666 = vunpack.c.h.b16 %v496
        %v667 = vunpack.c.l.b16 %v497
        %v668 = vunpack.c.h.b16 %v497
        %v669 = vunpack.c.l.b16 %v498
        %v670 = vunpack.c.h.b16 %v498
        %v671 = vunpack.c.l.b16 %v499
        %v672 = vunpack.c.h.b16 %v499
        %v673 = vunpack.c.l.b16 %v500
        %v674 = vunpack.c.h.b16 %v500
        %v675 = vunpack.c.l.b16 %v501
        %v676 = vunpack.c.h.b16 %v501
        %v677 = vunpack.c.l.b16 %v502
        %v678 = vunpack.c.h.b16 %v502
        %v679 = vunpack.c.l.b16 %v503
        %v680 = vunpack.c.h.b16 %v503
        %v681 = vunpack.c.l.b16 %v504
        %v682 = vunpack.c.h.b16 %v504
        %v683 = vunpack.c.l.b16 %v505
        %v684 = vunpack.c.h.b16 %v505
        %v685 = vunpack.c.l.b16 %v506
        %v686 = vunpack.c.h.b16 %v506
        %v687 = vunpack.c.l.b16 %v507
        %v688 = vunpack.c.h.b16 %v507
        %v689 = vunpack.c.l.b16 %v508
        %v690 = vunpack.c.h.b16 %v508
        %v691 = vunpack.c.l.b16 %v509
        %v692 = vunpack.c.h.b16 %v509
        %v693 = vunpack.c.l.b16 %v510
        %v694 = vunpack.c.h.b16 %v510
        %v695 = vunpack.c.l.b16 %v511
        %v696 = vunpack.c.h.b16 %v511
        %v697 = vunpack.c.l.b16 %v512
        %v698 = vunpack.c.h.b16 %v512
        %v699 = vunpack.c.l.b16 %v513
        %v700 = vunpack.c.h.b16 %v513
        %v701 = vunpack.c.l.b16 %v514
        %v702 = vunpack.c.h.b16 %v514
        %v703 = vunpack.c.l.b16 %v515
        %v704 = vunpack.c.h.b16 %v515
        %v705 = vunpack.c.l.b16 %v516
        %v706 = vunpack.c.h.b16 %v516
        %v707 = vunpack.c.l.b16 %v517
        %v708 = vunpack.c.h.b16 %v517
        %v709 = vunpack.c.l.b16 %v518
        %v710 = vunpack.c.h.b16 %v518
        %v711 = vunpack.c.l.b16 %v519
        %v712 = vunpack.c.h.b16 %v519
        %v713 = vunpack.c.l.b16 %v520
        %v714 = vunpack.c.h.b16 %v520
        %v715 = vunpack.c.l.b16 %v521
        %v716 = vunpack.c.h.b16 %v521
        %v717 = vunpack.c.l.b16 %v522
        %v718 = vunpack.c.h.b16 %v522
        %v719 = vunpack.c.l.b16 %v523
        %v720 = vunpack.c.h.b16 %v523
        %v721 = vunpack.c.l.b16 %v524
        %v722 = vunpack.c.h.b16 %v524
        %v723 = vunpack.c.l.b16 %v525
        %v724 = vunpack.c.h.b16 %v525
        %v725 = vunpack.c.l.b16 %v526
        %v726 = vunpack.c.h.b16 %v526
        %v727 = vunpack.c.l.b16 %v527
        %v728 = vunpack.c.h.b16 %v527
        %v729 = vunpack.c.l.b16 %v528
        %v730 = vunpack.c.h.b16 %v528
        %v731 = vunpack.c.l.b16 %v529
        %v732 = vunpack.c.h.b16 %v529
        %v733 = vunpack.c.l.b16 %v530
        %v734 = vunpack.c.h.b16 %v530
        %v735 = vunpack.c.l.b16 %v531
        %v736 = vunpack.c.h.b16 %v531
        %v737 = vunpack.c.l.b16 %v532
        %v738 = vunpack.c.h.b16 %v532
        %v739 = vunpack.c.l.b16 %v533
        %v740 = vunpack.c.h.b16 %v533
        %v741 = vunpack.c.l.b16 %v534
        %v742 = vunpack.c.h.b16 %v534
        %v743 = vunpack.c.l.b16 %v535
        %v744 = vunpack.c.h.b16 %v535
        %v745 = vunpack.c.l.b16 %v536
        %v746 = vunpack.c.h.b16 %v536
        %v747 = vunpack.c.l.b16 %v537
        %v748 = vunpack.c.h.b16 %v537
        %v749 = vunpack.c.l.b16 %v538
        %v750 = vunpack.c.h.b16 %v538
        %v751 = vpack.c.b16 %v627, %v623
        %v752 = vpack.c.b16 %v628, %v624
        %v753 = vpack.c.b16 %v629, %v625
        %v754 = vpack.c.b16 %v630, %v626
        %v755 = vpack.c.b16 %v635, %v631
        %v756 = vpack.c.b16 %v636, %v632
        %v757 = vpack.c.b16 %v637, %v633
        %v758 = vpack.c.b16 %v638, %v634
        %v759 = vpack.c.b16 %v643, %v639
        %v760 = vpack.c.b16 %v644, %v640
        %v761 = vpack.c.b16 %v645, %v641
        %v762 = vpack.c.b16 %v646, %v642
        %v763 = vpack.c.b16 %v651, %v647
        %v764 = vpack.c.b16 %v652, %v648
        %v765 = vpack.c.b16 %v653, %v649
        %v766 = vpack.c.b16 %v654, %v650
        %v767 = vpack.c.b16 %v659, %v655
        %v768 = vpack.c.b16 %v660, %v656
        %v769 = vpack.c.b16 %v661, %v657
        %v770 = vpack.c.b16 %v662, %v658
        %v771 = vpack.c.b16 %v667, %v663
        %v772 = vpack.c.b16 %v668, %v664
        %v773 = vpack.c.b16 %v669, %v665
        %v774 = vpack.c.b16 %v670, %v666
        %v775 = vpack.c.b16 %v675, %v671
        %v776 = vpack.c.b16 %v676, %v672
        %v777 = vpack.c.b16 %v677, %v673
        %v778 = vpack.c.b16 %v678, %v674
        %v779 = vpack.c.b16 %v683, %v679
        %v780 = vpack.c.b16 %v684, %v680
        %v781 = vpack.c.b16 %v685, %v681
        %v782 = vpack.c.b16 %v686, %v682
        %v783 = vpack.c.b16 %v691, %v687
        %v784 = vpack.c.b16 %v692, %v688
        %v785 = vpack.c.b16 %v693, %v689
        %v786 = vpack.c.b16 %v694, %v690
        %v787 = vpack.c.b16 %v699, %v695
        %v788 = vpack.c.b16 %v700, %v696
        %v789 = vpack.c.b16 %v701, %v697
        %v790 = vpack.c.b16 %v702, %v698
        %v791 = vpack.c.b16 %v707, %v703
        %v792 = vpack.c.b16 %v708, %v704
        %v793 = vpack.c.b16 %v709, %v705
        %v794 = vpack.c.b16 %v710, %v706
        %v795 = vpack.c.b16 %v715, %v711
        %v796 = vpack.c.b16 %v716, %v712
        %v797 = vpack.c.b16 %v717, %v713
        %v798 = vpack.c.b16 %v718, %v714
        %v799 = vpack.c.b16 %v723, %v719
        %v800 = vpack.c.b16 %v724, %v720
        %v801 = vpack.c.b16 %v725, %v721
        %v802 = vpack.c.b16 %v726, %v722
        %v803 = vpack.c.b16 %v731, %v727
        %v804 = vpack.c.b16 %v732, %v728
        %v805 = vpack.c.b16 %v733, %v729
        %v806 = vpack.c.b16 %v734, %v730
        %v807 = vpack.c.b16 %v739, %v735
        %v808 = vpack.c.b16 %v740, %v736
        %v809 = vpack.c.b16 %v741, %v737
        %v810 = vpack.c.b16 %v742, %v738
        %v811 = vpack.c.b16 %v747, %v743
        %v812 = vpack.c.b16 %v748, %v744
        %v813 = vpack.c.b16 %v749, %v745
        %v814 = vpack.c.b16 %v750, %v746
        %879 = vmatprep.subr.bf16.mxu0 %v780
        %880 = vmatpush1.bf16.msra.mxu0 %v779
        %881 = vmatprep.subr.bf16.mxu0 %v776
        %882 = vmatpush1.bf16.msra.mxu0 %v775
        %883 = vmatprep.subr.bf16.mxu0 %v772
        %884 = vmatpush1.bf16.msra.mxu0 %v771
        %885 = vmatprep.subr.bf16.mxu0 %v768
        %886 = vmatpush1.bf16.msra.mxu0 %v767
        %887 = vmatprep.subr.bf16.mxu0 %v764
        %888 = vmatpush1.bf16.msra.mxu0 %v763
        %889 = vmatprep.subr.bf16.mxu0 %v760
        %890 = vmatpush1.bf16.msra.mxu0 %v759
        %891 = vmatprep.subr.bf16.mxu0 %v756
        %892 = vmatpush1.bf16.msra.mxu0 %v755
        %893 = vmatprep.subr.bf16.mxu0 %v752
        %894 = vmatpush1.bf16.msra.mxu0 %v751
        %895 = vmatprep.subr.bf16.mxu0 %v812
        %896 = vmatpush2.bf16.msra.mxu0 %v811
        %897 = vmatprep.subr.bf16.mxu0 %v808
        %898 = vmatpush2.bf16.msra.mxu0 %v807
        %899 = vmatprep.subr.bf16.mxu0 %v804
        %900 = vmatpush2.bf16.msra.mxu0 %v803
        %901 = vmatprep.subr.bf16.mxu0 %v800
        %902 = vmatpush2.bf16.msra.mxu0 %v799
        %903 = vmatprep.subr.bf16.mxu0 %v796
        %904 = vmatpush2.bf16.msra.mxu0 %v795
        %905 = vmatprep.subr.bf16.mxu0 %v792
        %906 = vmatpush2.bf16.msra.mxu0 %v791
        %907 = vmatprep.subr.bf16.mxu0 %v788
        %908 = vmatpush2.bf16.msra.mxu0 %v787
        %909 = vmatprep.subr.bf16.mxu0 %v784
        %910 = vmatpush2.bf16.msra.mxu0 %v783
        %911 = vmatprep.mubr.bf16.mxu0 %v552
        %912 = vmatmul.mubr.bf16.gmra.mxu0 %v551
        %v913 = vpop.f32.mrf.mxu0
        %v914 = vadd.f32 0.0, %v913
        %v915 = vpop.f32.mrf.mxu0
        %v916 = vadd.f32 0.0, %v915
        %v917 = vpop.f32.mrf.mxu0
        %v918 = vadd.f32 0.0, %v917
        %v919 = vpop.f32.mrf.mxu0
        %v920 = vadd.f32 0.0, %v919
        %921 = vmatprep.mubr.bf16.mxu0 %v554
        %922 = vmatmul.mubr.bf16.gmra.mxu0 %v553
        %v923 = vpop.f32.mrf.mxu0
        %v924 = vadd.f32 0.0, %v923
        %v925 = vpop.f32.mrf.mxu0
        %v926 = vadd.f32 0.0, %v925
        %v927 = vpop.f32.mrf.mxu0
        %v928 = vadd.f32 0.0, %v927
        %v929 = vpop.f32.mrf.mxu0
        %v930 = vadd.f32 0.0, %v929
        %931 = vdwg.mxu0
        %932 = vmatprep.subr.bf16.mxu0 %v782
        %933 = vmatpush1.bf16.msra.mxu0 %v781
        %934 = vmatprep.subr.bf16.mxu0 %v778
        %935 = vmatpush1.bf16.msra.mxu0 %v777
        %936 = vmatprep.subr.bf16.mxu0 %v774
        %937 = vmatpush1.bf16.msra.mxu0 %v773
        %938 = vmatprep.subr.bf16.mxu0 %v770
        %939 = vmatpush1.bf16.msra.mxu0 %v769
        %940 = vmatprep.subr.bf16.mxu0 %v766
        %941 = vmatpush1.bf16.msra.mxu0 %v765
        %942 = vmatprep.subr.bf16.mxu0 %v762
        %943 = vmatpush1.bf16.msra.mxu0 %v761
        %944 = vmatprep.subr.bf16.mxu0 %v758
        %945 = vmatpush1.bf16.msra.mxu0 %v757
        %946 = vmatprep.subr.bf16.mxu0 %v754
        %947 = vmatpush1.bf16.msra.mxu0 %v753
        %948 = vmatprep.subr.bf16.mxu0 %v814
        %949 = vmatpush2.bf16.msra.mxu0 %v813
        %950 = vmatprep.subr.bf16.mxu0 %v810
        %951 = vmatpush2.bf16.msra.mxu0 %v809
        %952 = vmatprep.subr.bf16.mxu0 %v806
        %953 = vmatpush2.bf16.msra.mxu0 %v805
        %954 = vmatprep.subr.bf16.mxu0 %v802
        %955 = vmatpush2.bf16.msra.mxu0 %v801
        %956 = vmatprep.subr.bf16.mxu0 %v798
        %957 = vmatpush2.bf16.msra.mxu0 %v797
        %958 = vmatprep.subr.bf16.mxu0 %v794
        %959 = vmatpush2.bf16.msra.mxu0 %v793
        %960 = vmatprep.subr.bf16.mxu0 %v790
        %961 = vmatpush2.bf16.msra.mxu0 %v789
        %962 = vmatprep.subr.bf16.mxu0 %v786
        %963 = vmatpush2.bf16.msra.mxu0 %v785
        %964 = vmatprep.mubr.bf16.mxu0 %v552
        %965 = vmatmul.mubr.bf16.gmra.mxu0 %v551
        %v966 = vpop.f32.mrf.mxu0
        %v967 = vadd.f32 0.0, %v966
        %v968 = vpop.f32.mrf.mxu0
        %v969 = vadd.f32 0.0, %v968
        %v970 = vpop.f32.mrf.mxu0
        %v971 = vadd.f32 0.0, %v970
        %v972 = vpop.f32.mrf.mxu0
        %v973 = vadd.f32 0.0, %v972
        %974 = vmatprep.mubr.bf16.mxu0 %v554
        %975 = vmatmul.mubr.bf16.gmra.mxu0 %v553
        %v976 = vpop.f32.mrf.mxu0
        %v977 = vadd.f32 0.0, %v976
        %v978 = vpop.f32.mrf.mxu0
        %v979 = vadd.f32 0.0, %v978
        %v980 = vpop.f32.mrf.mxu0
        %v981 = vadd.f32 0.0, %v980
        %v982 = vpop.f32.mrf.mxu0
        %v983 = vadd.f32 0.0, %v982
        %984 = vdwg.mxu0
        %v985 = vadd.f32 %v455, %v914
        %v986 = vadd.f32 %v456, %v916
        %v987 = vadd.f32 %v457, %v967
        %v988 = vadd.f32 %v458, %v969
        %v989 = vadd.f32 %v459, %v918
        %v990 = vadd.f32 %v460, %v920
        %v991 = vadd.f32 %v461, %v971
        %v992 = vadd.f32 %v462, %v973
        %v993 = vadd.f32 %v463, %v924
        %v994 = vadd.f32 %v464, %v926
        %v995 = vadd.f32 %v465, %v977
        %v996 = vadd.f32 %v466, %v979
        %v997 = vadd.f32 %v467, %v928
        %v998 = vadd.f32 %v468, %v930
        %v999 = vadd.f32 %v469, %v981
        %v1000 = vadd.f32 %v470, %v983
        %1001 = vst [vmem:[#allocation2] sm:$0xff] %v985
        %1002 = vst [vmem:[#allocation2 + $0x8] sm:$0xff] %v986
        %1003 = vst [vmem:[#allocation2 + $0x10] sm:$0xff] %v987
        %1004 = vst [vmem:[#allocation2 + $0x18] sm:$0xff] %v988
        %1005 = vst [vmem:[#allocation2 + $0x20] sm:$0xff] %v989
        %1006 = vst [vmem:[#allocation2 + $0x28] sm:$0xff] %v990
        %1007 = vst [vmem:[#allocation2 + $0x30] sm:$0xff] %v991
        %1008 = vst [vmem:[#allocation2 + $0x38] sm:$0xff] %v992
        %1009 = vst [vmem:[#allocation2 + $0x40] sm:$0xff] %v993
        %1010 = vst [vmem:[#allocation2 + $0x48] sm:$0xff] %v994
        %1011 = vst [vmem:[#allocation2 + $0x50] sm:$0xff] %v995
        %1012 = vst [vmem:[#allocation2 + $0x58] sm:$0xff] %v996
        %1013 = vst [vmem:[#allocation2 + $0x60] sm:$0xff] %v997
        %1014 = vst [vmem:[#allocation2 + $0x68] sm:$0xff] %v998
        %1015 = vst [vmem:[#allocation2 + $0x70] sm:$0xff] %v999
        %1016 = vst [vmem:[#allocation2 + $0x78] sm:$0xff] %v1000
        %p1017 = scmp.eq.s32.totalorder %s21, 2
        // Predicated region
        $region98: #{closed_call.19} parent=84 // pred_check
          %p1018 = pneg %p1017
        $region99: #{closed_call.19} parent=84 // pred_check_branch
          %1020 = sbr.rel (%p1018) target = $region101
        $region100: #{closed_call.19} parent=84 // pred_region
          %v1021 = vld [vmem:[#allocation2] sm:$0xff]
          %v1022 = vld [vmem:[#allocation2 + $0x8] sm:$0xff]
          %v1023 = vld [vmem:[#allocation2 + $0x10] sm:$0xff]
          %v1024 = vld [vmem:[#allocation2 + $0x18] sm:$0xff]
          %v1025 = vld [vmem:[#allocation2 + $0x20] sm:$0xff]
          %v1026 = vld [vmem:[#allocation2 + $0x28] sm:$0xff]
          %v1027 = vld [vmem:[#allocation2 + $0x30] sm:$0xff]
          %v1028 = vld [vmem:[#allocation2 + $0x38] sm:$0xff]
          %v1029 = vld [vmem:[#allocation2 + $0x40] sm:$0xff]
          %v1030 = vld [vmem:[#allocation2 + $0x48] sm:$0xff]
          %v1031 = vld [vmem:[#allocation2 + $0x50] sm:$0xff]
          %v1032 = vld [vmem:[#allocation2 + $0x58] sm:$0xff]
          %v1033 = vld [vmem:[#allocation2 + $0x60] sm:$0xff]
          %v1034 = vld [vmem:[#allocation2 + $0x68] sm:$0xff]
          %v1035 = vld [vmem:[#allocation2 + $0x70] sm:$0xff]
          %v1036 = vld [vmem:[#allocation2 + $0x78] sm:$0xff]
          %v1037 = vld [vmem:[%s431] sm:$0xf]
          %v1039 = vlaneseq
          %v1040 = vshrl.u32 %v1039, 7
          %v1041 = vsub.s32 0, %v1040
          %v1042 = vrot.slane %v1037, %v1041
          %v1043 = vlaneseq
          %v1044 = vshrl.u32 %v1043, 7
          %v1045 = vsub.s32 1, %v1044
          %v1046 = vrot.slane %v1037, %v1045
          %v1047 = vlaneseq
          %v1048 = vshrl.u32 %v1047, 7
          %v1049 = vsub.s32 2, %v1048
          %v1050 = vrot.slane %v1037, %v1049
          %v1051 = vlaneseq
          %v1052 = vshrl.u32 %v1051, 7
          %v1053 = vsub.s32 3, %v1052
          %v1054 = vrot.slane %v1037, %v1053
          %v1059 = vadd.f32 %v1021, %v1042
          %v1060 = vadd.f32 %v1022, %v1046
          %v1061 = vadd.f32 %v1023, %v1050
          %v1062 = vadd.f32 %v1024, %v1054
          %v1063 = vadd.f32 %v1025, %v1042
          %v1064 = vadd.f32 %v1026, %v1046
          %v1065 = vadd.f32 %v1027, %v1050
          %v1066 = vadd.f32 %v1028, %v1054
          %v1067 = vadd.f32 %v1029, %v1042
          %v1068 = vadd.f32 %v1030, %v1046
          %v1069 = vadd.f32 %v1031, %v1050
          %v1070 = vadd.f32 %v1032, %v1054
          %v1071 = vadd.f32 %v1033, %v1042
          %v1072 = vadd.f32 %v1034, %v1046
          %v1073 = vadd.f32 %v1035, %v1050
          %v1074 = vadd.f32 %v1036, %v1054
          %v1075 = vmul.f32 %v1059, 0.5
          %v1076 = vmul.f32 %v1060, 0.5
          %v1077 = vmul.f32 %v1061, 0.5
          %v1078 = vmul.f32 %v1062, 0.5
          %v1079 = vmul.f32 %v1063, 0.5
          %v1080 = vmul.f32 %v1064, 0.5
          %v1081 = vmul.f32 %v1065, 0.5
          %v1082 = vmul.f32 %v1066, 0.5
          %v1083 = vmul.f32 %v1067, 0.5
          %v1084 = vmul.f32 %v1068, 0.5
          %v1085 = vmul.f32 %v1069, 0.5
          %v1086 = vmul.f32 %v1070, 0.5
          %v1087 = vmul.f32 %v1071, 0.5
          %v1088 = vmul.f32 %v1072, 0.5
          %v1089 = vmul.f32 %v1073, 0.5
          %v1090 = vmul.f32 %v1074, 0.5
          %v1091 = vmul.f32 %v1059, 0.044715
          %v1092 = vmul.f32 %v1060, 0.044715
          %v1093 = vmul.f32 %v1061, 0.044715
          %v1094 = vmul.f32 %v1062, 0.044715
          %v1095 = vmul.f32 %v1063, 0.044715
          %v1096 = vmul.f32 %v1064, 0.044715
          %v1097 = vmul.f32 %v1065, 0.044715
          %v1098 = vmul.f32 %v1066, 0.044715
          %v1099 = vmul.f32 %v1067, 0.044715
          %v1100 = vmul.f32 %v1068, 0.044715
          %v1101 = vmul.f32 %v1069, 0.044715
          %v1102 = vmul.f32 %v1070, 0.044715
          %v1103 = vmul.f32 %v1071, 0.044715
          %v1104 = vmul.f32 %v1072, 0.044715
          %v1105 = vmul.f32 %v1073, 0.044715
          %v1106 = vmul.f32 %v1074, 0.044715
          %v1107 = vmul.f32 %v1091, %v1059
          %v1108 = vmul.f32 %v1092, %v1060
          %v1109 = vmul.f32 %v1093, %v1061
          %v1110 = vmul.f32 %v1094, %v1062
          %v1111 = vmul.f32 %v1095, %v1063
          %v1112 = vmul.f32 %v1096, %v1064
          %v1113 = vmul.f32 %v1097, %v1065
          %v1114 = vmul.f32 %v1098, %v1066
          %v1115 = vmul.f32 %v1099, %v1067
          %v1116 = vmul.f32 %v1100, %v1068
          %v1117 = vmul.f32 %v1101, %v1069
          %v1118 = vmul.f32 %v1102, %v1070
          %v1119 = vmul.f32 %v1103, %v1071
          %v1120 = vmul.f32 %v1104, %v1072
          %v1121 = vmul.f32 %v1105, %v1073
          %v1122 = vmul.f32 %v1106, %v1074
          %v1123 = vmul.f32 %v1107, %v1059
          %v1124 = vmul.f32 %v1108, %v1060
          %v1125 = vmul.f32 %v1109, %v1061
          %v1126 = vmul.f32 %v1110, %v1062
          %v1127 = vmul.f32 %v1111, %v1063
          %v1128 = vmul.f32 %v1112, %v1064
          %v1129 = vmul.f32 %v1113, %v1065
          %v1130 = vmul.f32 %v1114, %v1066
          %v1131 = vmul.f32 %v1115, %v1067
          %v1132 = vmul.f32 %v1116, %v1068
          %v1133 = vmul.f32 %v1117, %v1069
          %v1134 = vmul.f32 %v1118, %v1070
          %v1135 = vmul.f32 %v1119, %v1071
          %v1136 = vmul.f32 %v1120, %v1072
          %v1137 = vmul.f32 %v1121, %v1073
          %v1138 = vmul.f32 %v1122, %v1074
          %v1139 = vadd.f32 %v1059, %v1123
          %v1140 = vadd.f32 %v1060, %v1124
          %v1141 = vadd.f32 %v1061, %v1125
          %v1142 = vadd.f32 %v1062, %v1126
          %v1143 = vadd.f32 %v1063, %v1127
          %v1144 = vadd.f32 %v1064, %v1128
          %v1145 = vadd.f32 %v1065, %v1129
          %v1146 = vadd.f32 %v1066, %v1130
          %v1147 = vadd.f32 %v1067, %v1131
          %v1148 = vadd.f32 %v1068, %v1132
          %v1149 = vadd.f32 %v1069, %v1133
          %v1150 = vadd.f32 %v1070, %v1134
          %v1151 = vadd.f32 %v1071, %v1135
          %v1152 = vadd.f32 %v1072, %v1136
          %v1153 = vadd.f32 %v1073, %v1137
          %v1154 = vadd.f32 %v1074, %v1138
          %v1155 = vmul.f32 %v1139, 0.7978846
          %v1156 = vmul.f32 %v1140, 0.7978846
          %v1157 = vmul.f32 %v1141, 0.7978846
          %v1158 = vmul.f32 %v1142, 0.7978846
          %v1159 = vmul.f32 %v1143, 0.7978846
          %v1160 = vmul.f32 %v1144, 0.7978846
          %v1161 = vmul.f32 %v1145, 0.7978846
          %v1162 = vmul.f32 %v1146, 0.7978846
          %v1163 = vmul.f32 %v1147, 0.7978846
          %v1164 = vmul.f32 %v1148, 0.7978846
          %v1165 = vmul.f32 %v1149, 0.7978846
          %v1166 = vmul.f32 %v1150, 0.7978846
          %v1167 = vmul.f32 %v1151, 0.7978846
          %v1168 = vmul.f32 %v1152, 0.7978846
          %v1169 = vmul.f32 %v1153, 0.7978846
          %v1170 = vmul.f32 %v1154, 0.7978846
          %v1171 = vtanh.pop %v1155
          %v1172 = vtanh.pop %v1156
          %v1173 = vtanh.pop %v1157
          %v1174 = vtanh.pop %v1158
          %v1175 = vtanh.pop %v1159
          %v1176 = vtanh.pop %v1160
          %v1177 = vtanh.pop %v1161
          %v1178 = vtanh.pop %v1162
          %v1179 = vtanh.pop %v1163
          %v1180 = vtanh.pop %v1164
          %v1181 = vtanh.pop %v1165
          %v1182 = vtanh.pop %v1166
          %v1183 = vtanh.pop %v1167
          %v1184 = vtanh.pop %v1168
          %v1185 = vtanh.pop %v1169
          %v1186 = vtanh.pop %v1170
          %v1187 = vadd.f32 %v1171, 1.0
          %v1188 = vadd.f32 %v1172, 1.0
          %v1189 = vadd.f32 %v1173, 1.0
          %v1190 = vadd.f32 %v1174, 1.0
          %v1191 = vadd.f32 %v1175, 1.0
          %v1192 = vadd.f32 %v1176, 1.0
          %v1193 = vadd.f32 %v1177, 1.0
          %v1194 = vadd.f32 %v1178, 1.0
          %v1195 = vadd.f32 %v1179, 1.0
          %v1196 = vadd.f32 %v1180, 1.0
          %v1197 = vadd.f32 %v1181, 1.0
          %v1198 = vadd.f32 %v1182, 1.0
          %v1199 = vadd.f32 %v1183, 1.0
          %v1200 = vadd.f32 %v1184, 1.0
          %v1201 = vadd.f32 %v1185, 1.0
          %v1202 = vadd.f32 %v1186, 1.0
          %v1203 = vmul.f32 %v1075, %v1187
          %v1204 = vmul.f32 %v1076, %v1188
          %v1205 = vmul.f32 %v1077, %v1189
          %v1206 = vmul.f32 %v1078, %v1190
          %v1207 = vmul.f32 %v1079, %v1191
          %v1208 = vmul.f32 %v1080, %v1192
          %v1209 = vmul.f32 %v1081, %v1193
          %v1210 = vmul.f32 %v1082, %v1194
          %v1211 = vmul.f32 %v1083, %v1195
          %v1212 = vmul.f32 %v1084, %v1196
          %v1213 = vmul.f32 %v1085, %v1197
          %v1214 = vmul.f32 %v1086, %v1198
          %v1215 = vmul.f32 %v1087, %v1199
          %v1216 = vmul.f32 %v1088, %v1200
          %v1217 = vmul.f32 %v1089, %v1201
          %v1218 = vmul.f32 %v1090, %v1202
          %v1219 = vpack.c.bf16 %v1207, %v1203
          %v1220 = vpack.c.bf16 %v1208, %v1204
          %v1221 = vpack.c.bf16 %v1209, %v1205
          %v1222 = vpack.c.bf16 %v1210, %v1206
          %v1223 = vpack.c.bf16 %v1215, %v1211
          %v1224 = vpack.c.bf16 %v1216, %v1212
          %v1225 = vpack.c.bf16 %v1217, %v1213
          %v1226 = vpack.c.bf16 %v1218, %v1214
          %v1235 = vunpack.c.l.b16 %v1219
          %v1236 = vunpack.c.l.b16 %v1220
          %v1237 = vunpack.c.l.b16 %v1221
          %v1238 = vunpack.c.l.b16 %v1222
          %v1239 = vunpack.c.h.b16 %v1219
          %v1240 = vunpack.c.h.b16 %v1220
          %v1241 = vunpack.c.h.b16 %v1221
          %v1242 = vunpack.c.h.b16 %v1222
          %v1243 = vunpack.c.l.b16 %v1223
          %v1244 = vunpack.c.l.b16 %v1224
          %v1245 = vunpack.c.l.b16 %v1225
          %v1246 = vunpack.c.l.b16 %v1226
          %v1247 = vunpack.c.h.b16 %v1223
          %v1248 = vunpack.c.h.b16 %v1224
          %v1249 = vunpack.c.h.b16 %v1225
          %v1250 = vunpack.c.h.b16 %v1226
          %v1251 = vpack.c.b16 %v1236, %v1235
          %v1252 = vpack.c.b16 %v1238, %v1237
          %v1253 = vpack.c.b16 %v1240, %v1239
          %v1254 = vpack.c.b16 %v1242, %v1241
          %v1255 = vpack.c.b16 %v1244, %v1243
          %v1256 = vpack.c.b16 %v1246, %v1245
          %v1257 = vpack.c.b16 %v1248, %v1247
          %v1258 = vpack.c.b16 %v1250, %v1249
          %1267 = vst [vmem:[%s423] sm:$0xff] %v1251
          %1268 = vst [vmem:[%s423 + $0x8] sm:$0xff] %v1252
          %1269 = vst [vmem:[%s423 + $0x10] sm:$0xff] %v1253
          %1270 = vst [vmem:[%s423 + $0x18] sm:$0xff] %v1254
          %1271 = vst [vmem:[%s423 + $0x20] sm:$0xff] %v1255
          %1272 = vst [vmem:[%s423 + $0x28] sm:$0xff] %v1256
          %1273 = vst [vmem:[%s423 + $0x30] sm:$0xff] %v1257
          %1274 = vst [vmem:[%s423 + $0x38] sm:$0xff] %v1258
        $region101: #{closed_call.19} parent=84 // pred_fallthru
          _
        %s1275 = sand.u32 %s125, 1
        %s1276 = sand.u32 %s125, 1
        %s1277 = smul.addr %s1276, 64
        %s1278 = scalar_lea.vmem [#allocation5], %s1277
        // Predicated region
        $region102: #{closed_call.19} parent=84 // pred_check
          %p1279 = pneg %p135
        $region103: #{closed_call.19} parent=84 // pred_check_branch
          %1281 = sbr.rel (%p1279) target = $region105
        $region104: #{closed_call.19} parent=84 // pred_region
          %s1282 = smul.u32 4, %s19
          %s1283 = smul.u32 4, %s20
          %s1284 = smul.addr %s1282, 24
          %s1285 = sadd.s32 %s1283, %s1284
          %s1286 = smul.addr %s1285, 4
          %s1287 = scalar_lea.vmem %s3, %s1286
          // Predicated region
          $region106: #{closed_call.19} parent=104 // pred_check
            _
          $region107: #{closed_call.19} parent=104 // pred_check_branch
            %1289 = sbr.rel (0) target = $region109
          $region108: #{closed_call.19} parent=104 // pred_region
            // Predicated region
            $region110: #{closed_call.19} parent=108 // pred_check
              _
            $region111: #{closed_call.19} parent=108 // pred_check_branch
              %1291 = sbr.rel (0) target = $region113
            $region112: #{closed_call.19} parent=108 // pred_region
              loop: start=0, step=1, limit=1
              $region114: #{closed_call.19} parent=112 // loop_pre_header
                _
              $region115: #{closed_call.19} parent=112 // loop_header
                %s1293 = sphi 0, %s1297
                %p1294 = scmp.ge.s32.totalorder %s1293, 1
                %s1298 = sphi %s1278, %s1278
                %s1299 = sphi %s1287, %s1287
              $region116: #{closed_call.19} parent=112 // loop_header_branch
                %1296 = sbr.rel (%p1294) target = $region120
              $region117: #{closed_call.19} parent=112 // loop_body
                %v1300 = vld [vmem:[%s1298] sm:$0xff]
                %1301 = vst [vmem:[%s1299] sm:$0xff] %v1300
                %v1302 = vld [vmem:[%s1298 + $0x8] sm:$0xff]
                %1303 = vst [vmem:[%s1299 + $0x8] sm:$0xff] %v1302
                %v1304 = vld [vmem:[%s1298 + $0x10] sm:$0xff]
                %1305 = vst [vmem:[%s1299 + $0x60] sm:$0xff] %v1304
                %v1306 = vld [vmem:[%s1298 + $0x18] sm:$0xff]
                %1307 = vst [vmem:[%s1299 + $0x68] sm:$0xff] %v1306
                %v1308 = vld [vmem:[%s1298 + $0x20] sm:$0xff]
                %1309 = vst [vmem:[%s1299 + $0xc0] sm:$0xff] %v1308
                %v1310 = vld [vmem:[%s1298 + $0x28] sm:$0xff]
                %1311 = vst [vmem:[%s1299 + $0xc8] sm:$0xff] %v1310
                %v1312 = vld [vmem:[%s1298 + $0x30] sm:$0xff]
                %1313 = vst [vmem:[%s1299 + $0x120] sm:$0xff] %v1312
                %v1314 = vld [vmem:[%s1298 + $0x38] sm:$0xff]
                %1315 = vst [vmem:[%s1299 + $0x128] sm:$0xff] %v1314
              $region118: #{closed_call.19} parent=112 // loop_footer
                %s1297 = sadd.s32 1, %s1293
              $region119: #{closed_call.19} parent=112 // loop_footer_branch
                %1292 = sbr.rel target = $region115
              $region120: #{closed_call.19} parent=112 // loop_exit
                _
            $region113: #{closed_call.19} parent=108 // pred_fallthru
              _
            // Predicated region
            $region121: #{closed_call.19} parent=108 // pred_check
              _
            $region122: #{closed_call.19} parent=108 // pred_check_branch
              %1317 = sbr.rel target = $region124
            $region123: #{closed_call.19} parent=108 // pred_region
              _
            $region124: #{closed_call.19} parent=108 // pred_fallthru
              _
          $region109: #{closed_call.19} parent=104 // pred_fallthru
            _
          %1318 = vnop
        $region105: #{closed_call.19} parent=84 // pred_fallthru
          _
      $region85: #{closed_call.19} parent=5 // pred_fallthru
        _
      %p1319 = scmp.le.s32.totalorder 2, %s9
      // Predicated region
      $region125: #{closed_call.19} parent=5 // pred_check
        %p1320 = pneg %p1319
      $region126: #{closed_call.19} parent=5 // pred_check_branch
        %1322 = sbr.rel (%p1320) target = $region128
      $region127: #{closed_call.19} parent=5 // pred_region
        %s1323 = ssub.s32 %s9, 2
        // Predicated region
        $region129: #{closed_call.19} parent=127 // pred_check
          %p1324 = pneg %p141
        $region130: #{closed_call.19} parent=127 // pred_check_branch
          %1326 = sbr.rel (%p1324) target = $region132
        $region131: #{closed_call.19} parent=127 // pred_region
          %s1327 = sand.u32 %s126, 1
          %s1328 = sand.u32 %s126, 1
          %s1329 = smul.addr %s1328, 64
          %s1330 = scalar_lea.vmem [#allocation5], %s1329
        $region132: #{closed_call.19} parent=127 // pred_fallthru
          _
      $region128: #{closed_call.19} parent=5 // pred_fallthru
        _
    $region6: #{closed_call.19} parent=1 // loop_footer
      %s13 = sadd.s32 1, %s9
    $region7: #{closed_call.19} parent=1 // loop_footer_branch
      %8 = sbr.rel target = $region3
    $region8: #{closed_call.19} parent=1 // loop_exit
      _

// kernel: text_encoder_forward.4
$region0: #{text_encoder_forward.4}
  #allocation0 [shape = 'u32[]', space=smem, size = 0x4, offset = 0x4, fixed_abs, tag = 'smem constant byte address 0x4 - core index']
  #allocation1 [shape = 'u32[144,128]{1,0:T(1,128)}', space=vmem, size = 0x12000, scoped, tag = 'internal scratch']
  #allocation2 [shape = 'f32[8,256]{1,0:T(8,128)}', space=vmem, size = 0x2000, scoped, tag = 'scratch operand']
  %s0 = inlined_call_operand.vmem [shape: bf16[8,768], index: 0, kind: input, shape index: {}]
  %s1 = inlined_call_operand.vmem [shape: bf16[768,768], index: 1, kind: input, shape index: {}]
  %s2 = inlined_call_operand.vmem [shape: f32[1,768], index: 2, kind: input, shape index: {}]
  %s3 = inlined_call_operand.vmem [shape: bf16[8,768], index: 3, kind: output, shape index: {}]
  %s4 = sld [smem:[#allocation0]]
  $region91: #{text_encoder_forward.4} parent=0
    _
  %s6 = ssub.s32 1, %s4
  %s7 = scalar_select 0, %s6, %s4
  $region1: #{text_encoder_forward.4} parent=0
    #allocation3 [shape = 'u8[262144]{0}', space=vmem, size = 0x40000, scoped, tag = 'input window, operand 1']
    loop: start=0, step=1, limit=11
    $region2: #{text_encoder_forward.4} parent=1 // loop_pre_header
      _
    $region3: #{text_encoder_forward.4} parent=1 // loop_header
      %s9 = sphi 0, %s13
      %p10 = scmp.ge.s32.totalorder %s9, 11
      %s16 = sphi 0, %s35
      %s17 = sphi 0, %s31
      %s18 = sphi 0, %s27
      %s19 = sphi 0, %s16
      %s20 = sphi 0, %s17
      %s21 = sphi 0, %s18
      %s22 = sphi 0, %s19
      %s23 = sphi 0, %s20
      %s24 = sphi 0, %s21
      %s40 = sphi 0, %s42
      %s43 = sphi 0, %s40
      %s44 = sphi 0, %s43
      %s60 = sphi 0, %s44
      %s68 = sphi 0, %s70
      %s71 = sphi 0, %s68
      %s72 = sphi 0, %s71
      %s88 = sphi 0, %s72
      %s94 = sphi 0, %s96
      %s97 = sphi 0, %s94
      %s98 = sphi 0, %s97
      %s114 = sphi 0, %s98
      %s122 = sphi 0, %s124
      %s125 = sphi 0, %s122
      %s126 = sphi 0, %s125
      %s142 = sphi 0, %s126
    $region4: #{text_encoder_forward.4} parent=1 // loop_header_branch
      %12 = sbr.rel (%p10) target = $region8
    $region5: #{text_encoder_forward.4} parent=1 // loop_body
      %s14 = ssub.s32 %s9, 1
      %s15 = ssub.s32 %s9, 2
      %s25 = sadd.s32 1, %s18
      %p26 = scmp.ge.s32.totalorder %s25, 3
      %s27 = scalar_select %p26, 0, %s25
      %s28 = sadd.s32 1, %s17
      %s29 = scalar_select %p26, %s28, %s17
      %p30 = scmp.ge.s32.totalorder %s29, 3
      %s31 = scalar_select %p30, 0, %s29
      %s32 = sadd.s32 1, %s16
      %s33 = scalar_select %p30, %s32, %s16
      %p34 = scmp.ge.s32.totalorder %s33, 1
      %s35 = scalar_select %p34, 0, %s33
      %s36 = ssub.s32 %s16, %s35
      %s37 = ssub.s32 %s18, %s27
      %s38 = sor.u32 %s36, %s37
      %p39 = scmp.eq.s32.totalorder %s38, 0
      %s41 = sadd.s32 %s40, 1
      %s42 = scalar_select %p39, %s40, %s41
      %p45 = pneg %p39
      %p46 = scmp.eq.s32.totalorder %s9, 8
      %p47 = por %p45, %p46
      %p48 = scmp.ne.s32.totalorder %s40, %s43
      %p49 = scmp.eq.s32.totalorder %s9, 0
      %p50 = por %p48, %p49
      %p51 = scmp.ne.s32.totalorder %s40, %s43
      %p52 = scmp.eq.s32.totalorder %s14, 8
      %p53 = por %p51, %p52
      %p54 = scmp.ne.s32.totalorder %s43, %s44
      %p55 = scmp.eq.s32.totalorder %s14, 0
      %p56 = por %p54, %p55
      %p57 = scmp.ne.s32.totalorder %s43, %s44
      %p58 = scmp.eq.s32.totalorder %s15, 8
      %p59 = por %p57, %p58
      %p61 = scmp.ne.s32.totalorder %s44, %s60
      %p62 = scmp.eq.s32.totalorder %s15, 0
      %p63 = por %p61, %p62
      %s64 = ssub.s32 %s18, %s27
      %s65 = ssub.s32 %s17, %s31
      %s66 = sor.u32 %s64, %s65
      %p67 = scmp.eq.s32.totalorder %s66, 0
      %s69 = sadd.s32 %s68, 1
      %s70 = scalar_select %p67, %s68, %s69
      %p73 = pneg %p67
      %p74 = scmp.eq.s32.totalorder %s9, 8
      %p75 = por %p73, %p74
      %p76 = scmp.ne.s32.totalorder %s68, %s71
      %p77 = scmp.eq.s32.totalorder %s9, 0
      %p78 = por %p76, %p77
      %p79 = scmp.ne.s32.totalorder %s68, %s71
      %p80 = scmp.eq.s32.totalorder %s14, 8
      %p81 = por %p79, %p80
      %p82 = scmp.ne.s32.totalorder %s71, %s72
      %p83 = scmp.eq.s32.totalorder %s14, 0
      %p84 = por %p82, %p83
      %p85 = scmp.ne.s32.totalorder %s71, %s72
      %p86 = scmp.eq.s32.totalorder %s15, 8
      %p87 = por %p85, %p86
      %p89 = scmp.ne.s32.totalorder %s72, %s88
      %p90 = scmp.eq.s32.totalorder %s15, 0
      %p91 = por %p89, %p90
      %s92 = ssub.s32 %s17, %s31
      %p93 = scmp.eq.s32.totalorder %s92, 0
      %s95 = sadd.s32 %s94, 1
      %s96 = scalar_select %p93, %s94, %s95
      %p99 = pneg %p93
      %p100 = scmp.eq.s32.totalorder %s9, 8
      %p101 = por %p99, %p100
      %p102 = scmp.ne.s32.totalorder %s94, %s97
      %p103 = scmp.eq.s32.totalorder %s9, 0
      %p104 = por %p102, %p103
      %p105 = scmp.ne.s32.totalorder %s94, %s97
      %p106 = scmp.eq.s32.totalorder %s14, 8
      %p107 = por %p105, %p106
      %p108 = scmp.ne.s32.totalorder %s97, %s98
      %p109 = scmp.eq.s32.totalorder %s14, 0
      %p110 = por %p108, %p109
      %p111 = scmp.ne.s32.totalorder %s97, %s98
      %p112 = scmp.eq.s32.totalorder %s15, 8
      %p113 = por %p111, %p112
      %p115 = scmp.ne.s32.totalorder %s98, %s114
      %p116 = scmp.eq.s32.totalorder %s15, 0
      %p117 = por %p115, %p116
      %s118 = ssub.s32 %s16, %s35
      %s119 = ssub.s32 %s17, %s31
      %s120 = sor.u32 %s118, %s119
      %p121 = scmp.eq.s32.totalorder %s120, 0
      %s123 = sadd.s32 %s122, 1
      %s124 = scalar_select %p121, %s122, %s123
      %p127 = pneg %p121
      %p128 = scmp.eq.s32.totalorder %s9, 8
      %p129 = por %p127, %p128
      %p130 = scmp.ne.s32.totalorder %s122, %s125
      %p131 = scmp.eq.s32.totalorder %s9, 0
      %p132 = por %p130, %p131
      %p133 = scmp.ne.s32.totalorder %s122, %s125
      %p134 = scmp.eq.s32.totalorder %s14, 8
      %p135 = por %p133, %p134
      %p136 = scmp.ne.s32.totalorder %s125, %s126
      %p137 = scmp.eq.s32.totalorder %s14, 0
      %p138 = por %p136, %p137
      %p139 = scmp.ne.s32.totalorder %s125, %s126
      %p140 = scmp.eq.s32.totalorder %s15, 8
      %p141 = por %p139, %p140
      %p143 = scmp.ne.s32.totalorder %s126, %s142
      %p144 = scmp.eq.s32.totalorder %s15, 0
      %p145 = por %p143, %p144
      %p146 = scmp.le.s32.totalorder 1, %s9
      %p147 = scmp.lt.s32.totalorder %s9, 10
      %p148 = pnand %p146, %p147
      %p149 = pneg %p148
      // Predicated region
      $region9: #{text_encoder_forward.4} parent=5 // pred_check
        _
      $region10: #{text_encoder_forward.4} parent=5 // pred_check_branch
        %151 = sbr.rel (%p148) target = $region12
      $region11: #{text_encoder_forward.4} parent=5 // pred_region
        %s152 = ssub.s32 %s9, 1
      $region12: #{text_encoder_forward.4} parent=5 // pred_fallthru
        _
      %p153 = scmp.lt.s32.totalorder %s9, 9
      // Predicated region
      $region13: #{text_encoder_forward.4} parent=5 // pred_check
        %p154 = pneg %p153
      $region14: #{text_encoder_forward.4} parent=5 // pred_check_branch
        %156 = sbr.rel (%p154) target = $region16
      $region15: #{text_encoder_forward.4} parent=5 // pred_region
        // Predicated region
        $region17: #{text_encoder_forward.4} parent=15 // pred_check
          %p157 = pneg %p50
        $region18: #{text_encoder_forward.4} parent=15 // pred_check_branch
          %159 = sbr.rel (%p157) target = $region20
        $region19: #{text_encoder_forward.4} parent=15 // pred_region
          %s160 = smul.u32 2, %s18
          %p161 = scmp.lt.s32.totalorder %s16, 0
          %s162 = scalar_select %p161, %s16, 0
          %p163 = scmp.lt.s32.totalorder %s160, 5
          %s164 = scalar_select %p163, %s160, 5
          %s165 = smul.addr %s162, 6
          %s166 = sadd.s32 %s164, %s165
          %s167 = smul.addr %s166, 4
          %s168 = scalar_lea.vmem %s0, %s167
          %s169 = smul.u32 2, %s18
        $region20: #{text_encoder_forward.4} parent=15 // pred_fallthru
          _
        // Predicated region
        $region21: #{text_encoder_forward.4} parent=15 // pred_check
          %p170 = pneg %p78
        $region22: #{text_encoder_forward.4} parent=15 // pred_check_branch
          %172 = sbr.rel (%p170) target = $region24
        $region23: #{text_encoder_forward.4} parent=15 // pred_region
          %s173 = sand.u32 %s68, 1
          %s174 = sand.u32 %s68, 1
          %s175 = smul.addr %s174, 256
          %s176 = scalar_lea.vmem [#allocation3], %s175
          %s177 = smul.u32 32, %s18
          %s178 = smul.u32 2, %s17
          %s179 = smul.addr %s177, 6
          %s180 = sadd.s32 %s178, %s179
          %s181 = smul.addr %s180, 4
          %s182 = scalar_lea.vmem %s1, %s181
          // Predicated region
          $region25: #{text_encoder_forward.4} parent=23 // pred_check
            _
          $region26: #{text_encoder_forward.4} parent=23 // pred_check_branch
            %184 = sbr.rel (0) target = $region28
          $region27: #{text_encoder_forward.4} parent=23 // pred_region
            // Predicated region
            $region29: #{text_encoder_forward.4} parent=27 // pred_check
              _
            $region30: #{text_encoder_forward.4} parent=27 // pred_check_branch
              %186 = sbr.rel (0) target = $region32
            $region31: #{text_encoder_forward.4} parent=27 // pred_region
              // Predicated region
              $region44: #{text_encoder_forward.4} parent=31 // pred_check
                _
              $region45: #{text_encoder_forward.4} parent=31 // pred_check_branch
                %264 = sbr.rel (0) target = $region47
              $region46: #{text_encoder_forward.4} parent=31 // pred_region
                loop: start=0, step=1, limit=1
                $region48: #{text_encoder_forward.4} parent=46 // loop_pre_header
                  _
                $region49: #{text_encoder_forward.4} parent=46 // loop_header
                  %s266 = sphi 0, %s270
                  %p267 = scmp.ge.s32.totalorder %s266, 1
                  %s271 = sphi %s182, %s182
                  %s272 = sphi %s176, %s176
                $region50: #{text_encoder_forward.4} parent=46 // loop_header_branch
                  %269 = sbr.rel (%p267) target = $region54
                $region51: #{text_encoder_forward.4} parent=46 // loop_body
                  %v273 = vld [vmem:[%s271] sm:$0xff]
                  %274 = vst [vmem:[%s272] sm:$0xff] %v273
                  %v275 = vld [vmem:[%s271 + $0x18] sm:$0xff]
                  %276 = vst [vmem:[%s272 + $0x8] sm:$0xff] %v275
                  %v277 = vld [vmem:[%s271 + $0x30] sm:$0xff]
                  %278 = vst [vmem:[%s272 + $0x10] sm:$0xff] %v277
                  %v279 = vld [vmem:[%s271 + $0x48] sm:$0xff]
                  %280 = vst [vmem:[%s272 + $0x18] sm:$0xff] %v279
                  %v281 = vld [vmem:[%s271 + $0x60] sm:$0xff]
                  %282 = vst [vmem:[%s272 + $0x20] sm:$0xff] %v281
                  %v283 = vld [vmem:[%s271 + $0x78] sm:$0xff]
                  %284 = vst [vmem:[%s272 + $0x28] sm:$0xff] %v283
                  %v285 = vld [vmem:[%s271 + $0x90] sm:$0xff]
                  %286 = vst [vmem:[%s272 + $0x30] sm:$0xff] %v285
                  %v287 = vld [vmem:[%s271 + $0xa8] sm:$0xff]
                  %288 = vst [vmem:[%s272 + $0x38] sm:$0xff] %v287
                  %v289 = vld [vmem:[%s271 + $0xc0] sm:$0xff]
                  %290 = vst [vmem:[%s272 + $0x40] sm:$0xff] %v289
                  %v291 = vld [vmem:[%s271 + $0xd8] sm:$0xff]
                  %292 = vst [vmem:[%s272 + $0x48] sm:$0xff] %v291
                  %v293 = vld [vmem:[%s271 + $0xf0] sm:$0xff]
                  %294 = vst [vmem:[%s272 + $0x50] sm:$0xff] %v293
                  %v295 = vld [vmem:[%s271 + $0x108] sm:$0xff]
                  %296 = vst [vmem:[%s272 + $0x58] sm:$0xff] %v295
                  %v297 = vld [vmem:[%s271 + $0x120] sm:$0xff]
                  %298 = vst [vmem:[%s272 + $0x60] sm:$0xff] %v297
                  %v299 = vld [vmem:[%s271 + $0x138] sm:$0xff]
                  %300 = vst [vmem:[%s272 + $0x68] sm:$0xff] %v299
                  %v301 = vld [vmem:[%s271 + $0x150] sm:$0xff]
                  %302 = vst [vmem:[%s272 + $0x70] sm:$0xff] %v301
                  %v303 = vld [vmem:[%s271 + $0x168] sm:$0xff]
                  %304 = vst [vmem:[%s272 + $0x78] sm:$0xff] %v303
                  %v305 = vld [vmem:[%s271 + $0x180] sm:$0xff]
                  %306 = vst [vmem:[%s272 + $0x80] sm:$0xff] %v305
                  %v307 = vld [vmem:[%s271 + $0x198] sm:$0xff]
                  %308 = vst [vmem:[%s272 + $0x88] sm:$0xff] %v307
                  %v309 = vld [vmem:[%s271 + $0x1b0] sm:$0xff]
                  %310 = vst [vmem:[%s272 + $0x90] sm:$0xff] %v309
                  %v311 = vld [vmem:[%s271 + $0x1c8] sm:$0xff]
                  %312 = vst [vmem:[%s272 + $0x98] sm:$0xff] %v311
                  %v313 = vld [vmem:[%s271 + $0x1e0] sm:$0xff]
                  %314 = vst [vmem:[%s272 + $0xa0] sm:$0xff] %v313
                  %v315 = vld [vmem:[%s271 + $0x1f8] sm:$0xff]
                  %316 = vst [vmem:[%s272 + $0xa8] sm:$0xff] %v315
                  %v317 = vld [vmem:[%s271 + $0x210] sm:$0xff]
                  %318 = vst [vmem:[%s272 + $0xb0] sm:$0xff] %v317
                  %v319 = vld [vmem:[%s271 + $0x228] sm:$0xff]
                  %320 = vst [vmem:[%s272 + $0xb8] sm:$0xff] %v319
                  %v321 = vld [vmem:[%s271 + $0x240] sm:$0xff]
                  %322 = vst [vmem:[%s272 + $0xc0] sm:$0xff] %v321
                  %v323 = vld [vmem:[%s271 + $0x258] sm:$0xff]
                  %324 = vst [vmem:[%s272 + $0xc8] sm:$0xff] %v323
                  %v325 = vld [vmem:[%s271 + $0x270] sm:$0xff]
                  %326 = vst [vmem:[%s272 + $0xd0] sm:$0xff] %v325
                  %v327 = vld [vmem:[%s271 + $0x288] sm:$0xff]
                  %328 = vst [vmem:[%s272 + $0xd8] sm:$0xff] %v327
                  %v329 = vld [vmem:[%s271 + $0x2a0] sm:$0xff]
                  %330 = vst [vmem:[%s272 + $0xe0] sm:$0xff] %v329
                  %v331 = vld [vmem:[%s271 + $0x2b8] sm:$0xff]
                  %332 = vst [vmem:[%s272 + $0xe8] sm:$0xff] %v331
                  %v333 = vld [vmem:[%s271 + $0x2d0] sm:$0xff]
                  %334 = vst [vmem:[%s272 + $0xf0] sm:$0xff] %v333
                  %v335 = vld [vmem:[%s271 + $0x2e8] sm:$0xff]
                  %336 = vst [vmem:[%s272 + $0xf8] sm:$0xff] %v335
                $region52: #{text_encoder_forward.4} parent=46 // loop_footer
                  %s270 = sadd.s32 1, %s266
                $region53: #{text_encoder_forward.4} parent=46 // loop_footer_branch
                  %265 = sbr.rel target = $region49
                $region54: #{text_encoder_forward.4} parent=46 // loop_exit
                  _
              $region47: #{text_encoder_forward.4} parent=31 // pred_fallthru
                _
              // Predicated region
              $region55: #{text_encoder_forward.4} parent=31 // pred_check
                _
              $region56: #{text_encoder_forward.4} parent=31 // pred_check_branch
                %338 = sbr.rel target = $region58
              $region57: #{text_encoder_forward.4} parent=31 // pred_region
                _
              $region58: #{text_encoder_forward.4} parent=31 // pred_fallthru
                _
            $region32: #{text_encoder_forward.4} parent=27 // pred_fallthru
              _
            // Predicated region
            $region33: #{text_encoder_forward.4} parent=27 // pred_check
              _
            $region34: #{text_encoder_forward.4} parent=27 // pred_check_branch
              %188 = sbr.rel target = $region36
            $region35: #{text_encoder_forward.4} parent=27 // pred_region
              %s190 = ssub.s32 256, 1
              loop: start=0, step=1, limit=1
              $region37: #{text_encoder_forward.4} parent=35 // loop_pre_header
                _
              $region38: #{text_encoder_forward.4} parent=35 // loop_header
                %s192 = sphi 0, %s196
                %p193 = scmp.ge.s32.totalorder %s192, 1
                %s197 = sphi %s182, %s182
                %s198 = sphi %s176, %s176
              $region39: #{text_encoder_forward.4} parent=35 // loop_header_branch
                %195 = sbr.rel (%p193) target = $region43
              $region40: #{text_encoder_forward.4} parent=35 // loop_body
                %v199 = vld [vmem:[%s197] sm:%s190]
                %200 = vst [vmem:[%s198] sm:%s190] %v199
                %v201 = vld [vmem:[%s197 + $0x18] sm:%s190]
                %202 = vst [vmem:[%s198 + $0x8] sm:%s190] %v201
                %v203 = vld [vmem:[%s197 + $0x30] sm:%s190]
                %204 = vst [vmem:[%s198 + $0x10] sm:%s190] %v203
                %v205 = vld [vmem:[%s197 + $0x48] sm:%s190]
                %206 = vst [vmem:[%s198 + $0x18] sm:%s190] %v205
                %v207 = vld [vmem:[%s197 + $0x60] sm:%s190]
                %208 = vst [vmem:[%s198 + $0x20] sm:%s190] %v207
                %v209 = vld [vmem:[%s197 + $0x78] sm:%s190]
                %210 = vst [vmem:[%s198 + $0x28] sm:%s190] %v209
                %v211 = vld [vmem:[%s197 + $0x90] sm:%s190]
                %212 = vst [vmem:[%s198 + $0x30] sm:%s190] %v211
                %v213 = vld [vmem:[%s197 + $0xa8] sm:%s190]
                %214 = vst [vmem:[%s198 + $0x38] sm:%s190] %v213
                %v215 = vld [vmem:[%s197 + $0xc0] sm:%s190]
                %216 = vst [vmem:[%s198 + $0x40] sm:%s190] %v215
                %v217 = vld [vmem:[%s197 + $0xd8] sm:%s190]
                %218 = vst [vmem:[%s198 + $0x48] sm:%s190] %v217
                %v219 = vld [vmem:[%s197 + $0xf0] sm:%s190]
                %220 = vst [vmem:[%s198 + $0x50] sm:%s190] %v219
                %v221 = vld [vmem:[%s197 + $0x108] sm:%s190]
                %222 = vst [vmem:[%s198 + $0x58] sm:%s190] %v221
                %v223 = vld [vmem:[%s197 + $0x120] sm:%s190]
                %224 = vst [vmem:[%s198 + $0x60] sm:%s190] %v223
                %v225 = vld [vmem:[%s197 + $0x138] sm:%s190]
                %226 = vst [vmem:[%s198 + $0x68] sm:%s190] %v225
                %v227 = vld [vmem:[%s197 + $0x150] sm:%s190]
                %228 = vst [vmem:[%s198 + $0x70] sm:%s190] %v227
                %v229 = vld [vmem:[%s197 + $0x168] sm:%s190]
                %230 = vst [vmem:[%s198 + $0x78] sm:%s190] %v229
                %v231 = vld [vmem:[%s197 + $0x180] sm:%s190]
                %232 = vst [vmem:[%s198 + $0x80] sm:%s190] %v231
                %v233 = vld [vmem:[%s197 + $0x198] sm:%s190]
                %234 = vst [vmem:[%s198 + $0x88] sm:%s190] %v233
                %v235 = vld [vmem:[%s197 + $0x1b0] sm:%s190]
                %236 = vst [vmem:[%s198 + $0x90] sm:%s190] %v235
                %v237 = vld [vmem:[%s197 + $0x1c8] sm:%s190]
                %238 = vst [vmem:[%s198 + $0x98] sm:%s190] %v237
                %v239 = vld [vmem:[%s197 + $0x1e0] sm:%s190]
                %240 = vst [vmem:[%s198 + $0xa0] sm:%s190] %v239
                %v241 = vld [vmem:[%s197 + $0x1f8] sm:%s190]
                %242 = vst [vmem:[%s198 + $0xa8] sm:%s190] %v241
                %v243 = vld [vmem:[%s197 + $0x210] sm:%s190]
                %244 = vst [vmem:[%s198 + $0xb0] sm:%s190] %v243
                %v245 = vld [vmem:[%s197 + $0x228] sm:%s190]
                %246 = vst [vmem:[%s198 + $0xb8] sm:%s190] %v245
                %v247 = vld [vmem:[%s197 + $0x240] sm:%s190]
                %248 = vst [vmem:[%s198 + $0xc0] sm:%s190] %v247
                %v249 = vld [vmem:[%s197 + $0x258] sm:%s190]
                %250 = vst [vmem:[%s198 + $0xc8] sm:%s190] %v249
                %v251 = vld [vmem:[%s197 + $0x270] sm:%s190]
                %252 = vst [vmem:[%s198 + $0xd0] sm:%s190] %v251
                %v253 = vld [vmem:[%s197 + $0x288] sm:%s190]
                %254 = vst [vmem:[%s198 + $0xd8] sm:%s190] %v253
                %v255 = vld [vmem:[%s197 + $0x2a0] sm:%s190]
                %256 = vst [vmem:[%s198 + $0xe0] sm:%s190] %v255
                %v257 = vld [vmem:[%s197 + $0x2b8] sm:%s190]
                %258 = vst [vmem:[%s198 + $0xe8] sm:%s190] %v257
                %v259 = vld [vmem:[%s197 + $0x2d0] sm:%s190]
                %260 = vst [vmem:[%s198 + $0xf0] sm:%s190] %v259
                %v261 = vld [vmem:[%s197 + $0x2e8] sm:%s190]
                %262 = vst [vmem:[%s198 + $0xf8] sm:%s190] %v261
              $region41: #{text_encoder_forward.4} parent=35 // loop_footer
                %s196 = sadd.s32 1, %s192
              $region42: #{text_encoder_forward.4} parent=35 // loop_footer_branch
                %191 = sbr.rel target = $region38
              $region43: #{text_encoder_forward.4} parent=35 // loop_exit
                _
            $region36: #{text_encoder_forward.4} parent=27 // pred_fallthru
              _
          $region28: #{text_encoder_forward.4} parent=23 // pred_fallthru
            _
          %339 = vnop
        $region24: #{text_encoder_forward.4} parent=15 // pred_fallthru
          _
        // Predicated region
        $region59: #{text_encoder_forward.4} parent=15 // pred_check
          %p340 = pneg %p104
        $region60: #{text_encoder_forward.4} parent=15 // pred_check_branch
          %342 = sbr.rel (%p340) target = $region62
        $region61: #{text_encoder_forward.4} parent=15 // pred_region
          %s343 = smul.u32 2, %s17
          %p344 = scmp.lt.s32.totalorder %s343, 5
          %s345 = scalar_select %p344, %s343, 5
          %s346 = scalar_lea.vmem %s2, %s345
          %s347 = smul.u32 2, %s17
        $region62: #{text_encoder_forward.4} parent=15 // pred_fallthru
          _
      $region16: #{text_encoder_forward.4} parent=5 // pred_fallthru
        _
      %p348 = scmp.le.s32.totalorder 1, %s9
      %p349 = scmp.lt.s32.totalorder %s9, 10
      %p350 = pnand %p348, %p349
      %p351 = pneg %p350
      // Predicated region
      $region63: #{text_encoder_forward.4} parent=5 // pred_check
        _
      $region64: #{text_encoder_forward.4} parent=5 // pred_check_branch
        %353 = sbr.rel (%p350) target = $region66
      $region65: #{text_encoder_forward.4} parent=5 // pred_region
        %s354 = ssub.s32 %s9, 1
        %s355 = sand.u32 %s71, 1
        %s356 = sand.u32 %s71, 1
        %s357 = smul.addr %s356, 256
        %s358 = scalar_lea.vmem [#allocation3], %s357
        // Predicated region
        $region67: #{text_encoder_forward.4} parent=65 // pred_check
          %p359 = pneg %p84
        $region68: #{text_encoder_forward.4} parent=65 // pred_check_branch
          %361 = sbr.rel (%p359) target = $region70
        $region69: #{text_encoder_forward.4} parent=65 // pred_region
          _
        $region70: #{text_encoder_forward.4} parent=65 // pred_fallthru
          _
        %s362 = smul.u32 2, %s21
        %p363 = scmp.lt.s32.totalorder %s19, 0
        %s364 = scalar_select %p363, %s19, 0
        %p365 = scmp.lt.s32.totalorder %s362, 5
        %s366 = scalar_select %p365, %s362, 5
        %s367 = smul.addr %s364, 6
        %s368 = sadd.s32 %s366, %s367
        %s369 = smul.addr %s368, 4
        %s370 = scalar_lea.vmem %s0, %s369
        %p371 = pneg %p56
        %p372 = pneg %p53
        %s373 = sand.u32 %s71, 1
        %s374 = sand.u32 %s71, 1
        %s375 = smul.addr %s374, 256
        %s376 = scalar_lea.vmem [#allocation3], %s375
        %p377 = pneg %p84
        %p378 = pneg %p81
        %s379 = smul.u32 2, %s20
        %p380 = scmp.lt.s32.totalorder %s379, 5
        %s381 = scalar_select %p380, %s379, 5
        %s382 = scalar_lea.vmem %s2, %s381
        %p383 = pneg %p110
        %p384 = pneg %p107
        %p385 = pneg %p138
        %p386 = pneg %p135
        %s387 = smul.u32 2, %s20
        %p388 = scmp.lt.s32.totalorder %s19, 0
        %s389 = scalar_select %p388, %s19, 0
        %p390 = scmp.lt.s32.totalorder %s387, 5
        %s391 = scalar_select %p390, %s387, 5
        %s392 = smul.addr %s389, 6
        %s393 = sadd.s32 %s391, %s392
        %s394 = smul.addr %s393, 4
        %s395 = scalar_lea.vmem %s3, %s394
        %s396 = smul.u32 2, %s21
        %p397 = scmp.lt.s32.totalorder %s19, 0
        %s398 = scalar_select %p397, %s19, 0
        %p399 = scmp.lt.s32.totalorder %s396, 5
        %s400 = scalar_select %p399, %s396, 5
        %s401 = smul.addr %s398, 6
        %s402 = sadd.s32 %s400, %s401
        %s403 = smul.addr %s402, 4
        %s404 = scalar_lea.vmem %s0, %s403
        %s405 = smul.u32 2, %s21
        %s406 = smul.u32 32, %s21
        %s407 = smul.u32 2, %s20
        %s408 = smul.u32 2, %s20
        %p409 = scmp.lt.s32.totalorder %s408, 5
        %s410 = scalar_select %p409, %s408, 5
        %s411 = scalar_lea.vmem %s2, %s410
        %s412 = smul.u32 2, %s20
        %s413 = smul.u32 2, %s20
        %p414 = scmp.lt.s32.totalorder %s19, 0
        %s415 = scalar_select %p414, %s19, 0
        %p416 = scmp.lt.s32.totalorder %s413, 5
        %s417 = scalar_select %p416, %s413, 5
        %s418 = smul.addr %s415, 6
        %s419 = sadd.s32 %s417, %s418
        %s420 = smul.addr %s419, 4
        %s421 = scalar_lea.vmem %s3, %s420
        %s422 = smul.u32 2, %s20
        %p423 = scmp.eq.s32.totalorder %s21, 0
        // Predicated region
        $region71: #{text_encoder_forward.4} parent=65 // pred_check
          %p424 = pneg %p423
        $region72: #{text_encoder_forward.4} parent=65 // pred_check_branch
          %426 = sbr.rel (%p424) target = $region74
        $region73: #{text_encoder_forward.4} parent=65 // pred_region
          %427 = vst [vmem:[#allocation2] sm:$0xff] 0.0
          %428 = vst [vmem:[#allocation2 + $0x8] sm:$0xff] 0.0
        $region74: #{text_encoder_forward.4} parent=65 // pred_fallthru
          _
        %v429 = vld [vmem:[#allocation2] sm:$0xff]
        %v430 = vld [vmem:[#allocation2 + $0x8] sm:$0xff]
        %v431 = vld [vmem:[%s404] sm:$0xff]
        %v432 = vld [vmem:[%s358] sm:$0xff]
        %v433 = vld [vmem:[%s358 + $0x8] sm:$0xff]
        %v434 = vld [vmem:[%s358 + $0x10] sm:$0xff]
        %v435 = vld [vmem:[%s358 + $0x18] sm:$0xff]
        %v436 = vld [vmem:[%s358 + $0x20] sm:$0xff]
        %v437 = vld [vmem:[%s358 + $0x28] sm:$0xff]
        %v438 = vld [vmem:[%s358 + $0x30] sm:$0xff]
        %v439 = vld [vmem:[%s358 + $0x38] sm:$0xff]
        %v440 = vld [vmem:[%s358 + $0x40] sm:$0xff]
        %v441 = vld [vmem:[%s358 + $0x48] sm:$0xff]
        %v442 = vld [vmem:[%s358 + $0x50] sm:$0xff]
        %v443 = vld [vmem:[%s358 + $0x58] sm:$0xff]
        %v444 = vld [vmem:[%s358 + $0x60] sm:$0xff]
        %v445 = vld [vmem:[%s358 + $0x68] sm:$0xff]
        %v446 = vld [vmem:[%s358 + $0x70] sm:$0xff]
        %v447 = vld [vmem:[%s358 + $0x78] sm:$0xff]
        %v448 = vld [vmem:[%s358 + $0x80] sm:$0xff]
        %v449 = vld [vmem:[%s358 + $0x88] sm:$0xff]
        %v450 = vld [vmem:[%s358 + $0x90] sm:$0xff]
        %v451 = vld [vmem:[%s358 + $0x98] sm:$0xff]
        %v452 = vld [vmem:[%s358 + $0xa0] sm:$0xff]
        %v453 = vld [vmem:[%s358 + $0xa8] sm:$0xff]
        %v454 = vld [vmem:[%s358 + $0xb0] sm:$0xff]
        %v455 = vld [vmem:[%s358 + $0xb8] sm:$0xff]
        %v456 = vld [vmem:[%s358 + $0xc0] sm:$0xff]
        %v457 = vld [vmem:[%s358 + $0xc8] sm:$0xff]
        %v458 = vld [vmem:[%s358 + $0xd0] sm:$0xff]
        %v459 = vld [vmem:[%s358 + $0xd8] sm:$0xff]
        %v460 = vld [vmem:[%s358 + $0xe0] sm:$0xff]
        %v461 = vld [vmem:[%s358 + $0xe8] sm:$0xff]
        %v462 = vld [vmem:[%s358 + $0xf0] sm:$0xff]
        %v463 = vld [vmem:[%s358 + $0xf8] sm:$0xff]
        %v465 = vunpack.c.l.b16 %v431
        %v466 = vunpack.c.h.b16 %v431
        %v467 = vpack.c.b16 %v465, %v465
        %v468 = vpack.c.b16 %v466, %v466
        %v503 = vunpack.c.l.b16 %v432
        %v504 = vunpack.c.h.b16 %v432
        %v505 = vunpack.c.l.b16 %v433
        %v506 = vunpack.c.h.b16 %v433
        %v507 = vunpack.c.l.b16 %v434
        %v508 = vunpack.c.h.b16 %v434
        %v509 = vunpack.c.l.b16 %v435
        %v510 = vunpack.c.h.b16 %v435
        %v511 = vunpack.c.l.b16 %v436
        %v512 = vunpack.c.h.b16 %v436
        %v513 = vunpack.c.l.b16 %v437
        %v514 = vunpack.c.h.b16 %v437
        %v515 = vunpack.c.l.b16 %v438
        %v516 = vunpack.c.h.b16 %v438
        %v517 = vunpack.c.l.b16 %v439
        %v518 = vunpack.c.h.b16 %v439
        %v519 = vunpack.c.l.b16 %v440
        %v520 = vunpack.c.h.b16 %v440
        %v521 = vunpack.c.l.b16 %v441
        %v522 = vunpack.c.h.b16 %v441
        %v523 = vunpack.c.l.b16 %v442
        %v524 = vunpack.c.h.b16 %v442
        %v525 = vunpack.c.l.b16 %v443
        %v526 = vunpack.c.h.b16 %v443
        %v527 = vunpack.c.l.b16 %v444
        %v528 = vunpack.c.h.b16 %v444
        %v529 = vunpack.c.l.b16 %v445
        %v530 = vunpack.c.h.b16 %v445
        %v531 = vunpack.c.l.b16 %v446
        %v532 = vunpack.c.h.b16 %v446
        %v533 = vunpack.c.l.b16 %v447
        %v534 = vunpack.c.h.b16 %v447
        %v535 = vunpack.c.l.b16 %v448
        %v536 = vunpack.c.h.b16 %v448
        %v537 = vunpack.c.l.b16 %v449
        %v538 = vunpack.c.h.b16 %v449
        %v539 = vunpack.c.l.b16 %v450
        %v540 = vunpack.c.h.b16 %v450
        %v541 = vunpack.c.l.b16 %v451
        %v542 = vunpack.c.h.b16 %v451
        %v543 = vunpack.c.l.b16 %v452
        %v544 = vunpack.c.h.b16 %v452
        %v545 = vunpack.c.l.b16 %v453
        %v546 = vunpack.c.h.b16 %v453
        %v547 = vunpack.c.l.b16 %v454
        %v548 = vunpack.c.h.b16 %v454
        %v549 = vunpack.c.l.b16 %v455
        %v550 = vunpack.c.h.b16 %v455
        %v551 = vunpack.c.l.b16 %v456
        %v552 = vunpack.c.h.b16 %v456
        %v553 = vunpack.c.l.b16 %v457
        %v554 = vunpack.c.h.b16 %v457
        %v555 = vunpack.c.l.b16 %v458
        %v556 = vunpack.c.h.b16 %v458
        %v557 = vunpack.c.l.b16 %v459
        %v558 = vunpack.c.h.b16 %v459
        %v559 = vunpack.c.l.b16 %v460
        %v560 = vunpack.c.h.b16 %v460
        %v561 = vunpack.c.l.b16 %v461
        %v562 = vunpack.c.h.b16 %v461
        %v563 = vunpack.c.l.b16 %v462
        %v564 = vunpack.c.h.b16 %v462
        %v565 = vunpack.c.l.b16 %v463
        %v566 = vunpack.c.h.b16 %v463
        %v567 = vpack.c.b16 %v505, %v503
        %v568 = vpack.c.b16 %v506, %v504
        %v569 = vpack.c.b16 %v509, %v507
        %v570 = vpack.c.b16 %v510, %v508
        %v571 = vpack.c.b16 %v513, %v511
        %v572 = vpack.c.b16 %v514, %v512
        %v573 = vpack.c.b16 %v517, %v515
        %v574 = vpack.c.b16 %v518, %v516
        %v575 = vpack.c.b16 %v521, %v519
        %v576 = vpack.c.b16 %v522, %v520
        %v577 = vpack.c.b16 %v525, %v523
        %v578 = vpack.c.b16 %v526, %v524
        %v579 = vpack.c.b16 %v529, %v527
        %v580 = vpack.c.b16 %v530, %v528
        %v581 = vpack.c.b16 %v533, %v531
        %v582 = vpack.c.b16 %v534, %v532
        %v583 = vpack.c.b16 %v537, %v535
        %v584 = vpack.c.b16 %v538, %v536
        %v585 = vpack.c.b16 %v541, %v539
        %v586 = vpack.c.b16 %v542, %v540
        %v587 = vpack.c.b16 %v545, %v543
        %v588 = vpack.c.b16 %v546, %v544
        %v589 = vpack.c.b16 %v549, %v547
        %v590 = vpack.c.b16 %v550, %v548
        %v591 = vpack.c.b16 %v553, %v551
        %v592 = vpack.c.b16 %v554, %v552
        %v593 = vpack.c.b16 %v557, %v555
        %v594 = vpack.c.b16 %v558, %v556
        %v595 = vpack.c.b16 %v561, %v559
        %v596 = vpack.c.b16 %v562, %v560
        %v597 = vpack.c.b16 %v565, %v563
        %v598 = vpack.c.b16 %v566, %v564
        %631 = vmatprep.subr.bf16.mxu0 %v582
        %632 = vmatpush1.bf16.msra.mxu0 %v581
        %633 = vmatprep.subr.bf16.mxu0 %v580
        %634 = vmatpush1.bf16.msra.mxu0 %v579
        %635 = vmatprep.subr.bf16.mxu0 %v578
        %636 = vmatpush1.bf16.msra.mxu0 %v577
        %637 = vmatprep.subr.bf16.mxu0 %v576
        %638 = vmatpush1.bf16.msra.mxu0 %v575
        %639 = vmatprep.subr.bf16.mxu0 %v574
        %640 = vmatpush1.bf16.msra.mxu0 %v573
        %641 = vmatprep.subr.bf16.mxu0 %v572
        %642 = vmatpush1.bf16.msra.mxu0 %v571
        %643 = vmatprep.subr.bf16.mxu0 %v570
        %644 = vmatpush1.bf16.msra.mxu0 %v569
        %645 = vmatprep.subr.bf16.mxu0 %v568
        %646 = vmatpush1.bf16.msra.mxu0 %v567
        %647 = vmatprep.subr.bf16.mxu0 %v598
        %648 = vmatpush2.bf16.msra.mxu0 %v597
        %649 = vmatprep.subr.bf16.mxu0 %v596
        %650 = vmatpush2.bf16.msra.mxu0 %v595
        %651 = vmatprep.subr.bf16.mxu0 %v594
        %652 = vmatpush2.bf16.msra.mxu0 %v593
        %653 = vmatprep.subr.bf16.mxu0 %v592
        %654 = vmatpush2.bf16.msra.mxu0 %v591
        %655 = vmatprep.subr.bf16.mxu0 %v590
        %656 = vmatpush2.bf16.msra.mxu0 %v589
        %657 = vmatprep.subr.bf16.mxu0 %v588
        %658 = vmatpush2.bf16.msra.mxu0 %v587
        %659 = vmatprep.subr.bf16.mxu0 %v586
        %660 = vmatpush2.bf16.msra.mxu0 %v585
        %661 = vmatprep.subr.bf16.mxu0 %v584
        %662 = vmatpush2.bf16.msra.mxu0 %v583
        %663 = vmatprep.mubr.bf16.mxu0 %v468
        %664 = vmatmul.mubr.bf16.gmra.mxu0 %v467
        %v665 = vpop.f32.mrf.mxu0
        %v666 = vadd.f32 0.0, %v665
        %v667 = vpop.f32.mrf.mxu0
        %v668 = vadd.f32 0.0, %v667
        %v669 = vpop.f32.mrf.mxu0
        %v670 = vpop.f32.mrf.mxu0
        %671 = vdwg.mxu0
        %v672 = vadd.f32 %v429, %v666
        %v673 = vadd.f32 %v430, %v668
        %674 = vst [vmem:[#allocation2] sm:$0xff] %v672
        %675 = vst [vmem:[#allocation2 + $0x8] sm:$0xff] %v673
        %p676 = scmp.eq.s32.totalorder %s21, 2
        // Predicated region
        $region75: #{text_encoder_forward.4} parent=65 // pred_check
          %p677 = pneg %p676
        $region76: #{text_encoder_forward.4} parent=65 // pred_check_branch
          %679 = sbr.rel (%p677) target = $region78
        $region77: #{text_encoder_forward.4} parent=65 // pred_region
          %v680 = vld [vmem:[#allocation2] sm:$0xff]
          %v681 = vld [vmem:[#allocation2 + $0x8] sm:$0xff]
          %v682 = vld [vmem:[%s411] sm:$0x3]
          %v684 = vlaneseq
          %v685 = vshrl.u32 %v684, 7
          %v686 = vsub.s32 0, %v685
          %v687 = vrot.slane %v682, %v686
          %v688 = vlaneseq
          %v689 = vshrl.u32 %v688, 7
          %v690 = vsub.s32 1, %v689
          %v691 = vrot.slane %v682, %v690
          %v694 = vadd.f32 %v680, %v687
          %v695 = vadd.f32 %v681, %v691
          %v696 = vtanh.pop %v694
          %v697 = vtanh.pop %v695
          %v698 = vpack.c.bf16 %v696, %v696
          %v699 = vpack.c.bf16 %v697, %v697
          %v702 = vunpack.c.l.b16 %v698
          %v703 = vunpack.c.l.b16 %v699
          %v704 = vpack.c.b16 %v703, %v702
          %706 = vst [vmem:[%s421] sm:$0xff] %v704
        $region78: #{text_encoder_forward.4} parent=65 // pred_fallthru
          _
        %s707 = smul.u32 2, %s20
        %p708 = scmp.lt.s32.totalorder %s19, 0
        %s709 = scalar_select %p708, %s19, 0
        %p710 = scmp.lt.s32.totalorder %s707, 5
        %s711 = scalar_select %p710, %s707, 5
        %s712 = smul.addr %s709, 6
        %s713 = sadd.s32 %s711, %s712
        %s714 = smul.addr %s713, 4
        %s715 = scalar_lea.vmem %s3, %s714
        // Predicated region
        $region79: #{text_encoder_forward.4} parent=65 // pred_check
          %p716 = pneg %p135
        $region80: #{text_encoder_forward.4} parent=65 // pred_check_branch
          %718 = sbr.rel (%p716) target = $region82
        $region81: #{text_encoder_forward.4} parent=65 // pred_region
          %s719 = smul.u32 2, %s20
        $region82: #{text_encoder_forward.4} parent=65 // pred_fallthru
          _
      $region66: #{text_encoder_forward.4} parent=5 // pred_fallthru
        _
      %p720 = scmp.le.s32.totalorder 2, %s9
      // Predicated region
      $region83: #{text_encoder_forward.4} parent=5 // pred_check
        %p721 = pneg %p720
      $region84: #{text_encoder_forward.4} parent=5 // pred_check_branch
        %723 = sbr.rel (%p721) target = $region86
      $region85: #{text_encoder_forward.4} parent=5 // pred_region
        %s724 = ssub.s32 %s9, 2
        // Predicated region
        $region87: #{text_encoder_forward.4} parent=85 // pred_check
          %p725 = pneg %p141
        $region88: #{text_encoder_forward.4} parent=85 // pred_check_branch
          %727 = sbr.rel (%p725) target = $region90
        $region89: #{text_encoder_forward.4} parent=85 // pred_region
          %s728 = smul.u32 2, %s23
          %p729 = scmp.lt.s32.totalorder %s22, 0
          %s730 = scalar_select %p729, %s22, 0
          %p731 = scmp.lt.s32.totalorder %s728, 5
          %s732 = scalar_select %p731, %s728, 5
          %s733 = smul.addr %s730, 6
          %s734 = sadd.s32 %s732, %s733
          %s735 = smul.addr %s734, 4
          %s736 = scalar_lea.vmem %s3, %s735
        $region90: #{text_encoder_forward.4} parent=85 // pred_fallthru
          _
      $region86: #{text_encoder_forward.4} parent=5 // pred_fallthru
        _
    $region6: #{text_encoder_forward.4} parent=1 // loop_footer
      %s13 = sadd.s32 1, %s9
    $region7: #{text_encoder_forward.4} parent=1 // loop_footer_branch
      %8 = sbr.rel target = $region3
    $region8: #{text_encoder_forward.4} parent=1 // loop_exit
      _

// kernel: closed_call.20
$region0: #{closed_call.20}
  #allocation0 [shape = 'u32[]', space=smem, size = 0x4, offset = 0x4, fixed_abs, tag = 'smem constant byte address 0x4 - core index']
  #allocation1 [shape = 'u32[144,128]{1,0:T(1,128)}', space=vmem, size = 0x12000, scoped, tag = 'internal scratch']
  #allocation2 [shape = 'f32[32,768]{1,0:T(8,128)}', space=vmem, size = 0x18000, scoped, tag = 'scratch operand']
  %s0 = inlined_call_operand.vmem [shape: bf16[32,3072], index: 0, kind: input, shape index: {}]
  %s1 = inlined_call_operand.vmem [shape: bf16[3072,768], index: 1, kind: input, shape index: {}]
  %s2 = inlined_call_operand.vmem [shape: f32[1,768], index: 2, kind: input, shape index: {}]
  %s3 = inlined_call_operand.vmem [shape: bf16[32,768], index: 3, kind: input, shape index: {}]
  %s4 = inlined_call_operand.vmem [shape: f32[1,768], index: 4, kind: input, shape index: {}]
  %s5 = inlined_call_operand.vmem [shape: f32[1,768], index: 5, kind: input, shape index: {}]
  %s6 = inlined_call_operand.vmem [shape: bf16[32,768], index: 6, kind: output, shape index: {}]
  %s7 = sld [smem:[#allocation0]]
  $region103: #{closed_call.20} parent=0
    _
  %s9 = ssub.s32 1, %s7
  %s10 = scalar_select 0, %s9, %s7
  $region1: #{closed_call.20} parent=0
    #allocation3 [shape = 'u8[32768]{0}', space=vmem, size = 0x8000, scoped, tag = 'input window, operand 0']
    loop: start=0, step=1, limit=14
    $region2: #{closed_call.20} parent=1 // loop_pre_header
      _
    $region3: #{closed_call.20} parent=1 // loop_header
      %s12 = sphi 0, %s16
      %p13 = scmp.ge.s32.totalorder %s12, 14
      %s19 = sphi 0, %s31
      %s20 = sphi 0, %s27
      %s21 = sphi 0, %s19
      %s22 = sphi 0, %s20
      %s23 = sphi 0, %s21
      %s24 = sphi 0, %s22
      %s36 = sphi 0, %s38
      %s39 = sphi 0, %s36
      %s40 = sphi 0, %s39
      %s56 = sphi 0, %s40
      %s62 = sphi 0, %s64
      %s65 = sphi 0, %s62
      %s66 = sphi 0, %s65
      %s82 = sphi 0, %s66
      %s86 = sphi 0, %s86
      %s88 = sphi 0, %s86
      %s89 = sphi 0, %s88
      %s103 = sphi 0, %s89
      %s109 = sphi 0, %s111
      %s112 = sphi 0, %s109
      %s113 = sphi 0, %s112
      %s129 = sphi 0, %s113
      %s133 = sphi 0, %s133
      %s135 = sphi 0, %s133
      %s136 = sphi 0, %s135
      %s150 = sphi 0, %s136
      %s154 = sphi 0, %s154
      %s156 = sphi 0, %s154
      %s157 = sphi 0, %s156
      %s171 = sphi 0, %s157
      %s177 = sphi 0, %s179
      %s180 = sphi 0, %s177
      %s181 = sphi 0, %s180
      %s197 = sphi 0, %s181
    $region4: #{closed_call.20} parent=1 // loop_header_branch
      %15 = sbr.rel (%p13) target = $region8
    $region5: #{closed_call.20} parent=1 // loop_body
      %s17 = ssub.s32 %s12, 1
      %s18 = ssub.s32 %s12, 2
      %s25 = sadd.s32 1, %s20
      %p26 = scmp.ge.s32.totalorder %s25, 12
      %s27 = scalar_select %p26, 0, %s25
      %s28 = sadd.s32 1, %s19
      %s29 = scalar_select %p26, %s28, %s19
      %p30 = scmp.ge.s32.totalorder %s29, 1
      %s31 = scalar_select %p30, 0, %s29
      %s32 = ssub.s32 %s19, %s31
      %s33 = ssub.s32 %s20, %s27
      %s34 = sor.u32 %s32, %s33
      %p35 = scmp.eq.s32.totalorder %s34, 0
      %s37 = sadd.s32 %s36, 1
      %s38 = scalar_select %p35, %s36, %s37
      %p41 = pneg %p35
      %p42 = scmp.eq.s32.totalorder %s12, 11
      %p43 = por %p41, %p42
      %p44 = scmp.ne.s32.totalorder %s36, %s39
      %p45 = scmp.eq.s32.totalorder %s12, 0
      %p46 = por %p44, %p45
      %p47 = scmp.ne.s32.totalorder %s36, %s39
      %p48 = scmp.eq.s32.totalorder %s17, 11
      %p49 = por %p47, %p48
      %p50 = scmp.ne.s32.totalorder %s39, %s40
      %p51 = scmp.eq.s32.totalorder %s17, 0
      %p52 = por %p50, %p51
      %p53 = scmp.ne.s32.totalorder %s39, %s40
      %p54 = scmp.eq.s32.totalorder %s18, 11
      %p55 = por %p53, %p54
      %p57 = scmp.ne.s32.totalorder %s40, %s56
      %p58 = scmp.eq.s32.totalorder %s18, 0
      %p59 = por %p57, %p58
      %s60 = ssub.s32 %s20, %s27
      %p61 = scmp.eq.s32.totalorder %s60, 0
      %s63 = sadd.s32 %s62, 1
      %s64 = scalar_select %p61, %s62, %s63
      %p67 = pneg %p61
      %p68 = scmp.eq.s32.totalorder %s12, 11
      %p69 = por %p67, %p68
      %p70 = scmp.ne.s32.totalorder %s62, %s65
      %p71 = scmp.eq.s32.totalorder %s12, 0
      %p72 = por %p70, %p71
      %p73 = scmp.ne.s32.totalorder %s62, %s65
      %p74 = scmp.eq.s32.totalorder %s17, 11
      %p75 = por %p73, %p74
      %p76 = scmp.ne.s32.totalorder %s65, %s66
      %p77 = scmp.eq.s32.totalorder %s17, 0
      %p78 = por %p76, %p77
      %p79 = scmp.ne.s32.totalorder %s65, %s66
      %p80 = scmp.eq.s32.totalorder %s18, 11
      %p81 = por %p79, %p80
      %p83 = scmp.ne.s32.totalorder %s66, %s82
      %p84 = scmp.eq.s32.totalorder %s18, 0
      %p85 = por %p83, %p84
      %s87 = sadd.s32 %s86, 1
      %p90 = scmp.eq.s32.totalorder %s12, 11
      %p91 = scmp.ne.s32.totalorder %s86, %s88
      %p92 = scmp.eq.s32.totalorder %s12, 0
      %p93 = por %p91, %p92
      %p94 = scmp.ne.s32.totalorder %s86, %s88
      %p95 = scmp.eq.s32.totalorder %s17, 11
      %p96 = por %p94, %p95
      %p97 = scmp.ne.s32.totalorder %s88, %s89
      %p98 = scmp.eq.s32.totalorder %s17, 0
      %p99 = por %p97, %p98
      %p100 = scmp.ne.s32.totalorder %s88, %s89
      %p101 = scmp.eq.s32.totalorder %s18, 11
      %p102 = por %p100, %p101
      %p104 = scmp.ne.s32.totalorder %s89, %s103
      %p105 = scmp.eq.s32.totalorder %s18, 0
      %p106 = por %p104, %p105
      %s107 = ssub.s32 %s19, %s31
      %p108 = scmp.eq.s32.totalorder %s107, 0
      %s110 = sadd.s32 %s109, 1
      %s111 = scalar_select %p108, %s109, %s110
      %p114 = pneg %p108
      %p115 = scmp.eq.s32.totalorder %s12, 11
      %p116 = por %p114, %p115
      %p117 = scmp.ne.s32.totalorder %s109, %s112
      %p118 = scmp.eq.s32.totalorder %s12, 0
      %p119 = por %p117, %p118
      %p120 = scmp.ne.s32.totalorder %s109, %s112
      %p121 = scmp.eq.s32.totalorder %s17, 11
      %p122 = por %p120, %p121
      %p123 = scmp.ne.s32.totalorder %s112, %s113
      %p124 = scmp.eq.s32.totalorder %s17, 0
      %p125 = por %p123, %p124
      %p126 = scmp.ne.s32.totalorder %s112, %s113
      %p127 = scmp.eq.s32.totalorder %s18, 11
      %p128 = por %p126, %p127
      %p130 = scmp.ne.s32.totalorder %s113, %s129
      %p131 = scmp.eq.s32.totalorder %s18, 0
      %p132 = por %p130, %p131
      %s134 = sadd.s32 %s133, 1
      %p137 = scmp.eq.s32.totalorder %s12, 11
      %p138 = scmp.ne.s32.totalorder %s133, %s135
      %p139 = scmp.eq.s32.totalorder %s12, 0
      %p140 = por %p138, %p139
      %p141 = scmp.ne.s32.totalorder %s133, %s135
      %p142 = scmp.eq.s32.totalorder %s17, 11
      %p143 = por %p141, %p142
      %p144 = scmp.ne.s32.totalorder %s135, %s136
      %p145 = scmp.eq.s32.totalorder %s17, 0
      %p146 = por %p144, %p145
      %p147 = scmp.ne.s32.totalorder %s135, %s136
      %p148 = scmp.eq.s32.totalorder %s18, 11
      %p149 = por %p147, %p148
      %p151 = scmp.ne.s32.totalorder %s136, %s150
      %p152 = scmp.eq.s32.totalorder %s18, 0
      %p153 = por %p151, %p152
      %s155 = sadd.s32 %s154, 1
      %p158 = scmp.eq.s32.totalorder %s12, 11
      %p159 = scmp.ne.s32.totalorder %s154, %s156
      %p160 = scmp.eq.s32.totalorder %s12, 0
      %p161 = por %p159, %p160
      %p162 = scmp.ne.s32.totalorder %s154, %s156
      %p163 = scmp.eq.s32.totalorder %s17, 11
      %p164 = por %p162, %p163
      %p165 = scmp.ne.s32.totalorder %s156, %s157
      %p166 = scmp.eq.s32.totalorder %s17, 0
      %p167 = por %p165, %p166
      %p168 = scmp.ne.s32.totalorder %s156, %s157
      %p169 = scmp.eq.s32.totalorder %s18, 11
      %p170 = por %p168, %p169
      %p172 = scmp.ne.s32.totalorder %s157, %s171
      %p173 = scmp.eq.s32.totalorder %s18, 0
      %p174 = por %p172, %p173
      %s175 = ssub.s32 %s19, %s31
      %p176 = scmp.eq.s32.totalorder %s175, 0
      %s178 = sadd.s32 %s177, 1
      %s179 = scalar_select %p176, %s177, %s178
      %p182 = pneg %p176
      %p183 = scmp.eq.s32.totalorder %s12, 11
      %p184 = por %p182, %p183
      %p185 = scmp.ne.s32.totalorder %s177, %s180
      %p186 = scmp.eq.s32.totalorder %s12, 0
      %p187 = por %p185, %p186
      %p188 = scmp.ne.s32.totalorder %s177, %s180
      %p189 = scmp.eq.s32.totalorder %s17, 11
      %p190 = por %p188, %p189
      %p191 = scmp.ne.s32.totalorder %s180, %s181
      %p192 = scmp.eq.s32.totalorder %s17, 0
      %p193 = por %p191, %p192
      %p194 = scmp.ne.s32.totalorder %s180, %s181
      %p195 = scmp.eq.s32.totalorder %s18, 11
      %p196 = por %p194, %p195
      %p198 = scmp.ne.s32.totalorder %s181, %s197
      %p199 = scmp.eq.s32.totalorder %s18, 0
      %p200 = por %p198, %p199
      %p201 = scmp.le.s32.totalorder 1, %s12
      %p202 = scmp.lt.s32.totalorder %s12, 13
      %p203 = pnand %p201, %p202
      %p204 = pneg %p203
      // Predicated region
      $region9: #{closed_call.20} parent=5 // pred_check
        _
      $region10: #{closed_call.20} parent=5 // pred_check_branch
        %206 = sbr.rel (%p203) target = $region12
      $region11: #{closed_call.20} parent=5 // pred_region
        %s207 = ssub.s32 %s12, 1
        // Predicated region
        $region13: #{closed_call.20} parent=11 // pred_check
          %p208 = pneg %p99
        $region14: #{closed_call.20} parent=11 // pred_check_branch
          %210 = sbr.rel (%p208) target = $region16
        $region15: #{closed_call.20} parent=11 // pred_region
          _
        $region16: #{closed_call.20} parent=11 // pred_fallthru
          _
        // Predicated region
        $region17: #{closed_call.20} parent=11 // pred_check
          %p211 = pneg %p125
        $region18: #{closed_call.20} parent=11 // pred_check_branch
          %213 = sbr.rel (%p211) target = $region20
        $region19: #{closed_call.20} parent=11 // pred_region
          %s214 = smul.u32 4, %s21
          %p215 = scmp.lt.s32.totalorder %s214, 3
          %s216 = scalar_select %p215, %s214, 3
          %s217 = smul.addr %s216, 6
          %s218 = smul.addr %s217, 4
          %s219 = scalar_lea.vmem %s3, %s218
          %s220 = smul.u32 4, %s21
        $region20: #{closed_call.20} parent=11 // pred_fallthru
          _
        // Predicated region
        $region21: #{closed_call.20} parent=11 // pred_check
          %p221 = pneg %p146
        $region22: #{closed_call.20} parent=11 // pred_check_branch
          %223 = sbr.rel (%p221) target = $region24
        $region23: #{closed_call.20} parent=11 // pred_region
          _
        $region24: #{closed_call.20} parent=11 // pred_fallthru
          _
        // Predicated region
        $region25: #{closed_call.20} parent=11 // pred_check
          %p224 = pneg %p167
        $region26: #{closed_call.20} parent=11 // pred_check_branch
          %226 = sbr.rel (%p224) target = $region28
        $region27: #{closed_call.20} parent=11 // pred_region
          _
        $region28: #{closed_call.20} parent=11 // pred_fallthru
          _
      $region12: #{closed_call.20} parent=5 // pred_fallthru
        _
      %p227 = scmp.lt.s32.totalorder %s12, 12
      // Predicated region
      $region29: #{closed_call.20} parent=5 // pred_check
        %p228 = pneg %p227
      $region30: #{closed_call.20} parent=5 // pred_check_branch
        %230 = sbr.rel (%p228) target = $region32
      $region31: #{closed_call.20} parent=5 // pred_region
        // Predicated region
        $region33: #{closed_call.20} parent=31 // pred_check
          %p231 = pneg %p46
        $region34: #{closed_call.20} parent=31 // pred_check_branch
          %233 = sbr.rel (%p231) target = $region36
        $region35: #{closed_call.20} parent=31 // pred_region
          %s234 = sand.u32 %s36, 1
          %s235 = sand.u32 %s36, 1
          %s236 = smul.addr %s235, 32
          %s237 = scalar_lea.vmem [#allocation3], %s236
          %s238 = smul.u32 4, %s19
          %s239 = smul.u32 2, %s20
          %s240 = smul.addr %s238, 24
          %s241 = sadd.s32 %s239, %s240
          %s242 = smul.addr %s241, 4
          %s243 = scalar_lea.vmem %s0, %s242
          // Predicated region
          $region37: #{closed_call.20} parent=35 // pred_check
            _
          $region38: #{closed_call.20} parent=35 // pred_check_branch
            %245 = sbr.rel (0) target = $region40
          $region39: #{closed_call.20} parent=35 // pred_region
            // Predicated region
            $region41: #{closed_call.20} parent=39 // pred_check
              _
            $region42: #{closed_call.20} parent=39 // pred_check_branch
              %247 = sbr.rel (0) target = $region44
            $region43: #{closed_call.20} parent=39 // pred_region
              // Predicated region
              $region56: #{closed_call.20} parent=43 // pred_check
                _
              $region57: #{closed_call.20} parent=43 // pred_check_branch
                %269 = sbr.rel (0) target = $region59
              $region58: #{closed_call.20} parent=43 // pred_region
                loop: start=0, step=1, limit=1
                $region60: #{closed_call.20} parent=58 // loop_pre_header
                  _
                $region61: #{closed_call.20} parent=58 // loop_header
                  %s271 = sphi 0, %s275
                  %p272 = scmp.ge.s32.totalorder %s271, 1
                  %s276 = sphi %s243, %s243
                  %s277 = sphi %s237, %s237
                $region62: #{closed_call.20} parent=58 // loop_header_branch
                  %274 = sbr.rel (%p272) target = $region66
                $region63: #{closed_call.20} parent=58 // loop_body
                  %v278 = vld [vmem:[%s276] sm:$0xff]
                  %279 = vst [vmem:[%s277] sm:$0xff] %v278
                  %v280 = vld [vmem:[%s276 + $0x60] sm:$0xff]
                  %281 = vst [vmem:[%s277 + $0x8] sm:$0xff] %v280
                  %v282 = vld [vmem:[%s276 + $0xc0] sm:$0xff]
                  %283 = vst [vmem:[%s277 + $0x10] sm:$0xff] %v282
                  %v284 = vld [vmem:[%s276 + $0x120] sm:$0xff]
                  %285 = vst [vmem:[%s277 + $0x18] sm:$0xff] %v284
                $region64: #{closed_call.20} parent=58 // loop_footer
                  %s275 = sadd.s32 1, %s271
                $region65: #{closed_call.20} parent=58 // loop_footer_branch
                  %270 = sbr.rel target = $region61
                $region66: #{closed_call.20} parent=58 // loop_exit
                  _
              $region59: #{closed_call.20} parent=43 // pred_fallthru
                _
              // Predicated region
              $region67: #{closed_call.20} parent=43 // pred_check
                _
              $region68: #{closed_call.20} parent=43 // pred_check_branch
                %287 = sbr.rel target = $region70
              $region69: #{closed_call.20} parent=43 // pred_region
                _
              $region70: #{closed_call.20} parent=43 // pred_fallthru
                _
            $region44: #{closed_call.20} parent=39 // pred_fallthru
              _
            // Predicated region
            $region45: #{closed_call.20} parent=39 // pred_check
              _
            $region46: #{closed_call.20} parent=39 // pred_check_branch
              %249 = sbr.rel target = $region48
            $region47: #{closed_call.20} parent=39 // pred_region
              %s251 = ssub.s32 256, 1
              loop: start=0, step=1, limit=1
              $region49: #{closed_call.20} parent=47 // loop_pre_header
                _
              $region50: #{closed_call.20} parent=47 // loop_header
                %s253 = sphi 0, %s257
                %p254 = scmp.ge.s32.totalorder %s253, 1
                %s258 = sphi %s243, %s243
                %s259 = sphi %s237, %s237
              $region51: #{closed_call.20} parent=47 // loop_header_branch
                %256 = sbr.rel (%p254) target = $region55
              $region52: #{closed_call.20} parent=47 // loop_body
                %v260 = vld [vmem:[%s258] sm:%s251]
                %261 = vst [vmem:[%s259] sm:%s251] %v260
                %v262 = vld [vmem:[%s258 + $0x60] sm:%s251]
                %263 = vst [vmem:[%s259 + $0x8] sm:%s251] %v262
                %v264 = vld [vmem:[%s258 + $0xc0] sm:%s251]
                %265 = vst [vmem:[%s259 + $0x10] sm:%s251] %v264
                %v266 = vld [vmem:[%s258 + $0x120] sm:%s251]
                %267 = vst [vmem:[%s259 + $0x18] sm:%s251] %v266
              $region53: #{closed_call.20} parent=47 // loop_footer
                %s257 = sadd.s32 1, %s253
              $region54: #{closed_call.20} parent=47 // loop_footer_branch
                %252 = sbr.rel target = $region50
              $region55: #{closed_call.20} parent=47 // loop_exit
                _
            $region48: #{closed_call.20} parent=39 // pred_fallthru
              _
          $region40: #{closed_call.20} parent=35 // pred_fallthru
            _
          %288 = vnop
        $region36: #{closed_call.20} parent=31 // pred_fallthru
          _
        // Predicated region
        $region71: #{closed_call.20} parent=31 // pred_check
          %p289 = pneg %p72
        $region72: #{closed_call.20} parent=31 // pred_check_branch
          %291 = sbr.rel (%p289) target = $region74
        $region73: #{closed_call.20} parent=31 // pred_region
          %s292 = smul.u32 32, %s20
          %p293 = scmp.lt.s32.totalorder %s292, 383
          %s294 = scalar_select %p293, %s292, 383
          %s295 = smul.addr %s294, 6
          %s296 = smul.addr %s295, 4
          %s297 = scalar_lea.vmem %s1, %s296
          %s298 = smul.u32 32, %s20
        $region74: #{closed_call.20} parent=31 // pred_fallthru
          _
      $region32: #{closed_call.20} parent=5 // pred_fallthru
        _
      %p299 = scmp.le.s32.totalorder 1, %s12
      %p300 = scmp.lt.s32.totalorder %s12, 13
      %p301 = pnand %p299, %p300
      %p302 = pneg %p301
      // Predicated region
      $region75: #{closed_call.20} parent=5 // pred_check
        _
      $region76: #{closed_call.20} parent=5 // pred_check_branch
        %304 = sbr.rel (%p301) target = $region78
      $region77: #{closed_call.20} parent=5 // pred_region
        %s305 = ssub.s32 %s12, 1
        %s306 = sand.u32 %s39, 1
        %s307 = sand.u32 %s39, 1
        %s308 = smul.addr %s307, 32
        %s309 = scalar_lea.vmem [#allocation3], %s308
        // Predicated region
        $region79: #{closed_call.20} parent=77 // pred_check
          %p310 = pneg %p52
        $region80: #{closed_call.20} parent=77 // pred_check_branch
          %312 = sbr.rel (%p310) target = $region82
        $region81: #{closed_call.20} parent=77 // pred_region
          _
        $region82: #{closed_call.20} parent=77 // pred_fallthru
          _
        %s313 = sand.u32 %s39, 1
        %s314 = sand.u32 %s39, 1
        %s315 = smul.addr %s314, 32
        %s316 = scalar_lea.vmem [#allocation3], %s315
        %p317 = pneg %p52
        %p318 = pneg %p49
        %s319 = smul.u32 32, %s22
        %p320 = scmp.lt.s32.totalorder %s319, 383
        %s321 = scalar_select %p320, %s319, 383
        %s322 = smul.addr %s321, 6
        %s323 = smul.addr %s322, 4
        %s324 = scalar_lea.vmem %s1, %s323
        %p325 = pneg %p78
        %p326 = pneg %p75
        %p327 = pneg %p99
        %p328 = pneg %p96
        %s329 = smul.u32 4, %s21
        %p330 = scmp.lt.s32.totalorder %s329, 3
        %s331 = scalar_select %p330, %s329, 3
        %s332 = smul.addr %s331, 6
        %s333 = smul.addr %s332, 4
        %s334 = scalar_lea.vmem %s3, %s333
        %p335 = pneg %p125
        %p336 = pneg %p122
        %p337 = pneg %p146
        %p338 = pneg %p143
        %p339 = pneg %p167
        %p340 = pneg %p164
        %p341 = pneg %p193
        %p342 = pneg %p190
        %s343 = smul.u32 4, %s21
        %p344 = scmp.lt.s32.totalorder %s343, 3
        %s345 = scalar_select %p344, %s343, 3
        %s346 = smul.addr %s345, 6
        %s347 = smul.addr %s346, 4
        %s348 = scalar_lea.vmem %s6, %s347
        %s349 = smul.u32 4, %s21
        %s350 = smul.u32 2, %s22
        %s351 = smul.u32 32, %s22
        %p352 = scmp.lt.s32.totalorder %s351, 383
        %s353 = scalar_select %p352, %s351, 383
        %s354 = smul.addr %s353, 6
        %s355 = smul.addr %s354, 4
        %s356 = scalar_lea.vmem %s1, %s355
        %s357 = smul.u32 32, %s22
        %s358 = smul.u32 4, %s21
        %p359 = scmp.lt.s32.totalorder %s358, 3
        %s360 = scalar_select %p359, %s358, 3
        %s361 = smul.addr %s360, 6
        %s362 = smul.addr %s361, 4
        %s363 = scalar_lea.vmem %s3, %s362
        %s364 = smul.u32 4, %s21
        %s365 = smul.u32 4, %s21
        %p366 = scmp.lt.s32.totalorder %s365, 3
        %s367 = scalar_select %p366, %s365, 3
        %s368 = smul.addr %s367, 6
        %s369 = smul.addr %s368, 4
        %s370 = scalar_lea.vmem %s6, %s369
        %s371 = smul.u32 4, %s21
        %p372 = scmp.eq.s32.totalorder %s22, 0
        // Predicated region
        $region83: #{closed_call.20} parent=77 // pred_check
          %p373 = pneg %p372
        $region84: #{closed_call.20} parent=77 // pred_check_branch
          %375 = sbr.rel (%p373) target = $region86
        $region85: #{closed_call.20} parent=77 // pred_region
          %376 = vst [vmem:[#allocation2] sm:$0xff] 0.0
          %377 = vst [vmem:[#allocation2 + $0x8] sm:$0xff] 0.0
          %378 = vst [vmem:[#allocation2 + $0x10] sm:$0xff] 0.0
          %379 = vst [vmem:[#allocation2 + $0x18] sm:$0xff] 0.0
          %380 = vst [vmem:[#allocation2 + $0x20] sm:$0xff] 0.0
          %381 = vst [vmem:[#allocation2 + $0x28] sm:$0xff] 0.0
          %382 = vst [vmem:[#allocation2 + $0x30] sm:$0xff] 0.0
          %383 = vst [vmem:[#allocation2 + $0x38] sm:$0xff] 0.0
          %384 = vst [vmem:[#allocation2 + $0x40] sm:$0xff] 0.0
          %385 = vst [vmem:[#allocation2 + $0x48] sm:$0xff] 0.0
          %386 = vst [vmem:[#allocation2 + $0x50] sm:$0xff] 0.0
          %387 = vst [vmem:[#allocation2 + $0x58] sm:$0xff] 0.0
          %388 = vst [vmem:[#allocation2 + $0x60] sm:$0xff] 0.0
          %389 = vst [vmem:[#allocation2 + $0x68] sm:$0xff] 0.0
          %390 = vst [vmem:[#allocation2 + $0x70] sm:$0xff] 0.0
          %391 = vst [vmem:[#allocation2 + $0x78] sm:$0xff] 0.0
          %392 = vst [vmem:[#allocation2 + $0x80] sm:$0xff] 0.0
          %393 = vst [vmem:[#allocation2 + $0x88] sm:$0xff] 0.0
          %394 = vst [vmem:[#allocation2 + $0x90] sm:$0xff] 0.0
          %395 = vst [vmem:[#allocation2 + $0x98] sm:$0xff] 0.0
          %396 = vst [vmem:[#allocation2 + $0xa0] sm:$0xff] 0.0
          %397 = vst [vmem:[#allocation2 + $0xa8] sm:$0xff] 0.0
          %398 = vst [vmem:[#allocation2 + $0xb0] sm:$0xff] 0.0
          %399 = vst [vmem:[#allocation2 + $0xb8] sm:$0xff] 0.0
        $region86: #{closed_call.20} parent=77 // pred_fallthru
          _
        %v400 = vld [vmem:[#allocation2] sm:$0xff]
        %v401 = vld [vmem:[#allocation2 + $0x8] sm:$0xff]
        %v402 = vld [vmem:[#allocation2 + $0x10] sm:$0xff]
        %v403 = vld [vmem:[#allocation2 + $0x18] sm:$0xff]
        %v404 = vld [vmem:[#allocation2 + $0x20] sm:$0xff]
        %v405 = vld [vmem:[#allocation2 + $0x28] sm:$0xff]
        %v406 = vld [vmem:[#allocation2 + $0x30] sm:$0xff]
        %v407 = vld [vmem:[#allocation2 + $0x38] sm:$0xff]
        %v408 = vld [vmem:[#allocation2 + $0x40] sm:$0xff]
        %v409 = vld [vmem:[#allocation2 + $0x48] sm:$0xff]
        %v410 = vld [vmem:[#allocation2 + $0x50] sm:$0xff]
        %v411 = vld [vmem:[#allocation2 + $0x58] sm:$0xff]
        %v412 = vld [vmem:[#allocation2 + $0x60] sm:$0xff]
        %v413 = vld [vmem:[#allocation2 + $0x68] sm:$0xff]
        %v414 = vld [vmem:[#allocation2 + $0x70] sm:$0xff]
        %v415 = vld [vmem:[#allocation2 + $0x78] sm:$0xff]
        %v416 = vld [vmem:[#allocation2 + $0x80] sm:$0xff]
        %v417 = vld [vmem:[#allocation2 + $0x88] sm:$0xff]
        %v418 = vld [vmem:[#allocation2 + $0x90] sm:$0xff]
        %v419 = vld [vmem:[#allocation2 + $0x98] sm:$0xff]
        %v420 = vld [vmem:[#allocation2 + $0xa0] sm:$0xff]
        %v421 = vld [vmem:[#allocation2 + $0xa8] sm:$0xff]
        %v422 = vld [vmem:[#allocation2 + $0xb0] sm:$0xff]
        %v423 = vld [vmem:[#allocation2 + $0xb8] sm:$0xff]
        %v424 = vld [vmem:[%s309] sm:$0xff]
        %v425 = vld [vmem:[%s309 + $0x8] sm:$0xff]
        %v426 = vld [vmem:[%s309 + $0x10] sm:$0xff]
        %v427 = vld [vmem:[%s309 + $0x18] sm:$0xff]
        %v428 = vld [vmem:[%s356] sm:$0xff]
        %v429 = vld [vmem:[%s356 + $0x8] sm:$0xff]
        %v430 = vld [vmem:[%s356 + $0x10] sm:$0xff]
        %v431 = vld [vmem:[%s356 + $0x18] sm:$0xff]
        %v432 = vld [vmem:[%s356 + $0x20] sm:$0xff]
        %v433 = vld [vmem:[%s356 + $0x28] sm:$0xff]
        %v434 = vld [vmem:[%s356 + $0x30] sm:$0xff]
        %v435 = vld [vmem:[%s356 + $0x38] sm:$0xff]
        %v436 = vld [vmem:[%s356 + $0x40] sm:$0xff]
        %v437 = vld [vmem:[%s356 + $0x48] sm:$0xff]
        %v438 = vld [vmem:[%s356 + $0x50] sm:$0xff]
        %v439 = vld [vmem:[%s356 + $0x58] sm:$0xff]
        %v440 = vld [vmem:[%s356 + $0x60] sm:$0xff]
        %v441 = vld [vmem:[%s356 + $0x68] sm:$0xff]
        %v442 = vld [vmem:[%s356 + $0x70] sm:$0xff]
        %v443 = vld [vmem:[%s356 + $0x78] sm:$0xff]
        %v444 = vld [vmem:[%s356 + $0x80] sm:$0xff]
        %v445 = vld [vmem:[%s356 + $0x88] sm:$0xff]
        %v446 = vld [vmem:[%s356 + $0x90] sm:$0xff]
        %v447 = vld [vmem:[%s356 + $0x98] sm:$0xff]
        %v448 = vld [vmem:[%s356 + $0xa0] sm:$0xff]
        %v449 = vld [vmem:[%s356 + $0xa8] sm:$0xff]
        %v450 = vld [vmem:[%s356 + $0xb0] sm:$0xff]
        %v451 = vld [vmem:[%s356 + $0xb8] sm:$0xff]
        %v452 = vld [vmem:[%s356 + $0xc0] sm:$0xff]
        %v453 = vld [vmem:[%s356 + $0xc8] sm:$0xff]
        %v454 = vld [vmem:[%s356 + $0xd0] sm:$0xff]
        %v455 = vld [vmem:[%s356 + $0xd8] sm:$0xff]
        %v456 = vld [vmem:[%s356 + $0xe0] sm:$0xff]
        %v457 = vld [vmem:[%s356 + $0xe8] sm:$0xff]
        %v458 = vld [vmem:[%s356 + $0xf0] sm:$0xff]
        %v459 = vld [vmem:[%s356 + $0xf8] sm:$0xff]
        %v460 = vld [vmem:[%s356 + $0x100] sm:$0xff]
        %v461 = vld [vmem:[%s356 + $0x108] sm:$0xff]
        %v462 = vld [vmem:[%s356 + $0x110] sm:$0xff]
        %v463 = vld [vmem:[%s356 + $0x118] sm:$0xff]
        %v464 = vld [vmem:[%s356 + $0x120] sm:$0xff]
        %v465 = vld [vmem:[%s356 + $0x128] sm:$0xff]
        %v466 = vld [vmem:[%s356 + $0x130] sm:$0xff]
        %v467 = vld [vmem:[%s356 + $0x138] sm:$0xff]
        %v468 = vld [vmem:[%s356 + $0x140] sm:$0xff]
        %v469 = vld [vmem:[%s356 + $0x148] sm:$0xff]
        %v470 = vld [vmem:[%s356 + $0x150] sm:$0xff]
        %v471 = vld [vmem:[%s356 + $0x158] sm:$0xff]
        %v472 = vld [vmem:[%s356 + $0x160] sm:$0xff]
        %v473 = vld [vmem:[%s356 + $0x168] sm:$0xff]
        %v474 = vld [vmem:[%s356 + $0x170] sm:$0xff]
        %v475 = vld [vmem:[%s356 + $0x178] sm:$0xff]
        %v476 = vld [vmem:[%s356 + $0x180] sm:$0xff]
        %v477 = vld [vmem:[%s356 + $0x188] sm:$0xff]
        %v478 = vld [vmem:[%s356 + $0x190] sm:$0xff]
        %v479 = vld [vmem:[%s356 + $0x198] sm:$0xff]
        %v480 = vld [vmem:[%s356 + $0x1a0] sm:$0xff]
        %v481 = vld [vmem:[%s356 + $0x1a8] sm:$0xff]
        %v482 = vld [vmem:[%s356 + $0x1b0] sm:$0xff]
        %v483 = vld [vmem:[%s356 + $0x1b8] sm:$0xff]
        %v484 = vld [vmem:[%s356 + $0x1c0] sm:$0xff]
        %v485 = vld [vmem:[%s356 + $0x1c8] sm:$0xff]
        %v486 = vld [vmem:[%s356 + $0x1d0] sm:$0xff]
        %v487 = vld [vmem:[%s356 + $0x1d8] sm:$0xff]
        %v488 = vld [vmem:[%s356 + $0x1e0] sm:$0xff]
        %v489 = vld [vmem:[%s356 + $0x1e8] sm:$0xff]
        %v490 = vld [vmem:[%s356 + $0x1f0] sm:$0xff]
        %v491 = vld [vmem:[%s356 + $0x1f8] sm:$0xff]
        %v492 = vld [vmem:[%s356 + $0x200] sm:$0xff]
        %v493 = vld [vmem:[%s356 + $0x208] sm:$0xff]
        %v494 = vld [vmem:[%s356 + $0x210] sm:$0xff]
        %v495 = vld [vmem:[%s356 + $0x218] sm:$0xff]
        %v496 = vld [vmem:[%s356 + $0x220] sm:$0xff]
        %v497 = vld [vmem:[%s356 + $0x228] sm:$0xff]
        %v498 = vld [vmem:[%s356 + $0x230] sm:$0xff]
        %v499 = vld [vmem:[%s356 + $0x238] sm:$0xff]
        %v500 = vld [vmem:[%s356 + $0x240] sm:$0xff]
        %v501 = vld [vmem:[%s356 + $0x248] sm:$0xff]
        %v502 = vld [vmem:[%s356 + $0x250] sm:$0xff]
        %v503 = vld [vmem:[%s356 + $0x258] sm:$0xff]
        %v504 = vld [vmem:[%s356 + $0x260] sm:$0xff]
        %v505 = vld [vmem:[%s356 + $0x268] sm:$0xff]
        %v506 = vld [vmem:[%s356 + $0x270] sm:$0xff]
        %v507 = vld [vmem:[%s356 + $0x278] sm:$0xff]
        %v508 = vld [vmem:[%s356 + $0x280] sm:$0xff]
        %v509 = vld [vmem:[%s356 + $0x288] sm:$0xff]
        %v510 = vld [vmem:[%s356 + $0x290] sm:$0xff]
        %v511 = vld [vmem:[%s356 + $0x298] sm:$0xff]
        %v512 = vld [vmem:[%s356 + $0x2a0] sm:$0xff]
        %v513 = vld [vmem:[%s356 + $0x2a8] sm:$0xff]
        %v514 = vld [vmem:[%s356 + $0x2b0] sm:$0xff]
        %v515 = vld [vmem:[%s356 + $0x2b8] sm:$0xff]
        %v516 = vld [vmem:[%s356 + $0x2c0] sm:$0xff]
        %v517 = vld [vmem:[%s356 + $0x2c8] sm:$0xff]
        %v518 = vld [vmem:[%s356 + $0x2d0] sm:$0xff]
        %v519 = vld [vmem:[%s356 + $0x2d8] sm:$0xff]
        %v520 = vld [vmem:[%s356 + $0x2e0] sm:$0xff]
        %v521 = vld [vmem:[%s356 + $0x2e8] sm:$0xff]
        %v522 = vld [vmem:[%s356 + $0x2f0] sm:$0xff]
        %v523 = vld [vmem:[%s356 + $0x2f8] sm:$0xff]
        %v528 = vunpack.c.l.b16 %v424
        %v529 = vunpack.c.h.b16 %v424
        %v530 = vunpack.c.l.b16 %v425
        %v531 = vunpack.c.h.b16 %v425
        %v532 = vunpack.c.l.b16 %v426
        %v533 = vunpack.c.h.b16 %v426
        %v534 = vunpack.c.l.b16 %v427
        %v535 = vunpack.c.h.b16 %v427
        %v536 = vpack.c.b16 %v530, %v528
        %v537 = vpack.c.b16 %v531, %v529
        %v538 = vpack.c.b16 %v534, %v532
        %v539 = vpack.c.b16 %v535, %v533
        %v640 = vunpack.c.l.b16 %v428
        %v641 = vunpack.c.h.b16 %v428
        %v642 = vunpack.c.l.b16 %v429
        %v643 = vunpack.c.h.b16 %v429
        %v644 = vunpack.c.l.b16 %v430
        %v645 = vunpack.c.h.b16 %v430
        %v646 = vunpack.c.l.b16 %v431
        %v647 = vunpack.c.h.b16 %v431
        %v648 = vunpack.c.l.b16 %v432
        %v649 = vunpack.c.h.b16 %v432
        %v650 = vunpack.c.l.b16 %v433
        %v651 = vunpack.c.h.b16 %v433
        %v652 = vunpack.c.l.b16 %v434
        %v653 = vunpack.c.h.b16 %v434
        %v654 = vunpack.c.l.b16 %v435
        %v655 = vunpack.c.h.b16 %v435
        %v656 = vunpack.c.l.b16 %v436
        %v657 = vunpack.c.h.b16 %v436
        %v658 = vunpack.c.l.b16 %v437
        %v659 = vunpack.c.h.b16 %v437
        %v660 = vunpack.c.l.b16 %v438
        %v661 = vunpack.c.h.b16 %v438
        %v662 = vunpack.c.l.b16 %v439
        %v663 = vunpack.c.h.b16 %v439
        %v664 = vunpack.c.l.b16 %v440
        %v665 = vunpack.c.h.b16 %v440
        %v666 = vunpack.c.l.b16 %v441
        %v667 = vunpack.c.h.b16 %v441
        %v668 = vunpack.c.l.b16 %v442
        %v669 = vunpack.c.h.b16 %v442
        %v670 = vunpack.c.l.b16 %v443
        %v671 = vunpack.c.h.b16 %v443
        %v672 = vunpack.c.l.b16 %v444
        %v673 = vunpack.c.h.b16 %v444
        %v674 = vunpack.c.l.b16 %v445
        %v675 = vunpack.c.h.b16 %v445
        %v676 = vunpack.c.l.b16 %v446
        %v677 = vunpack.c.h.b16 %v446
        %v678 = vunpack.c.l.b16 %v447
        %v679 = vunpack.c.h.b16 %v447
        %v680 = vunpack.c.l.b16 %v448
        %v681 = vunpack.c.h.b16 %v448
        %v682 = vunpack.c.l.b16 %v449
        %v683 = vunpack.c.h.b16 %v449
        %v684 = vunpack.c.l.b16 %v450
        %v685 = vunpack.c.h.b16 %v450
        %v686 = vunpack.c.l.b16 %v451
        %v687 = vunpack.c.h.b16 %v451
        %v688 = vunpack.c.l.b16 %v452
        %v689 = vunpack.c.h.b16 %v452
        %v690 = vunpack.c.l.b16 %v453
        %v691 = vunpack.c.h.b16 %v453
        %v692 = vunpack.c.l.b16 %v454
        %v693 = vunpack.c.h.b16 %v454
        %v694 = vunpack.c.l.b16 %v455
        %v695 = vunpack.c.h.b16 %v455
        %v696 = vunpack.c.l.b16 %v456
        %v697 = vunpack.c.h.b16 %v456
        %v698 = vunpack.c.l.b16 %v457
        %v699 = vunpack.c.h.b16 %v457
        %v700 = vunpack.c.l.b16 %v458
        %v701 = vunpack.c.h.b16 %v458
        %v702 = vunpack.c.l.b16 %v459
        %v703 = vunpack.c.h.b16 %v459
        %v704 = vunpack.c.l.b16 %v460
        %v705 = vunpack.c.h.b16 %v460
        %v706 = vunpack.c.l.b16 %v461
        %v707 = vunpack.c.h.b16 %v461
        %v708 = vunpack.c.l.b16 %v462
        %v709 = vunpack.c.h.b16 %v462
        %v710 = vunpack.c.l.b16 %v463
        %v711 = vunpack.c.h.b16 %v463
        %v712 = vunpack.c.l.b16 %v464
        %v713 = vunpack.c.h.b16 %v464
        %v714 = vunpack.c.l.b16 %v465
        %v715 = vunpack.c.h.b16 %v465
        %v716 = vunpack.c.l.b16 %v466
        %v717 = vunpack.c.h.b16 %v466
        %v718 = vunpack.c.l.b16 %v467
        %v719 = vunpack.c.h.b16 %v467
        %v720 = vunpack.c.l.b16 %v468
        %v721 = vunpack.c.h.b16 %v468
        %v722 = vunpack.c.l.b16 %v469
        %v723 = vunpack.c.h.b16 %v469
        %v724 = vunpack.c.l.b16 %v470
        %v725 = vunpack.c.h.b16 %v470
        %v726 = vunpack.c.l.b16 %v471
        %v727 = vunpack.c.h.b16 %v471
        %v728 = vunpack.c.l.b16 %v472
        %v729 = vunpack.c.h.b16 %v472
        %v730 = vunpack.c.l.b16 %v473
        %v731 = vunpack.c.h.b16 %v473
        %v732 = vunpack.c.l.b16 %v474
        %v733 = vunpack.c.h.b16 %v474
        %v734 = vunpack.c.l.b16 %v475
        %v735 = vunpack.c.h.b16 %v475
        %v736 = vunpack.c.l.b16 %v476
        %v737 = vunpack.c.h.b16 %v476
        %v738 = vunpack.c.l.b16 %v477
        %v739 = vunpack.c.h.b16 %v477
        %v740 = vunpack.c.l.b16 %v478
        %v741 = vunpack.c.h.b16 %v478
        %v742 = vunpack.c.l.b16 %v479
        %v743 = vunpack.c.h.b16 %v479
        %v744 = vunpack.c.l.b16 %v480
        %v745 = vunpack.c.h.b16 %v480
        %v746 = vunpack.c.l.b16 %v481
        %v747 = vunpack.c.h.b16 %v481
        %v748 = vunpack.c.l.b16 %v482
        %v749 = vunpack.c.h.b16 %v482
        %v750 = vunpack.c.l.b16 %v483
        %v751 = vunpack.c.h.b16 %v483
        %v752 = vunpack.c.l.b16 %v484
        %v753 = vunpack.c.h.b16 %v484
        %v754 = vunpack.c.l.b16 %v485
        %v755 = vunpack.c.h.b16 %v485
        %v756 = vunpack.c.l.b16 %v486
        %v757 = vunpack.c.h.b16 %v486
        %v758 = vunpack.c.l.b16 %v487
        %v759 = vunpack.c.h.b16 %v487
        %v760 = vunpack.c.l.b16 %v488
        %v761 = vunpack.c.h.b16 %v488
        %v762 = vunpack.c.l.b16 %v489
        %v763 = vunpack.c.h.b16 %v489
        %v764 = vunpack.c.l.b16 %v490
        %v765 = vunpack.c.h.b16 %v490
        %v766 = vunpack.c.l.b16 %v491
        %v767 = vunpack.c.h.b16 %v491
        %v768 = vunpack.c.l.b16 %v492
        %v769 = vunpack.c.h.b16 %v492
        %v770 = vunpack.c.l.b16 %v493
        %v771 = vunpack.c.h.b16 %v493
        %v772 = vunpack.c.l.b16 %v494
        %v773 = vunpack.c.h.b16 %v494
        %v774 = vunpack.c.l.b16 %v495
        %v775 = vunpack.c.h.b16 %v495
        %v776 = vunpack.c.l.b16 %v496
        %v777 = vunpack.c.h.b16 %v496
        %v778 = vunpack.c.l.b16 %v497
        %v779 = vunpack.c.h.b16 %v497
        %v780 = vunpack.c.l.b16 %v498
        %v781 = vunpack.c.h.b16 %v498
        %v782 = vunpack.c.l.b16 %v499
        %v783 = vunpack.c.h.b16 %v499
        %v784 = vunpack.c.l.b16 %v500
        %v785 = vunpack.c.h.b16 %v500
        %v786 = vunpack.c.l.b16 %v501
        %v787 = vunpack.c.h.b16 %v501
        %v788 = vunpack.c.l.b16 %v502
        %v789 = vunpack.c.h.b16 %v502
        %v790 = vunpack.c.l.b16 %v503
        %v791 = vunpack.c.h.b16 %v503
        %v792 = vunpack.c.l.b16 %v504
        %v793 = vunpack.c.h.b16 %v504
        %v794 = vunpack.c.l.b16 %v505
        %v795 = vunpack.c.h.b16 %v505
        %v796 = vunpack.c.l.b16 %v506
        %v797 = vunpack.c.h.b16 %v506
        %v798 = vunpack.c.l.b16 %v507
        %v799 = vunpack.c.h.b16 %v507
        %v800 = vunpack.c.l.b16 %v508
        %v801 = vunpack.c.h.b16 %v508
        %v802 = vunpack.c.l.b16 %v509
        %v803 = vunpack.c.h.b16 %v509
        %v804 = vunpack.c.l.b16 %v510
        %v805 = vunpack.c.h.b16 %v510
        %v806 = vunpack.c.l.b16 %v511
        %v807 = vunpack.c.h.b16 %v511
        %v808 = vunpack.c.l.b16 %v512
        %v809 = vunpack.c.h.b16 %v512
        %v810 = vunpack.c.l.b16 %v513
        %v811 = vunpack.c.h.b16 %v513
        %v812 = vunpack.c.l.b16 %v514
        %v813 = vunpack.c.h.b16 %v514
        %v814 = vunpack.c.l.b16 %v515
        %v815 = vunpack.c.h.b16 %v515
        %v816 = vunpack.c.l.b16 %v516
        %v817 = vunpack.c.h.b16 %v516
        %v818 = vunpack.c.l.b16 %v517
        %v819 = vunpack.c.h.b16 %v517
        %v820 = vunpack.c.l.b16 %v518
        %v821 = vunpack.c.h.b16 %v518
        %v822 = vunpack.c.l.b16 %v519
        %v823 = vunpack.c.h.b16 %v519
        %v824 = vunpack.c.l.b16 %v520
        %v825 = vunpack.c.h.b16 %v520
        %v826 = vunpack.c.l.b16 %v521
        %v827 = vunpack.c.h.b16 %v521
        %v828 = vunpack.c.l.b16 %v522
        %v829 = vunpack.c.h.b16 %v522
        %v830 = vunpack.c.l.b16 %v523
        %v831 = vunpack.c.h.b16 %v523
        %v832 = vpack.c.b16 %v646, %v640
        %v833 = vpack.c.b16 %v647, %v641
        %v834 = vpack.c.b16 %v648, %v642
        %v835 = vpack.c.b16 %v649, %v643
        %v836 = vpack.c.b16 %v650, %v644
        %v837 = vpack.c.b16 %v651, %v645
        %v838 = vpack.c.b16 %v658, %v652
        %v839 = vpack.c.b16 %v659, %v653
        %v840 = vpack.c.b16 %v660, %v654
        %v841 = vpack.c.b16 %v661, %v655
        %v842 = vpack.c.b16 %v662, %v656
        %v843 = vpack.c.b16 %v663, %v657
        %v844 = vpack.c.b16 %v670, %v664
        %v845 = vpack.c.b16 %v671, %v665
        %v846 = vpack.c.b16 %v672, %v666
        %v847 = vpack.c.b16 %v673, %v667
        %v848 = vpack.c.b16 %v674, %v668
        %v849 = vpack.c.b16 %v675, %v669
        %v850 = vpack.c.b16 %v682, %v676
        %v851 = vpack.c.b16 %v683, %v677
        %v852 = vpack.c.b16 %v684, %v678
        %v853 = vpack.c.b16 %v685, %v679
        %v854 = vpack.c.b16 %v686, %v680
        %v855 = vpack.c.b16 %v687, %v681
        %v856 = vpack.c.b16 %v694, %v688
        %v857 = vpack.c.b16 %v695, %v689
        %v858 = vpack.c.b16 %v696, %v690
        %v859 = vpack.c.b16 %v697, %v691
        %v860 = vpack.c.b16 %v698, %v692
        %v861 = vpack.c.b16 %v699, %v693
        %v862 = vpack.c.b16 %v706, %v700
        %v863 = vpack.c.b16 %v707, %v701
        %v864 = vpack.c.b16 %v708, %v702
        %v865 = vpack.c.b16 %v709, %v703
        %v866 = vpack.c.b16 %v710, %v704
        %v867 = vpack.c.b16 %v711, %v705
        %v868 = vpack.c.b16 %v718, %v712
        %v869 = vpack.c.b16 %v719, %v713
        %v870 = vpack.c.b16 %v720, %v714
        %v871 = vpack.c.b16 %v721, %v715
        %v872 = vpack.c.b16 %v722, %v716
        %v873 = vpack.c.b16 %v723, %v717
        %v874 = vpack.c.b16 %v730, %v724
        %v875 = vpack.c.b16 %v731, %v725
        %v876 = vpack.c.b16 %v732, %v726
        %v877 = vpack.c.b16 %v733, %v727
        %v878 = vpack.c.b16 %v734, %v728
        %v879 = vpack.c.b16 %v735, %v729
        %v880 = vpack.c.b16 %v742, %v736
        %v881 = vpack.c.b16 %v743, %v737
        %v882 = vpack.c.b16 %v744, %v738
        %v883 = vpack.c.b16 %v745, %v739
        %v884 = vpack.c.b16 %v746, %v740
        %v885 = vpack.c.b16 %v747, %v741
        %v886 = vpack.c.b16 %v754, %v748
        %v887 = vpack.c.b16 %v755, %v749
        %v888 = vpack.c.b16 %v756, %v750
        %v889 = vpack.c.b16 %v757, %v751
        %v890 = vpack.c.b16 %v758, %v752
        %v891 = vpack.c.b16 %v759, %v753
        %v892 = vpack.c.b16 %v766, %v760
        %v893 = vpack.c.b16 %v767, %v761
        %v894 = vpack.c.b16 %v768, %v762
        %v895 = vpack.c.b16 %v769, %v763
        %v896 = vpack.c.b16 %v770, %v764
        %v897 = vpack.c.b16 %v771, %v765
        %v898 = vpack.c.b16 %v778, %v772
        %v899 = vpack.c.b16 %v779, %v773
        %v900 = vpack.c.b16 %v780, %v774
        %v901 = vpack.c.b16 %v781, %v775
        %v902 = vpack.c.b16 %v782, %v776
        %v903 = vpack.c.b16 %v783, %v777
        %v904 = vpack.c.b16 %v790, %v784
        %v905 = vpack.c.b16 %v791, %v785
        %v906 = vpack.c.b16 %v792, %v786
        %v907 = vpack.c.b16 %v793, %v787
        %v908 = vpack.c.b16 %v794, %v788
        %v909 = vpack.c.b16 %v795, %v789
        %v910 = vpack.c.b16 %v802, %v796
        %v911 = vpack.c.b16 %v803, %v797
        %v912 = vpack.c.b16 %v804, %v798
        %v913 = vpack.c.b16 %v805, %v799
        %v914 = vpack.c.b16 %v806, %v800
        %v915 = vpack.c.b16 %v807, %v801
        %v916 = vpack.c.b16 %v814, %v808
        %v917 = vpack.c.b16 %v815, %v809
        %v918 = vpack.c.b16 %v816, %v810
        %v919 = vpack.c.b16 %v817, %v811
        %v920 = vpack.c.b16 %v818, %v812
        %v921 = vpack.c.b16 %v819, %v813
        %v922 = vpack.c.b16 %v826, %v820
        %v923 = vpack.c.b16 %v827, %v821
        %v924 = vpack.c.b16 %v828, %v822
        %v925 = vpack.c.b16 %v829, %v823
        %v926 = vpack.c.b16 %v830, %v824
        %v927 = vpack.c.b16 %v831, %v825
        %1024 = vmatprep.subr.bf16.mxu0 %v875
        %1025 = vmatpush1.bf16.msra.mxu0 %v874
        %1026 = vmatprep.subr.bf16.mxu0 %v869
        %1027 = vmatpush1.bf16.msra.mxu0 %v868
        %1028 = vmatprep.subr.bf16.mxu0 %v863
        %1029 = vmatpush1.bf16.msra.mxu0 %v862
        %1030 = vmatprep.subr.bf16.mxu0 %v857
        %1031 = vmatpush1.bf16.msra.mxu0 %v856
        %1032 = vmatprep.subr.bf16.mxu0 %v851
        %1033 = vmatpush1.bf16.msra.mxu0 %v850
        %1034 = vmatprep.subr.bf16.mxu0 %v845
        %1035 = vmatpush1.bf16.msra.mxu0 %v844
        %1036 = vmatprep.subr.bf16.mxu0 %v839
        %1037 = vmatpush1.bf16.msra.mxu0 %v838
        %1038 = vmatprep.subr.bf16.mxu0 %v833
        %1039 = vmatpush1.bf16.msra.mxu0 %v832
        %1040 = vmatprep.subr.bf16.mxu0 %v923
        %1041 = vmatpush2.bf16.msra.mxu0 %v922
        %1042 = vmatprep.subr.bf16.mxu0 %v917
        %1043 = vmatpush2.bf16.msra.mxu0 %v916
        %1044 = vmatprep.subr.bf16.mxu0 %v911
        %1045 = vmatpush2.bf16.msra.mxu0 %v910
        %1046 = vmatprep.subr.bf16.mxu0 %v905
        %1047 = vmatpush2.bf16.msra.mxu0 %v904
        %1048 = vmatprep.subr.bf16.mxu0 %v899
        %1049 = vmatpush2.bf16.msra.mxu0 %v898
        %1050 = vmatprep.subr.bf16.mxu0 %v893
        %1051 = vmatpush2.bf16.msra.mxu0 %v892
        %1052 = vmatprep.subr.bf16.mxu0 %v887
        %1053 = vmatpush2.bf16.msra.mxu0 %v886
        %1054 = vmatprep.subr.bf16.mxu0 %v881
        %1055 = vmatpush2.bf16.msra.mxu0 %v880
        %1056 = vmatprep.mubr.bf16.mxu0 %v537
        %1057 = vmatmul.mubr.bf16.gmra.mxu0 %v536
        %v1058 = vpop.f32.mrf.mxu0
        %v1059 = vadd.f32 0.0, %v1058
        %v1060 = vpop.f32.mrf.mxu0
        %v1061 = vadd.f32 0.0, %v1060
        %v1062 = vpop.f32.mrf.mxu0
        %v1063 = vadd.f32 0.0, %v1062
        %v1064 = vpop.f32.mrf.mxu0
        %v1065 = vadd.f32 0.0, %v1064
        %1066 = vmatprep.mubr.bf16.mxu0 %v539
        %1067 = vmatmul.mubr.bf16.gmra.mxu0 %v538
        %v1068 = vpop.f32.mrf.mxu0
        %v1069 = vadd.f32 0.0, %v1068
        %v1070 = vpop.f32.mrf.mxu0
        %v1071 = vadd.f32 0.0, %v1070
        %v1072 = vpop.f32.mrf.mxu0
        %v1073 = vadd.f32 0.0, %v1072
        %v1074 = vpop.f32.mrf.mxu0
        %v1075 = vadd.f32 0.0, %v1074
        %1076 = vdwg.mxu0
        %1077 = vmatprep.subr.bf16.mxu0 %v877
        %1078 = vmatpush1.bf16.msra.mxu0 %v876
        %1079 = vmatprep.subr.bf16.mxu0 %v871
        %1080 = vmatpush1.bf16.msra.mxu0 %v870
        %1081 = vmatprep.subr.bf16.mxu0 %v865
        %1082 = vmatpush1.bf16.msra.mxu0 %v864
        %1083 = vmatprep.subr.bf16.mxu0 %v859
        %1084 = vmatpush1.bf16.msra.mxu0 %v858
        %1085 = vmatprep.subr.bf16.mxu0 %v853
        %1086 = vmatpush1.bf16.msra.mxu0 %v852
        %1087 = vmatprep.subr.bf16.mxu0 %v847
        %1088 = vmatpush1.bf16.msra.mxu0 %v846
        %1089 = vmatprep.subr.bf16.mxu0 %v841
        %1090 = vmatpush1.bf16.msra.mxu0 %v840
        %1091 = vmatprep.subr.bf16.mxu0 %v835
        %1092 = vmatpush1.bf16.msra.mxu0 %v834
        %1093 = vmatprep.subr.bf16.mxu0 %v925
        %1094 = vmatpush2.bf16.msra.mxu0 %v924
        %1095 = vmatprep.subr.bf16.mxu0 %v919
        %1096 = vmatpush2.bf16.msra.mxu0 %v918
        %1097 = vmatprep.subr.bf16.mxu0 %v913
        %1098 = vmatpush2.bf16.msra.mxu0 %v912
        %1099 = vmatprep.subr.bf16.mxu0 %v907
        %1100 = vmatpush2.bf16.msra.mxu0 %v906
        %1101 = vmatprep.subr.bf16.mxu0 %v901
        %1102 = vmatpush2.bf16.msra.mxu0 %v900
        %1103 = vmatprep.subr.bf16.mxu0 %v895
        %1104 = vmatpush2.bf16.msra.mxu0 %v894
        %1105 = vmatprep.subr.bf16.mxu0 %v889
        %1106 = vmatpush2.bf16.msra.mxu0 %v888
        %1107 = vmatprep.subr.bf16.mxu0 %v883
        %1108 = vmatpush2.bf16.msra.mxu0 %v882
        %1109 = vmatprep.mubr.bf16.mxu0 %v537
        %1110 = vmatmul.mubr.bf16.gmra.mxu0 %v536
        %v1111 = vpop.f32.mrf.mxu0
        %v1112 = vadd.f32 0.0, %v1111
        %v1113 = vpop.f32.mrf.mxu0
        %v1114 = vadd.f32 0.0, %v1113
        %v1115 = vpop.f32.mrf.mxu0
        %v1116 = vadd.f32 0.0, %v1115
        %v1117 = vpop.f32.mrf.mxu0
        %v1118 = vadd.f32 0.0, %v1117
        %1119 = vmatprep.mubr.bf16.mxu0 %v539
        %1120 = vmatmul.mubr.bf16.gmra.mxu0 %v538
        %v1121 = vpop.f32.mrf.mxu0
        %v1122 = vadd.f32 0.0, %v1121
        %v1123 = vpop.f32.mrf.mxu0
        %v1124 = vadd.f32 0.0, %v1123
        %v1125 = vpop.f32.mrf.mxu0
        %v1126 = vadd.f32 0.0, %v1125
        %v1127 = vpop.f32.mrf.mxu0
        %v1128 = vadd.f32 0.0, %v1127
        %1129 = vdwg.mxu0
        %1130 = vmatprep.subr.bf16.mxu0 %v879
        %1131 = vmatpush1.bf16.msra.mxu0 %v878
        %1132 = vmatprep.subr.bf16.mxu0 %v873
        %1133 = vmatpush1.bf16.msra.mxu0 %v872
        %1134 = vmatprep.subr.bf16.mxu0 %v867
        %1135 = vmatpush1.bf16.msra.mxu0 %v866
        %1136 = vmatprep.subr.bf16.mxu0 %v861
        %1137 = vmatpush1.bf16.msra.mxu0 %v860
        %1138 = vmatprep.subr.bf16.mxu0 %v855
        %1139 = vmatpush1.bf16.msra.mxu0 %v854
        %1140 = vmatprep.subr.bf16.mxu0 %v849
        %1141 = vmatpush1.bf16.msra.mxu0 %v848
        %1142 = vmatprep.subr.bf16.mxu0 %v843
        %1143 = vmatpush1.bf16.msra.mxu0 %v842
        %1144 = vmatprep.subr.bf16.mxu0 %v837
        %1145 = vmatpush1.bf16.msra.mxu0 %v836
        %1146 = vmatprep.subr.bf16.mxu0 %v927
        %1147 = vmatpush2.bf16.msra.mxu0 %v926
        %1148 = vmatprep.subr.bf16.mxu0 %v921
        %1149 = vmatpush2.bf16.msra.mxu0 %v920
        %1150 = vmatprep.subr.bf16.mxu0 %v915
        %1151 = vmatpush2.bf16.msra.mxu0 %v914
        %1152 = vmatprep.subr.bf16.mxu0 %v909
        %1153 = vmatpush2.bf16.msra.mxu0 %v908
        %1154 = vmatprep.subr.bf16.mxu0 %v903
        %1155 = vmatpush2.bf16.msra.mxu0 %v902
        %1156 = vmatprep.subr.bf16.mxu0 %v897
        %1157 = vmatpush2.bf16.msra.mxu0 %v896
        %1158 = vmatprep.subr.bf16.mxu0 %v891
        %1159 = vmatpush2.bf16.msra.mxu0 %v890
        %1160 = vmatprep.subr.bf16.mxu0 %v885
        %1161 = vmatpush2.bf16.msra.mxu0 %v884
        %1162 = vmatprep.mubr.bf16.mxu0 %v537
        %1163 = vmatmul.mubr.bf16.gmra.mxu0 %v536
        %v1164 = vpop.f32.mrf.mxu0
        %v1165 = vadd.f32 0.0, %v1164
        %v1166 = vpop.f32.mrf.mxu0
        %v1167 = vadd.f32 0.0, %v1166
        %v1168 = vpop.f32.mrf.mxu0
        %v1169 = vadd.f32 0.0, %v1168
        %v1170 = vpop.f32.mrf.mxu0
        %v1171 = vadd.f32 0.0, %v1170
        %1172 = vmatprep.mubr.bf16.mxu0 %v539
        %1173 = vmatmul.mubr.bf16.gmra.mxu0 %v538
        %v1174 = vpop.f32.mrf.mxu0
        %v1175 = vadd.f32 0.0, %v1174
        %v1176 = vpop.f32.mrf.mxu0
        %v1177 = vadd.f32 0.0, %v1176
        %v1178 = vpop.f32.mrf.mxu0
        %v1179 = vadd.f32 0.0, %v1178
        %v1180 = vpop.f32.mrf.mxu0
        %v1181 = vadd.f32 0.0, %v1180
        %1182 = vdwg.mxu0
        %v1183 = vadd.f32 %v400, %v1059
        %v1184 = vadd.f32 %v401, %v1061
        %v1185 = vadd.f32 %v402, %v1112
        %v1186 = vadd.f32 %v403, %v1114
        %v1187 = vadd.f32 %v404, %v1165
        %v1188 = vadd.f32 %v405, %v1167
        %v1189 = vadd.f32 %v406, %v1063
        %v1190 = vadd.f32 %v407, %v1065
        %v1191 = vadd.f32 %v408, %v1116
        %v1192 = vadd.f32 %v409, %v1118
        %v1193 = vadd.f32 %v410, %v1169
        %v1194 = vadd.f32 %v411, %v1171
        %v1195 = vadd.f32 %v412, %v1069
        %v1196 = vadd.f32 %v413, %v1071
        %v1197 = vadd.f32 %v414, %v1122
        %v1198 = vadd.f32 %v415, %v1124
        %v1199 = vadd.f32 %v416, %v1175
        %v1200 = vadd.f32 %v417, %v1177
        %v1201 = vadd.f32 %v418, %v1073
        %v1202 = vadd.f32 %v419, %v1075
        %v1203 = vadd.f32 %v420, %v1126
        %v1204 = vadd.f32 %v421, %v1128
        %v1205 = vadd.f32 %v422, %v1179
        %v1206 = vadd.f32 %v423, %v1181
        %1207 = vst [vmem:[#allocation2] sm:$0xff] %v1183
        %1208 = vst [vmem:[#allocation2 + $0x8] sm:$0xff] %v1184
        %1209 = vst [vmem:[#allocation2 + $0x10] sm:$0xff] %v1185
        %1210 = vst [vmem:[#allocation2 + $0x18] sm:$0xff] %v1186
        %1211 = vst [vmem:[#allocation2 + $0x20] sm:$0xff] %v1187
        %1212 = vst [vmem:[#allocation2 + $0x28] sm:$0xff] %v1188
        %1213 = vst [vmem:[#allocation2 + $0x30] sm:$0xff] %v1189
        %1214 = vst [vmem:[#allocation2 + $0x38] sm:$0xff] %v1190
        %1215 = vst [vmem:[#allocation2 + $0x40] sm:$0xff] %v1191
        %1216 = vst [vmem:[#allocation2 + $0x48] sm:$0xff] %v1192
        %1217 = vst [vmem:[#allocation2 + $0x50] sm:$0xff] %v1193
        %1218 = vst [vmem:[#allocation2 + $0x58] sm:$0xff] %v1194
        %1219 = vst [vmem:[#allocation2 + $0x60] sm:$0xff] %v1195
        %1220 = vst [vmem:[#allocation2 + $0x68] sm:$0xff] %v1196
        %1221 = vst [vmem:[#allocation2 + $0x70] sm:$0xff] %v1197
        %1222 = vst [vmem:[#allocation2 + $0x78] sm:$0xff] %v1198
        %1223 = vst [vmem:[#allocation2 + $0x80] sm:$0xff] %v1199
        %1224 = vst [vmem:[#allocation2 + $0x88] sm:$0xff] %v1200
        %1225 = vst [vmem:[#allocation2 + $0x90] sm:$0xff] %v1201
        %1226 = vst [vmem:[#allocation2 + $0x98] sm:$0xff] %v1202
        %1227 = vst [vmem:[#allocation2 + $0xa0] sm:$0xff] %v1203
        %1228 = vst [vmem:[#allocation2 + $0xa8] sm:$0xff] %v1204
        %1229 = vst [vmem:[#allocation2 + $0xb0] sm:$0xff] %v1205
        %1230 = vst [vmem:[#allocation2 + $0xb8] sm:$0xff] %v1206
        %p1231 = scmp.eq.s32.totalorder %s22, 11
        // Predicated region
        $region87: #{closed_call.20} parent=77 // pred_check
          %p1232 = pneg %p1231
        $region88: #{closed_call.20} parent=77 // pred_check_branch
          %1234 = sbr.rel (%p1232) target = $region90
        $region89: #{closed_call.20} parent=77 // pred_region
          %v1235 = vld [vmem:[#allocation2] sm:$0xff]
          %v1236 = vld [vmem:[#allocation2 + $0x8] sm:$0xff]
          %v1237 = vld [vmem:[#allocation2 + $0x10] sm:$0xff]
          %v1238 = vld [vmem:[#allocation2 + $0x18] sm:$0xff]
          %v1239 = vld [vmem:[#allocation2 + $0x20] sm:$0xff]
          %v1240 = vld [vmem:[#allocation2 + $0x28] sm:$0xff]
          %v1241 = vld [vmem:[#allocation2 + $0x30] sm:$0xff]
          %v1242 = vld [vmem:[#allocation2 + $0x38] sm:$0xff]
          %v1243 = vld [vmem:[#allocation2 + $0x40] sm:$0xff]
          %v1244 = vld [vmem:[#allocation2 + $0x48] sm:$0xff]
          %v1245 = vld [vmem:[#allocation2 + $0x50] sm:$0xff]
          %v1246 = vld [vmem:[#allocation2 + $0x58] sm:$0xff]
          %v1247 = vld [vmem:[#allocation2 + $0x60] sm:$0xff]
          %v1248 = vld [vmem:[#allocation2 + $0x68] sm:$0xff]
          %v1249 = vld [vmem:[#allocation2 + $0x70] sm:$0xff]
          %v1250 = vld [vmem:[#allocation2 + $0x78] sm:$0xff]
          %v1251 = vld [vmem:[#allocation2 + $0x80] sm:$0xff]
          %v1252 = vld [vmem:[#allocation2 + $0x88] sm:$0xff]
          %v1253 = vld [vmem:[#allocation2 + $0x90] sm:$0xff]
          %v1254 = vld [vmem:[#allocation2 + $0x98] sm:$0xff]
          %v1255 = vld [vmem:[#allocation2 + $0xa0] sm:$0xff]
          %v1256 = vld [vmem:[#allocation2 + $0xa8] sm:$0xff]
          %v1257 = vld [vmem:[#allocation2 + $0xb0] sm:$0xff]
          %v1258 = vld [vmem:[#allocation2 + $0xb8] sm:$0xff]
          %v1259 = vld [vmem:[%s2] sm:$0x3f]
          %v1261 = vlaneseq
          %v1262 = vshrl.u32 %v1261, 7
          %v1263 = vsub.s32 0, %v1262
          %v1264 = vrot.slane %v1259, %v1263
          %v1265 = vlaneseq
          %v1266 = vshrl.u32 %v1265, 7
          %v1267 = vsub.s32 1, %v1266
          %v1268 = vrot.slane %v1259, %v1267
          %v1269 = vlaneseq
          %v1270 = vshrl.u32 %v1269, 7
          %v1271 = vsub.s32 2, %v1270
          %v1272 = vrot.slane %v1259, %v1271
          %v1273 = vlaneseq
          %v1274 = vshrl.u32 %v1273, 7
          %v1275 = vsub.s32 3, %v1274
          %v1276 = vrot.slane %v1259, %v1275
          %v1277 = vlaneseq
          %v1278 = vshrl.u32 %v1277, 7
          %v1279 = vsub.s32 4, %v1278
          %v1280 = vrot.slane %v1259, %v1279
          %v1281 = vlaneseq
          %v1282 = vshrl.u32 %v1281, 7
          %v1283 = vsub.s32 5, %v1282
          %v1284 = vrot.slane %v1259, %v1283
          %v1291 = vadd.f32 %v1235, %v1264
          %v1292 = vadd.f32 %v1236, %v1268
          %v1293 = vadd.f32 %v1237, %v1272
          %v1294 = vadd.f32 %v1238, %v1276
          %v1295 = vadd.f32 %v1239, %v1280
          %v1296 = vadd.f32 %v1240, %v1284
          %v1297 = vadd.f32 %v1241, %v1264
          %v1298 = vadd.f32 %v1242, %v1268
          %v1299 = vadd.f32 %v1243, %v1272
          %v1300 = vadd.f32 %v1244, %v1276
          %v1301 = vadd.f32 %v1245, %v1280
          %v1302 = vadd.f32 %v1246, %v1284
          %v1303 = vadd.f32 %v1247, %v1264
          %v1304 = vadd.f32 %v1248, %v1268
          %v1305 = vadd.f32 %v1249, %v1272
          %v1306 = vadd.f32 %v1250, %v1276
          %v1307 = vadd.f32 %v1251, %v1280
          %v1308 = vadd.f32 %v1252, %v1284
          %v1309 = vadd.f32 %v1253, %v1264
          %v1310 = vadd.f32 %v1254, %v1268
          %v1311 = vadd.f32 %v1255, %v1272
          %v1312 = vadd.f32 %v1256, %v1276
          %v1313 = vadd.f32 %v1257, %v1280
          %v1314 = vadd.f32 %v1258, %v1284
          %v1315 = vld [vmem:[%s363] sm:$0xff]
          %v1316 = vld [vmem:[%s363 + $0x8] sm:$0xff]
          %v1317 = vld [vmem:[%s363 + $0x10] sm:$0xff]
          %v1318 = vld [vmem:[%s363 + $0x18] sm:$0xff]
          %v1319 = vld [vmem:[%s363 + $0x20] sm:$0xff]
          %v1320 = vld [vmem:[%s363 + $0x28] sm:$0xff]
          %v1321 = vld [vmem:[%s363 + $0x30] sm:$0xff]
          %v1322 = vld [vmem:[%s363 + $0x38] sm:$0xff]
          %v1323 = vld [vmem:[%s363 + $0x40] sm:$0xff]
          %v1324 = vld [vmem:[%s363 + $0x48] sm:$0xff]
          %v1325 = vld [vmem:[%s363 + $0x50] sm:$0xff]
          %v1326 = vld [vmem:[%s363 + $0x58] sm:$0xff]
          %v1327 = vunpack.c.l.bf16 %v1315
          %v1328 = vunpack.c.h.bf16 %v1315
          %v1329 = vunpack.c.l.bf16 %v1316
          %v1330 = vunpack.c.h.bf16 %v1316
          %v1331 = vunpack.c.l.bf16 %v1317
          %v1332 = vunpack.c.h.bf16 %v1317
          %v1333 = vunpack.c.l.bf16 %v1318
          %v1334 = vunpack.c.h.bf16 %v1318
          %v1335 = vunpack.c.l.bf16 %v1319
          %v1336 = vunpack.c.h.bf16 %v1319
          %v1337 = vunpack.c.l.bf16 %v1320
          %v1338 = vunpack.c.h.bf16 %v1320
          %v1339 = vunpack.c.l.bf16 %v1321
          %v1340 = vunpack.c.h.bf16 %v1321
          %v1341 = vunpack.c.l.bf16 %v1322
          %v1342 = vunpack.c.h.bf16 %v1322
          %v1343 = vunpack.c.l.bf16 %v1323
          %v1344 = vunpack.c.h.bf16 %v1323
          %v1345 = vunpack.c.l.bf16 %v1324
          %v1346 = vunpack.c.h.bf16 %v1324
          %v1347 = vunpack.c.l.bf16 %v1325
          %v1348 = vunpack.c.h.bf16 %v1325
          %v1349 = vunpack.c.l.bf16 %v1326
          %v1350 = vunpack.c.h.bf16 %v1326
          %v1351 = vadd.f32 %v1291, %v1327
          %v1352 = vadd.f32 %v1292, %v1328
          %v1353 = vadd.f32 %v1293, %v1329
          %v1354 = vadd.f32 %v1294, %v1330
          %v1355 = vadd.f32 %v1295, %v1331
          %v1356 = vadd.f32 %v1296, %v1332
          %v1357 = vadd.f32 %v1297, %v1333
          %v1358 = vadd.f32 %v1298, %v1334
          %v1359 = vadd.f32 %v1299, %v1335
          %v1360 = vadd.f32 %v1300, %v1336
          %v1361 = vadd.f32 %v1301, %v1337
          %v1362 = vadd.f32 %v1302, %v1338
          %v1363 = vadd.f32 %v1303, %v1339
          %v1364 = vadd.f32 %v1304, %v1340
          %v1365 = vadd.f32 %v1305, %v1341
          %v1366 = vadd.f32 %v1306, %v1342
          %v1367 = vadd.f32 %v1307, %v1343
          %v1368 = vadd.f32 %v1308, %v1344
          %v1369 = vadd.f32 %v1309, %v1345
          %v1370 = vadd.f32 %v1310, %v1346
          %v1371 = vadd.f32 %v1311, %v1347
          %v1372 = vadd.f32 %v1312, %v1348
          %v1373 = vadd.f32 %v1313, %v1349
          %v1374 = vadd.f32 %v1314, %v1350
          %v1375 = vadd.f32 %v1351, %v1352
          %v1376 = vadd.f32 %v1375, %v1353
          %v1377 = vadd.f32 %v1376, %v1354
          %v1378 = vadd.f32 %v1377, %v1355
          %v1379 = vadd.f32 %v1378, %v1356
          %1380 = vadd.xlane.f32.xlu0 %v1379
          %v1381 = vpop.xlane.xlu0 %1380
          %v1382 = vadd.f32 %v1357, %v1358
          %v1383 = vadd.f32 %v1382, %v1359
          %v1384 = vadd.f32 %v1383, %v1360
          %v1385 = vadd.f32 %v1384, %v1361
          %v1386 = vadd.f32 %v1385, %v1362
          %1387 = vadd.xlane.f32.xlu0 %v1386
          %v1388 = vpop.xlane.xlu0 %1387
          %v1389 = vadd.f32 %v1363, %v1364
          %v1390 = vadd.f32 %v1389, %v1365
          %v1391 = vadd.f32 %v1390, %v1366
          %v1392 = vadd.f32 %v1391, %v1367
          %v1393 = vadd.f32 %v1392, %v1368
          %1394 = vadd.xlane.f32.xlu0 %v1393
          %v1395 = vpop.xlane.xlu0 %1394
          %v1396 = vadd.f32 %v1369, %v1370
          %v1397 = vadd.f32 %v1396, %v1371
          %v1398 = vadd.f32 %v1397, %v1372
          %v1399 = vadd.f32 %v1398, %v1373
          %v1400 = vadd.f32 %v1399, %v1374
          %1401 = vadd.xlane.f32.xlu0 %v1400
          %v1402 = vpop.xlane.xlu0 %1401
          %v1403 = vrcp.pop 768.0
          %v1404 = vmul.f32 %v1381, %v1403
          %v1405 = vmul.f32 %v1388, %v1403
          %v1406 = vmul.f32 %v1395, %v1403
          %v1407 = vmul.f32 %v1402, %v1403
          %v1408 = vsub.f32 %v1351, %v1404
          %v1409 = vsub.f32 %v1352, %v1404
          %v1410 = vsub.f32 %v1353, %v1404
          %v1411 = vsub.f32 %v1354, %v1404
          %v1412 = vsub.f32 %v1355, %v1404
          %v1413 = vsub.f32 %v1356, %v1404
          %v1414 = vsub.f32 %v1357, %v1405
          %v1415 = vsub.f32 %v1358, %v1405
          %v1416 = vsub.f32 %v1359, %v1405
          %v1417 = vsub.f32 %v1360, %v1405
          %v1418 = vsub.f32 %v1361, %v1405
          %v1419 = vsub.f32 %v1362, %v1405
          %v1420 = vsub.f32 %v1363, %v1406
          %v1421 = vsub.f32 %v1364, %v1406
          %v1422 = vsub.f32 %v1365, %v1406
          %v1423 = vsub.f32 %v1366, %v1406
          %v1424 = vsub.f32 %v1367, %v1406
          %v1425 = vsub.f32 %v1368, %v1406
          %v1426 = vsub.f32 %v1369, %v1407
          %v1427 = vsub.f32 %v1370, %v1407
          %v1428 = vsub.f32 %v1371, %v1407
          %v1429 = vsub.f32 %v1372, %v1407
          %v1430 = vsub.f32 %v1373, %v1407
          %v1431 = vsub.f32 %v1374, %v1407
          %v1432 = vmul.f32 %v1408, %v1408
          %v1433 = vmul.f32 %v1409, %v1409
          %v1434 = vmul.f32 %v1410, %v1410
          %v1435 = vmul.f32 %v1411, %v1411
          %v1436 = vmul.f32 %v1412, %v1412
          %v1437 = vmul.f32 %v1413, %v1413
          %v1438 = vmul.f32 %v1414, %v1414
          %v1439 = vmul.f32 %v1415, %v1415
          %v1440 = vmul.f32 %v1416, %v1416
          %v1441 = vmul.f32 %v1417, %v1417
          %v1442 = vmul.f32 %v1418, %v1418
          %v1443 = vmul.f32 %v1419, %v1419
          %v1444 = vmul.f32 %v1420, %v1420
          %v1445 = vmul.f32 %v1421, %v1421
          %v1446 = vmul.f32 %v1422, %v1422
          %v1447 = vmul.f32 %v1423, %v1423
          %v1448 = vmul.f32 %v1424, %v1424
          %v1449 = vmul.f32 %v1425, %v1425
          %v1450 = vmul.f32 %v1426, %v1426
          %v1451 = vmul.f32 %v1427, %v1427
          %v1452 = vmul.f32 %v1428, %v1428
          %v1453 = vmul.f32 %v1429, %v1429
          %v1454 = vmul.f32 %v1430, %v1430
          %v1455 = vmul.f32 %v1431, %v1431
          %v1456 = vadd.f32 %v1432, %v1433
          %v1457 = vadd.f32 %v1456, %v1434
          %v1458 = vadd.f32 %v1457, %v1435
          %v1459 = vadd.f32 %v1458, %v1436
          %v1460 = vadd.f32 %v1459, %v1437
          %1461 = vadd.xlane.f32.xlu0 %v1460
          %v1462 = vpop.xlane.xlu0 %1461
          %v1463 = vadd.f32 %v1438, %v1439
          %v1464 = vadd.f32 %v1463, %v1440
          %v1465 = vadd.f32 %v1464, %v1441
          %v1466 = vadd.f32 %v1465, %v1442
          %v1467 = vadd.f32 %v1466, %v1443
          %1468 = vadd.xlane.f32.xlu0 %v1467
          %v1469 = vpop.xlane.xlu0 %1468
          %v1470 = vadd.f32 %v1444, %v1445
          %v1471 = vadd.f32 %v1470, %v1446
          %v1472 = vadd.f32 %v1471, %v1447
          %v1473 = vadd.f32 %v1472, %v1448
          %v1474 = vadd.f32 %v1473, %v1449
          %1475 = vadd.xlane.f32.xlu0 %v1474
          %v1476 = vpop.xlane.xlu0 %1475
          %v1477 = vadd.f32 %v1450, %v1451
          %v1478 = vadd.f32 %v1477, %v1452
          %v1479 = vadd.f32 %v1478, %v1453
          %v1480 = vadd.f32 %v1479, %v1454
          %v1481 = vadd.f32 %v1480, %v1455
          %1482 = vadd.xlane.f32.xlu0 %v1481
          %v1483 = vpop.xlane.xlu0 %1482
          %v1484 = vmul.f32 %v1462, %v1403
          %v1485 = vmul.f32 %v1469, %v1403
          %v1486 = vmul.f32 %v1476, %v1403
          %v1487 = vmul.f32 %v1483, %v1403
          %v1488 = vadd.f32 %v1484, 1e-12
          %v1489 = vadd.f32 %v1485, 1e-12
          %v1490 = vadd.f32 %v1486, 1e-12
          %v1491 = vadd.f32 %v1487, 1e-12
          %v1492 = vrsqrt.pop %v1488
          %v1493 = vrsqrt.pop %v1489
          %v1494 = vrsqrt.pop %v1490
          %v1495 = vrsqrt.pop %v1491
          %v1496 = vmul.f32 %v1408, %v1492
          %v1497 = vmul.f32 %v1409, %v1492
          %v1498 = vmul.f32 %v1410, %v1492
          %v1499 = vmul.f32 %v1411, %v1492
          %v1500 = vmul.f32 %v1412, %v1492
          %v1501 = vmul.f32 %v1413, %v1492
          %v1502 = vmul.f32 %v1414, %v1493
          %v1503 = vmul.f32 %v1415, %v1493
          %v1504 = vmul.f32 %v1416, %v1493
          %v1505 = vmul.f32 %v1417, %v1493
          %v1506 = vmul.f32 %v1418, %v1493
          %v1507 = vmul.f32 %v1419, %v1493
          %v1508 = vmul.f32 %v1420, %v1494
          %v1509 = vmul.f32 %v1421, %v1494
          %v1510 = vmul.f32 %v1422, %v1494
          %v1511 = vmul.f32 %v1423, %v1494
          %v1512 = vmul.f32 %v1424, %v1494
          %v1513 = vmul.f32 %v1425, %v1494
          %v1514 = vmul.f32 %v1426, %v1495
          %v1515 = vmul.f32 %v1427, %v1495
          %v1516 = vmul.f32 %v1428, %v1495
          %v1517 = vmul.f32 %v1429, %v1495
          %v1518 = vmul.f32 %v1430, %v1495
          %v1519 = vmul.f32 %v1431, %v1495
          %v1520 = vld [vmem:[%s4] sm:$0x3f]
          %v1522 = vlaneseq
          %v1523 = vshrl.u32 %v1522, 7
          %v1524 = vsub.s32 0, %v1523
          %v1525 = vrot.slane %v1520, %v1524
          %v1526 = vlaneseq
          %v1527 = vshrl.u32 %v1526, 7
          %v1528 = vsub.s32 1, %v1527
          %v1529 = vrot.slane %v1520, %v1528
          %v1530 = vlaneseq
          %v1531 = vshrl.u32 %v1530, 7
          %v1532 = vsub.s32 2, %v1531
          %v1533 = vrot.slane %v1520, %v1532
          %v1534 = vlaneseq
          %v1535 = vshrl.u32 %v1534, 7
          %v1536 = vsub.s32 3, %v1535
          %v1537 = vrot.slane %v1520, %v1536
          %v1538 = vlaneseq
          %v1539 = vshrl.u32 %v1538, 7
          %v1540 = vsub.s32 4, %v1539
          %v1541 = vrot.slane %v1520, %v1540
          %v1542 = vlaneseq
          %v1543 = vshrl.u32 %v1542, 7
          %v1544 = vsub.s32 5, %v1543
          %v1545 = vrot.slane %v1520, %v1544
          %v1552 = vmul.f32 %v1496, %v1525
          %v1553 = vmul.f32 %v1497, %v1529
          %v1554 = vmul.f32 %v1498, %v1533
          %v1555 = vmul.f32 %v1499, %v1537
          %v1556 = vmul.f32 %v1500, %v1541
          %v1557 = vmul.f32 %v1501, %v1545
          %v1558 = vmul.f32 %v1502, %v1525
          %v1559 = vmul.f32 %v1503, %v1529
          %v1560 = vmul.f32 %v1504, %v1533
          %v1561 = vmul.f32 %v1505, %v1537
          %v1562 = vmul.f32 %v1506, %v1541
          %v1563 = vmul.f32 %v1507, %v1545
          %v1564 = vmul.f32 %v1508, %v1525
          %v1565 = vmul.f32 %v1509, %v1529
          %v1566 = vmul.f32 %v1510, %v1533
          %v1567 = vmul.f32 %v1511, %v1537
          %v1568 = vmul.f32 %v1512, %v1541
          %v1569 = vmul.f32 %v1513, %v1545
          %v1570 = vmul.f32 %v1514, %v1525
          %v1571 = vmul.f32 %v1515, %v1529
          %v1572 = vmul.f32 %v1516, %v1533
          %v1573 = vmul.f32 %v1517, %v1537
          %v1574 = vmul.f32 %v1518, %v1541
          %v1575 = vmul.f32 %v1519, %v1545
          %v1576 = vld [vmem:[%s5] sm:$0x3f]
          %v1578 = vlaneseq
          %v1579 = vshrl.u32 %v1578, 7
          %v1580 = vsub.s32 0, %v1579
          %v1581 = vrot.slane %v1576, %v1580
          %v1582 = vlaneseq
          %v1583 = vshrl.u32 %v1582, 7
          %v1584 = vsub.s32 1, %v1583
          %v1585 = vrot.slane %v1576, %v1584
          %v1586 = vlaneseq
          %v1587 = vshrl.u32 %v1586, 7
          %v1588 = vsub.s32 2, %v1587
          %v1589 = vrot.slane %v1576, %v1588
          %v1590 = vlaneseq
          %v1591 = vshrl.u32 %v1590, 7
          %v1592 = vsub.s32 3, %v1591
          %v1593 = vrot.slane %v1576, %v1592
          %v1594 = vlaneseq
          %v1595 = vshrl.u32 %v1594, 7
          %v1596 = vsub.s32 4, %v1595
          %v1597 = vrot.slane %v1576, %v1596
          %v1598 = vlaneseq
          %v1599 = vshrl.u32 %v1598, 7
          %v1600 = vsub.s32 5, %v1599
          %v1601 = vrot.slane %v1576, %v1600
          %v1608 = vadd.f32 %v1552, %v1581
          %v1609 = vadd.f32 %v1553, %v1585
          %v1610 = vadd.f32 %v1554, %v1589
          %v1611 = vadd.f32 %v1555, %v1593
          %v1612 = vadd.f32 %v1556, %v1597
          %v1613 = vadd.f32 %v1557, %v1601
          %v1614 = vadd.f32 %v1558, %v1581
          %v1615 = vadd.f32 %v1559, %v1585
          %v1616 = vadd.f32 %v1560, %v1589
          %v1617 = vadd.f32 %v1561, %v1593
          %v1618 = vadd.f32 %v1562, %v1597
          %v1619 = vadd.f32 %v1563, %v1601
          %v1620 = vadd.f32 %v1564, %v1581
          %v1621 = vadd.f32 %v1565, %v1585
          %v1622 = vadd.f32 %v1566, %v1589
          %v1623 = vadd.f32 %v1567, %v1593
          %v1624 = vadd.f32 %v1568, %v1597
          %v1625 = vadd.f32 %v1569, %v1601
          %v1626 = vadd.f32 %v1570, %v1581
          %v1627 = vadd.f32 %v1571, %v1585
          %v1628 = vadd.f32 %v1572, %v1589
          %v1629 = vadd.f32 %v1573, %v1593
          %v1630 = vadd.f32 %v1574, %v1597
          %v1631 = vadd.f32 %v1575, %v1601
          %v1632 = vpack.c.bf16 %v1614, %v1608
          %v1633 = vpack.c.bf16 %v1615, %v1609
          %v1634 = vpack.c.bf16 %v1616, %v1610
          %v1635 = vpack.c.bf16 %v1617, %v1611
          %v1636 = vpack.c.bf16 %v1618, %v1612
          %v1637 = vpack.c.bf16 %v1619, %v1613
          %v1638 = vpack.c.bf16 %v1626, %v1620
          %v1639 = vpack.c.bf16 %v1627, %v1621
          %v1640 = vpack.c.bf16 %v1628, %v1622
          %v1641 = vpack.c.bf16 %v1629, %v1623
          %v1642 = vpack.c.bf16 %v1630, %v1624
          %v1643 = vpack.c.bf16 %v1631, %v1625
          %v1656 = vunpack.c.l.b16 %v1632
          %v1657 = vunpack.c.l.b16 %v1633
          %v1658 = vunpack.c.l.b16 %v1634
          %v1659 = vunpack.c.l.b16 %v1635
          %v1660 = vunpack.c.l.b16 %v1636
          %v1661 = vunpack.c.l.b16 %v1637
          %v1662 = vunpack.c.h.b16 %v1632
          %v1663 = vunpack.c.h.b16 %v1633
          %v1664 = vunpack.c.h.b16 %v1634
          %v1665 = vunpack.c.h.b16 %v1635
          %v1666 = vunpack.c.h.b16 %v1636
          %v1667 = vunpack.c.h.b16 %v1637
          %v1668 = vunpack.c.l.b16 %v1638
          %v1669 = vunpack.c.l.b16 %v1639
          %v1670 = vunpack.c.l.b16 %v1640
          %v1671 = vunpack.c.l.b16 %v1641
          %v1672 = vunpack.c.l.b16 %v1642
          %v1673 = vunpack.c.l.b16 %v1643
          %v1674 = vunpack.c.h.b16 %v1638
          %v1675 = vunpack.c.h.b16 %v1639
          %v1676 = vunpack.c.h.b16 %v1640
          %v1677 = vunpack.c.h.b16 %v1641
          %v1678 = vunpack.c.h.b16 %v1642
          %v1679 = vunpack.c.h.b16 %v1643
          %v1680 = vpack.c.b16 %v1657, %v1656
          %v1681 = vpack.c.b16 %v1659, %v1658
          %v1682 = vpack.c.b16 %v1661, %v1660
          %v1683 = vpack.c.b16 %v1663, %v1662
          %v1684 = vpack.c.b16 %v1665, %v1664
          %v1685 = vpack.c.b16 %v1667, %v1666
          %v1686 = vpack.c.b16 %v1669, %v1668
          %v1687 = vpack.c.b16 %v1671, %v1670
          %v1688 = vpack.c.b16 %v1673, %v1672
          %v1689 = vpack.c.b16 %v1675, %v1674
          %v1690 = vpack.c.b16 %v1677, %v1676
          %v1691 = vpack.c.b16 %v1679, %v1678
          %1704 = vst [vmem:[%s370] sm:$0xff] %v1680
          %1705 = vst [vmem:[%s370 + $0x8] sm:$0xff] %v1681
          %1706 = vst [vmem:[%s370 + $0x10] sm:$0xff] %v1682
          %1707 = vst [vmem:[%s370 + $0x18] sm:$0xff] %v1683
          %1708 = vst [vmem:[%s370 + $0x20] sm:$0xff] %v1684
          %1709 = vst [vmem:[%s370 + $0x28] sm:$0xff] %v1685
          %1710 = vst [vmem:[%s370 + $0x30] sm:$0xff] %v1686
          %1711 = vst [vmem:[%s370 + $0x38] sm:$0xff] %v1687
          %1712 = vst [vmem:[%s370 + $0x40] sm:$0xff] %v1688
          %1713 = vst [vmem:[%s370 + $0x48] sm:$0xff] %v1689
          %1714 = vst [vmem:[%s370 + $0x50] sm:$0xff] %v1690
          %1715 = vst [vmem:[%s370 + $0x58] sm:$0xff] %v1691
        $region90: #{closed_call.20} parent=77 // pred_fallthru
          _
        %s1716 = smul.u32 4, %s21
        %p1717 = scmp.lt.s32.totalorder %s1716, 3
        %s1718 = scalar_select %p1717, %s1716, 3
        %s1719 = smul.addr %s1718, 6
        %s1720 = smul.addr %s1719, 4
        %s1721 = scalar_lea.vmem %s6, %s1720
        // Predicated region
        $region91: #{closed_call.20} parent=77 // pred_check
          %p1722 = pneg %p190
        $region92: #{closed_call.20} parent=77 // pred_check_branch
          %1724 = sbr.rel (%p1722) target = $region94
        $region93: #{closed_call.20} parent=77 // pred_region
          %s1725 = smul.u32 4, %s21
        $region94: #{closed_call.20} parent=77 // pred_fallthru
          _
        // Predicated region
        $region95: #{closed_call.20} parent=77 // pred_check
          %p1726 = pneg %p190
        $region96: #{closed_call.20} parent=77 // pred_check_branch
          %1728 = sbr.rel (%p1726) target = $region98
        $region97: #{closed_call.20} parent=77 // pred_region
          %s1729 = smul.u32 4, %s21
          %p1730 = scmp.lt.s32.totalorder %s1729, 3
          %s1731 = scalar_select %p1730, %s1729, 3
          %s1732 = smul.addr %s1731, 6
          %s1733 = smul.addr %s1732, 4
          %s1734 = scalar_lea.vmem %s6, %s1733
        $region98: #{closed_call.20} parent=77 // pred_fallthru
          _
      $region78: #{closed_call.20} parent=5 // pred_fallthru
        _
      %p1735 = scmp.le.s32.totalorder 2, %s12
      // Predicated region
      $region99: #{closed_call.20} parent=5 // pred_check
        %p1736 = pneg %p1735
      $region100: #{closed_call.20} parent=5 // pred_check_branch
        %1738 = sbr.rel (%p1736) target = $region102
      $region101: #{closed_call.20} parent=5 // pred_region
        %s1739 = ssub.s32 %s12, 2
      $region102: #{closed_call.20} parent=5 // pred_fallthru
        _
    $region6: #{closed_call.20} parent=1 // loop_footer
      %s16 = sadd.s32 1, %s12
    $region7: #{closed_call.20} parent=1 // loop_footer_branch
      %11 = sbr.rel target = $region3
    $region8: #{closed_call.20} parent=1 // loop_exit
      _

// kernel: text_encoder_forward.5
$region0: #{text_encoder_forward.5}
  #allocation0 [shape = 'u32[]', space=smem, size = 0x4, offset = 0x4, fixed_abs, tag = 'smem constant byte address 0x4 - core index']
  #allocation1 [shape = 'u32[144,128]{1,0:T(1,128)}', space=vmem, size = 0x12000, scoped, tag = 'internal scratch']
  #allocation2 [shape = 'f32[8,128]{1,0:T(8,128)}', space=vmem, size = 0x1000, scoped, tag = 'scratch operand']
  %s0 = inlined_call_operand.vmem [shape: bf16[8,768], index: 0, kind: input, shape index: {}]
  %s1 = inlined_call_operand.vmem [shape: bf16[768,128], index: 1, kind: input, shape index: {}]
  %s2 = inlined_call_operand.vmem [shape: f32[1,128], index: 2, kind: input, shape index: {}]
  %s3 = inlined_call_operand.vmem [shape: f32[8,128], index: 3, kind: output, shape index: {}]
  %s4 = sld [smem:[#allocation0]]
  $region53: #{text_encoder_forward.5} parent=0
    _
  %s6 = ssub.s32 1, %s4
  %s7 = scalar_select 0, %s6, %s4
  loop: start=0, step=1, limit=5
  $region2: #{text_encoder_forward.5} parent=0 // loop_pre_header
    _
  $region3: #{text_encoder_forward.5} parent=0 // loop_header
    %s9 = sphi 0, %s13
    %p10 = scmp.ge.s32.totalorder %s9, 5
    %s16 = sphi 0, %s35
    %s17 = sphi 0, %s31
    %s18 = sphi 0, %s27
    %s19 = sphi 0, %s16
    %s20 = sphi 0, %s17
    %s21 = sphi 0, %s18
    %s22 = sphi 0, %s19
    %s23 = sphi 0, %s20
    %s24 = sphi 0, %s21
    %s40 = sphi 0, %s42
    %s43 = sphi 0, %s40
    %s44 = sphi 0, %s43
    %s60 = sphi 0, %s44
    %s68 = sphi 0, %s70
    %s71 = sphi 0, %s68
    %s72 = sphi 0, %s71
    %s88 = sphi 0, %s72
    %s94 = sphi 0, %s96
    %s97 = sphi 0, %s94
    %s98 = sphi 0, %s97
    %s114 = sphi 0, %s98
    %s122 = sphi 0, %s124
    %s125 = sphi 0, %s122
    %s126 = sphi 0, %s125
    %s142 = sphi 0, %s126
  $region4: #{text_encoder_forward.5} parent=0 // loop_header_branch
    %12 = sbr.rel (%p10) target = $region8
  $region5: #{text_encoder_forward.5} parent=0 // loop_body
    %s14 = ssub.s32 %s9, 1
    %s15 = ssub.s32 %s9, 2
    %s25 = sadd.s32 1, %s18
    %p26 = scmp.ge.s32.totalorder %s25, 3
    %s27 = scalar_select %p26, 0, %s25
    %s28 = sadd.s32 1, %s17
    %s29 = scalar_select %p26, %s28, %s17
    %p30 = scmp.ge.s32.totalorder %s29, 1
    %s31 = scalar_select %p30, 0, %s29
    %s32 = sadd.s32 1, %s16
    %s33 = scalar_select %p30, %s32, %s16
    %p34 = scmp.ge.s32.totalorder %s33, 1
    %s35 = scalar_select %p34, 0, %s33
    %s36 = ssub.s32 %s16, %s35
    %s37 = ssub.s32 %s18, %s27
    %s38 = sor.u32 %s36, %s37
    %p39 = scmp.eq.s32.totalorder %s38, 0
    %s41 = sadd.s32 %s40, 1
    %s42 = scalar_select %p39, %s40, %s41
    %p45 = pneg %p39
    %p46 = scmp.eq.s32.totalorder %s9, 2
    %p47 = por %p45, %p46
    %p48 = scmp.ne.s32.totalorder %s40, %s43
    %p49 = scmp.eq.s32.totalorder %s9, 0
    %p50 = por %p48, %p49
    %p51 = scmp.ne.s32.totalorder %s40, %s43
    %p52 = scmp.eq.s32.totalorder %s14, 2
    %p53 = por %p51, %p52
    %p54 = scmp.ne.s32.totalorder %s43, %s44
    %p55 = scmp.eq.s32.totalorder %s14, 0
    %p56 = por %p54, %p55
    %p57 = scmp.ne.s32.totalorder %s43, %s44
    %p58 = scmp.eq.s32.totalorder %s15, 2
    %p59 = por %p57, %p58
    %p61 = scmp.ne.s32.totalorder %s44, %s60
    %p62 = scmp.eq.s32.totalorder %s15, 0
    %p63 = por %p61, %p62
    %s64 = ssub.s32 %s18, %s27
    %s65 = ssub.s32 %s17, %s31
    %s66 = sor.u32 %s64, %s65
    %p67 = scmp.eq.s32.totalorder %s66, 0
    %s69 = sadd.s32 %s68, 1
    %s70 = scalar_select %p67, %s68, %s69
    %p73 = pneg %p67
    %p74 = scmp.eq.s32.totalorder %s9, 2
    %p75 = por %p73, %p74
    %p76 = scmp.ne.s32.totalorder %s68, %s71
    %p77 = scmp.eq.s32.totalorder %s9, 0
    %p78 = por %p76, %p77
    %p79 = scmp.ne.s32.totalorder %s68, %s71
    %p80 = scmp.eq.s32.totalorder %s14, 2
    %p81 = por %p79, %p80
    %p82 = scmp.ne.s32.totalorder %s71, %s72
    %p83 = scmp.eq.s32.totalorder %s14, 0
    %p84 = por %p82, %p83
    %p85 = scmp.ne.s32.totalorder %s71, %s72
    %p86 = scmp.eq.s32.totalorder %s15, 2
    %p87 = por %p85, %p86
    %p89 = scmp.ne.s32.totalorder %s72, %s88
    %p90 = scmp.eq.s32.totalorder %s15, 0
    %p91 = por %p89, %p90
    %s92 = ssub.s32 %s17, %s31
    %p93 = scmp.eq.s32.totalorder %s92, 0
    %s95 = sadd.s32 %s94, 1
    %s96 = scalar_select %p93, %s94, %s95
    %p99 = pneg %p93
    %p100 = scmp.eq.s32.totalorder %s9, 2
    %p101 = por %p99, %p100
    %p102 = scmp.ne.s32.totalorder %s94, %s97
    %p103 = scmp.eq.s32.totalorder %s9, 0
    %p104 = por %p102, %p103
    %p105 = scmp.ne.s32.totalorder %s94, %s97
    %p106 = scmp.eq.s32.totalorder %s14, 2
    %p107 = por %p105, %p106
    %p108 = scmp.ne.s32.totalorder %s97, %s98
    %p109 = scmp.eq.s32.totalorder %s14, 0
    %p110 = por %p108, %p109
    %p111 = scmp.ne.s32.totalorder %s97, %s98
    %p112 = scmp.eq.s32.totalorder %s15, 2
    %p113 = por %p111, %p112
    %p115 = scmp.ne.s32.totalorder %s98, %s114
    %p116 = scmp.eq.s32.totalorder %s15, 0
    %p117 = por %p115, %p116
    %s118 = ssub.s32 %s16, %s35
    %s119 = ssub.s32 %s17, %s31
    %s120 = sor.u32 %s118, %s119
    %p121 = scmp.eq.s32.totalorder %s120, 0
    %s123 = sadd.s32 %s122, 1
    %s124 = scalar_select %p121, %s122, %s123
    %p127 = pneg %p121
    %p128 = scmp.eq.s32.totalorder %s9, 2
    %p129 = por %p127, %p128
    %p130 = scmp.ne.s32.totalorder %s122, %s125
    %p131 = scmp.eq.s32.totalorder %s9, 0
    %p132 = por %p130, %p131
    %p133 = scmp.ne.s32.totalorder %s122, %s125
    %p134 = scmp.eq.s32.totalorder %s14, 2
    %p135 = por %p133, %p134
    %p136 = scmp.ne.s32.totalorder %s125, %s126
    %p137 = scmp.eq.s32.totalorder %s14, 0
    %p138 = por %p136, %p137
    %p139 = scmp.ne.s32.totalorder %s125, %s126
    %p140 = scmp.eq.s32.totalorder %s15, 2
    %p141 = por %p139, %p140
    %p143 = scmp.ne.s32.totalorder %s126, %s142
    %p144 = scmp.eq.s32.totalorder %s15, 0
    %p145 = por %p143, %p144
    %p146 = scmp.le.s32.totalorder 1, %s9
    %p147 = scmp.lt.s32.totalorder %s9, 4
    %p148 = pnand %p146, %p147
    %p149 = pneg %p148
    // Predicated region
    $region9: #{text_encoder_forward.5} parent=5 // pred_check
      _
    $region10: #{text_encoder_forward.5} parent=5 // pred_check_branch
      %151 = sbr.rel (%p148) target = $region12
    $region11: #{text_encoder_forward.5} parent=5 // pred_region
      %s152 = ssub.s32 %s9, 1
      // Predicated region
      $region13: #{text_encoder_forward.5} parent=11 // pred_check
        %p153 = pneg %p110
      $region14: #{text_encoder_forward.5} parent=11 // pred_check_branch
        %155 = sbr.rel (%p153) target = $region16
      $region15: #{text_encoder_forward.5} parent=11 // pred_region
        %p156 = scmp.lt.s32.totalorder %s20, 0
        %s157 = scalar_select %p156, %s20, 0
        %s158 = scalar_lea.vmem %s2, %s157
      $region16: #{text_encoder_forward.5} parent=11 // pred_fallthru
        _
    $region12: #{text_encoder_forward.5} parent=5 // pred_fallthru
      _
    %p159 = scmp.lt.s32.totalorder %s9, 3
    // Predicated region
    $region17: #{text_encoder_forward.5} parent=5 // pred_check
      %p160 = pneg %p159
    $region18: #{text_encoder_forward.5} parent=5 // pred_check_branch
      %162 = sbr.rel (%p160) target = $region20
    $region19: #{text_encoder_forward.5} parent=5 // pred_region
      // Predicated region
      $region21: #{text_encoder_forward.5} parent=19 // pred_check
        %p163 = pneg %p50
      $region22: #{text_encoder_forward.5} parent=19 // pred_check_branch
        %165 = sbr.rel (%p163) target = $region24
      $region23: #{text_encoder_forward.5} parent=19 // pred_region
        %s166 = smul.u32 2, %s18
        %p167 = scmp.lt.s32.totalorder %s16, 0
        %s168 = scalar_select %p167, %s16, 0
        %p169 = scmp.lt.s32.totalorder %s166, 5
        %s170 = scalar_select %p169, %s166, 5
        %s171 = smul.addr %s168, 6
        %s172 = sadd.s32 %s170, %s171
        %s173 = smul.addr %s172, 4
        %s174 = scalar_lea.vmem %s0, %s173
        %s175 = smul.u32 2, %s18
      $region24: #{text_encoder_forward.5} parent=19 // pred_fallthru
        _
      // Predicated region
      $region25: #{text_encoder_forward.5} parent=19 // pred_check
        %p176 = pneg %p78
      $region26: #{text_encoder_forward.5} parent=19 // pred_check_branch
        %178 = sbr.rel (%p176) target = $region28
      $region27: #{text_encoder_forward.5} parent=19 // pred_region
        %s179 = smul.u32 32, %s18
        %p180 = scmp.lt.s32.totalorder %s179, 95
        %s181 = scalar_select %p180, %s179, 95
        %p182 = scmp.lt.s32.totalorder %s17, 0
        %s183 = scalar_select %p182, %s17, 0
        %s184 = sadd.s32 %s183, %s181
        %s185 = smul.addr %s184, 4
        %s186 = scalar_lea.vmem %s1, %s185
        %s187 = smul.u32 32, %s18
      $region28: #{text_encoder_forward.5} parent=19 // pred_fallthru
        _
    $region20: #{text_encoder_forward.5} parent=5 // pred_fallthru
      _
    %p188 = scmp.le.s32.totalorder 1, %s9
    %p189 = scmp.lt.s32.totalorder %s9, 4
    %p190 = pnand %p188, %p189
    %p191 = pneg %p190
    // Predicated region
    $region29: #{text_encoder_forward.5} parent=5 // pred_check
      _
    $region30: #{text_encoder_forward.5} parent=5 // pred_check_branch
      %193 = sbr.rel (%p190) target = $region32
    $region31: #{text_encoder_forward.5} parent=5 // pred_region
      %s194 = ssub.s32 %s9, 1
      %s195 = smul.u32 2, %s21
      %p196 = scmp.lt.s32.totalorder %s19, 0
      %s197 = scalar_select %p196, %s19, 0
      %p198 = scmp.lt.s32.totalorder %s195, 5
      %s199 = scalar_select %p198, %s195, 5
      %s200 = smul.addr %s197, 6
      %s201 = sadd.s32 %s199, %s200
      %s202 = smul.addr %s201, 4
      %s203 = scalar_lea.vmem %s0, %s202
      %p204 = pneg %p56
      %p205 = pneg %p53
      %s206 = smul.u32 32, %s21
      %p207 = scmp.lt.s32.totalorder %s206, 95
      %s208 = scalar_select %p207, %s206, 95
      %p209 = scmp.lt.s32.totalorder %s20, 0
      %s210 = scalar_select %p209, %s20, 0
      %s211 = sadd.s32 %s210, %s208
      %s212 = smul.addr %s211, 4
      %s213 = scalar_lea.vmem %s1, %s212
      %p214 = pneg %p84
      %p215 = pneg %p81
      %p216 = scmp.lt.s32.totalorder %s20, 0
      %s217 = scalar_select %p216, %s20, 0
      %s218 = scalar_lea.vmem %s2, %s217
      %p219 = pneg %p110
      %p220 = pneg %p107
      %p221 = pneg %p138
      %p222 = pneg %p135
      %p223 = scmp.lt.s32.totalorder %s19, 0
      %s224 = scalar_select %p223, %s19, 0
      %p225 = scmp.lt.s32.totalorder %s20, 0
      %s226 = scalar_select %p225, %s20, 0
      %s227 = sadd.s32 %s226, %s224
      %s228 = smul.addr %s227, 8
      %s229 = scalar_lea.vmem %s3, %s228
      %s230 = smul.u32 2, %s21
      %p231 = scmp.lt.s32.totalorder %s19, 0
      %s232 = scalar_select %p231, %s19, 0
      %p233 = scmp.lt.s32.totalorder %s230, 5
      %s234 = scalar_select %p233, %s230, 5
      %s235 = smul.addr %s232, 6
      %s236 = sadd.s32 %s234, %s235
      %s237 = smul.addr %s236, 4
      %s238 = scalar_lea.vmem %s0, %s237
      %s239 = smul.u32 2, %s21
      %s240 = smul.u32 32, %s21
      %p241 = scmp.lt.s32.totalorder %s240, 95
      %s242 = scalar_select %p241, %s240, 95
      %p243 = scmp.lt.s32.totalorder %s20, 0
      %s244 = scalar_select %p243, %s20, 0
      %s245 = sadd.s32 %s244, %s242
      %s246 = smul.addr %s245, 4
      %s247 = scalar_lea.vmem %s1, %s246
      %s248 = smul.u32 32, %s21
      %p249 = scmp.lt.s32.totalorder %s20, 0
      %s250 = scalar_select %p249, %s20, 0
      %s251 = scalar_lea.vmem %s2, %s250
      %p252 = scmp.lt.s32.totalorder %s19, 0
      %s253 = scalar_select %p252, %s19, 0
      %p254 = scmp.lt.s32.totalorder %s20, 0
      %s255 = scalar_select %p254, %s20, 0
      %s256 = sadd.s32 %s255, %s253
      %s257 = smul.addr %s256, 8
      %s258 = scalar_lea.vmem %s3, %s257
      %p260 = scmp.eq.s32.totalorder %s21, 0
      // Predicated region
      $region33: #{text_encoder_forward.5} parent=31 // pred_check
        %p261 = pneg %p260
      $region34: #{text_encoder_forward.5} parent=31 // pred_check_branch
        %263 = sbr.rel (%p261) target = $region36
      $region35: #{text_encoder_forward.5} parent=31 // pred_region
        %264 = vst [vmem:[#allocation2] sm:$0xff] 0.0
      $region36: #{text_encoder_forward.5} parent=31 // pred_fallthru
        _
      %v265 = vld [vmem:[#allocation2] sm:$0xff]
      %v266 = vld [vmem:[%s238] sm:$0xff]
      %v267 = vld [vmem:[%s247] sm:$0xf]
      %v268 = vld [vmem:[%s247 + $0x4] sm:$0xf]
      %v269 = vld [vmem:[%s247 + $0x8] sm:$0xf]
      %v270 = vld [vmem:[%s247 + $0xc] sm:$0xf]
      %v271 = vld [vmem:[%s247 + $0x10] sm:$0xf]
      %v272 = vld [vmem:[%s247 + $0x14] sm:$0xf]
      %v273 = vld [vmem:[%s247 + $0x18] sm:$0xf]
      %v274 = vld [vmem:[%s247 + $0x1c] sm:$0xf]
      %v275 = vld [vmem:[%s247 + $0x20] sm:$0xf]
      %v276 = vld [vmem:[%s247 + $0x24] sm:$0xf]
      %v277 = vld [vmem:[%s247 + $0x28] sm:$0xf]
      %v278 = vld [vmem:[%s247 + $0x2c] sm:$0xf]
      %v279 = vld [vmem:[%s247 + $0x30] sm:$0xf]
      %v280 = vld [vmem:[%s247 + $0x34] sm:$0xf]
      %v281 = vld [vmem:[%s247 + $0x38] sm:$0xf]
      %v282 = vld [vmem:[%s247 + $0x3c] sm:$0xf]
      %v283 = vld [vmem:[%s247 + $0x40] sm:$0xf]
      %v284 = vld [vmem:[%s247 + $0x44] sm:$0xf]
      %v285 = vld [vmem:[%s247 + $0x48] sm:$0xf]
      %v286 = vld [vmem:[%s247 + $0x4c] sm:$0xf]
      %v287 = vld [vmem:[%s247 + $0x50] sm:$0xf]
      %v288 = vld [vmem:[%s247 + $0x54] sm:$0xf]
      %v289 = vld [vmem:[%s247 + $0x58] sm:$0xf]
      %v290 = vld [vmem:[%s247 + $0x5c] sm:$0xf]
      %v291 = vld [vmem:[%s247 + $0x60] sm:$0xf]
      %v292 = vld [vmem:[%s247 + $0x64] sm:$0xf]
      %v293 = vld [vmem:[%s247 + $0x68] sm:$0xf]
      %v294 = vld [vmem:[%s247 + $0x6c] sm:$0xf]
      %v295 = vld [vmem:[%s247 + $0x70] sm:$0xf]
      %v296 = vld [vmem:[%s247 + $0x74] sm:$0xf]
      %v297 = vld [vmem:[%s247 + $0x78] sm:$0xf]
      %v298 = vld [vmem:[%s247 + $0x7c] sm:$0xf]
      %v300 = vunpack.c.l.b16 %v266
      %v301 = vunpack.c.h.b16 %v266
      %v302 = vpack.c.b16 %v300, %v300
      %v303 = vpack.c.b16 %v301, %v301
      %v338 = vunpack.c.l.b16 %v267
      %v339 = vunpack.c.l.b16 %v268
      %v340 = vunpack.c.l.b16 %v269
      %v341 = vunpack.c.l.b16 %v270
      %v342 = vunpack.c.l.b16 %v271
      %v343 = vunpack.c.l.b16 %v272
      %v344 = vunpack.c.l.b16 %v273
      %v345 = vunpack.c.l.b16 %v274
      %v346 = vunpack.c.l.b16 %v275
      %v347 = vunpack.c.l.b16 %v276
      %v348 = vunpack.c.l.b16 %v277
      %v349 = vunpack.c.l.b16 %v278
      %v350 = vunpack.c.l.b16 %v279
      %v351 = vunpack.c.l.b16 %v280
      %v352 = vunpack.c.l.b16 %v281
      %v353 = vunpack.c.l.b16 %v282
      %v354 = vunpack.c.l.b16 %v283
      %v355 = vunpack.c.l.b16 %v284
      %v356 = vunpack.c.l.b16 %v285
      %v357 = vunpack.c.l.b16 %v286
      %v358 = vunpack.c.l.b16 %v287
      %v359 = vunpack.c.l.b16 %v288
      %v360 = vunpack.c.l.b16 %v289
      %v361 = vunpack.c.l.b16 %v290
      %v362 = vunpack.c.l.b16 %v291
      %v363 = vunpack.c.l.b16 %v292
      %v364 = vunpack.c.l.b16 %v293
      %v365 = vunpack.c.l.b16 %v294
      %v366 = vunpack.c.l.b16 %v295
      %v367 = vunpack.c.l.b16 %v296
      %v368 = vunpack.c.l.b16 %v297
      %v369 = vunpack.c.l.b16 %v298
      %v370 = vpack.c.b16 %v339, %v338
      %v371 = vpack.c.b16 %v341, %v340
      %v372 = vpack.c.b16 %v343, %v342
      %v373 = vpack.c.b16 %v345, %v344
      %v374 = vpack.c.b16 %v347, %v346
      %v375 = vpack.c.b16 %v349, %v348
      %v376 = vpack.c.b16 %v351, %v350
      %v377 = vpack.c.b16 %v353, %v352
      %v378 = vpack.c.b16 %v355, %v354
      %v379 = vpack.c.b16 %v357, %v356
      %v380 = vpack.c.b16 %v359, %v358
      %v381 = vpack.c.b16 %v361, %v360
      %v382 = vpack.c.b16 %v363, %v362
      %v383 = vpack.c.b16 %v365, %v364
      %v384 = vpack.c.b16 %v367, %v366
      %v385 = vpack.c.b16 %v369, %v368
      %402 = vmatprep.subr.bf16.mxu0 0
      %403 = vmatpush1.bf16.msra.mxu0 %v377
      %404 = vmatprep.subr.bf16.mxu0 0
      %405 = vmatpush1.bf16.msra.mxu0 %v376
      %406 = vmatprep.subr.bf16.mxu0 0
      %407 = vmatpush1.bf16.msra.mxu0 %v375
      %408 = vmatprep.subr.bf16.mxu0 0
      %409 = vmatpush1.bf16.msra.mxu0 %v374
      %410 = vmatprep.subr.bf16.mxu0 0
      %411 = vmatpush1.bf16.msra.mxu0 %v373
      %412 = vmatprep.subr.bf16.mxu0 0
      %413 = vmatpush1.bf16.msra.mxu0 %v372
      %414 = vmatprep.subr.bf16.mxu0 0
      %415 = vmatpush1.bf16.msra.mxu0 %v371
      %416 = vmatprep.subr.bf16.mxu0 0
      %417 = vmatpush1.bf16.msra.mxu0 %v370
      %418 = vmatprep.subr.bf16.mxu0 0
      %419 = vmatpush2.bf16.msra.mxu0 %v385
      %420 = vmatprep.subr.bf16.mxu0 0
      %421 = vmatpush2.bf16.msra.mxu0 %v384
      %422 = vmatprep.subr.bf16.mxu0 0
      %423 = vmatpush2.bf16.msra.mxu0 %v383
      %424 = vmatprep.subr.bf16.mxu0 0
      %425 = vmatpush2.bf16.msra.mxu0 %v382
      %426 = vmatprep.subr.bf16.mxu0 0
      %427 = vmatpush2.bf16.msra.mxu0 %v381
      %428 = vmatprep.subr.bf16.mxu0 0
      %429 = vmatpush2.bf16.msra.mxu0 %v380
      %430 = vmatprep.subr.bf16.mxu0 0
      %431 = vmatpush2.bf16.msra.mxu0 %v379
      %432 = vmatprep.subr.bf16.mxu0 0
      %433 = vmatpush2.bf16.msra.mxu0 %v378
      %434 = vmatprep.mubr.bf16.mxu0 %v303
      %435 = vmatmul.mubr.bf16.gmra.mxu0 %v302
      %v436 = vpop.f32.mrf.mxu0
      %v437 = vadd.f32 0.0, %v436
      %v438 = vpop.f32.mrf.mxu0
      %v439 = vpop.f32.mrf.mxu0
      %v440 = vpop.f32.mrf.mxu0
      %441 = vdwg.mxu0
      %v442 = vadd.f32 %v265, %v437
      %443 = vst [vmem:[#allocation2] sm:$0xff] %v442
      %p444 = scmp.eq.s32.totalorder %s21, 2
      // Predicated region
      $region37: #{text_encoder_forward.5} parent=31 // pred_check
        %p445 = pneg %p444
      $region38: #{text_encoder_forward.5} parent=31 // pred_check_branch
        %447 = sbr.rel (%p445) target = $region40
      $region39: #{text_encoder_forward.5} parent=31 // pred_region
        %v448 = vld [vmem:[#allocation2] sm:$0xff]
        %v449 = vld [vmem:[%s251] sm:$0x1]
        %v451 = vlaneseq
        %v452 = vshrl.u32 %v451, 7
        %v453 = vsub.s32 0, %v452
        %v454 = vrot.slane %v449, %v453
        %v456 = vadd.f32 %v448, %v454
        %457 = vst [vmem:[%s258] sm:$0xff] %v456
      $region40: #{text_encoder_forward.5} parent=31 // pred_fallthru
        _
      %p458 = scmp.lt.s32.totalorder %s19, 0
      %s459 = scalar_select %p458, %s19, 0
      %p460 = scmp.lt.s32.totalorder %s20, 0
      %s461 = scalar_select %p460, %s20, 0
      %s462 = sadd.s32 %s461, %s459
      %s463 = smul.addr %s462, 8
      %s464 = scalar_lea.vmem %s3, %s463
      // Predicated region
      $region41: #{text_encoder_forward.5} parent=31 // pred_check
        %p465 = pneg %p135
      $region42: #{text_encoder_forward.5} parent=31 // pred_check_branch
        %467 = sbr.rel (%p465) target = $region44
      $region43: #{text_encoder_forward.5} parent=31 // pred_region
        _
      $region44: #{text_encoder_forward.5} parent=31 // pred_fallthru
        _
      // Predicated region
      $region45: #{text_encoder_forward.5} parent=31 // pred_check
        %p468 = pneg %p135
      $region46: #{text_encoder_forward.5} parent=31 // pred_check_branch
        %470 = sbr.rel (%p468) target = $region48
      $region47: #{text_encoder_forward.5} parent=31 // pred_region
        %p471 = scmp.lt.s32.totalorder %s19, 0
        %s472 = scalar_select %p471, %s19, 0
        %p473 = scmp.lt.s32.totalorder %s20, 0
        %s474 = scalar_select %p473, %s20, 0
        %s475 = sadd.s32 %s474, %s472
        %s476 = smul.addr %s475, 8
        %s477 = scalar_lea.vmem %s3, %s476
      $region48: #{text_encoder_forward.5} parent=31 // pred_fallthru
        _
    $region32: #{text_encoder_forward.5} parent=5 // pred_fallthru
      _
    %p478 = scmp.le.s32.totalorder 2, %s9
    // Predicated region
    $region49: #{text_encoder_forward.5} parent=5 // pred_check
      %p479 = pneg %p478
    $region50: #{text_encoder_forward.5} parent=5 // pred_check_branch
      %481 = sbr.rel (%p479) target = $region52
    $region51: #{text_encoder_forward.5} parent=5 // pred_region
      %s482 = ssub.s32 %s9, 2
    $region52: #{text_encoder_forward.5} parent=5 // pred_fallthru
      _
  $region6: #{text_encoder_forward.5} parent=0 // loop_footer
    %s13 = sadd.s32 1, %s9
  $region7: #{text_encoder_forward.5} parent=0 // loop_footer_branch
    %8 = sbr.rel target = $region3
  $region8: #{text_encoder_forward.5} parent=0 // loop_exit
    _

</llo_original>
